<compile_context>
chip_gen: v7x
topology: tpu7x:2x2x1
jax: 0.10.0
libtpu: 0.0.40
codegen_flags: <defaults>
</compile_context>

<pallas_src>
import functools
import math

import jax
import jax.numpy as jnp
from jax import lax
from jax.experimental import pallas as pl
from jax.experimental.pallas import tpu as pltpu

D_MODEL = 64
N_HEADS = 2
HEAD_DIM = D_MODEL // N_HEADS
D_FF = 2048          # PyTorch TransformerEncoderLayer default dim_feedforward
NUM_LAYERS = 3
LN_EPS = 1e-5


# ---------------- fused whole-network kernel ----------------

def _dtqn_kernel(x_ref, fc_w, fc_b, fc1_w, fc1_b, fc2_w, fc2_b,
                 ipw, ipb, opw, opb, ln1g, ln1b,
                 f1w, f1b, f2w, f2b, ln2g, ln2b,
                 o_ref, *, B, S):
    # Dropout (p=0.1) inside the PyTorch encoder layer is identity in eval mode; omitted.

    def matmul(a_f32, w_bf16):
        # bf16 operands, f32 accumulation on the MXU.
        return jnp.dot(a_f32.astype(jnp.bfloat16), w_bf16,
                       preferred_element_type=jnp.float32)

    def layernorm(z, g, b):
        # biased variance, eps=1e-5 (matches PyTorch LayerNorm), post-norm order.
        mean = jnp.mean(z, axis=-1, keepdims=True)
        cent = z - mean
        var = jnp.mean(cent * cent, axis=-1, keepdims=True)
        return cent * lax.rsqrt(var + LN_EPS) * g + b

    # fc: (B*S, num_inputs) -> (B*S, 64)
    h = matmul(x_ref[...], fc_w[...]) + fc_b[...]

    # 3 post-norm encoder layers, fully unrolled (static index into stacked weights).
    for l in range(NUM_LAYERS):
        # --- multi-head self-attention ---
        # 1/sqrt(HEAD_DIM) is already folded into the Q columns of ipw/ipb.
        qkv = matmul(h, ipw[l]) + ipb[l]                              # (B*S, 192)
        batch_rows = []
        for b in range(B):
            r0 = b * S
            head_outs = []
            for hd in range(N_HEADS):
                c = hd * HEAD_DIM
                q = qkv[r0:r0 + S, c:c + HEAD_DIM].astype(jnp.bfloat16)               # (S, Dh)
                k = qkv[r0:r0 + S, D_MODEL + c:D_MODEL + c + HEAD_DIM].astype(jnp.bfloat16)
                v = qkv[r0:r0 + S, 2 * D_MODEL + c:2 * D_MODEL + c + HEAD_DIM].astype(jnp.bfloat16)
                s = jnp.dot(q, k.T, preferred_element_type=jnp.float32)               # (S, S)
                s = s - jnp.max(s, axis=-1, keepdims=True)                            # stable softmax
                p = jnp.exp(s)
                p = p * pl.reciprocal(jnp.sum(p, axis=-1, keepdims=True), approx=True)
                head_outs.append(jnp.dot(p.astype(jnp.bfloat16), v,
                                         preferred_element_type=jnp.float32))         # (S, Dh)
            batch_rows.append(jnp.concatenate(head_outs, axis=-1))                    # (S, 64)
        attn = jnp.concatenate(batch_rows, axis=0)                                    # (B*S, 64)
        attn = matmul(attn, opw[l]) + opb[l]
        h = layernorm(h + attn, ln1g[l], ln1b[l])

        # --- feed-forward ---
        ff = jnp.maximum(matmul(h, f1w[l]) + f1b[l], 0.0)             # (B*S, 2048), stays in VMEM
        ff = matmul(ff, f2w[l]) + f2b[l]
        h = layernorm(h + ff, ln2g[l], ln2b[l])

    # head: fc1 + relu, fc2
    h = jnp.maximum(matmul(h, fc1_w[...]) + fc1_b[...], 0.0)          # (B*S, 32)
    o_ref[...] = matmul(h, fc2_w[...]) + fc2_b[...]                   # (B*S, num_outputs)


# ---------------- parameters ----------------

def xavier_uniform(key, fan_in, fan_out):
    # matches nn.init.xavier_uniform_ on a PyTorch (out, in) weight; stored (in, out)
    bound = math.sqrt(6.0 / (fan_in + fan_out))
    return jax.random.uniform(key, (fan_in, fan_out), jnp.float32, -bound, bound)


def init_params(key, num_inputs, num_outputs):
    ks = iter(jax.random.split(key, 4 + 4 * NUM_LAYERS))
    scale = 1.0 / math.sqrt(HEAD_DIM)
    bf16 = lambda a: a.astype(jnp.bfloat16)

    in_proj_w = jnp.stack([xavier_uniform(next(ks), D_MODEL, 3 * D_MODEL)
                           for _ in range(NUM_LAYERS)])
    in_proj_w = in_proj_w.at[:, :, :D_MODEL].multiply(scale)          # fold 1/sqrt(Dh) into Q
    in_proj_b = jnp.zeros((NUM_LAYERS, 1, 3 * D_MODEL), jnp.float32)
    in_proj_b = in_proj_b.at[:, :, :D_MODEL].multiply(scale)          # (no-op for zero bias)

    out_proj_w = jnp.stack([xavier_uniform(next(ks), D_MODEL, D_MODEL)
                            for _ in range(NUM_LAYERS)])
    ffn1_w = jnp.stack([xavier_uniform(next(ks), D_MODEL, D_FF)
                        for _ in range(NUM_LAYERS)])
    ffn2_w = jnp.stack([xavier_uniform(next(ks), D_FF, D_MODEL)
                        for _ in range(NUM_LAYERS)])

    return {
        "fc_w": bf16(xavier_uniform(next(ks), num_inputs, D_MODEL)),
        "fc_b": jnp.zeros((1, D_MODEL), jnp.float32),
        "fc1_w": bf16(xavier_uniform(next(ks), D_MODEL, 32)),
        "fc1_b": jnp.zeros((1, 32), jnp.float32),
        "fc2_w": bf16(xavier_uniform(next(ks), 32, num_outputs)),
        "fc2_b": jnp.zeros((1, num_outputs), jnp.float32),
        "in_proj_w": bf16(in_proj_w),
        "in_proj_b": in_proj_b,
        "out_proj_w": bf16(out_proj_w),
        "out_proj_b": jnp.zeros((NUM_LAYERS, 1, D_MODEL), jnp.float32),
        "ln1_g": jnp.ones((NUM_LAYERS, 1, D_MODEL), jnp.float32),
        "ln1_b": jnp.zeros((NUM_LAYERS, 1, D_MODEL), jnp.float32),
        "ffn1_w": bf16(ffn1_w),
        "ffn1_b": jnp.zeros((NUM_LAYERS, 1, D_FF), jnp.float32),
        "ffn2_w": bf16(ffn2_w),
        "ffn2_b": jnp.zeros((NUM_LAYERS, 1, D_MODEL), jnp.float32),
        "ln2_g": jnp.ones((NUM_LAYERS, 1, D_MODEL), jnp.float32),
        "ln2_b": jnp.zeros((NUM_LAYERS, 1, D_MODEL), jnp.float32),
    }


# ---------------- forward ----------------

def dtqn_forward(params, x, hidden=None):
    B, S, F = x.shape
    tok = x.reshape(B * S, F)
    n_out = params["fc2_b"].shape[-1]
    args = (tok,
            params["fc_w"], params["fc_b"],
            params["fc1_w"], params["fc1_b"],
            params["fc2_w"], params["fc2_b"],
            params["in_proj_w"], params["in_proj_b"],
            params["out_proj_w"], params["out_proj_b"],
            params["ln1_g"], params["ln1_b"],
            params["ffn1_w"], params["ffn1_b"],
            params["ffn2_w"], params["ffn2_b"],
            params["ln2_g"], params["ln2_b"])
    q = pl.pallas_call(
        functools.partial(_dtqn_kernel, B=B, S=S),
        out_shape=jax.ShapeDtypeStruct((B * S, n_out), jnp.float32),
        in_specs=[pl.BlockSpec(memory_space=pltpu.MemorySpace.VMEM)] * len(args),
        out_specs=pl.BlockSpec(memory_space=pltpu.MemorySpace.VMEM),
    )(*args)
    return q.reshape(B, S, n_out), hidden                             # (qvalue, hidden)


if __name__ == "__main__":
    NUM_INPUTS, NUM_OUTPUTS = 2, 4
    B, S = 2, 8
    key = jax.random.PRNGKey(0)
    pkey, xkey = jax.random.split(key)
    params = init_params(pkey, NUM_INPUTS, NUM_OUTPUTS)
    x = jax.random.normal(xkey, (B, S, NUM_INPUTS), jnp.float32)

    qvalue, hidden = jax.jit(dtqn_forward)(params, x)
    jax.block_until_ready(qvalue)
    assert qvalue.shape == (B, S, NUM_OUTPUTS)
    assert hidden is None
    print("KERNEL_OK")
</pallas_src>

<mosaic_0001>
module attributes {stable_mosaic.version = 11 : i64} {
  func.func @_dtqn_kernel(%arg0: memref<16x2xf32, #tpu.memory_space<vmem>>, %arg1: memref<2x64xbf16, #tpu.memory_space<vmem>>, %arg2: memref<1x64xf32, #tpu.memory_space<vmem>>, %arg3: memref<64x32xbf16, #tpu.memory_space<vmem>>, %arg4: memref<1x32xf32, #tpu.memory_space<vmem>>, %arg5: memref<32x4xbf16, #tpu.memory_space<vmem>>, %arg6: memref<1x4xf32, #tpu.memory_space<vmem>>, %arg7: memref<3x64x192xbf16, #tpu.memory_space<vmem>>, %arg8: memref<3x1x192xf32, #tpu.memory_space<vmem>>, %arg9: memref<3x64x64xbf16, #tpu.memory_space<vmem>>, %arg10: memref<3x1x64xf32, #tpu.memory_space<vmem>>, %arg11: memref<3x1x64xf32, #tpu.memory_space<vmem>>, %arg12: memref<3x1x64xf32, #tpu.memory_space<vmem>>, %arg13: memref<3x64x2048xbf16, #tpu.memory_space<vmem>>, %arg14: memref<3x1x2048xf32, #tpu.memory_space<vmem>>, %arg15: memref<3x2048x64xbf16, #tpu.memory_space<vmem>>, %arg16: memref<3x1x64xf32, #tpu.memory_space<vmem>>, %arg17: memref<3x1x64xf32, #tpu.memory_space<vmem>>, %arg18: memref<3x1x64xf32, #tpu.memory_space<vmem>>, %arg19: memref<16x4xf32, #tpu.memory_space<vmem>>) attributes {dimension_semantics = [], scalar_prefetch = 0 : i64, scratch_operands = 0 : i64, tpu.core_type = #tpu.core_type<tc>} {
    %c0 = arith.constant 0 : index
    %c0_0 = arith.constant 0 : index
    %0 = vector.load %arg0[%c0, %c0_0] : memref<16x2xf32, #tpu.memory_space<vmem>>, vector<16x2xf32>
    %c0_1 = arith.constant 0 : index
    %c0_2 = arith.constant 0 : index
    %1 = vector.load %arg1[%c0_1, %c0_2] : memref<2x64xbf16, #tpu.memory_space<vmem>>, vector<2x64xbf16>
    %2 = arith.truncf %0 : vector<16x2xf32> to vector<16x2xbf16>
    %cst = arith.constant dense<0.000000e+00> : vector<16x64xf32>
    %3 = tpu.matmul %2, %1, %cst {dimension_numbers = #tpu.dot_dimension_numbers<[1], [0], [0], [1], [0, 0, 1, 1], [], []>} : vector<16x2xbf16>, vector<2x64xbf16>, vector<16x64xf32> -> vector<16x64xf32>
    %c0_3 = arith.constant 0 : index
    %c0_4 = arith.constant 0 : index
    %4 = vector.load %arg2[%c0_3, %c0_4] : memref<1x64xf32, #tpu.memory_space<vmem>>, vector<1x64xf32>
    %5 = vector.broadcast %4 : vector<1x64xf32> to vector<16x64xf32>
    %6 = arith.addf %3, %5 : vector<16x64xf32>
    %c0_5 = arith.constant 0 : index
    %c0_6 = arith.constant 0 : index
    %c0_7 = arith.constant 0 : index
    %7 = vector.load %arg7[%c0_5, %c0_6, %c0_7] : memref<3x64x192xbf16, #tpu.memory_space<vmem>>, vector<1x64x192xbf16>
    %8 = vector.shape_cast %7 : vector<1x64x192xbf16> to vector<64x192xbf16>
    %9 = arith.truncf %6 : vector<16x64xf32> to vector<16x64xbf16>
    %cst_8 = arith.constant dense<0.000000e+00> : vector<16x192xf32>
    %10 = tpu.matmul %9, %8, %cst_8 {dimension_numbers = #tpu.dot_dimension_numbers<[1], [0], [0], [1], [0, 0, 1, 1], [], []>} : vector<16x64xbf16>, vector<64x192xbf16>, vector<16x192xf32> -> vector<16x192xf32>
    %c0_9 = arith.constant 0 : index
    %c0_10 = arith.constant 0 : index
    %c0_11 = arith.constant 0 : index
    %11 = vector.load %arg8[%c0_9, %c0_10, %c0_11] : memref<3x1x192xf32, #tpu.memory_space<vmem>>, vector<1x1x192xf32>
    %12 = vector.shape_cast %11 : vector<1x1x192xf32> to vector<1x192xf32>
    %13 = vector.broadcast %12 : vector<1x192xf32> to vector<16x192xf32>
    %14 = arith.addf %10, %13 : vector<16x192xf32>
    %15 = vector.extract_strided_slice %14 {offsets = [0, 0], sizes = [8, 32], strides = [1, 1]} : vector<16x192xf32> to vector<8x32xf32>
    %16 = arith.truncf %15 : vector<8x32xf32> to vector<8x32xbf16>
    %17 = vector.extract_strided_slice %14 {offsets = [0, 64], sizes = [8, 32], strides = [1, 1]} : vector<16x192xf32> to vector<8x32xf32>
    %18 = arith.truncf %17 : vector<8x32xf32> to vector<8x32xbf16>
    %19 = vector.extract_strided_slice %14 {offsets = [0, 128], sizes = [8, 32], strides = [1, 1]} : vector<16x192xf32> to vector<8x32xf32>
    %20 = arith.truncf %19 : vector<8x32xf32> to vector<8x32xbf16>
    %21 = tpu.transpose %18, [1, 0] : vector<8x32xbf16> -> vector<32x8xbf16>
    %cst_12 = arith.constant dense<0.000000e+00> : vector<8x8xf32>
    %22 = tpu.matmul %16, %21, %cst_12 {dimension_numbers = #tpu.dot_dimension_numbers<[1], [0], [0], [1], [0, 0, 1, 1], [], []>} : vector<8x32xbf16>, vector<32x8xbf16>, vector<8x8xf32> -> vector<8x8xf32>
    %cst_13 = arith.constant dense<0xFF800000> : vector<8xf32>
    %23 = vector.multi_reduction <maximumf>, %22, %cst_13 [1] : vector<8x8xf32> to vector<8xf32>
    %24 = vector.shape_cast %23 : vector<8xf32> to vector<8x1xf32>
    %25 = vector.broadcast %24 : vector<8x1xf32> to vector<8x8xf32>
    %26 = arith.subf %22, %25 : vector<8x8xf32>
    %27 = math.exp %26 : vector<8x8xf32>
    %cst_14 = arith.constant dense<0.000000e+00> : vector<8xf32>
    %28 = vector.multi_reduction <add>, %27, %cst_14 [1] : vector<8x8xf32> to vector<8xf32>
    %29 = vector.shape_cast %28 : vector<8xf32> to vector<8x1xf32>
    %30 = tpu.reciprocal %29 {approx = true} : vector<8x1xf32> -> vector<8x1xf32>
    %31 = vector.broadcast %30 : vector<8x1xf32> to vector<8x8xf32>
    %32 = arith.mulf %27, %31 : vector<8x8xf32>
    %33 = arith.truncf %32 : vector<8x8xf32> to vector<8x8xbf16>
    %cst_15 = arith.constant dense<0.000000e+00> : vector<8x32xf32>
    %34 = tpu.matmul %33, %20, %cst_15 {dimension_numbers = #tpu.dot_dimension_numbers<[1], [0], [0], [1], [0, 0, 1, 1], [], []>} : vector<8x8xbf16>, vector<8x32xbf16>, vector<8x32xf32> -> vector<8x32xf32>
    %35 = vector.extract_strided_slice %14 {offsets = [0, 32], sizes = [8, 32], strides = [1, 1]} : vector<16x192xf32> to vector<8x32xf32>
    %36 = arith.truncf %35 : vector<8x32xf32> to vector<8x32xbf16>
    %37 = vector.extract_strided_slice %14 {offsets = [0, 96], sizes = [8, 32], strides = [1, 1]} : vector<16x192xf32> to vector<8x32xf32>
    %38 = arith.truncf %37 : vector<8x32xf32> to vector<8x32xbf16>
    %39 = vector.extract_strided_slice %14 {offsets = [0, 160], sizes = [8, 32], strides = [1, 1]} : vector<16x192xf32> to vector<8x32xf32>
    %40 = arith.truncf %39 : vector<8x32xf32> to vector<8x32xbf16>
    %41 = tpu.transpose %38, [1, 0] : vector<8x32xbf16> -> vector<32x8xbf16>
    %cst_16 = arith.constant dense<0.000000e+00> : vector<8x8xf32>
    %42 = tpu.matmul %36, %41, %cst_16 {dimension_numbers = #tpu.dot_dimension_numbers<[1], [0], [0], [1], [0, 0, 1, 1], [], []>} : vector<8x32xbf16>, vector<32x8xbf16>, vector<8x8xf32> -> vector<8x8xf32>
    %cst_17 = arith.constant dense<0xFF800000> : vector<8xf32>
    %43 = vector.multi_reduction <maximumf>, %42, %cst_17 [1] : vector<8x8xf32> to vector<8xf32>
    %44 = vector.shape_cast %43 : vector<8xf32> to vector<8x1xf32>
    %45 = vector.broadcast %44 : vector<8x1xf32> to vector<8x8xf32>
    %46 = arith.subf %42, %45 : vector<8x8xf32>
    %47 = math.exp %46 : vector<8x8xf32>
    %cst_18 = arith.constant dense<0.000000e+00> : vector<8xf32>
    %48 = vector.multi_reduction <add>, %47, %cst_18 [1] : vector<8x8xf32> to vector<8xf32>
    %49 = vector.shape_cast %48 : vector<8xf32> to vector<8x1xf32>
    %50 = tpu.reciprocal %49 {approx = true} : vector<8x1xf32> -> vector<8x1xf32>
    %51 = vector.broadcast %50 : vector<8x1xf32> to vector<8x8xf32>
    %52 = arith.mulf %47, %51 : vector<8x8xf32>
    %53 = arith.truncf %52 : vector<8x8xf32> to vector<8x8xbf16>
    %cst_19 = arith.constant dense<0.000000e+00> : vector<8x32xf32>
    %54 = tpu.matmul %53, %40, %cst_19 {dimension_numbers = #tpu.dot_dimension_numbers<[1], [0], [0], [1], [0, 0, 1, 1], [], []>} : vector<8x8xbf16>, vector<8x32xbf16>, vector<8x32xf32> -> vector<8x32xf32>
    %55 = tpu.concatenate %34, %54 in 1 : vector<8x32xf32>, vector<8x32xf32> -> vector<8x64xf32>
    %56 = vector.extract_strided_slice %14 {offsets = [8, 0], sizes = [8, 32], strides = [1, 1]} : vector<16x192xf32> to vector<8x32xf32>
    %57 = arith.truncf %56 : vector<8x32xf32> to vector<8x32xbf16>
    %58 = vector.extract_strided_slice %14 {offsets = [8, 64], sizes = [8, 32], strides = [1, 1]} : vector<16x192xf32> to vector<8x32xf32>
    %59 = arith.truncf %58 : vector<8x32xf32> to vector<8x32xbf16>
    %60 = vector.extract_strided_slice %14 {offsets = [8, 128], sizes = [8, 32], strides = [1, 1]} : vector<16x192xf32> to vector<8x32xf32>
    %61 = arith.truncf %60 : vector<8x32xf32> to vector<8x32xbf16>
    %62 = tpu.transpose %59, [1, 0] : vector<8x32xbf16> -> vector<32x8xbf16>
    %cst_20 = arith.constant dense<0.000000e+00> : vector<8x8xf32>
    %63 = tpu.matmul %57, %62, %cst_20 {dimension_numbers = #tpu.dot_dimension_numbers<[1], [0], [0], [1], [0, 0, 1, 1], [], []>} : vector<8x32xbf16>, vector<32x8xbf16>, vector<8x8xf32> -> vector<8x8xf32>
    %cst_21 = arith.constant dense<0xFF800000> : vector<8xf32>
    %64 = vector.multi_reduction <maximumf>, %63, %cst_21 [1] : vector<8x8xf32> to vector<8xf32>
    %65 = vector.shape_cast %64 : vector<8xf32> to vector<8x1xf32>
    %66 = vector.broadcast %65 : vector<8x1xf32> to vector<8x8xf32>
    %67 = arith.subf %63, %66 : vector<8x8xf32>
    %68 = math.exp %67 : vector<8x8xf32>
    %cst_22 = arith.constant dense<0.000000e+00> : vector<8xf32>
    %69 = vector.multi_reduction <add>, %68, %cst_22 [1] : vector<8x8xf32> to vector<8xf32>
    %70 = vector.shape_cast %69 : vector<8xf32> to vector<8x1xf32>
    %71 = tpu.reciprocal %70 {approx = true} : vector<8x1xf32> -> vector<8x1xf32>
    %72 = vector.broadcast %71 : vector<8x1xf32> to vector<8x8xf32>
    %73 = arith.mulf %68, %72 : vector<8x8xf32>
    %74 = arith.truncf %73 : vector<8x8xf32> to vector<8x8xbf16>
    %cst_23 = arith.constant dense<0.000000e+00> : vector<8x32xf32>
    %75 = tpu.matmul %74, %61, %cst_23 {dimension_numbers = #tpu.dot_dimension_numbers<[1], [0], [0], [1], [0, 0, 1, 1], [], []>} : vector<8x8xbf16>, vector<8x32xbf16>, vector<8x32xf32> -> vector<8x32xf32>
    %76 = vector.extract_strided_slice %14 {offsets = [8, 32], sizes = [8, 32], strides = [1, 1]} : vector<16x192xf32> to vector<8x32xf32>
    %77 = arith.truncf %76 : vector<8x32xf32> to vector<8x32xbf16>
    %78 = vector.extract_strided_slice %14 {offsets = [8, 96], sizes = [8, 32], strides = [1, 1]} : vector<16x192xf32> to vector<8x32xf32>
    %79 = arith.truncf %78 : vector<8x32xf32> to vector<8x32xbf16>
    %80 = vector.extract_strided_slice %14 {offsets = [8, 160], sizes = [8, 32], strides = [1, 1]} : vector<16x192xf32> to vector<8x32xf32>
    %81 = arith.truncf %80 : vector<8x32xf32> to vector<8x32xbf16>
    %82 = tpu.transpose %79, [1, 0] : vector<8x32xbf16> -> vector<32x8xbf16>
    %cst_24 = arith.constant dense<0.000000e+00> : vector<8x8xf32>
    %83 = tpu.matmul %77, %82, %cst_24 {dimension_numbers = #tpu.dot_dimension_numbers<[1], [0], [0], [1], [0, 0, 1, 1], [], []>} : vector<8x32xbf16>, vector<32x8xbf16>, vector<8x8xf32> -> vector<8x8xf32>
    %cst_25 = arith.constant dense<0xFF800000> : vector<8xf32>
    %84 = vector.multi_reduction <maximumf>, %83, %cst_25 [1] : vector<8x8xf32> to vector<8xf32>
    %85 = vector.shape_cast %84 : vector<8xf32> to vector<8x1xf32>
    %86 = vector.broadcast %85 : vector<8x1xf32> to vector<8x8xf32>
    %87 = arith.subf %83, %86 : vector<8x8xf32>
    %88 = math.exp %87 : vector<8x8xf32>
    %cst_26 = arith.constant dense<0.000000e+00> : vector<8xf32>
    %89 = vector.multi_reduction <add>, %88, %cst_26 [1] : vector<8x8xf32> to vector<8xf32>
    %90 = vector.shape_cast %89 : vector<8xf32> to vector<8x1xf32>
    %91 = tpu.reciprocal %90 {approx = true} : vector<8x1xf32> -> vector<8x1xf32>
    %92 = vector.broadcast %91 : vector<8x1xf32> to vector<8x8xf32>
    %93 = arith.mulf %88, %92 : vector<8x8xf32>
    %94 = arith.truncf %93 : vector<8x8xf32> to vector<8x8xbf16>
    %cst_27 = arith.constant dense<0.000000e+00> : vector<8x32xf32>
    %95 = tpu.matmul %94, %81, %cst_27 {dimension_numbers = #tpu.dot_dimension_numbers<[1], [0], [0], [1], [0, 0, 1, 1], [], []>} : vector<8x8xbf16>, vector<8x32xbf16>, vector<8x32xf32> -> vector<8x32xf32>
    %96 = tpu.concatenate %75, %95 in 1 : vector<8x32xf32>, vector<8x32xf32> -> vector<8x64xf32>
    %97 = tpu.concatenate %55, %96 in 0 : vector<8x64xf32>, vector<8x64xf32> -> vector<16x64xf32>
    %c0_28 = arith.constant 0 : index
    %c0_29 = arith.constant 0 : index
    %c0_30 = arith.constant 0 : index
    %98 = vector.load %arg9[%c0_28, %c0_29, %c0_30] : memref<3x64x64xbf16, #tpu.memory_space<vmem>>, vector<1x64x64xbf16>
    %99 = vector.shape_cast %98 : vector<1x64x64xbf16> to vector<64x64xbf16>
    %100 = arith.truncf %97 : vector<16x64xf32> to vector<16x64xbf16>
    %cst_31 = arith.constant dense<0.000000e+00> : vector<16x64xf32>
    %101 = tpu.matmul %100, %99, %cst_31 {dimension_numbers = #tpu.dot_dimension_numbers<[1], [0], [0], [1], [0, 0, 1, 1], [], []>} : vector<16x64xbf16>, vector<64x64xbf16>, vector<16x64xf32> -> vector<16x64xf32>
    %c0_32 = arith.constant 0 : index
    %c0_33 = arith.constant 0 : index
    %c0_34 = arith.constant 0 : index
    %102 = vector.load %arg10[%c0_32, %c0_33, %c0_34] : memref<3x1x64xf32, #tpu.memory_space<vmem>>, vector<1x1x64xf32>
    %103 = vector.shape_cast %102 : vector<1x1x64xf32> to vector<1x64xf32>
    %104 = vector.broadcast %103 : vector<1x64xf32> to vector<16x64xf32>
    %105 = arith.addf %101, %104 : vector<16x64xf32>
    %106 = arith.addf %6, %105 : vector<16x64xf32>
    %c0_35 = arith.constant 0 : index
    %c0_36 = arith.constant 0 : index
    %c0_37 = arith.constant 0 : index
    %107 = vector.load %arg11[%c0_35, %c0_36, %c0_37] : memref<3x1x64xf32, #tpu.memory_space<vmem>>, vector<1x1x64xf32>
    %108 = vector.shape_cast %107 : vector<1x1x64xf32> to vector<1x64xf32>
    %c0_38 = arith.constant 0 : index
    %c0_39 = arith.constant 0 : index
    %c0_40 = arith.constant 0 : index
    %109 = vector.load %arg12[%c0_38, %c0_39, %c0_40] : memref<3x1x64xf32, #tpu.memory_space<vmem>>, vector<1x1x64xf32>
    %110 = vector.shape_cast %109 : vector<1x1x64xf32> to vector<1x64xf32>
    %cst_41 = arith.constant dense<0.000000e+00> : vector<16xf32>
    %111 = vector.multi_reduction <add>, %106, %cst_41 [1] : vector<16x64xf32> to vector<16xf32>
    %112 = vector.shape_cast %111 : vector<16xf32> to vector<16x1xf32>
    %cst_42 = arith.constant 6.400000e+01 : f32
    %113 = vector.broadcast %cst_42 : f32 to vector<16x1xf32>
    %114 = arith.divf %112, %113 : vector<16x1xf32>
    %115 = vector.broadcast %114 : vector<16x1xf32> to vector<16x64xf32>
    %116 = arith.subf %106, %115 : vector<16x64xf32>
    %117 = arith.mulf %116, %116 : vector<16x64xf32>
    %cst_43 = arith.constant dense<0.000000e+00> : vector<16xf32>
    %118 = vector.multi_reduction <add>, %117, %cst_43 [1] : vector<16x64xf32> to vector<16xf32>
    %119 = vector.shape_cast %118 : vector<16xf32> to vector<16x1xf32>
    %cst_44 = arith.constant 6.400000e+01 : f32
    %120 = vector.broadcast %cst_44 : f32 to vector<16x1xf32>
    %121 = arith.divf %119, %120 : vector<16x1xf32>
    %cst_45 = arith.constant 9.99999974E-6 : f32
    %122 = vector.broadcast %cst_45 : f32 to vector<16x1xf32>
    %123 = arith.addf %121, %122 : vector<16x1xf32>
    %124 = math.rsqrt %123 : vector<16x1xf32>
    %125 = vector.broadcast %124 : vector<16x1xf32> to vector<16x64xf32>
    %126 = arith.mulf %116, %125 : vector<16x64xf32>
    %127 = vector.broadcast %108 : vector<1x64xf32> to vector<16x64xf32>
    %128 = arith.mulf %126, %127 : vector<16x64xf32>
    %129 = vector.broadcast %110 : vector<1x64xf32> to vector<16x64xf32>
    %130 = arith.addf %128, %129 : vector<16x64xf32>
    %c0_46 = arith.constant 0 : index
    %c0_47 = arith.constant 0 : index
    %c0_48 = arith.constant 0 : index
    %131 = vector.load %arg13[%c0_46, %c0_47, %c0_48] : memref<3x64x2048xbf16, #tpu.memory_space<vmem>>, vector<1x64x2048xbf16>
    %132 = vector.shape_cast %131 : vector<1x64x2048xbf16> to vector<64x2048xbf16>
    %133 = arith.truncf %130 : vector<16x64xf32> to vector<16x64xbf16>
    %cst_49 = arith.constant dense<0.000000e+00> : vector<16x2048xf32>
    %134 = tpu.matmul %133, %132, %cst_49 {dimension_numbers = #tpu.dot_dimension_numbers<[1], [0], [0], [1], [0, 0, 1, 1], [], []>} : vector<16x64xbf16>, vector<64x2048xbf16>, vector<16x2048xf32> -> vector<16x2048xf32>
    %c0_50 = arith.constant 0 : index
    %c0_51 = arith.constant 0 : index
    %c0_52 = arith.constant 0 : index
    %135 = vector.load %arg14[%c0_50, %c0_51, %c0_52] : memref<3x1x2048xf32, #tpu.memory_space<vmem>>, vector<1x1x2048xf32>
    %136 = vector.shape_cast %135 : vector<1x1x2048xf32> to vector<1x2048xf32>
    %137 = vector.broadcast %136 : vector<1x2048xf32> to vector<16x2048xf32>
    %138 = arith.addf %134, %137 : vector<16x2048xf32>
    %cst_53 = arith.constant 0.000000e+00 : f32
    %139 = vector.broadcast %cst_53 : f32 to vector<16x2048xf32>
    %140 = arith.maximumf %138, %139 : vector<16x2048xf32>
    %c0_54 = arith.constant 0 : index
    %c0_55 = arith.constant 0 : index
    %c0_56 = arith.constant 0 : index
    %141 = vector.load %arg15[%c0_54, %c0_55, %c0_56] : memref<3x2048x64xbf16, #tpu.memory_space<vmem>>, vector<1x2048x64xbf16>
    %142 = vector.shape_cast %141 : vector<1x2048x64xbf16> to vector<2048x64xbf16>
    %143 = arith.truncf %140 : vector<16x2048xf32> to vector<16x2048xbf16>
    %cst_57 = arith.constant dense<0.000000e+00> : vector<16x64xf32>
    %144 = tpu.matmul %143, %142, %cst_57 {dimension_numbers = #tpu.dot_dimension_numbers<[1], [0], [0], [1], [0, 0, 1, 1], [], []>} : vector<16x2048xbf16>, vector<2048x64xbf16>, vector<16x64xf32> -> vector<16x64xf32>
    %c0_58 = arith.constant 0 : index
    %c0_59 = arith.constant 0 : index
    %c0_60 = arith.constant 0 : index
    %145 = vector.load %arg16[%c0_58, %c0_59, %c0_60] : memref<3x1x64xf32, #tpu.memory_space<vmem>>, vector<1x1x64xf32>
    %146 = vector.shape_cast %145 : vector<1x1x64xf32> to vector<1x64xf32>
    %147 = vector.broadcast %146 : vector<1x64xf32> to vector<16x64xf32>
    %148 = arith.addf %144, %147 : vector<16x64xf32>
    %149 = arith.addf %130, %148 : vector<16x64xf32>
    %c0_61 = arith.constant 0 : index
    %c0_62 = arith.constant 0 : index
    %c0_63 = arith.constant 0 : index
    %150 = vector.load %arg17[%c0_61, %c0_62, %c0_63] : memref<3x1x64xf32, #tpu.memory_space<vmem>>, vector<1x1x64xf32>
    %151 = vector.shape_cast %150 : vector<1x1x64xf32> to vector<1x64xf32>
    %c0_64 = arith.constant 0 : index
    %c0_65 = arith.constant 0 : index
    %c0_66 = arith.constant 0 : index
    %152 = vector.load %arg18[%c0_64, %c0_65, %c0_66] : memref<3x1x64xf32, #tpu.memory_space<vmem>>, vector<1x1x64xf32>
    %153 = vector.shape_cast %152 : vector<1x1x64xf32> to vector<1x64xf32>
    %cst_67 = arith.constant dense<0.000000e+00> : vector<16xf32>
    %154 = vector.multi_reduction <add>, %149, %cst_67 [1] : vector<16x64xf32> to vector<16xf32>
    %155 = vector.shape_cast %154 : vector<16xf32> to vector<16x1xf32>
    %cst_68 = arith.constant 6.400000e+01 : f32
    %156 = vector.broadcast %cst_68 : f32 to vector<16x1xf32>
    %157 = arith.divf %155, %156 : vector<16x1xf32>
    %158 = vector.broadcast %157 : vector<16x1xf32> to vector<16x64xf32>
    %159 = arith.subf %149, %158 : vector<16x64xf32>
    %160 = arith.mulf %159, %159 : vector<16x64xf32>
    %cst_69 = arith.constant dense<0.000000e+00> : vector<16xf32>
    %161 = vector.multi_reduction <add>, %160, %cst_69 [1] : vector<16x64xf32> to vector<16xf32>
    %162 = vector.shape_cast %161 : vector<16xf32> to vector<16x1xf32>
    %cst_70 = arith.constant 6.400000e+01 : f32
    %163 = vector.broadcast %cst_70 : f32 to vector<16x1xf32>
    %164 = arith.divf %162, %163 : vector<16x1xf32>
    %cst_71 = arith.constant 9.99999974E-6 : f32
    %165 = vector.broadcast %cst_71 : f32 to vector<16x1xf32>
    %166 = arith.addf %164, %165 : vector<16x1xf32>
    %167 = math.rsqrt %166 : vector<16x1xf32>
    %168 = vector.broadcast %167 : vector<16x1xf32> to vector<16x64xf32>
    %169 = arith.mulf %159, %168 : vector<16x64xf32>
    %170 = vector.broadcast %151 : vector<1x64xf32> to vector<16x64xf32>
    %171 = arith.mulf %169, %170 : vector<16x64xf32>
    %172 = vector.broadcast %153 : vector<1x64xf32> to vector<16x64xf32>
    %173 = arith.addf %171, %172 : vector<16x64xf32>
    %c1 = arith.constant 1 : index
    %c0_72 = arith.constant 0 : index
    %c0_73 = arith.constant 0 : index
    %174 = vector.load %arg7[%c1, %c0_72, %c0_73] : memref<3x64x192xbf16, #tpu.memory_space<vmem>>, vector<1x64x192xbf16>
    %175 = vector.shape_cast %174 : vector<1x64x192xbf16> to vector<64x192xbf16>
    %176 = arith.truncf %173 : vector<16x64xf32> to vector<16x64xbf16>
    %cst_74 = arith.constant dense<0.000000e+00> : vector<16x192xf32>
    %177 = tpu.matmul %176, %175, %cst_74 {dimension_numbers = #tpu.dot_dimension_numbers<[1], [0], [0], [1], [0, 0, 1, 1], [], []>} : vector<16x64xbf16>, vector<64x192xbf16>, vector<16x192xf32> -> vector<16x192xf32>
    %c1_75 = arith.constant 1 : index
    %c0_76 = arith.constant 0 : index
    %c0_77 = arith.constant 0 : index
    %178 = vector.load %arg8[%c1_75, %c0_76, %c0_77] : memref<3x1x192xf32, #tpu.memory_space<vmem>>, vector<1x1x192xf32>
    %179 = vector.shape_cast %178 : vector<1x1x192xf32> to vector<1x192xf32>
    %180 = vector.broadcast %179 : vector<1x192xf32> to vector<16x192xf32>
    %181 = arith.addf %177, %180 : vector<16x192xf32>
    %182 = vector.extract_strided_slice %181 {offsets = [0, 0], sizes = [8, 32], strides = [1, 1]} : vector<16x192xf32> to vector<8x32xf32>
    %183 = arith.truncf %182 : vector<8x32xf32> to vector<8x32xbf16>
    %184 = vector.extract_strided_slice %181 {offsets = [0, 64], sizes = [8, 32], strides = [1, 1]} : vector<16x192xf32> to vector<8x32xf32>
    %185 = arith.truncf %184 : vector<8x32xf32> to vector<8x32xbf16>
    %186 = vector.extract_strided_slice %181 {offsets = [0, 128], sizes = [8, 32], strides = [1, 1]} : vector<16x192xf32> to vector<8x32xf32>
    %187 = arith.truncf %186 : vector<8x32xf32> to vector<8x32xbf16>
    %188 = tpu.transpose %185, [1, 0] : vector<8x32xbf16> -> vector<32x8xbf16>
    %cst_78 = arith.constant dense<0.000000e+00> : vector<8x8xf32>
    %189 = tpu.matmul %183, %188, %cst_78 {dimension_numbers = #tpu.dot_dimension_numbers<[1], [0], [0], [1], [0, 0, 1, 1], [], []>} : vector<8x32xbf16>, vector<32x8xbf16>, vector<8x8xf32> -> vector<8x8xf32>
    %cst_79 = arith.constant dense<0xFF800000> : vector<8xf32>
    %190 = vector.multi_reduction <maximumf>, %189, %cst_79 [1] : vector<8x8xf32> to vector<8xf32>
    %191 = vector.shape_cast %190 : vector<8xf32> to vector<8x1xf32>
    %192 = vector.broadcast %191 : vector<8x1xf32> to vector<8x8xf32>
    %193 = arith.subf %189, %192 : vector<8x8xf32>
    %194 = math.exp %193 : vector<8x8xf32>
    %cst_80 = arith.constant dense<0.000000e+00> : vector<8xf32>
    %195 = vector.multi_reduction <add>, %194, %cst_80 [1] : vector<8x8xf32> to vector<8xf32>
    %196 = vector.shape_cast %195 : vector<8xf32> to vector<8x1xf32>
    %197 = tpu.reciprocal %196 {approx = true} : vector<8x1xf32> -> vector<8x1xf32>
    %198 = vector.broadcast %197 : vector<8x1xf32> to vector<8x8xf32>
    %199 = arith.mulf %194, %198 : vector<8x8xf32>
    %200 = arith.truncf %199 : vector<8x8xf32> to vector<8x8xbf16>
    %cst_81 = arith.constant dense<0.000000e+00> : vector<8x32xf32>
    %201 = tpu.matmul %200, %187, %cst_81 {dimension_numbers = #tpu.dot_dimension_numbers<[1], [0], [0], [1], [0, 0, 1, 1], [], []>} : vector<8x8xbf16>, vector<8x32xbf16>, vector<8x32xf32> -> vector<8x32xf32>
    %202 = vector.extract_strided_slice %181 {offsets = [0, 32], sizes = [8, 32], strides = [1, 1]} : vector<16x192xf32> to vector<8x32xf32>
    %203 = arith.truncf %202 : vector<8x32xf32> to vector<8x32xbf16>
    %204 = vector.extract_strided_slice %181 {offsets = [0, 96], sizes = [8, 32], strides = [1, 1]} : vector<16x192xf32> to vector<8x32xf32>
    %205 = arith.truncf %204 : vector<8x32xf32> to vector<8x32xbf16>
    %206 = vector.extract_strided_slice %181 {offsets = [0, 160], sizes = [8, 32], strides = [1, 1]} : vector<16x192xf32> to vector<8x32xf32>
    %207 = arith.truncf %206 : vector<8x32xf32> to vector<8x32xbf16>
    %208 = tpu.transpose %205, [1, 0] : vector<8x32xbf16> -> vector<32x8xbf16>
    %cst_82 = arith.constant dense<0.000000e+00> : vector<8x8xf32>
    %209 = tpu.matmul %203, %208, %cst_82 {dimension_numbers = #tpu.dot_dimension_numbers<[1], [0], [0], [1], [0, 0, 1, 1], [], []>} : vector<8x32xbf16>, vector<32x8xbf16>, vector<8x8xf32> -> vector<8x8xf32>
    %cst_83 = arith.constant dense<0xFF800000> : vector<8xf32>
    %210 = vector.multi_reduction <maximumf>, %209, %cst_83 [1] : vector<8x8xf32> to vector<8xf32>
    %211 = vector.shape_cast %210 : vector<8xf32> to vector<8x1xf32>
    %212 = vector.broadcast %211 : vector<8x1xf32> to vector<8x8xf32>
    %213 = arith.subf %209, %212 : vector<8x8xf32>
    %214 = math.exp %213 : vector<8x8xf32>
    %cst_84 = arith.constant dense<0.000000e+00> : vector<8xf32>
    %215 = vector.multi_reduction <add>, %214, %cst_84 [1] : vector<8x8xf32> to vector<8xf32>
    %216 = vector.shape_cast %215 : vector<8xf32> to vector<8x1xf32>
    %217 = tpu.reciprocal %216 {approx = true} : vector<8x1xf32> -> vector<8x1xf32>
    %218 = vector.broadcast %217 : vector<8x1xf32> to vector<8x8xf32>
    %219 = arith.mulf %214, %218 : vector<8x8xf32>
    %220 = arith.truncf %219 : vector<8x8xf32> to vector<8x8xbf16>
    %cst_85 = arith.constant dense<0.000000e+00> : vector<8x32xf32>
    %221 = tpu.matmul %220, %207, %cst_85 {dimension_numbers = #tpu.dot_dimension_numbers<[1], [0], [0], [1], [0, 0, 1, 1], [], []>} : vector<8x8xbf16>, vector<8x32xbf16>, vector<8x32xf32> -> vector<8x32xf32>
    %222 = tpu.concatenate %201, %221 in 1 : vector<8x32xf32>, vector<8x32xf32> -> vector<8x64xf32>
    %223 = vector.extract_strided_slice %181 {offsets = [8, 0], sizes = [8, 32], strides = [1, 1]} : vector<16x192xf32> to vector<8x32xf32>
    %224 = arith.truncf %223 : vector<8x32xf32> to vector<8x32xbf16>
    %225 = vector.extract_strided_slice %181 {offsets = [8, 64], sizes = [8, 32], strides = [1, 1]} : vector<16x192xf32> to vector<8x32xf32>
    %226 = arith.truncf %225 : vector<8x32xf32> to vector<8x32xbf16>
    %227 = vector.extract_strided_slice %181 {offsets = [8, 128], sizes = [8, 32], strides = [1, 1]} : vector<16x192xf32> to vector<8x32xf32>
    %228 = arith.truncf %227 : vector<8x32xf32> to vector<8x32xbf16>
    %229 = tpu.transpose %226, [1, 0] : vector<8x32xbf16> -> vector<32x8xbf16>
    %cst_86 = arith.constant dense<0.000000e+00> : vector<8x8xf32>
    %230 = tpu.matmul %224, %229, %cst_86 {dimension_numbers = #tpu.dot_dimension_numbers<[1], [0], [0], [1], [0, 0, 1, 1], [], []>} : vector<8x32xbf16>, vector<32x8xbf16>, vector<8x8xf32> -> vector<8x8xf32>
    %cst_87 = arith.constant dense<0xFF800000> : vector<8xf32>
    %231 = vector.multi_reduction <maximumf>, %230, %cst_87 [1] : vector<8x8xf32> to vector<8xf32>
    %232 = vector.shape_cast %231 : vector<8xf32> to vector<8x1xf32>
    %233 = vector.broadcast %232 : vector<8x1xf32> to vector<8x8xf32>
    %234 = arith.subf %230, %233 : vector<8x8xf32>
    %235 = math.exp %234 : vector<8x8xf32>
    %cst_88 = arith.constant dense<0.000000e+00> : vector<8xf32>
    %236 = vector.multi_reduction <add>, %235, %cst_88 [1] : vector<8x8xf32> to vector<8xf32>
    %237 = vector.shape_cast %236 : vector<8xf32> to vector<8x1xf32>
    %238 = tpu.reciprocal %237 {approx = true} : vector<8x1xf32> -> vector<8x1xf32>
    %239 = vector.broadcast %238 : vector<8x1xf32> to vector<8x8xf32>
    %240 = arith.mulf %235, %239 : vector<8x8xf32>
    %241 = arith.truncf %240 : vector<8x8xf32> to vector<8x8xbf16>
    %cst_89 = arith.constant dense<0.000000e+00> : vector<8x32xf32>
    %242 = tpu.matmul %241, %228, %cst_89 {dimension_numbers = #tpu.dot_dimension_numbers<[1], [0], [0], [1], [0, 0, 1, 1], [], []>} : vector<8x8xbf16>, vector<8x32xbf16>, vector<8x32xf32> -> vector<8x32xf32>
    %243 = vector.extract_strided_slice %181 {offsets = [8, 32], sizes = [8, 32], strides = [1, 1]} : vector<16x192xf32> to vector<8x32xf32>
    %244 = arith.truncf %243 : vector<8x32xf32> to vector<8x32xbf16>
    %245 = vector.extract_strided_slice %181 {offsets = [8, 96], sizes = [8, 32], strides = [1, 1]} : vector<16x192xf32> to vector<8x32xf32>
    %246 = arith.truncf %245 : vector<8x32xf32> to vector<8x32xbf16>
    %247 = vector.extract_strided_slice %181 {offsets = [8, 160], sizes = [8, 32], strides = [1, 1]} : vector<16x192xf32> to vector<8x32xf32>
    %248 = arith.truncf %247 : vector<8x32xf32> to vector<8x32xbf16>
    %249 = tpu.transpose %246, [1, 0] : vector<8x32xbf16> -> vector<32x8xbf16>
    %cst_90 = arith.constant dense<0.000000e+00> : vector<8x8xf32>
    %250 = tpu.matmul %244, %249, %cst_90 {dimension_numbers = #tpu.dot_dimension_numbers<[1], [0], [0], [1], [0, 0, 1, 1], [], []>} : vector<8x32xbf16>, vector<32x8xbf16>, vector<8x8xf32> -> vector<8x8xf32>
    %cst_91 = arith.constant dense<0xFF800000> : vector<8xf32>
    %251 = vector.multi_reduction <maximumf>, %250, %cst_91 [1] : vector<8x8xf32> to vector<8xf32>
    %252 = vector.shape_cast %251 : vector<8xf32> to vector<8x1xf32>
    %253 = vector.broadcast %252 : vector<8x1xf32> to vector<8x8xf32>
    %254 = arith.subf %250, %253 : vector<8x8xf32>
    %255 = math.exp %254 : vector<8x8xf32>
    %cst_92 = arith.constant dense<0.000000e+00> : vector<8xf32>
    %256 = vector.multi_reduction <add>, %255, %cst_92 [1] : vector<8x8xf32> to vector<8xf32>
    %257 = vector.shape_cast %256 : vector<8xf32> to vector<8x1xf32>
    %258 = tpu.reciprocal %257 {approx = true} : vector<8x1xf32> -> vector<8x1xf32>
    %259 = vector.broadcast %258 : vector<8x1xf32> to vector<8x8xf32>
    %260 = arith.mulf %255, %259 : vector<8x8xf32>
    %261 = arith.truncf %260 : vector<8x8xf32> to vector<8x8xbf16>
    %cst_93 = arith.constant dense<0.000000e+00> : vector<8x32xf32>
    %262 = tpu.matmul %261, %248, %cst_93 {dimension_numbers = #tpu.dot_dimension_numbers<[1], [0], [0], [1], [0, 0, 1, 1], [], []>} : vector<8x8xbf16>, vector<8x32xbf16>, vector<8x32xf32> -> vector<8x32xf32>
    %263 = tpu.concatenate %242, %262 in 1 : vector<8x32xf32>, vector<8x32xf32> -> vector<8x64xf32>
    %264 = tpu.concatenate %222, %263 in 0 : vector<8x64xf32>, vector<8x64xf32> -> vector<16x64xf32>
    %c1_94 = arith.constant 1 : index
    %c0_95 = arith.constant 0 : index
    %c0_96 = arith.constant 0 : index
    %265 = vector.load %arg9[%c1_94, %c0_95, %c0_96] : memref<3x64x64xbf16, #tpu.memory_space<vmem>>, vector<1x64x64xbf16>
    %266 = vector.shape_cast %265 : vector<1x64x64xbf16> to vector<64x64xbf16>
    %267 = arith.truncf %264 : vector<16x64xf32> to vector<16x64xbf16>
    %cst_97 = arith.constant dense<0.000000e+00> : vector<16x64xf32>
    %268 = tpu.matmul %267, %266, %cst_97 {dimension_numbers = #tpu.dot_dimension_numbers<[1], [0], [0], [1], [0, 0, 1, 1], [], []>} : vector<16x64xbf16>, vector<64x64xbf16>, vector<16x64xf32> -> vector<16x64xf32>
    %c1_98 = arith.constant 1 : index
    %c0_99 = arith.constant 0 : index
    %c0_100 = arith.constant 0 : index
    %269 = vector.load %arg10[%c1_98, %c0_99, %c0_100] : memref<3x1x64xf32, #tpu.memory_space<vmem>>, vector<1x1x64xf32>
    %270 = vector.shape_cast %269 : vector<1x1x64xf32> to vector<1x64xf32>
    %271 = vector.broadcast %270 : vector<1x64xf32> to vector<16x64xf32>
    %272 = arith.addf %268, %271 : vector<16x64xf32>
    %273 = arith.addf %173, %272 : vector<16x64xf32>
    %c1_101 = arith.constant 1 : index
    %c0_102 = arith.constant 0 : index
    %c0_103 = arith.constant 0 : index
    %274 = vector.load %arg11[%c1_101, %c0_102, %c0_103] : memref<3x1x64xf32, #tpu.memory_space<vmem>>, vector<1x1x64xf32>
    %275 = vector.shape_cast %274 : vector<1x1x64xf32> to vector<1x64xf32>
    %c1_104 = arith.constant 1 : index
    %c0_105 = arith.constant 0 : index
    %c0_106 = arith.constant 0 : index
    %276 = vector.load %arg12[%c1_104, %c0_105, %c0_106] : memref<3x1x64xf32, #tpu.memory_space<vmem>>, vector<1x1x64xf32>
    %277 = vector.shape_cast %276 : vector<1x1x64xf32> to vector<1x64xf32>
    %cst_107 = arith.constant dense<0.000000e+00> : vector<16xf32>
    %278 = vector.multi_reduction <add>, %273, %cst_107 [1] : vector<16x64xf32> to vector<16xf32>
    %279 = vector.shape_cast %278 : vector<16xf32> to vector<16x1xf32>
    %cst_108 = arith.constant 6.400000e+01 : f32
    %280 = vector.broadcast %cst_108 : f32 to vector<16x1xf32>
    %281 = arith.divf %279, %280 : vector<16x1xf32>
    %282 = vector.broadcast %281 : vector<16x1xf32> to vector<16x64xf32>
    %283 = arith.subf %273, %282 : vector<16x64xf32>
    %284 = arith.mulf %283, %283 : vector<16x64xf32>
    %cst_109 = arith.constant dense<0.000000e+00> : vector<16xf32>
    %285 = vector.multi_reduction <add>, %284, %cst_109 [1] : vector<16x64xf32> to vector<16xf32>
    %286 = vector.shape_cast %285 : vector<16xf32> to vector<16x1xf32>
    %cst_110 = arith.constant 6.400000e+01 : f32
    %287 = vector.broadcast %cst_110 : f32 to vector<16x1xf32>
    %288 = arith.divf %286, %287 : vector<16x1xf32>
    %cst_111 = arith.constant 9.99999974E-6 : f32
    %289 = vector.broadcast %cst_111 : f32 to vector<16x1xf32>
    %290 = arith.addf %288, %289 : vector<16x1xf32>
    %291 = math.rsqrt %290 : vector<16x1xf32>
    %292 = vector.broadcast %291 : vector<16x1xf32> to vector<16x64xf32>
    %293 = arith.mulf %283, %292 : vector<16x64xf32>
    %294 = vector.broadcast %275 : vector<1x64xf32> to vector<16x64xf32>
    %295 = arith.mulf %293, %294 : vector<16x64xf32>
    %296 = vector.broadcast %277 : vector<1x64xf32> to vector<16x64xf32>
    %297 = arith.addf %295, %296 : vector<16x64xf32>
    %c1_112 = arith.constant 1 : index
    %c0_113 = arith.constant 0 : index
    %c0_114 = arith.constant 0 : index
    %298 = vector.load %arg13[%c1_112, %c0_113, %c0_114] : memref<3x64x2048xbf16, #tpu.memory_space<vmem>>, vector<1x64x2048xbf16>
    %299 = vector.shape_cast %298 : vector<1x64x2048xbf16> to vector<64x2048xbf16>
    %300 = arith.truncf %297 : vector<16x64xf32> to vector<16x64xbf16>
    %cst_115 = arith.constant dense<0.000000e+00> : vector<16x2048xf32>
    %301 = tpu.matmul %300, %299, %cst_115 {dimension_numbers = #tpu.dot_dimension_numbers<[1], [0], [0], [1], [0, 0, 1, 1], [], []>} : vector<16x64xbf16>, vector<64x2048xbf16>, vector<16x2048xf32> -> vector<16x2048xf32>
    %c1_116 = arith.constant 1 : index
    %c0_117 = arith.constant 0 : index
    %c0_118 = arith.constant 0 : index
    %302 = vector.load %arg14[%c1_116, %c0_117, %c0_118] : memref<3x1x2048xf32, #tpu.memory_space<vmem>>, vector<1x1x2048xf32>
    %303 = vector.shape_cast %302 : vector<1x1x2048xf32> to vector<1x2048xf32>
    %304 = vector.broadcast %303 : vector<1x2048xf32> to vector<16x2048xf32>
    %305 = arith.addf %301, %304 : vector<16x2048xf32>
    %cst_119 = arith.constant 0.000000e+00 : f32
    %306 = vector.broadcast %cst_119 : f32 to vector<16x2048xf32>
    %307 = arith.maximumf %305, %306 : vector<16x2048xf32>
    %c1_120 = arith.constant 1 : index
    %c0_121 = arith.constant 0 : index
    %c0_122 = arith.constant 0 : index
    %308 = vector.load %arg15[%c1_120, %c0_121, %c0_122] : memref<3x2048x64xbf16, #tpu.memory_space<vmem>>, vector<1x2048x64xbf16>
    %309 = vector.shape_cast %308 : vector<1x2048x64xbf16> to vector<2048x64xbf16>
    %310 = arith.truncf %307 : vector<16x2048xf32> to vector<16x2048xbf16>
    %cst_123 = arith.constant dense<0.000000e+00> : vector<16x64xf32>
    %311 = tpu.matmul %310, %309, %cst_123 {dimension_numbers = #tpu.dot_dimension_numbers<[1], [0], [0], [1], [0, 0, 1, 1], [], []>} : vector<16x2048xbf16>, vector<2048x64xbf16>, vector<16x64xf32> -> vector<16x64xf32>
    %c1_124 = arith.constant 1 : index
    %c0_125 = arith.constant 0 : index
    %c0_126 = arith.constant 0 : index
    %312 = vector.load %arg16[%c1_124, %c0_125, %c0_126] : memref<3x1x64xf32, #tpu.memory_space<vmem>>, vector<1x1x64xf32>
    %313 = vector.shape_cast %312 : vector<1x1x64xf32> to vector<1x64xf32>
    %314 = vector.broadcast %313 : vector<1x64xf32> to vector<16x64xf32>
    %315 = arith.addf %311, %314 : vector<16x64xf32>
    %316 = arith.addf %297, %315 : vector<16x64xf32>
    %c1_127 = arith.constant 1 : index
    %c0_128 = arith.constant 0 : index
    %c0_129 = arith.constant 0 : index
    %317 = vector.load %arg17[%c1_127, %c0_128, %c0_129] : memref<3x1x64xf32, #tpu.memory_space<vmem>>, vector<1x1x64xf32>
    %318 = vector.shape_cast %317 : vector<1x1x64xf32> to vector<1x64xf32>
    %c1_130 = arith.constant 1 : index
    %c0_131 = arith.constant 0 : index
    %c0_132 = arith.constant 0 : index
    %319 = vector.load %arg18[%c1_130, %c0_131, %c0_132] : memref<3x1x64xf32, #tpu.memory_space<vmem>>, vector<1x1x64xf32>
    %320 = vector.shape_cast %319 : vector<1x1x64xf32> to vector<1x64xf32>
    %cst_133 = arith.constant dense<0.000000e+00> : vector<16xf32>
    %321 = vector.multi_reduction <add>, %316, %cst_133 [1] : vector<16x64xf32> to vector<16xf32>
    %322 = vector.shape_cast %321 : vector<16xf32> to vector<16x1xf32>
    %cst_134 = arith.constant 6.400000e+01 : f32
    %323 = vector.broadcast %cst_134 : f32 to vector<16x1xf32>
    %324 = arith.divf %322, %323 : vector<16x1xf32>
    %325 = vector.broadcast %324 : vector<16x1xf32> to vector<16x64xf32>
    %326 = arith.subf %316, %325 : vector<16x64xf32>
    %327 = arith.mulf %326, %326 : vector<16x64xf32>
    %cst_135 = arith.constant dense<0.000000e+00> : vector<16xf32>
    %328 = vector.multi_reduction <add>, %327, %cst_135 [1] : vector<16x64xf32> to vector<16xf32>
    %329 = vector.shape_cast %328 : vector<16xf32> to vector<16x1xf32>
    %cst_136 = arith.constant 6.400000e+01 : f32
    %330 = vector.broadcast %cst_136 : f32 to vector<16x1xf32>
    %331 = arith.divf %329, %330 : vector<16x1xf32>
    %cst_137 = arith.constant 9.99999974E-6 : f32
    %332 = vector.broadcast %cst_137 : f32 to vector<16x1xf32>
    %333 = arith.addf %331, %332 : vector<16x1xf32>
    %334 = math.rsqrt %333 : vector<16x1xf32>
    %335 = vector.broadcast %334 : vector<16x1xf32> to vector<16x64xf32>
    %336 = arith.mulf %326, %335 : vector<16x64xf32>
    %337 = vector.broadcast %318 : vector<1x64xf32> to vector<16x64xf32>
    %338 = arith.mulf %336, %337 : vector<16x64xf32>
    %339 = vector.broadcast %320 : vector<1x64xf32> to vector<16x64xf32>
    %340 = arith.addf %338, %339 : vector<16x64xf32>
    %c2 = arith.constant 2 : index
    %c0_138 = arith.constant 0 : index
    %c0_139 = arith.constant 0 : index
    %341 = vector.load %arg7[%c2, %c0_138, %c0_139] : memref<3x64x192xbf16, #tpu.memory_space<vmem>>, vector<1x64x192xbf16>
    %342 = vector.shape_cast %341 : vector<1x64x192xbf16> to vector<64x192xbf16>
    %343 = arith.truncf %340 : vector<16x64xf32> to vector<16x64xbf16>
    %cst_140 = arith.constant dense<0.000000e+00> : vector<16x192xf32>
    %344 = tpu.matmul %343, %342, %cst_140 {dimension_numbers = #tpu.dot_dimension_numbers<[1], [0], [0], [1], [0, 0, 1, 1], [], []>} : vector<16x64xbf16>, vector<64x192xbf16>, vector<16x192xf32> -> vector<16x192xf32>
    %c2_141 = arith.constant 2 : index
    %c0_142 = arith.constant 0 : index
    %c0_143 = arith.constant 0 : index
    %345 = vector.load %arg8[%c2_141, %c0_142, %c0_143] : memref<3x1x192xf32, #tpu.memory_space<vmem>>, vector<1x1x192xf32>
    %346 = vector.shape_cast %345 : vector<1x1x192xf32> to vector<1x192xf32>
    %347 = vector.broadcast %346 : vector<1x192xf32> to vector<16x192xf32>
    %348 = arith.addf %344, %347 : vector<16x192xf32>
    %349 = vector.extract_strided_slice %348 {offsets = [0, 0], sizes = [8, 32], strides = [1, 1]} : vector<16x192xf32> to vector<8x32xf32>
    %350 = arith.truncf %349 : vector<8x32xf32> to vector<8x32xbf16>
    %351 = vector.extract_strided_slice %348 {offsets = [0, 64], sizes = [8, 32], strides = [1, 1]} : vector<16x192xf32> to vector<8x32xf32>
    %352 = arith.truncf %351 : vector<8x32xf32> to vector<8x32xbf16>
    %353 = vector.extract_strided_slice %348 {offsets = [0, 128], sizes = [8, 32], strides = [1, 1]} : vector<16x192xf32> to vector<8x32xf32>
    %354 = arith.truncf %353 : vector<8x32xf32> to vector<8x32xbf16>
    %355 = tpu.transpose %352, [1, 0] : vector<8x32xbf16> -> vector<32x8xbf16>
    %cst_144 = arith.constant dense<0.000000e+00> : vector<8x8xf32>
    %356 = tpu.matmul %350, %355, %cst_144 {dimension_numbers = #tpu.dot_dimension_numbers<[1], [0], [0], [1], [0, 0, 1, 1], [], []>} : vector<8x32xbf16>, vector<32x8xbf16>, vector<8x8xf32> -> vector<8x8xf32>
    %cst_145 = arith.constant dense<0xFF800000> : vector<8xf32>
    %357 = vector.multi_reduction <maximumf>, %356, %cst_145 [1] : vector<8x8xf32> to vector<8xf32>
    %358 = vector.shape_cast %357 : vector<8xf32> to vector<8x1xf32>
    %359 = vector.broadcast %358 : vector<8x1xf32> to vector<8x8xf32>
    %360 = arith.subf %356, %359 : vector<8x8xf32>
    %361 = math.exp %360 : vector<8x8xf32>
    %cst_146 = arith.constant dense<0.000000e+00> : vector<8xf32>
    %362 = vector.multi_reduction <add>, %361, %cst_146 [1] : vector<8x8xf32> to vector<8xf32>
    %363 = vector.shape_cast %362 : vector<8xf32> to vector<8x1xf32>
    %364 = tpu.reciprocal %363 {approx = true} : vector<8x1xf32> -> vector<8x1xf32>
    %365 = vector.broadcast %364 : vector<8x1xf32> to vector<8x8xf32>
    %366 = arith.mulf %361, %365 : vector<8x8xf32>
    %367 = arith.truncf %366 : vector<8x8xf32> to vector<8x8xbf16>
    %cst_147 = arith.constant dense<0.000000e+00> : vector<8x32xf32>
    %368 = tpu.matmul %367, %354, %cst_147 {dimension_numbers = #tpu.dot_dimension_numbers<[1], [0], [0], [1], [0, 0, 1, 1], [], []>} : vector<8x8xbf16>, vector<8x32xbf16>, vector<8x32xf32> -> vector<8x32xf32>
    %369 = vector.extract_strided_slice %348 {offsets = [0, 32], sizes = [8, 32], strides = [1, 1]} : vector<16x192xf32> to vector<8x32xf32>
    %370 = arith.truncf %369 : vector<8x32xf32> to vector<8x32xbf16>
    %371 = vector.extract_strided_slice %348 {offsets = [0, 96], sizes = [8, 32], strides = [1, 1]} : vector<16x192xf32> to vector<8x32xf32>
    %372 = arith.truncf %371 : vector<8x32xf32> to vector<8x32xbf16>
    %373 = vector.extract_strided_slice %348 {offsets = [0, 160], sizes = [8, 32], strides = [1, 1]} : vector<16x192xf32> to vector<8x32xf32>
    %374 = arith.truncf %373 : vector<8x32xf32> to vector<8x32xbf16>
    %375 = tpu.transpose %372, [1, 0] : vector<8x32xbf16> -> vector<32x8xbf16>
    %cst_148 = arith.constant dense<0.000000e+00> : vector<8x8xf32>
    %376 = tpu.matmul %370, %375, %cst_148 {dimension_numbers = #tpu.dot_dimension_numbers<[1], [0], [0], [1], [0, 0, 1, 1], [], []>} : vector<8x32xbf16>, vector<32x8xbf16>, vector<8x8xf32> -> vector<8x8xf32>
    %cst_149 = arith.constant dense<0xFF800000> : vector<8xf32>
    %377 = vector.multi_reduction <maximumf>, %376, %cst_149 [1] : vector<8x8xf32> to vector<8xf32>
    %378 = vector.shape_cast %377 : vector<8xf32> to vector<8x1xf32>
    %379 = vector.broadcast %378 : vector<8x1xf32> to vector<8x8xf32>
    %380 = arith.subf %376, %379 : vector<8x8xf32>
    %381 = math.exp %380 : vector<8x8xf32>
    %cst_150 = arith.constant dense<0.000000e+00> : vector<8xf32>
    %382 = vector.multi_reduction <add>, %381, %cst_150 [1] : vector<8x8xf32> to vector<8xf32>
    %383 = vector.shape_cast %382 : vector<8xf32> to vector<8x1xf32>
    %384 = tpu.reciprocal %383 {approx = true} : vector<8x1xf32> -> vector<8x1xf32>
    %385 = vector.broadcast %384 : vector<8x1xf32> to vector<8x8xf32>
    %386 = arith.mulf %381, %385 : vector<8x8xf32>
    %387 = arith.truncf %386 : vector<8x8xf32> to vector<8x8xbf16>
    %cst_151 = arith.constant dense<0.000000e+00> : vector<8x32xf32>
    %388 = tpu.matmul %387, %374, %cst_151 {dimension_numbers = #tpu.dot_dimension_numbers<[1], [0], [0], [1], [0, 0, 1, 1], [], []>} : vector<8x8xbf16>, vector<8x32xbf16>, vector<8x32xf32> -> vector<8x32xf32>
    %389 = tpu.concatenate %368, %388 in 1 : vector<8x32xf32>, vector<8x32xf32> -> vector<8x64xf32>
    %390 = vector.extract_strided_slice %348 {offsets = [8, 0], sizes = [8, 32], strides = [1, 1]} : vector<16x192xf32> to vector<8x32xf32>
    %391 = arith.truncf %390 : vector<8x32xf32> to vector<8x32xbf16>
    %392 = vector.extract_strided_slice %348 {offsets = [8, 64], sizes = [8, 32], strides = [1, 1]} : vector<16x192xf32> to vector<8x32xf32>
    %393 = arith.truncf %392 : vector<8x32xf32> to vector<8x32xbf16>
    %394 = vector.extract_strided_slice %348 {offsets = [8, 128], sizes = [8, 32], strides = [1, 1]} : vector<16x192xf32> to vector<8x32xf32>
    %395 = arith.truncf %394 : vector<8x32xf32> to vector<8x32xbf16>
    %396 = tpu.transpose %393, [1, 0] : vector<8x32xbf16> -> vector<32x8xbf16>
    %cst_152 = arith.constant dense<0.000000e+00> : vector<8x8xf32>
    %397 = tpu.matmul %391, %396, %cst_152 {dimension_numbers = #tpu.dot_dimension_numbers<[1], [0], [0], [1], [0, 0, 1, 1], [], []>} : vector<8x32xbf16>, vector<32x8xbf16>, vector<8x8xf32> -> vector<8x8xf32>
    %cst_153 = arith.constant dense<0xFF800000> : vector<8xf32>
    %398 = vector.multi_reduction <maximumf>, %397, %cst_153 [1] : vector<8x8xf32> to vector<8xf32>
    %399 = vector.shape_cast %398 : vector<8xf32> to vector<8x1xf32>
    %400 = vector.broadcast %399 : vector<8x1xf32> to vector<8x8xf32>
    %401 = arith.subf %397, %400 : vector<8x8xf32>
    %402 = math.exp %401 : vector<8x8xf32>
    %cst_154 = arith.constant dense<0.000000e+00> : vector<8xf32>
    %403 = vector.multi_reduction <add>, %402, %cst_154 [1] : vector<8x8xf32> to vector<8xf32>
    %404 = vector.shape_cast %403 : vector<8xf32> to vector<8x1xf32>
    %405 = tpu.reciprocal %404 {approx = true} : vector<8x1xf32> -> vector<8x1xf32>
    %406 = vector.broadcast %405 : vector<8x1xf32> to vector<8x8xf32>
    %407 = arith.mulf %402, %406 : vector<8x8xf32>
    %408 = arith.truncf %407 : vector<8x8xf32> to vector<8x8xbf16>
    %cst_155 = arith.constant dense<0.000000e+00> : vector<8x32xf32>
    %409 = tpu.matmul %408, %395, %cst_155 {dimension_numbers = #tpu.dot_dimension_numbers<[1], [0], [0], [1], [0, 0, 1, 1], [], []>} : vector<8x8xbf16>, vector<8x32xbf16>, vector<8x32xf32> -> vector<8x32xf32>
    %410 = vector.extract_strided_slice %348 {offsets = [8, 32], sizes = [8, 32], strides = [1, 1]} : vector<16x192xf32> to vector<8x32xf32>
    %411 = arith.truncf %410 : vector<8x32xf32> to vector<8x32xbf16>
    %412 = vector.extract_strided_slice %348 {offsets = [8, 96], sizes = [8, 32], strides = [1, 1]} : vector<16x192xf32> to vector<8x32xf32>
    %413 = arith.truncf %412 : vector<8x32xf32> to vector<8x32xbf16>
    %414 = vector.extract_strided_slice %348 {offsets = [8, 160], sizes = [8, 32], strides = [1, 1]} : vector<16x192xf32> to vector<8x32xf32>
    %415 = arith.truncf %414 : vector<8x32xf32> to vector<8x32xbf16>
    %416 = tpu.transpose %413, [1, 0] : vector<8x32xbf16> -> vector<32x8xbf16>
    %cst_156 = arith.constant dense<0.000000e+00> : vector<8x8xf32>
    %417 = tpu.matmul %411, %416, %cst_156 {dimension_numbers = #tpu.dot_dimension_numbers<[1], [0], [0], [1], [0, 0, 1, 1], [], []>} : vector<8x32xbf16>, vector<32x8xbf16>, vector<8x8xf32> -> vector<8x8xf32>
    %cst_157 = arith.constant dense<0xFF800000> : vector<8xf32>
    %418 = vector.multi_reduction <maximumf>, %417, %cst_157 [1] : vector<8x8xf32> to vector<8xf32>
    %419 = vector.shape_cast %418 : vector<8xf32> to vector<8x1xf32>
    %420 = vector.broadcast %419 : vector<8x1xf32> to vector<8x8xf32>
    %421 = arith.subf %417, %420 : vector<8x8xf32>
    %422 = math.exp %421 : vector<8x8xf32>
    %cst_158 = arith.constant dense<0.000000e+00> : vector<8xf32>
    %423 = vector.multi_reduction <add>, %422, %cst_158 [1] : vector<8x8xf32> to vector<8xf32>
    %424 = vector.shape_cast %423 : vector<8xf32> to vector<8x1xf32>
    %425 = tpu.reciprocal %424 {approx = true} : vector<8x1xf32> -> vector<8x1xf32>
    %426 = vector.broadcast %425 : vector<8x1xf32> to vector<8x8xf32>
    %427 = arith.mulf %422, %426 : vector<8x8xf32>
    %428 = arith.truncf %427 : vector<8x8xf32> to vector<8x8xbf16>
    %cst_159 = arith.constant dense<0.000000e+00> : vector<8x32xf32>
    %429 = tpu.matmul %428, %415, %cst_159 {dimension_numbers = #tpu.dot_dimension_numbers<[1], [0], [0], [1], [0, 0, 1, 1], [], []>} : vector<8x8xbf16>, vector<8x32xbf16>, vector<8x32xf32> -> vector<8x32xf32>
    %430 = tpu.concatenate %409, %429 in 1 : vector<8x32xf32>, vector<8x32xf32> -> vector<8x64xf32>
    %431 = tpu.concatenate %389, %430 in 0 : vector<8x64xf32>, vector<8x64xf32> -> vector<16x64xf32>
    %c2_160 = arith.constant 2 : index
    %c0_161 = arith.constant 0 : index
    %c0_162 = arith.constant 0 : index
    %432 = vector.load %arg9[%c2_160, %c0_161, %c0_162] : memref<3x64x64xbf16, #tpu.memory_space<vmem>>, vector<1x64x64xbf16>
    %433 = vector.shape_cast %432 : vector<1x64x64xbf16> to vector<64x64xbf16>
    %434 = arith.truncf %431 : vector<16x64xf32> to vector<16x64xbf16>
    %cst_163 = arith.constant dense<0.000000e+00> : vector<16x64xf32>
    %435 = tpu.matmul %434, %433, %cst_163 {dimension_numbers = #tpu.dot_dimension_numbers<[1], [0], [0], [1], [0, 0, 1, 1], [], []>} : vector<16x64xbf16>, vector<64x64xbf16>, vector<16x64xf32> -> vector<16x64xf32>
    %c2_164 = arith.constant 2 : index
    %c0_165 = arith.constant 0 : index
    %c0_166 = arith.constant 0 : index
    %436 = vector.load %arg10[%c2_164, %c0_165, %c0_166] : memref<3x1x64xf32, #tpu.memory_space<vmem>>, vector<1x1x64xf32>
    %437 = vector.shape_cast %436 : vector<1x1x64xf32> to vector<1x64xf32>
    %438 = vector.broadcast %437 : vector<1x64xf32> to vector<16x64xf32>
    %439 = arith.addf %435, %438 : vector<16x64xf32>
    %440 = arith.addf %340, %439 : vector<16x64xf32>
    %c2_167 = arith.constant 2 : index
    %c0_168 = arith.constant 0 : index
    %c0_169 = arith.constant 0 : index
    %441 = vector.load %arg11[%c2_167, %c0_168, %c0_169] : memref<3x1x64xf32, #tpu.memory_space<vmem>>, vector<1x1x64xf32>
    %442 = vector.shape_cast %441 : vector<1x1x64xf32> to vector<1x64xf32>
    %c2_170 = arith.constant 2 : index
    %c0_171 = arith.constant 0 : index
    %c0_172 = arith.constant 0 : index
    %443 = vector.load %arg12[%c2_170, %c0_171, %c0_172] : memref<3x1x64xf32, #tpu.memory_space<vmem>>, vector<1x1x64xf32>
    %444 = vector.shape_cast %443 : vector<1x1x64xf32> to vector<1x64xf32>
    %cst_173 = arith.constant dense<0.000000e+00> : vector<16xf32>
    %445 = vector.multi_reduction <add>, %440, %cst_173 [1] : vector<16x64xf32> to vector<16xf32>
    %446 = vector.shape_cast %445 : vector<16xf32> to vector<16x1xf32>
    %cst_174 = arith.constant 6.400000e+01 : f32
    %447 = vector.broadcast %cst_174 : f32 to vector<16x1xf32>
    %448 = arith.divf %446, %447 : vector<16x1xf32>
    %449 = vector.broadcast %448 : vector<16x1xf32> to vector<16x64xf32>
    %450 = arith.subf %440, %449 : vector<16x64xf32>
    %451 = arith.mulf %450, %450 : vector<16x64xf32>
    %cst_175 = arith.constant dense<0.000000e+00> : vector<16xf32>
    %452 = vector.multi_reduction <add>, %451, %cst_175 [1] : vector<16x64xf32> to vector<16xf32>
    %453 = vector.shape_cast %452 : vector<16xf32> to vector<16x1xf32>
    %cst_176 = arith.constant 6.400000e+01 : f32
    %454 = vector.broadcast %cst_176 : f32 to vector<16x1xf32>
    %455 = arith.divf %453, %454 : vector<16x1xf32>
    %cst_177 = arith.constant 9.99999974E-6 : f32
    %456 = vector.broadcast %cst_177 : f32 to vector<16x1xf32>
    %457 = arith.addf %455, %456 : vector<16x1xf32>
    %458 = math.rsqrt %457 : vector<16x1xf32>
    %459 = vector.broadcast %458 : vector<16x1xf32> to vector<16x64xf32>
    %460 = arith.mulf %450, %459 : vector<16x64xf32>
    %461 = vector.broadcast %442 : vector<1x64xf32> to vector<16x64xf32>
    %462 = arith.mulf %460, %461 : vector<16x64xf32>
    %463 = vector.broadcast %444 : vector<1x64xf32> to vector<16x64xf32>
    %464 = arith.addf %462, %463 : vector<16x64xf32>
    %c2_178 = arith.constant 2 : index
    %c0_179 = arith.constant 0 : index
    %c0_180 = arith.constant 0 : index
    %465 = vector.load %arg13[%c2_178, %c0_179, %c0_180] : memref<3x64x2048xbf16, #tpu.memory_space<vmem>>, vector<1x64x2048xbf16>
    %466 = vector.shape_cast %465 : vector<1x64x2048xbf16> to vector<64x2048xbf16>
    %467 = arith.truncf %464 : vector<16x64xf32> to vector<16x64xbf16>
    %cst_181 = arith.constant dense<0.000000e+00> : vector<16x2048xf32>
    %468 = tpu.matmul %467, %466, %cst_181 {dimension_numbers = #tpu.dot_dimension_numbers<[1], [0], [0], [1], [0, 0, 1, 1], [], []>} : vector<16x64xbf16>, vector<64x2048xbf16>, vector<16x2048xf32> -> vector<16x2048xf32>
    %c2_182 = arith.constant 2 : index
    %c0_183 = arith.constant 0 : index
    %c0_184 = arith.constant 0 : index
    %469 = vector.load %arg14[%c2_182, %c0_183, %c0_184] : memref<3x1x2048xf32, #tpu.memory_space<vmem>>, vector<1x1x2048xf32>
    %470 = vector.shape_cast %469 : vector<1x1x2048xf32> to vector<1x2048xf32>
    %471 = vector.broadcast %470 : vector<1x2048xf32> to vector<16x2048xf32>
    %472 = arith.addf %468, %471 : vector<16x2048xf32>
    %cst_185 = arith.constant 0.000000e+00 : f32
    %473 = vector.broadcast %cst_185 : f32 to vector<16x2048xf32>
    %474 = arith.maximumf %472, %473 : vector<16x2048xf32>
    %c2_186 = arith.constant 2 : index
    %c0_187 = arith.constant 0 : index
    %c0_188 = arith.constant 0 : index
    %475 = vector.load %arg15[%c2_186, %c0_187, %c0_188] : memref<3x2048x64xbf16, #tpu.memory_space<vmem>>, vector<1x2048x64xbf16>
    %476 = vector.shape_cast %475 : vector<1x2048x64xbf16> to vector<2048x64xbf16>
    %477 = arith.truncf %474 : vector<16x2048xf32> to vector<16x2048xbf16>
    %cst_189 = arith.constant dense<0.000000e+00> : vector<16x64xf32>
    %478 = tpu.matmul %477, %476, %cst_189 {dimension_numbers = #tpu.dot_dimension_numbers<[1], [0], [0], [1], [0, 0, 1, 1], [], []>} : vector<16x2048xbf16>, vector<2048x64xbf16>, vector<16x64xf32> -> vector<16x64xf32>
    %c2_190 = arith.constant 2 : index
    %c0_191 = arith.constant 0 : index
    %c0_192 = arith.constant 0 : index
    %479 = vector.load %arg16[%c2_190, %c0_191, %c0_192] : memref<3x1x64xf32, #tpu.memory_space<vmem>>, vector<1x1x64xf32>
    %480 = vector.shape_cast %479 : vector<1x1x64xf32> to vector<1x64xf32>
    %481 = vector.broadcast %480 : vector<1x64xf32> to vector<16x64xf32>
    %482 = arith.addf %478, %481 : vector<16x64xf32>
    %483 = arith.addf %464, %482 : vector<16x64xf32>
    %c2_193 = arith.constant 2 : index
    %c0_194 = arith.constant 0 : index
    %c0_195 = arith.constant 0 : index
    %484 = vector.load %arg17[%c2_193, %c0_194, %c0_195] : memref<3x1x64xf32, #tpu.memory_space<vmem>>, vector<1x1x64xf32>
    %485 = vector.shape_cast %484 : vector<1x1x64xf32> to vector<1x64xf32>
    %c2_196 = arith.constant 2 : index
    %c0_197 = arith.constant 0 : index
    %c0_198 = arith.constant 0 : index
    %486 = vector.load %arg18[%c2_196, %c0_197, %c0_198] : memref<3x1x64xf32, #tpu.memory_space<vmem>>, vector<1x1x64xf32>
    %487 = vector.shape_cast %486 : vector<1x1x64xf32> to vector<1x64xf32>
    %cst_199 = arith.constant dense<0.000000e+00> : vector<16xf32>
    %488 = vector.multi_reduction <add>, %483, %cst_199 [1] : vector<16x64xf32> to vector<16xf32>
    %489 = vector.shape_cast %488 : vector<16xf32> to vector<16x1xf32>
    %cst_200 = arith.constant 6.400000e+01 : f32
    %490 = vector.broadcast %cst_200 : f32 to vector<16x1xf32>
    %491 = arith.divf %489, %490 : vector<16x1xf32>
    %492 = vector.broadcast %491 : vector<16x1xf32> to vector<16x64xf32>
    %493 = arith.subf %483, %492 : vector<16x64xf32>
    %494 = arith.mulf %493, %493 : vector<16x64xf32>
    %cst_201 = arith.constant dense<0.000000e+00> : vector<16xf32>
    %495 = vector.multi_reduction <add>, %494, %cst_201 [1] : vector<16x64xf32> to vector<16xf32>
    %496 = vector.shape_cast %495 : vector<16xf32> to vector<16x1xf32>
    %cst_202 = arith.constant 6.400000e+01 : f32
    %497 = vector.broadcast %cst_202 : f32 to vector<16x1xf32>
    %498 = arith.divf %496, %497 : vector<16x1xf32>
    %cst_203 = arith.constant 9.99999974E-6 : f32
    %499 = vector.broadcast %cst_203 : f32 to vector<16x1xf32>
    %500 = arith.addf %498, %499 : vector<16x1xf32>
    %501 = math.rsqrt %500 : vector<16x1xf32>
    %502 = vector.broadcast %501 : vector<16x1xf32> to vector<16x64xf32>
    %503 = arith.mulf %493, %502 : vector<16x64xf32>
    %504 = vector.broadcast %485 : vector<1x64xf32> to vector<16x64xf32>
    %505 = arith.mulf %503, %504 : vector<16x64xf32>
    %506 = vector.broadcast %487 : vector<1x64xf32> to vector<16x64xf32>
    %507 = arith.addf %505, %506 : vector<16x64xf32>
    %c0_204 = arith.constant 0 : index
    %c0_205 = arith.constant 0 : index
    %508 = vector.load %arg3[%c0_204, %c0_205] : memref<64x32xbf16, #tpu.memory_space<vmem>>, vector<64x32xbf16>
    %509 = arith.truncf %507 : vector<16x64xf32> to vector<16x64xbf16>
    %cst_206 = arith.constant dense<0.000000e+00> : vector<16x32xf32>
    %510 = tpu.matmul %509, %508, %cst_206 {dimension_numbers = #tpu.dot_dimension_numbers<[1], [0], [0], [1], [0, 0, 1, 1], [], []>} : vector<16x64xbf16>, vector<64x32xbf16>, vector<16x32xf32> -> vector<16x32xf32>
    %c0_207 = arith.constant 0 : index
    %c0_208 = arith.constant 0 : index
    %511 = vector.load %arg4[%c0_207, %c0_208] : memref<1x32xf32, #tpu.memory_space<vmem>>, vector<1x32xf32>
    %512 = vector.broadcast %511 : vector<1x32xf32> to vector<16x32xf32>
    %513 = arith.addf %510, %512 : vector<16x32xf32>
    %cst_209 = arith.constant 0.000000e+00 : f32
    %514 = vector.broadcast %cst_209 : f32 to vector<16x32xf32>
    %515 = arith.maximumf %513, %514 : vector<16x32xf32>
    %c0_210 = arith.constant 0 : index
    %c0_211 = arith.constant 0 : index
    %516 = vector.load %arg5[%c0_210, %c0_211] : memref<32x4xbf16, #tpu.memory_space<vmem>>, vector<32x4xbf16>
    %517 = arith.truncf %515 : vector<16x32xf32> to vector<16x32xbf16>
    %cst_212 = arith.constant dense<0.000000e+00> : vector<16x4xf32>
    %518 = tpu.matmul %517, %516, %cst_212 {dimension_numbers = #tpu.dot_dimension_numbers<[1], [0], [0], [1], [0, 0, 1, 1], [], []>} : vector<16x32xbf16>, vector<32x4xbf16>, vector<16x4xf32> -> vector<16x4xf32>
    %c0_213 = arith.constant 0 : index
    %c0_214 = arith.constant 0 : index
    %519 = vector.load %arg6[%c0_213, %c0_214] : memref<1x4xf32, #tpu.memory_space<vmem>>, vector<1x4xf32>
    %520 = vector.broadcast %519 : vector<1x4xf32> to vector<16x4xf32>
    %521 = arith.addf %518, %520 : vector<16x4xf32>
    %c0_215 = arith.constant 0 : index
    %c0_216 = arith.constant 0 : index
    %522 = vector.load %arg19[%c0_215, %c0_216] : memref<16x4xf32, #tpu.memory_space<vmem>>, vector<16x4xf32>
    tpu.vector_store %arg19[%c0_215, %c0_216], %521 {strides = array<i32>} : memref<16x4xf32, #tpu.memory_space<vmem>>, vector<16x4xf32>,
    return
  }
}

</mosaic_0001>

<llo_original>
// kernel: dtqn_forward.1
$region0: #{dtqn_forward.1}
  #allocation0 [shape = 'u32[]', space=smem, size = 0x4, offset = 0x4, fixed_abs, tag = 'smem constant byte address 0x4 - core index']
  #allocation1 [shape = 'u32[144,128]{1,0:T(1,128)}', space=vmem, size = 0x12000, scoped, tag = 'internal scratch']
  %s0 = inlined_call_operand.vmem [shape: f32[16,2], index: 0, kind: input, shape index: {}]
  %s1 = inlined_call_operand.vmem [shape: bf16[2,64], index: 1, kind: input, shape index: {}]
  %s2 = inlined_call_operand.vmem [shape: f32[1,64], index: 2, kind: input, shape index: {}]
  %s3 = inlined_call_operand.vmem [shape: bf16[64,32], index: 3, kind: input, shape index: {}]
  %s4 = inlined_call_operand.vmem [shape: f32[1,32], index: 4, kind: input, shape index: {}]
  %s5 = inlined_call_operand.vmem [shape: bf16[32,4], index: 5, kind: input, shape index: {}]
  %s6 = inlined_call_operand.vmem [shape: f32[1,4], index: 6, kind: input, shape index: {}]
  %s7 = inlined_call_operand.vmem [shape: bf16[3,64,192], index: 7, kind: input, shape index: {}]
  %s8 = inlined_call_operand.vmem [shape: f32[3,1,192], index: 8, kind: input, shape index: {}]
  %s9 = inlined_call_operand.vmem [shape: bf16[3,64,64], index: 9, kind: input, shape index: {}]
  %s10 = inlined_call_operand.vmem [shape: f32[3,1,64], index: 10, kind: input, shape index: {}]
  %s11 = inlined_call_operand.vmem [shape: f32[3,1,64], index: 11, kind: input, shape index: {}]
  %s12 = inlined_call_operand.vmem [shape: f32[3,1,64], index: 12, kind: input, shape index: {}]
  %s13 = inlined_call_operand.vmem [shape: bf16[3,64,2048], index: 13, kind: input, shape index: {}]
  %s14 = inlined_call_operand.vmem [shape: f32[3,1,2048], index: 14, kind: input, shape index: {}]
  %s15 = inlined_call_operand.vmem [shape: bf16[3,2048,64], index: 15, kind: input, shape index: {}]
  %s16 = inlined_call_operand.vmem [shape: f32[3,1,64], index: 16, kind: input, shape index: {}]
  %s17 = inlined_call_operand.vmem [shape: f32[3,1,64], index: 17, kind: input, shape index: {}]
  %s18 = inlined_call_operand.vmem [shape: f32[3,1,64], index: 18, kind: input, shape index: {}]
  %s19 = inlined_call_operand.vmem [shape: f32[16,4], index: 19, kind: output, shape index: {}]
  %s20 = sld [smem:[#allocation0]]
  $region86: #{dtqn_forward.1} parent=0
    _
  %s22 = ssub.s32 1, %s20
  %s23 = scalar_select 0, %s22, %s20
  // Predicated region
  $region2: #{dtqn_forward.1} parent=0 // pred_check
    _
  $region3: #{dtqn_forward.1} parent=0 // pred_check_branch
    %25 = sbr.rel (0) target = $region5
  $region4: #{dtqn_forward.1} parent=0 // pred_region
    _
  $region5: #{dtqn_forward.1} parent=0 // pred_fallthru
    _
  // Predicated region
  $region6: #{dtqn_forward.1} parent=0 // pred_check
    _
  $region7: #{dtqn_forward.1} parent=0 // pred_check_branch
    %27 = sbr.rel (0) target = $region9
  $region8: #{dtqn_forward.1} parent=0 // pred_region
    _
  $region9: #{dtqn_forward.1} parent=0 // pred_fallthru
    _
  // Predicated region
  $region10: #{dtqn_forward.1} parent=0 // pred_check
    _
  $region11: #{dtqn_forward.1} parent=0 // pred_check_branch
    %29 = sbr.rel (0) target = $region13
  $region12: #{dtqn_forward.1} parent=0 // pred_region
    _
  $region13: #{dtqn_forward.1} parent=0 // pred_fallthru
    _
  // Predicated region
  $region14: #{dtqn_forward.1} parent=0 // pred_check
    _
  $region15: #{dtqn_forward.1} parent=0 // pred_check_branch
    %31 = sbr.rel (0) target = $region17
  $region16: #{dtqn_forward.1} parent=0 // pred_region
    _
  $region17: #{dtqn_forward.1} parent=0 // pred_fallthru
    _
  // Predicated region
  $region18: #{dtqn_forward.1} parent=0 // pred_check
    _
  $region19: #{dtqn_forward.1} parent=0 // pred_check_branch
    %33 = sbr.rel (0) target = $region21
  $region20: #{dtqn_forward.1} parent=0 // pred_region
    _
  $region21: #{dtqn_forward.1} parent=0 // pred_fallthru
    _
  // Predicated region
  $region22: #{dtqn_forward.1} parent=0 // pred_check
    _
  $region23: #{dtqn_forward.1} parent=0 // pred_check_branch
    %35 = sbr.rel (0) target = $region25
  $region24: #{dtqn_forward.1} parent=0 // pred_region
    _
  $region25: #{dtqn_forward.1} parent=0 // pred_fallthru
    _
  // Predicated region
  $region26: #{dtqn_forward.1} parent=0 // pred_check
    _
  $region27: #{dtqn_forward.1} parent=0 // pred_check_branch
    %37 = sbr.rel (0) target = $region29
  $region28: #{dtqn_forward.1} parent=0 // pred_region
    _
  $region29: #{dtqn_forward.1} parent=0 // pred_fallthru
    _
  // Predicated region
  $region30: #{dtqn_forward.1} parent=0 // pred_check
    _
  $region31: #{dtqn_forward.1} parent=0 // pred_check_branch
    %39 = sbr.rel (0) target = $region33
  $region32: #{dtqn_forward.1} parent=0 // pred_region
    _
  $region33: #{dtqn_forward.1} parent=0 // pred_fallthru
    _
  // Predicated region
  $region34: #{dtqn_forward.1} parent=0 // pred_check
    _
  $region35: #{dtqn_forward.1} parent=0 // pred_check_branch
    %41 = sbr.rel (0) target = $region37
  $region36: #{dtqn_forward.1} parent=0 // pred_region
    _
  $region37: #{dtqn_forward.1} parent=0 // pred_fallthru
    _
  // Predicated region
  $region38: #{dtqn_forward.1} parent=0 // pred_check
    _
  $region39: #{dtqn_forward.1} parent=0 // pred_check_branch
    %43 = sbr.rel (0) target = $region41
  $region40: #{dtqn_forward.1} parent=0 // pred_region
    _
  $region41: #{dtqn_forward.1} parent=0 // pred_fallthru
    _
  // Predicated region
  $region42: #{dtqn_forward.1} parent=0 // pred_check
    _
  $region43: #{dtqn_forward.1} parent=0 // pred_check_branch
    %45 = sbr.rel (0) target = $region45
  $region44: #{dtqn_forward.1} parent=0 // pred_region
    _
  $region45: #{dtqn_forward.1} parent=0 // pred_fallthru
    _
  // Predicated region
  $region46: #{dtqn_forward.1} parent=0 // pred_check
    _
  $region47: #{dtqn_forward.1} parent=0 // pred_check_branch
    %47 = sbr.rel (0) target = $region49
  $region48: #{dtqn_forward.1} parent=0 // pred_region
    _
  $region49: #{dtqn_forward.1} parent=0 // pred_fallthru
    _
  // Predicated region
  $region50: #{dtqn_forward.1} parent=0 // pred_check
    _
  $region51: #{dtqn_forward.1} parent=0 // pred_check_branch
    %49 = sbr.rel (0) target = $region53
  $region52: #{dtqn_forward.1} parent=0 // pred_region
    _
  $region53: #{dtqn_forward.1} parent=0 // pred_fallthru
    _
  // Predicated region
  $region54: #{dtqn_forward.1} parent=0 // pred_check
    _
  $region55: #{dtqn_forward.1} parent=0 // pred_check_branch
    %51 = sbr.rel (0) target = $region57
  $region56: #{dtqn_forward.1} parent=0 // pred_region
    _
  $region57: #{dtqn_forward.1} parent=0 // pred_fallthru
    _
  // Predicated region
  $region58: #{dtqn_forward.1} parent=0 // pred_check
    _
  $region59: #{dtqn_forward.1} parent=0 // pred_check_branch
    %53 = sbr.rel (0) target = $region61
  $region60: #{dtqn_forward.1} parent=0 // pred_region
    _
  $region61: #{dtqn_forward.1} parent=0 // pred_fallthru
    _
  // Predicated region
  $region62: #{dtqn_forward.1} parent=0 // pred_check
    _
  $region63: #{dtqn_forward.1} parent=0 // pred_check_branch
    %55 = sbr.rel (0) target = $region65
  $region64: #{dtqn_forward.1} parent=0 // pred_region
    _
  $region65: #{dtqn_forward.1} parent=0 // pred_fallthru
    _
  // Predicated region
  $region66: #{dtqn_forward.1} parent=0 // pred_check
    _
  $region67: #{dtqn_forward.1} parent=0 // pred_check_branch
    %57 = sbr.rel (0) target = $region69
  $region68: #{dtqn_forward.1} parent=0 // pred_region
    _
  $region69: #{dtqn_forward.1} parent=0 // pred_fallthru
    _
  // Predicated region
  $region70: #{dtqn_forward.1} parent=0 // pred_check
    _
  $region71: #{dtqn_forward.1} parent=0 // pred_check_branch
    %59 = sbr.rel (0) target = $region73
  $region72: #{dtqn_forward.1} parent=0 // pred_region
    _
  $region73: #{dtqn_forward.1} parent=0 // pred_fallthru
    _
  // Predicated region
  $region74: #{dtqn_forward.1} parent=0 // pred_check
    _
  $region75: #{dtqn_forward.1} parent=0 // pred_check_branch
    %61 = sbr.rel (0) target = $region77
  $region76: #{dtqn_forward.1} parent=0 // pred_region
    _
  $region77: #{dtqn_forward.1} parent=0 // pred_fallthru
    _
  %v63 = vld [vmem:[%s0] sm:$0xff]
  %v64 = vld [vmem:[%s0 + $0x8] sm:$0xff]
  %v65 = vld [vmem:[%s1] sm:$0x1]
  %v66 = vpack.c.bf16 %v64, %v63
  %v67 = vld [vmem:[%s2] sm:$0x1]
  %v69 = vlaneseq
  %v70 = vshrl.u32 %v69, 7
  %v71 = vsub.s32 0, %v70
  %v72 = vrot.slane %v67, %v71
  %vm74 = vcmask 15360
  %v76 = vsel %vm74, %v66, 0
  %vm78 = vcmask 1040384
  %v80 = vsel %vm78, %v65, 0
  %82 = vmatprep.subr.bf16.mxu0 0
  %83 = vmatpush1.bf16.msra.mxu0 %v80
  %84 = vmatprep.subr.bf16.mxu0 0
  %85 = vmatpush1.bf16.msra.mxu0 0
  %86 = vmatprep.subr.bf16.mxu0 0
  %87 = vmatpush1.bf16.msra.mxu0 0
  %88 = vmatprep.subr.bf16.mxu0 0
  %89 = vmatpush1.bf16.msra.mxu0 0
  %90 = vmatprep.subr.bf16.mxu0 0
  %91 = vmatpush1.bf16.msra.mxu0 0
  %92 = vmatprep.subr.bf16.mxu0 0
  %93 = vmatpush1.bf16.msra.mxu0 0
  %94 = vmatprep.subr.bf16.mxu0 0
  %95 = vmatpush1.bf16.msra.mxu0 0
  %96 = vmatprep.subr.bf16.mxu0 0
  %97 = vmatpush1.bf16.msra.mxu0 0
  %98 = vmatprep.subr.bf16.mxu0 0
  %99 = vmatpush1.bf16.msra.mxu0 0
  %100 = vmatprep.subr.bf16.mxu0 0
  %101 = vmatpush1.bf16.msra.mxu0 0
  %102 = vmatprep.subr.bf16.mxu0 0
  %103 = vmatpush1.bf16.msra.mxu0 0
  %104 = vmatprep.subr.bf16.mxu0 0
  %105 = vmatpush1.bf16.msra.mxu0 0
  %106 = vmatprep.subr.bf16.mxu0 0
  %107 = vmatpush1.bf16.msra.mxu0 0
  %108 = vmatprep.subr.bf16.mxu0 0
  %109 = vmatpush1.bf16.msra.mxu0 0
  %110 = vmatprep.subr.bf16.mxu0 0
  %111 = vmatpush1.bf16.msra.mxu0 0
  %112 = vmatprep.subr.bf16.mxu0 0
  %113 = vmatpush1.bf16.msra.mxu0 0
  %114 = vmatprep.mubr.bf16.mxu0 0
  %115 = vmatmul.mubr.bf16.gmra.mrb[0].mxu0 %v76
  %v116 = vpop.f32.mrb[0].mxu0
  %v117 = vadd.f32 %v72, %v116
  %v118 = vpop.f32.mrb[0].mxu0
  %v119 = vpop.f32.mrb[0].mxu0
  %v120 = vadd.f32 %v72, %v119
  %v121 = vpop.f32.mrb[0].mxu0
  %122 = vdwg.mxu0
  %v123 = vld [vmem:[%s7] sm:$0xff]
  %v124 = vld [vmem:[%s7 + $0x8] sm:$0xff]
  %v125 = vld [vmem:[%s7 + $0x10] sm:$0xff]
  %v126 = vld [vmem:[%s7 + $0x18] sm:$0xff]
  %v127 = vld [vmem:[%s7 + $0x20] sm:$0xff]
  %v128 = vld [vmem:[%s7 + $0x28] sm:$0xff]
  %v129 = vld [vmem:[%s7 + $0x30] sm:$0xff]
  %v130 = vld [vmem:[%s7 + $0x38] sm:$0xff]
  %v131 = vpack.c.bf16 %v120, %v117
  %v132 = vld [vmem:[%s8] sm:$0x3]
  %v134 = vlaneseq
  %v135 = vshrl.u32 %v134, 7
  %v136 = vsub.s32 0, %v135
  %v137 = vrot.slane %v132, %v136
  %v138 = vlaneseq
  %v139 = vshrl.u32 %v138, 7
  %v140 = vsub.s32 1, %v139
  %v141 = vrot.slane %v132, %v140
  %v152 = vunpack.c.l.b16 %v123
  %v153 = vunpack.c.h.b16 %v123
  %v154 = vunpack.c.l.b16 %v124
  %v155 = vunpack.c.h.b16 %v124
  %v156 = vunpack.c.l.b16 %v125
  %v157 = vunpack.c.h.b16 %v125
  %v158 = vunpack.c.l.b16 %v126
  %v159 = vunpack.c.h.b16 %v126
  %v160 = vunpack.c.l.b16 %v127
  %v161 = vunpack.c.h.b16 %v127
  %v162 = vunpack.c.l.b16 %v128
  %v163 = vunpack.c.h.b16 %v128
  %v164 = vunpack.c.l.b16 %v129
  %v165 = vunpack.c.h.b16 %v129
  %v166 = vunpack.c.l.b16 %v130
  %v167 = vunpack.c.h.b16 %v130
  %v168 = vpack.c.b16 %v154, %v152
  %v169 = vpack.c.b16 %v155, %v153
  %v170 = vpack.c.b16 %v158, %v156
  %v171 = vpack.c.b16 %v159, %v157
  %v172 = vpack.c.b16 %v162, %v160
  %v173 = vpack.c.b16 %v163, %v161
  %v174 = vpack.c.b16 %v166, %v164
  %v175 = vpack.c.b16 %v167, %v165
  %vm184 = vcmask 523264
  %v186 = vsel %vm184, %v131, 0
  %188 = vmatprep.subr.bf16.mxu0 %v169
  %189 = vmatpush1.bf16.msra.mxu0 %v168
  %190 = vmatprep.subr.bf16.mxu0 %v171
  %191 = vmatpush1.bf16.msra.mxu0 %v170
  %192 = vmatprep.subr.bf16.mxu0 %v173
  %193 = vmatpush1.bf16.msra.mxu0 %v172
  %194 = vmatprep.subr.bf16.mxu0 %v175
  %195 = vmatpush1.bf16.msra.mxu0 %v174
  %196 = vmatprep.subr.bf16.mxu0 0
  %197 = vmatpush1.bf16.msra.mxu0 0
  %198 = vmatprep.subr.bf16.mxu0 0
  %199 = vmatpush1.bf16.msra.mxu0 0
  %200 = vmatprep.subr.bf16.mxu0 0
  %201 = vmatpush1.bf16.msra.mxu0 0
  %202 = vmatprep.subr.bf16.mxu0 0
  %203 = vmatpush1.bf16.msra.mxu0 0
  %204 = vmatprep.subr.bf16.mxu0 0
  %205 = vmatpush1.bf16.msra.mxu0 0
  %206 = vmatprep.subr.bf16.mxu0 0
  %207 = vmatpush1.bf16.msra.mxu0 0
  %208 = vmatprep.subr.bf16.mxu0 0
  %209 = vmatpush1.bf16.msra.mxu0 0
  %210 = vmatprep.subr.bf16.mxu0 0
  %211 = vmatpush1.bf16.msra.mxu0 0
  %212 = vmatprep.subr.bf16.mxu0 0
  %213 = vmatpush1.bf16.msra.mxu0 0
  %214 = vmatprep.subr.bf16.mxu0 0
  %215 = vmatpush1.bf16.msra.mxu0 0
  %216 = vmatprep.subr.bf16.mxu0 0
  %217 = vmatpush1.bf16.msra.mxu0 0
  %218 = vmatprep.subr.bf16.mxu0 0
  %219 = vmatpush1.bf16.msra.mxu0 0
  %220 = vmatprep.mubr.bf16.mxu0 0
  %221 = vmatmul.mubr.bf16.gmra.mrb[0].mxu0 %v186
  %v222 = vpop.f32.mrb[0].mxu0
  %v223 = vadd.f32 %v137, %v222
  %v224 = vpop.f32.mrb[0].mxu0
  %v225 = vadd.f32 %v141, %v224
  %v226 = vpop.f32.mrb[0].mxu0
  %v227 = vadd.f32 %v137, %v226
  %v228 = vpop.f32.mrb[0].mxu0
  %v229 = vadd.f32 %v141, %v228
  %230 = vdwg.mxu0
  %v231 = vpack.c.bf16 %v223, %v223
  %v232 = vpack.c.bf16 %v225, %v225
  %234 = vrot.lane.b32.xlu0 %v231, 64
  %v235 = vpop.permute.xlu0 %234
  %vm236 = vcmask 261120
  %v238 = vsel %vm236, %v231, 0
  %v241 = vsel %vm236, %v235, 0
  %243 = vmatprep.subr.bf16.mxu0 0
  %244 = vmatpush1.bf16.xpose.msra.mxu0 %v241
  %245 = vmatprep.subr.bf16.mxu0 0
  %246 = vmatpush1.bf16.xpose.msra.mxu0 0
  %247 = vmatprep.subr.bf16.mxu0 0
  %248 = vmatpush1.bf16.xpose.msra.mxu0 0
  %249 = vmatprep.subr.bf16.mxu0 0
  %250 = vmatpush1.bf16.xpose.msra.mxu0 0
  %251 = vmatprep.subr.bf16.mxu0 0
  %252 = vmatpush1.bf16.xpose.msra.mxu0 0
  %253 = vmatprep.subr.bf16.mxu0 0
  %254 = vmatpush1.bf16.xpose.msra.mxu0 0
  %255 = vmatprep.subr.bf16.mxu0 0
  %256 = vmatpush1.bf16.xpose.msra.mxu0 0
  %257 = vmatprep.subr.bf16.mxu0 0
  %258 = vmatpush1.bf16.xpose.msra.mxu0 0
  %259 = vmatprep.subr.bf16.mxu0 0
  %260 = vmatpush1.bf16.xpose.msra.mxu0 0
  %261 = vmatprep.subr.bf16.mxu0 0
  %262 = vmatpush1.bf16.xpose.msra.mxu0 0
  %263 = vmatprep.subr.bf16.mxu0 0
  %264 = vmatpush1.bf16.xpose.msra.mxu0 0
  %265 = vmatprep.subr.bf16.mxu0 0
  %266 = vmatpush1.bf16.xpose.msra.mxu0 0
  %267 = vmatprep.subr.bf16.mxu0 0
  %268 = vmatpush1.bf16.xpose.msra.mxu0 0
  %269 = vmatprep.subr.bf16.mxu0 0
  %270 = vmatpush1.bf16.xpose.msra.mxu0 0
  %271 = vmatprep.subr.bf16.mxu0 0
  %272 = vmatpush1.bf16.xpose.msra.mxu0 0
  %273 = vmatprep.subr.bf16.mxu0 0
  %274 = vmatpush1.bf16.xpose.msra.mxu0 0
  %275 = vmatprep.mubr.bf16.mxu0 0
  %276 = vmatmul.mubr.bf16.gmra.mrb[0].mxu0 %v238
  %v277 = vpop.f32.mrb[0].mxu0
  %v278 = vadd.f32 0.0, %v277
  %v279 = vpop.f32.mrb[0].mxu0
  %v280 = vpop.f32.mrb[0].mxu0
  %v281 = vpop.f32.mrb[0].mxu0
  %282 = vdwg.mxu0
  %vm283 = vcmask 64512
  %v284 = vsel %vm283, %v278, -inf
  %285 = vmax.xlane.f32.xlu0 %v284
  %v286 = vpop.xlane.xlu0 %285
  %v287 = vsub.f32 %v278, %v286
  %v288 = vmul.f32 %v287, 1.442695
  %v289 = vpow.pop %v288
  %v290 = vsel %vm283, %v289, 0.0
  %291 = vadd.xlane.f32.xlu0 %v290
  %v292 = vpop.xlane.xlu0 %291
  %v293 = vrcp.pop %v292
  %v294 = vmul.f32 %v289, %v293
  %v295 = vpack.c.bf16 %v294, %v294
  %v297 = vsel %vm283, %v295, 0
  %vm299 = vcmask 1043456
  %v301 = vsel %vm299, %v232, 0
  %303 = vmatprep.subr.bf16.mxu0 0
  %304 = vmatpush1.bf16.msra.mxu0 %v301
  %305 = vmatprep.subr.bf16.mxu0 0
  %306 = vmatpush1.bf16.msra.mxu0 0
  %307 = vmatprep.subr.bf16.mxu0 0
  %308 = vmatpush1.bf16.msra.mxu0 0
  %309 = vmatprep.subr.bf16.mxu0 0
  %310 = vmatpush1.bf16.msra.mxu0 0
  %311 = vmatprep.subr.bf16.mxu0 0
  %312 = vmatpush1.bf16.msra.mxu0 0
  %313 = vmatprep.subr.bf16.mxu0 0
  %314 = vmatpush1.bf16.msra.mxu0 0
  %315 = vmatprep.subr.bf16.mxu0 0
  %316 = vmatpush1.bf16.msra.mxu0 0
  %317 = vmatprep.subr.bf16.mxu0 0
  %318 = vmatpush1.bf16.msra.mxu0 0
  %319 = vmatprep.subr.bf16.mxu0 0
  %320 = vmatpush1.bf16.msra.mxu0 0
  %321 = vmatprep.subr.bf16.mxu0 0
  %322 = vmatpush1.bf16.msra.mxu0 0
  %323 = vmatprep.subr.bf16.mxu0 0
  %324 = vmatpush1.bf16.msra.mxu0 0
  %325 = vmatprep.subr.bf16.mxu0 0
  %326 = vmatpush1.bf16.msra.mxu0 0
  %327 = vmatprep.subr.bf16.mxu0 0
  %328 = vmatpush1.bf16.msra.mxu0 0
  %329 = vmatprep.subr.bf16.mxu0 0
  %330 = vmatpush1.bf16.msra.mxu0 0
  %331 = vmatprep.subr.bf16.mxu0 0
  %332 = vmatpush1.bf16.msra.mxu0 0
  %333 = vmatprep.subr.bf16.mxu0 0
  %334 = vmatpush1.bf16.msra.mxu0 0
  %335 = vmatprep.mubr.bf16.mxu0 0
  %336 = vmatmul.mubr.bf16.gmra.mrb[0].mxu0 %v297
  %v337 = vpop.f32.mrb[0].mxu0
  %v338 = vadd.f32 0.0, %v337
  %v339 = vpop.f32.mrb[0].mxu0
  %v340 = vpop.f32.mrb[0].mxu0
  %v341 = vpop.f32.mrb[0].mxu0
  %342 = vdwg.mxu0
  %343 = vrot.lane.b32.xlu0 %v231, 96
  %v344 = vpop.permute.xlu0 %343
  %345 = vrot.lane.b32.xlu0 %v231, 32
  %v346 = vpop.permute.xlu0 %345
  %v348 = vsel %vm236, %v344, 0
  %v351 = vsel %vm236, %v346, 0
  %353 = vmatprep.subr.bf16.mxu0 0
  %354 = vmatpush1.bf16.xpose.msra.mxu0 %v351
  %355 = vmatprep.subr.bf16.mxu0 0
  %356 = vmatpush1.bf16.xpose.msra.mxu0 0
  %357 = vmatprep.subr.bf16.mxu0 0
  %358 = vmatpush1.bf16.xpose.msra.mxu0 0
  %359 = vmatprep.subr.bf16.mxu0 0
  %360 = vmatpush1.bf16.xpose.msra.mxu0 0
  %361 = vmatprep.subr.bf16.mxu0 0
  %362 = vmatpush1.bf16.xpose.msra.mxu0 0
  %363 = vmatprep.subr.bf16.mxu0 0
  %364 = vmatpush1.bf16.xpose.msra.mxu0 0
  %365 = vmatprep.subr.bf16.mxu0 0
  %366 = vmatpush1.bf16.xpose.msra.mxu0 0
  %367 = vmatprep.subr.bf16.mxu0 0
  %368 = vmatpush1.bf16.xpose.msra.mxu0 0
  %369 = vmatprep.subr.bf16.mxu0 0
  %370 = vmatpush1.bf16.xpose.msra.mxu0 0
  %371 = vmatprep.subr.bf16.mxu0 0
  %372 = vmatpush1.bf16.xpose.msra.mxu0 0
  %373 = vmatprep.subr.bf16.mxu0 0
  %374 = vmatpush1.bf16.xpose.msra.mxu0 0
  %375 = vmatprep.subr.bf16.mxu0 0
  %376 = vmatpush1.bf16.xpose.msra.mxu0 0
  %377 = vmatprep.subr.bf16.mxu0 0
  %378 = vmatpush1.bf16.xpose.msra.mxu0 0
  %379 = vmatprep.subr.bf16.mxu0 0
  %380 = vmatpush1.bf16.xpose.msra.mxu0 0
  %381 = vmatprep.subr.bf16.mxu0 0
  %382 = vmatpush1.bf16.xpose.msra.mxu0 0
  %383 = vmatprep.subr.bf16.mxu0 0
  %384 = vmatpush1.bf16.xpose.msra.mxu0 0
  %385 = vmatprep.mubr.bf16.mxu0 0
  %386 = vmatmul.mubr.bf16.gmra.mrb[0].mxu0 %v348
  %v387 = vpop.f32.mrb[0].mxu0
  %v388 = vadd.f32 0.0, %v387
  %v389 = vpop.f32.mrb[0].mxu0
  %v390 = vpop.f32.mrb[0].mxu0
  %v391 = vpop.f32.mrb[0].mxu0
  %392 = vdwg.mxu0
  %v393 = vsel %vm283, %v388, -inf
  %394 = vmax.xlane.f32.xlu0 %v393
  %v395 = vpop.xlane.xlu0 %394
  %v396 = vsub.f32 %v388, %v395
  %v397 = vmul.f32 %v396, 1.442695
  %v398 = vpow.pop %v397
  %v399 = vsel %vm283, %v398, 0.0
  %400 = vadd.xlane.f32.xlu0 %v399
  %v401 = vpop.xlane.xlu0 %400
  %v402 = vrcp.pop %v401
  %v403 = vmul.f32 %v398, %v402
  %v404 = vpack.c.bf16 %v403, %v403
  %406 = vrot.lane.b32.xlu0 %v232, 96
  %v407 = vpop.permute.xlu0 %406
  %v409 = vsel %vm283, %v404, 0
  %v412 = vsel %vm299, %v407, 0
  %414 = vmatprep.subr.bf16.mxu0 0
  %415 = vmatpush1.bf16.msra.mxu0 %v412
  %416 = vmatprep.subr.bf16.mxu0 0
  %417 = vmatpush1.bf16.msra.mxu0 0
  %418 = vmatprep.subr.bf16.mxu0 0
  %419 = vmatpush1.bf16.msra.mxu0 0
  %420 = vmatprep.subr.bf16.mxu0 0
  %421 = vmatpush1.bf16.msra.mxu0 0
  %422 = vmatprep.subr.bf16.mxu0 0
  %423 = vmatpush1.bf16.msra.mxu0 0
  %424 = vmatprep.subr.bf16.mxu0 0
  %425 = vmatpush1.bf16.msra.mxu0 0
  %426 = vmatprep.subr.bf16.mxu0 0
  %427 = vmatpush1.bf16.msra.mxu0 0
  %428 = vmatprep.subr.bf16.mxu0 0
  %429 = vmatpush1.bf16.msra.mxu0 0
  %430 = vmatprep.subr.bf16.mxu0 0
  %431 = vmatpush1.bf16.msra.mxu0 0
  %432 = vmatprep.subr.bf16.mxu0 0
  %433 = vmatpush1.bf16.msra.mxu0 0
  %434 = vmatprep.subr.bf16.mxu0 0
  %435 = vmatpush1.bf16.msra.mxu0 0
  %436 = vmatprep.subr.bf16.mxu0 0
  %437 = vmatpush1.bf16.msra.mxu0 0
  %438 = vmatprep.subr.bf16.mxu0 0
  %439 = vmatpush1.bf16.msra.mxu0 0
  %440 = vmatprep.subr.bf16.mxu0 0
  %441 = vmatpush1.bf16.msra.mxu0 0
  %442 = vmatprep.subr.bf16.mxu0 0
  %443 = vmatpush1.bf16.msra.mxu0 0
  %444 = vmatprep.subr.bf16.mxu0 0
  %445 = vmatpush1.bf16.msra.mxu0 0
  %446 = vmatprep.mubr.bf16.mxu0 0
  %447 = vmatmul.mubr.bf16.gmra.mrb[0].mxu0 %v409
  %v448 = vpop.f32.mrb[0].mxu0
  %v449 = vadd.f32 0.0, %v448
  %v450 = vpop.f32.mrb[0].mxu0
  %v451 = vpop.f32.mrb[0].mxu0
  %v452 = vpop.f32.mrb[0].mxu0
  %453 = vdwg.mxu0
  %455 = vrot.lane.b32.xlu0 %v449, 32
  %v456 = vpop.permute.xlu0 %455
  %v458 = vsel %vm236, %v338, %v456
  %v459 = vpack.c.bf16 %v227, %v227
  %v460 = vpack.c.bf16 %v229, %v229
  %462 = vrot.lane.b32.xlu0 %v459, 64
  %v463 = vpop.permute.xlu0 %462
  %v465 = vsel %vm236, %v459, 0
  %v468 = vsel %vm236, %v463, 0
  %470 = vmatprep.subr.bf16.mxu0 0
  %471 = vmatpush1.bf16.xpose.msra.mxu0 %v468
  %472 = vmatprep.subr.bf16.mxu0 0
  %473 = vmatpush1.bf16.xpose.msra.mxu0 0
  %474 = vmatprep.subr.bf16.mxu0 0
  %475 = vmatpush1.bf16.xpose.msra.mxu0 0
  %476 = vmatprep.subr.bf16.mxu0 0
  %477 = vmatpush1.bf16.xpose.msra.mxu0 0
  %478 = vmatprep.subr.bf16.mxu0 0
  %479 = vmatpush1.bf16.xpose.msra.mxu0 0
  %480 = vmatprep.subr.bf16.mxu0 0
  %481 = vmatpush1.bf16.xpose.msra.mxu0 0
  %482 = vmatprep.subr.bf16.mxu0 0
  %483 = vmatpush1.bf16.xpose.msra.mxu0 0
  %484 = vmatprep.subr.bf16.mxu0 0
  %485 = vmatpush1.bf16.xpose.msra.mxu0 0
  %486 = vmatprep.subr.bf16.mxu0 0
  %487 = vmatpush1.bf16.xpose.msra.mxu0 0
  %488 = vmatprep.subr.bf16.mxu0 0
  %489 = vmatpush1.bf16.xpose.msra.mxu0 0
  %490 = vmatprep.subr.bf16.mxu0 0
  %491 = vmatpush1.bf16.xpose.msra.mxu0 0
  %492 = vmatprep.subr.bf16.mxu0 0
  %493 = vmatpush1.bf16.xpose.msra.mxu0 0
  %494 = vmatprep.subr.bf16.mxu0 0
  %495 = vmatpush1.bf16.xpose.msra.mxu0 0
  %496 = vmatprep.subr.bf16.mxu0 0
  %497 = vmatpush1.bf16.xpose.msra.mxu0 0
  %498 = vmatprep.subr.bf16.mxu0 0
  %499 = vmatpush1.bf16.xpose.msra.mxu0 0
  %500 = vmatprep.subr.bf16.mxu0 0
  %501 = vmatpush1.bf16.xpose.msra.mxu0 0
  %502 = vmatprep.mubr.bf16.mxu0 0
  %503 = vmatmul.mubr.bf16.gmra.mrb[0].mxu0 %v465
  %v504 = vpop.f32.mrb[0].mxu0
  %v505 = vadd.f32 0.0, %v504
  %v506 = vpop.f32.mrb[0].mxu0
  %v507 = vpop.f32.mrb[0].mxu0
  %v508 = vpop.f32.mrb[0].mxu0
  %509 = vdwg.mxu0
  %v510 = vsel %vm283, %v505, -inf
  %511 = vmax.xlane.f32.xlu0 %v510
  %v512 = vpop.xlane.xlu0 %511
  %v513 = vsub.f32 %v505, %v512
  %v514 = vmul.f32 %v513, 1.442695
  %v515 = vpow.pop %v514
  %v516 = vsel %vm283, %v515, 0.0
  %517 = vadd.xlane.f32.xlu0 %v516
  %v518 = vpop.xlane.xlu0 %517
  %v519 = vrcp.pop %v518
  %v520 = vmul.f32 %v515, %v519
  %v521 = vpack.c.bf16 %v520, %v520
  %v523 = vsel %vm283, %v521, 0
  %v526 = vsel %vm299, %v460, 0
  %528 = vmatprep.subr.bf16.mxu0 0
  %529 = vmatpush1.bf16.msra.mxu0 %v526
  %530 = vmatprep.subr.bf16.mxu0 0
  %531 = vmatpush1.bf16.msra.mxu0 0
  %532 = vmatprep.subr.bf16.mxu0 0
  %533 = vmatpush1.bf16.msra.mxu0 0
  %534 = vmatprep.subr.bf16.mxu0 0
  %535 = vmatpush1.bf16.msra.mxu0 0
  %536 = vmatprep.subr.bf16.mxu0 0
  %537 = vmatpush1.bf16.msra.mxu0 0
  %538 = vmatprep.subr.bf16.mxu0 0
  %539 = vmatpush1.bf16.msra.mxu0 0
  %540 = vmatprep.subr.bf16.mxu0 0
  %541 = vmatpush1.bf16.msra.mxu0 0
  %542 = vmatprep.subr.bf16.mxu0 0
  %543 = vmatpush1.bf16.msra.mxu0 0
  %544 = vmatprep.subr.bf16.mxu0 0
  %545 = vmatpush1.bf16.msra.mxu0 0
  %546 = vmatprep.subr.bf16.mxu0 0
  %547 = vmatpush1.bf16.msra.mxu0 0
  %548 = vmatprep.subr.bf16.mxu0 0
  %549 = vmatpush1.bf16.msra.mxu0 0
  %550 = vmatprep.subr.bf16.mxu0 0
  %551 = vmatpush1.bf16.msra.mxu0 0
  %552 = vmatprep.subr.bf16.mxu0 0
  %553 = vmatpush1.bf16.msra.mxu0 0
  %554 = vmatprep.subr.bf16.mxu0 0
  %555 = vmatpush1.bf16.msra.mxu0 0
  %556 = vmatprep.subr.bf16.mxu0 0
  %557 = vmatpush1.bf16.msra.mxu0 0
  %558 = vmatprep.subr.bf16.mxu0 0
  %559 = vmatpush1.bf16.msra.mxu0 0
  %560 = vmatprep.mubr.bf16.mxu0 0
  %561 = vmatmul.mubr.bf16.gmra.mrb[0].mxu0 %v523
  %v562 = vpop.f32.mrb[0].mxu0
  %v563 = vadd.f32 0.0, %v562
  %v564 = vpop.f32.mrb[0].mxu0
  %v565 = vpop.f32.mrb[0].mxu0
  %v566 = vpop.f32.mrb[0].mxu0
  %567 = vdwg.mxu0
  %568 = vrot.lane.b32.xlu0 %v459, 96
  %v569 = vpop.permute.xlu0 %568
  %570 = vrot.lane.b32.xlu0 %v459, 32
  %v571 = vpop.permute.xlu0 %570
  %v573 = vsel %vm236, %v569, 0
  %v576 = vsel %vm236, %v571, 0
  %578 = vmatprep.subr.bf16.mxu0 0
  %579 = vmatpush1.bf16.xpose.msra.mxu0 %v576
  %580 = vmatprep.subr.bf16.mxu0 0
  %581 = vmatpush1.bf16.xpose.msra.mxu0 0
  %582 = vmatprep.subr.bf16.mxu0 0
  %583 = vmatpush1.bf16.xpose.msra.mxu0 0
  %584 = vmatprep.subr.bf16.mxu0 0
  %585 = vmatpush1.bf16.xpose.msra.mxu0 0
  %586 = vmatprep.subr.bf16.mxu0 0
  %587 = vmatpush1.bf16.xpose.msra.mxu0 0
  %588 = vmatprep.subr.bf16.mxu0 0
  %589 = vmatpush1.bf16.xpose.msra.mxu0 0
  %590 = vmatprep.subr.bf16.mxu0 0
  %591 = vmatpush1.bf16.xpose.msra.mxu0 0
  %592 = vmatprep.subr.bf16.mxu0 0
  %593 = vmatpush1.bf16.xpose.msra.mxu0 0
  %594 = vmatprep.subr.bf16.mxu0 0
  %595 = vmatpush1.bf16.xpose.msra.mxu0 0
  %596 = vmatprep.subr.bf16.mxu0 0
  %597 = vmatpush1.bf16.xpose.msra.mxu0 0
  %598 = vmatprep.subr.bf16.mxu0 0
  %599 = vmatpush1.bf16.xpose.msra.mxu0 0
  %600 = vmatprep.subr.bf16.mxu0 0
  %601 = vmatpush1.bf16.xpose.msra.mxu0 0
  %602 = vmatprep.subr.bf16.mxu0 0
  %603 = vmatpush1.bf16.xpose.msra.mxu0 0
  %604 = vmatprep.subr.bf16.mxu0 0
  %605 = vmatpush1.bf16.xpose.msra.mxu0 0
  %606 = vmatprep.subr.bf16.mxu0 0
  %607 = vmatpush1.bf16.xpose.msra.mxu0 0
  %608 = vmatprep.subr.bf16.mxu0 0
  %609 = vmatpush1.bf16.xpose.msra.mxu0 0
  %610 = vmatprep.mubr.bf16.mxu0 0
  %611 = vmatmul.mubr.bf16.gmra.mrb[0].mxu0 %v573
  %v612 = vpop.f32.mrb[0].mxu0
  %v613 = vadd.f32 0.0, %v612
  %v614 = vpop.f32.mrb[0].mxu0
  %v615 = vpop.f32.mrb[0].mxu0
  %v616 = vpop.f32.mrb[0].mxu0
  %617 = vdwg.mxu0
  %v618 = vsel %vm283, %v613, -inf
  %619 = vmax.xlane.f32.xlu0 %v618
  %v620 = vpop.xlane.xlu0 %619
  %v621 = vsub.f32 %v613, %v620
  %v622 = vmul.f32 %v621, 1.442695
  %v623 = vpow.pop %v622
  %v624 = vsel %vm283, %v623, 0.0
  %625 = vadd.xlane.f32.xlu0 %v624
  %v626 = vpop.xlane.xlu0 %625
  %v627 = vrcp.pop %v626
  %v628 = vmul.f32 %v623, %v627
  %v629 = vpack.c.bf16 %v628, %v628
  %631 = vrot.lane.b32.xlu0 %v460, 96
  %v632 = vpop.permute.xlu0 %631
  %v634 = vsel %vm283, %v629, 0
  %v637 = vsel %vm299, %v632, 0
  %639 = vmatprep.subr.bf16.mxu0 0
  %640 = vmatpush1.bf16.msra.mxu0 %v637
  %641 = vmatprep.subr.bf16.mxu0 0
  %642 = vmatpush1.bf16.msra.mxu0 0
  %643 = vmatprep.subr.bf16.mxu0 0
  %644 = vmatpush1.bf16.msra.mxu0 0
  %645 = vmatprep.subr.bf16.mxu0 0
  %646 = vmatpush1.bf16.msra.mxu0 0
  %647 = vmatprep.subr.bf16.mxu0 0
  %648 = vmatpush1.bf16.msra.mxu0 0
  %649 = vmatprep.subr.bf16.mxu0 0
  %650 = vmatpush1.bf16.msra.mxu0 0
  %651 = vmatprep.subr.bf16.mxu0 0
  %652 = vmatpush1.bf16.msra.mxu0 0
  %653 = vmatprep.subr.bf16.mxu0 0
  %654 = vmatpush1.bf16.msra.mxu0 0
  %655 = vmatprep.subr.bf16.mxu0 0
  %656 = vmatpush1.bf16.msra.mxu0 0
  %657 = vmatprep.subr.bf16.mxu0 0
  %658 = vmatpush1.bf16.msra.mxu0 0
  %659 = vmatprep.subr.bf16.mxu0 0
  %660 = vmatpush1.bf16.msra.mxu0 0
  %661 = vmatprep.subr.bf16.mxu0 0
  %662 = vmatpush1.bf16.msra.mxu0 0
  %663 = vmatprep.subr.bf16.mxu0 0
  %664 = vmatpush1.bf16.msra.mxu0 0
  %665 = vmatprep.subr.bf16.mxu0 0
  %666 = vmatpush1.bf16.msra.mxu0 0
  %667 = vmatprep.subr.bf16.mxu0 0
  %668 = vmatpush1.bf16.msra.mxu0 0
  %669 = vmatprep.subr.bf16.mxu0 0
  %670 = vmatpush1.bf16.msra.mxu0 0
  %671 = vmatprep.mubr.bf16.mxu0 0
  %672 = vmatmul.mubr.bf16.gmra.mrb[0].mxu0 %v634
  %v673 = vpop.f32.mrb[0].mxu0
  %v674 = vadd.f32 0.0, %v673
  %v675 = vpop.f32.mrb[0].mxu0
  %v676 = vpop.f32.mrb[0].mxu0
  %v677 = vpop.f32.mrb[0].mxu0
  %678 = vdwg.mxu0
  %680 = vrot.lane.b32.xlu0 %v674, 32
  %v681 = vpop.permute.xlu0 %680
  %v683 = vsel %vm236, %v563, %v681
  %v684 = vld [vmem:[%s9] sm:$0xf]
  %v685 = vld [vmem:[%s9 + $0x4] sm:$0xf]
  %v686 = vld [vmem:[%s9 + $0x8] sm:$0xf]
  %v687 = vld [vmem:[%s9 + $0xc] sm:$0xf]
  %v688 = vld [vmem:[%s9 + $0x10] sm:$0xf]
  %v689 = vld [vmem:[%s9 + $0x14] sm:$0xf]
  %v690 = vld [vmem:[%s9 + $0x18] sm:$0xf]
  %v691 = vld [vmem:[%s9 + $0x1c] sm:$0xf]
  %v692 = vpack.c.bf16 %v683, %v458
  %v693 = vld [vmem:[%s10] sm:$0x1]
  %v695 = vlaneseq
  %v696 = vshrl.u32 %v695, 7
  %v697 = vsub.s32 0, %v696
  %v698 = vrot.slane %v693, %v697
  %v708 = vunpack.c.l.b16 %v684
  %v709 = vunpack.c.l.b16 %v685
  %v710 = vunpack.c.l.b16 %v686
  %v711 = vunpack.c.l.b16 %v687
  %v712 = vunpack.c.l.b16 %v688
  %v713 = vunpack.c.l.b16 %v689
  %v714 = vunpack.c.l.b16 %v690
  %v715 = vunpack.c.l.b16 %v691
  %v716 = vpack.c.b16 %v709, %v708
  %v717 = vpack.c.b16 %v711, %v710
  %v718 = vpack.c.b16 %v713, %v712
  %v719 = vpack.c.b16 %v715, %v714
  %v725 = vsel %vm184, %v692, 0
  %727 = vmatprep.subr.bf16.mxu0 0
  %728 = vmatpush1.bf16.msra.mxu0 %v716
  %729 = vmatprep.subr.bf16.mxu0 0
  %730 = vmatpush1.bf16.msra.mxu0 %v717
  %731 = vmatprep.subr.bf16.mxu0 0
  %732 = vmatpush1.bf16.msra.mxu0 %v718
  %733 = vmatprep.subr.bf16.mxu0 0
  %734 = vmatpush1.bf16.msra.mxu0 %v719
  %735 = vmatprep.subr.bf16.mxu0 0
  %736 = vmatpush1.bf16.msra.mxu0 0
  %737 = vmatprep.subr.bf16.mxu0 0
  %738 = vmatpush1.bf16.msra.mxu0 0
  %739 = vmatprep.subr.bf16.mxu0 0
  %740 = vmatpush1.bf16.msra.mxu0 0
  %741 = vmatprep.subr.bf16.mxu0 0
  %742 = vmatpush1.bf16.msra.mxu0 0
  %743 = vmatprep.subr.bf16.mxu0 0
  %744 = vmatpush1.bf16.msra.mxu0 0
  %745 = vmatprep.subr.bf16.mxu0 0
  %746 = vmatpush1.bf16.msra.mxu0 0
  %747 = vmatprep.subr.bf16.mxu0 0
  %748 = vmatpush1.bf16.msra.mxu0 0
  %749 = vmatprep.subr.bf16.mxu0 0
  %750 = vmatpush1.bf16.msra.mxu0 0
  %751 = vmatprep.subr.bf16.mxu0 0
  %752 = vmatpush1.bf16.msra.mxu0 0
  %753 = vmatprep.subr.bf16.mxu0 0
  %754 = vmatpush1.bf16.msra.mxu0 0
  %755 = vmatprep.subr.bf16.mxu0 0
  %756 = vmatpush1.bf16.msra.mxu0 0
  %757 = vmatprep.subr.bf16.mxu0 0
  %758 = vmatpush1.bf16.msra.mxu0 0
  %759 = vmatprep.mubr.bf16.mxu0 0
  %760 = vmatmul.mubr.bf16.gmra.mrb[0].mxu0 %v725
  %v761 = vpop.f32.mrb[0].mxu0
  %v762 = vadd.f32 %v698, %v761
  %v763 = vpop.f32.mrb[0].mxu0
  %v764 = vpop.f32.mrb[0].mxu0
  %v765 = vadd.f32 %v698, %v764
  %v766 = vpop.f32.mrb[0].mxu0
  %767 = vdwg.mxu0
  %v768 = vadd.f32 %v117, %v762
  %v769 = vadd.f32 %v120, %v765
  %v770 = vld [vmem:[%s11] sm:$0x1]
  %v771 = vld [vmem:[%s12] sm:$0x1]
  %v772 = vsel %vm184, %v768, 0.0
  %773 = vadd.xlane.f32.xlu0 %v772
  %v774 = vpop.xlane.xlu0 %773
  %v775 = vsel %vm184, %v769, 0.0
  %776 = vadd.xlane.f32.xlu0 %v775
  %v777 = vpop.xlane.xlu0 %776
  %v778 = vrcp.pop 64.0
  %v779 = vmul.f32 %v774, %v778
  %v780 = vmul.f32 %v777, %v778
  %v781 = vsub.f32 %v768, %v779
  %v782 = vsub.f32 %v769, %v780
  %v783 = vmul.f32 %v781, %v781
  %v784 = vmul.f32 %v782, %v782
  %v785 = vsel %vm184, %v783, 0.0
  %786 = vadd.xlane.f32.xlu0 %v785
  %v787 = vpop.xlane.xlu0 %786
  %v788 = vsel %vm184, %v784, 0.0
  %789 = vadd.xlane.f32.xlu0 %v788
  %v790 = vpop.xlane.xlu0 %789
  %v791 = vmul.f32 %v787, %v778
  %v792 = vmul.f32 %v790, %v778
  %v793 = vadd.f32 %v791, 1e-05
  %v794 = vadd.f32 %v792, 1e-05
  %v795 = vrsqrt.pop %v793
  %v796 = vrsqrt.pop %v794
  %v797 = vmul.f32 %v781, %v795
  %v798 = vmul.f32 %v782, %v796
  %v800 = vlaneseq
  %v801 = vshrl.u32 %v800, 7
  %v802 = vsub.s32 0, %v801
  %v803 = vrot.slane %v770, %v802
  %v805 = vmul.f32 %v797, %v803
  %v806 = vmul.f32 %v798, %v803
  %v808 = vlaneseq
  %v809 = vshrl.u32 %v808, 7
  %v810 = vsub.s32 0, %v809
  %v811 = vrot.slane %v771, %v810
  %v813 = vadd.f32 %v805, %v811
  %v814 = vadd.f32 %v806, %v811
  %v815 = vld [vmem:[%s13] sm:$0xff]
  %v816 = vld [vmem:[%s13 + $0x8] sm:$0xff]
  %v817 = vld [vmem:[%s13 + $0x10] sm:$0xff]
  %v818 = vld [vmem:[%s13 + $0x18] sm:$0xff]
  %v819 = vld [vmem:[%s13 + $0x20] sm:$0xff]
  %v820 = vld [vmem:[%s13 + $0x28] sm:$0xff]
  %v821 = vld [vmem:[%s13 + $0x30] sm:$0xff]
  %v822 = vld [vmem:[%s13 + $0x38] sm:$0xff]
  %v823 = vld [vmem:[%s13 + $0x40] sm:$0xff]
  %v824 = vld [vmem:[%s13 + $0x48] sm:$0xff]
  %v825 = vld [vmem:[%s13 + $0x50] sm:$0xff]
  %v826 = vld [vmem:[%s13 + $0x58] sm:$0xff]
  %v827 = vld [vmem:[%s13 + $0x60] sm:$0xff]
  %v828 = vld [vmem:[%s13 + $0x68] sm:$0xff]
  %v829 = vld [vmem:[%s13 + $0x70] sm:$0xff]
  %v830 = vld [vmem:[%s13 + $0x78] sm:$0xff]
  %v831 = vld [vmem:[%s13 + $0x80] sm:$0xff]
  %v832 = vld [vmem:[%s13 + $0x88] sm:$0xff]
  %v833 = vld [vmem:[%s13 + $0x90] sm:$0xff]
  %v834 = vld [vmem:[%s13 + $0x98] sm:$0xff]
  %v835 = vld [vmem:[%s13 + $0xa0] sm:$0xff]
  %v836 = vld [vmem:[%s13 + $0xa8] sm:$0xff]
  %v837 = vld [vmem:[%s13 + $0xb0] sm:$0xff]
  %v838 = vld [vmem:[%s13 + $0xb8] sm:$0xff]
  %v839 = vld [vmem:[%s13 + $0xc0] sm:$0xff]
  %v840 = vld [vmem:[%s13 + $0xc8] sm:$0xff]
  %v841 = vld [vmem:[%s13 + $0xd0] sm:$0xff]
  %v842 = vld [vmem:[%s13 + $0xd8] sm:$0xff]
  %v843 = vld [vmem:[%s13 + $0xe0] sm:$0xff]
  %v844 = vld [vmem:[%s13 + $0xe8] sm:$0xff]
  %v845 = vld [vmem:[%s13 + $0xf0] sm:$0xff]
  %v846 = vld [vmem:[%s13 + $0xf8] sm:$0xff]
  %v847 = vld [vmem:[%s13 + $0x100] sm:$0xff]
  %v848 = vld [vmem:[%s13 + $0x108] sm:$0xff]
  %v849 = vld [vmem:[%s13 + $0x110] sm:$0xff]
  %v850 = vld [vmem:[%s13 + $0x118] sm:$0xff]
  %v851 = vld [vmem:[%s13 + $0x120] sm:$0xff]
  %v852 = vld [vmem:[%s13 + $0x128] sm:$0xff]
  %v853 = vld [vmem:[%s13 + $0x130] sm:$0xff]
  %v854 = vld [vmem:[%s13 + $0x138] sm:$0xff]
  %v855 = vld [vmem:[%s13 + $0x140] sm:$0xff]
  %v856 = vld [vmem:[%s13 + $0x148] sm:$0xff]
  %v857 = vld [vmem:[%s13 + $0x150] sm:$0xff]
  %v858 = vld [vmem:[%s13 + $0x158] sm:$0xff]
  %v859 = vld [vmem:[%s13 + $0x160] sm:$0xff]
  %v860 = vld [vmem:[%s13 + $0x168] sm:$0xff]
  %v861 = vld [vmem:[%s13 + $0x170] sm:$0xff]
  %v862 = vld [vmem:[%s13 + $0x178] sm:$0xff]
  %v863 = vld [vmem:[%s13 + $0x180] sm:$0xff]
  %v864 = vld [vmem:[%s13 + $0x188] sm:$0xff]
  %v865 = vld [vmem:[%s13 + $0x190] sm:$0xff]
  %v866 = vld [vmem:[%s13 + $0x198] sm:$0xff]
  %v867 = vld [vmem:[%s13 + $0x1a0] sm:$0xff]
  %v868 = vld [vmem:[%s13 + $0x1a8] sm:$0xff]
  %v869 = vld [vmem:[%s13 + $0x1b0] sm:$0xff]
  %v870 = vld [vmem:[%s13 + $0x1b8] sm:$0xff]
  %v871 = vld [vmem:[%s13 + $0x1c0] sm:$0xff]
  %v872 = vld [vmem:[%s13 + $0x1c8] sm:$0xff]
  %v873 = vld [vmem:[%s13 + $0x1d0] sm:$0xff]
  %v874 = vld [vmem:[%s13 + $0x1d8] sm:$0xff]
  %v875 = vld [vmem:[%s13 + $0x1e0] sm:$0xff]
  %v876 = vld [vmem:[%s13 + $0x1e8] sm:$0xff]
  %v877 = vld [vmem:[%s13 + $0x1f0] sm:$0xff]
  %v878 = vld [vmem:[%s13 + $0x1f8] sm:$0xff]
  %v879 = vpack.c.bf16 %v814, %v813
  %v880 = vld [vmem:[%s14] sm:$0xff]
  %v881 = vld [vmem:[%s14 + $0x8] sm:$0xff]
  %v884 = vlaneseq
  %v885 = vshrl.u32 %v884, 7
  %v886 = vsub.s32 0, %v885
  %v887 = vrot.slane %v880, %v886
  %v888 = vlaneseq
  %v889 = vshrl.u32 %v888, 7
  %v890 = vsub.s32 1, %v889
  %v891 = vrot.slane %v880, %v890
  %v892 = vlaneseq
  %v893 = vshrl.u32 %v892, 7
  %v894 = vsub.s32 2, %v893
  %v895 = vrot.slane %v880, %v894
  %v896 = vlaneseq
  %v897 = vshrl.u32 %v896, 7
  %v898 = vsub.s32 3, %v897
  %v899 = vrot.slane %v880, %v898
  %v900 = vlaneseq
  %v901 = vshrl.u32 %v900, 7
  %v902 = vsub.s32 4, %v901
  %v903 = vrot.slane %v880, %v902
  %v904 = vlaneseq
  %v905 = vshrl.u32 %v904, 7
  %v906 = vsub.s32 5, %v905
  %v907 = vrot.slane %v880, %v906
  %v908 = vlaneseq
  %v909 = vshrl.u32 %v908, 7
  %v910 = vsub.s32 6, %v909
  %v911 = vrot.slane %v880, %v910
  %v912 = vlaneseq
  %v913 = vshrl.u32 %v912, 7
  %v914 = vsub.s32 7, %v913
  %v915 = vrot.slane %v880, %v914
  %v916 = vlaneseq
  %v917 = vshrl.u32 %v916, 7
  %v918 = vsub.s32 0, %v917
  %v919 = vrot.slane %v881, %v918
  %v920 = vlaneseq
  %v921 = vshrl.u32 %v920, 7
  %v922 = vsub.s32 1, %v921
  %v923 = vrot.slane %v881, %v922
  %v924 = vlaneseq
  %v925 = vshrl.u32 %v924, 7
  %v926 = vsub.s32 2, %v925
  %v927 = vrot.slane %v881, %v926
  %v928 = vlaneseq
  %v929 = vshrl.u32 %v928, 7
  %v930 = vsub.s32 3, %v929
  %v931 = vrot.slane %v881, %v930
  %v932 = vlaneseq
  %v933 = vshrl.u32 %v932, 7
  %v934 = vsub.s32 4, %v933
  %v935 = vrot.slane %v881, %v934
  %v936 = vlaneseq
  %v937 = vshrl.u32 %v936, 7
  %v938 = vsub.s32 5, %v937
  %v939 = vrot.slane %v881, %v938
  %v940 = vlaneseq
  %v941 = vshrl.u32 %v940, 7
  %v942 = vsub.s32 6, %v941
  %v943 = vrot.slane %v881, %v942
  %v944 = vlaneseq
  %v945 = vshrl.u32 %v944, 7
  %v946 = vsub.s32 7, %v945
  %v947 = vrot.slane %v881, %v946
  %v1028 = vunpack.c.l.b16 %v815
  %v1029 = vunpack.c.h.b16 %v815
  %v1030 = vunpack.c.l.b16 %v816
  %v1031 = vunpack.c.h.b16 %v816
  %v1032 = vunpack.c.l.b16 %v817
  %v1033 = vunpack.c.h.b16 %v817
  %v1034 = vunpack.c.l.b16 %v818
  %v1035 = vunpack.c.h.b16 %v818
  %v1036 = vunpack.c.l.b16 %v819
  %v1037 = vunpack.c.h.b16 %v819
  %v1038 = vunpack.c.l.b16 %v820
  %v1039 = vunpack.c.h.b16 %v820
  %v1040 = vunpack.c.l.b16 %v821
  %v1041 = vunpack.c.h.b16 %v821
  %v1042 = vunpack.c.l.b16 %v822
  %v1043 = vunpack.c.h.b16 %v822
  %v1044 = vunpack.c.l.b16 %v823
  %v1045 = vunpack.c.h.b16 %v823
  %v1046 = vunpack.c.l.b16 %v824
  %v1047 = vunpack.c.h.b16 %v824
  %v1048 = vunpack.c.l.b16 %v825
  %v1049 = vunpack.c.h.b16 %v825
  %v1050 = vunpack.c.l.b16 %v826
  %v1051 = vunpack.c.h.b16 %v826
  %v1052 = vunpack.c.l.b16 %v827
  %v1053 = vunpack.c.h.b16 %v827
  %v1054 = vunpack.c.l.b16 %v828
  %v1055 = vunpack.c.h.b16 %v828
  %v1056 = vunpack.c.l.b16 %v829
  %v1057 = vunpack.c.h.b16 %v829
  %v1058 = vunpack.c.l.b16 %v830
  %v1059 = vunpack.c.h.b16 %v830
  %v1060 = vunpack.c.l.b16 %v831
  %v1061 = vunpack.c.h.b16 %v831
  %v1062 = vunpack.c.l.b16 %v832
  %v1063 = vunpack.c.h.b16 %v832
  %v1064 = vunpack.c.l.b16 %v833
  %v1065 = vunpack.c.h.b16 %v833
  %v1066 = vunpack.c.l.b16 %v834
  %v1067 = vunpack.c.h.b16 %v834
  %v1068 = vunpack.c.l.b16 %v835
  %v1069 = vunpack.c.h.b16 %v835
  %v1070 = vunpack.c.l.b16 %v836
  %v1071 = vunpack.c.h.b16 %v836
  %v1072 = vunpack.c.l.b16 %v837
  %v1073 = vunpack.c.h.b16 %v837
  %v1074 = vunpack.c.l.b16 %v838
  %v1075 = vunpack.c.h.b16 %v838
  %v1076 = vunpack.c.l.b16 %v839
  %v1077 = vunpack.c.h.b16 %v839
  %v1078 = vunpack.c.l.b16 %v840
  %v1079 = vunpack.c.h.b16 %v840
  %v1080 = vunpack.c.l.b16 %v841
  %v1081 = vunpack.c.h.b16 %v841
  %v1082 = vunpack.c.l.b16 %v842
  %v1083 = vunpack.c.h.b16 %v842
  %v1084 = vunpack.c.l.b16 %v843
  %v1085 = vunpack.c.h.b16 %v843
  %v1086 = vunpack.c.l.b16 %v844
  %v1087 = vunpack.c.h.b16 %v844
  %v1088 = vunpack.c.l.b16 %v845
  %v1089 = vunpack.c.h.b16 %v845
  %v1090 = vunpack.c.l.b16 %v846
  %v1091 = vunpack.c.h.b16 %v846
  %v1092 = vunpack.c.l.b16 %v847
  %v1093 = vunpack.c.h.b16 %v847
  %v1094 = vunpack.c.l.b16 %v848
  %v1095 = vunpack.c.h.b16 %v848
  %v1096 = vunpack.c.l.b16 %v849
  %v1097 = vunpack.c.h.b16 %v849
  %v1098 = vunpack.c.l.b16 %v850
  %v1099 = vunpack.c.h.b16 %v850
  %v1100 = vunpack.c.l.b16 %v851
  %v1101 = vunpack.c.h.b16 %v851
  %v1102 = vunpack.c.l.b16 %v852
  %v1103 = vunpack.c.h.b16 %v852
  %v1104 = vunpack.c.l.b16 %v853
  %v1105 = vunpack.c.h.b16 %v853
  %v1106 = vunpack.c.l.b16 %v854
  %v1107 = vunpack.c.h.b16 %v854
  %v1108 = vunpack.c.l.b16 %v855
  %v1109 = vunpack.c.h.b16 %v855
  %v1110 = vunpack.c.l.b16 %v856
  %v1111 = vunpack.c.h.b16 %v856
  %v1112 = vunpack.c.l.b16 %v857
  %v1113 = vunpack.c.h.b16 %v857
  %v1114 = vunpack.c.l.b16 %v858
  %v1115 = vunpack.c.h.b16 %v858
  %v1116 = vunpack.c.l.b16 %v859
  %v1117 = vunpack.c.h.b16 %v859
  %v1118 = vunpack.c.l.b16 %v860
  %v1119 = vunpack.c.h.b16 %v860
  %v1120 = vunpack.c.l.b16 %v861
  %v1121 = vunpack.c.h.b16 %v861
  %v1122 = vunpack.c.l.b16 %v862
  %v1123 = vunpack.c.h.b16 %v862
  %v1124 = vunpack.c.l.b16 %v863
  %v1125 = vunpack.c.h.b16 %v863
  %v1126 = vunpack.c.l.b16 %v864
  %v1127 = vunpack.c.h.b16 %v864
  %v1128 = vunpack.c.l.b16 %v865
  %v1129 = vunpack.c.h.b16 %v865
  %v1130 = vunpack.c.l.b16 %v866
  %v1131 = vunpack.c.h.b16 %v866
  %v1132 = vunpack.c.l.b16 %v867
  %v1133 = vunpack.c.h.b16 %v867
  %v1134 = vunpack.c.l.b16 %v868
  %v1135 = vunpack.c.h.b16 %v868
  %v1136 = vunpack.c.l.b16 %v869
  %v1137 = vunpack.c.h.b16 %v869
  %v1138 = vunpack.c.l.b16 %v870
  %v1139 = vunpack.c.h.b16 %v870
  %v1140 = vunpack.c.l.b16 %v871
  %v1141 = vunpack.c.h.b16 %v871
  %v1142 = vunpack.c.l.b16 %v872
  %v1143 = vunpack.c.h.b16 %v872
  %v1144 = vunpack.c.l.b16 %v873
  %v1145 = vunpack.c.h.b16 %v873
  %v1146 = vunpack.c.l.b16 %v874
  %v1147 = vunpack.c.h.b16 %v874
  %v1148 = vunpack.c.l.b16 %v875
  %v1149 = vunpack.c.h.b16 %v875
  %v1150 = vunpack.c.l.b16 %v876
  %v1151 = vunpack.c.h.b16 %v876
  %v1152 = vunpack.c.l.b16 %v877
  %v1153 = vunpack.c.h.b16 %v877
  %v1154 = vunpack.c.l.b16 %v878
  %v1155 = vunpack.c.h.b16 %v878
  %v1156 = vpack.c.b16 %v1044, %v1028
  %v1157 = vpack.c.b16 %v1045, %v1029
  %v1158 = vpack.c.b16 %v1046, %v1030
  %v1159 = vpack.c.b16 %v1047, %v1031
  %v1160 = vpack.c.b16 %v1048, %v1032
  %v1161 = vpack.c.b16 %v1049, %v1033
  %v1162 = vpack.c.b16 %v1050, %v1034
  %v1163 = vpack.c.b16 %v1051, %v1035
  %v1164 = vpack.c.b16 %v1052, %v1036
  %v1165 = vpack.c.b16 %v1053, %v1037
  %v1166 = vpack.c.b16 %v1054, %v1038
  %v1167 = vpack.c.b16 %v1055, %v1039
  %v1168 = vpack.c.b16 %v1056, %v1040
  %v1169 = vpack.c.b16 %v1057, %v1041
  %v1170 = vpack.c.b16 %v1058, %v1042
  %v1171 = vpack.c.b16 %v1059, %v1043
  %v1172 = vpack.c.b16 %v1076, %v1060
  %v1173 = vpack.c.b16 %v1077, %v1061
  %v1174 = vpack.c.b16 %v1078, %v1062
  %v1175 = vpack.c.b16 %v1079, %v1063
  %v1176 = vpack.c.b16 %v1080, %v1064
  %v1177 = vpack.c.b16 %v1081, %v1065
  %v1178 = vpack.c.b16 %v1082, %v1066
  %v1179 = vpack.c.b16 %v1083, %v1067
  %v1180 = vpack.c.b16 %v1084, %v1068
  %v1181 = vpack.c.b16 %v1085, %v1069
  %v1182 = vpack.c.b16 %v1086, %v1070
  %v1183 = vpack.c.b16 %v1087, %v1071
  %v1184 = vpack.c.b16 %v1088, %v1072
  %v1185 = vpack.c.b16 %v1089, %v1073
  %v1186 = vpack.c.b16 %v1090, %v1074
  %v1187 = vpack.c.b16 %v1091, %v1075
  %v1188 = vpack.c.b16 %v1108, %v1092
  %v1189 = vpack.c.b16 %v1109, %v1093
  %v1190 = vpack.c.b16 %v1110, %v1094
  %v1191 = vpack.c.b16 %v1111, %v1095
  %v1192 = vpack.c.b16 %v1112, %v1096
  %v1193 = vpack.c.b16 %v1113, %v1097
  %v1194 = vpack.c.b16 %v1114, %v1098
  %v1195 = vpack.c.b16 %v1115, %v1099
  %v1196 = vpack.c.b16 %v1116, %v1100
  %v1197 = vpack.c.b16 %v1117, %v1101
  %v1198 = vpack.c.b16 %v1118, %v1102
  %v1199 = vpack.c.b16 %v1119, %v1103
  %v1200 = vpack.c.b16 %v1120, %v1104
  %v1201 = vpack.c.b16 %v1121, %v1105
  %v1202 = vpack.c.b16 %v1122, %v1106
  %v1203 = vpack.c.b16 %v1123, %v1107
  %v1204 = vpack.c.b16 %v1140, %v1124
  %v1205 = vpack.c.b16 %v1141, %v1125
  %v1206 = vpack.c.b16 %v1142, %v1126
  %v1207 = vpack.c.b16 %v1143, %v1127
  %v1208 = vpack.c.b16 %v1144, %v1128
  %v1209 = vpack.c.b16 %v1145, %v1129
  %v1210 = vpack.c.b16 %v1146, %v1130
  %v1211 = vpack.c.b16 %v1147, %v1131
  %v1212 = vpack.c.b16 %v1148, %v1132
  %v1213 = vpack.c.b16 %v1149, %v1133
  %v1214 = vpack.c.b16 %v1150, %v1134
  %v1215 = vpack.c.b16 %v1151, %v1135
  %v1216 = vpack.c.b16 %v1152, %v1136
  %v1217 = vpack.c.b16 %v1153, %v1137
  %v1218 = vpack.c.b16 %v1154, %v1138
  %v1219 = vpack.c.b16 %v1155, %v1139
  %v1285 = vsel %vm184, %v879, 0
  %1287 = vmatprep.subr.bf16.mxu0 %v1157
  %1288 = vmatpush1.bf16.msra.mxu0 %v1156
  %1289 = vmatprep.subr.bf16.mxu0 %v1173
  %1290 = vmatpush1.bf16.msra.mxu0 %v1172
  %1291 = vmatprep.subr.bf16.mxu0 %v1189
  %1292 = vmatpush1.bf16.msra.mxu0 %v1188
  %1293 = vmatprep.subr.bf16.mxu0 %v1205
  %1294 = vmatpush1.bf16.msra.mxu0 %v1204
  %1295 = vmatprep.subr.bf16.mxu0 0
  %1296 = vmatpush1.bf16.msra.mxu0 0
  %1297 = vmatprep.subr.bf16.mxu0 0
  %1298 = vmatpush1.bf16.msra.mxu0 0
  %1299 = vmatprep.subr.bf16.mxu0 0
  %1300 = vmatpush1.bf16.msra.mxu0 0
  %1301 = vmatprep.subr.bf16.mxu0 0
  %1302 = vmatpush1.bf16.msra.mxu0 0
  %1303 = vmatprep.subr.bf16.mxu0 0
  %1304 = vmatpush1.bf16.msra.mxu0 0
  %1305 = vmatprep.subr.bf16.mxu0 0
  %1306 = vmatpush1.bf16.msra.mxu0 0
  %1307 = vmatprep.subr.bf16.mxu0 0
  %1308 = vmatpush1.bf16.msra.mxu0 0
  %1309 = vmatprep.subr.bf16.mxu0 0
  %1310 = vmatpush1.bf16.msra.mxu0 0
  %1311 = vmatprep.subr.bf16.mxu0 0
  %1312 = vmatpush1.bf16.msra.mxu0 0
  %1313 = vmatprep.subr.bf16.mxu0 0
  %1314 = vmatpush1.bf16.msra.mxu0 0
  %1315 = vmatprep.subr.bf16.mxu0 0
  %1316 = vmatpush1.bf16.msra.mxu0 0
  %1317 = vmatprep.subr.bf16.mxu0 0
  %1318 = vmatpush1.bf16.msra.mxu0 0
  %1319 = vmatprep.mubr.bf16.mxu0 0
  %1320 = vmatmul.mubr.bf16.gmra.mrb[0].mxu0 %v1285
  %v1321 = vpop.f32.mrb[0].mxu0
  %v1322 = vadd.f32 %v887, %v1321
  %v1323 = vpop.f32.mrb[0].mxu0
  %v1324 = vadd.f32 %v891, %v1323
  %v1325 = vpop.f32.mrb[0].mxu0
  %v1326 = vadd.f32 %v887, %v1325
  %v1327 = vpop.f32.mrb[0].mxu0
  %v1328 = vadd.f32 %v891, %v1327
  %1329 = vdwg.mxu0
  %1330 = vmatprep.subr.bf16.mxu0 %v1159
  %1331 = vmatpush1.bf16.msra.mxu0 %v1158
  %1332 = vmatprep.subr.bf16.mxu0 %v1175
  %1333 = vmatpush1.bf16.msra.mxu0 %v1174
  %1334 = vmatprep.subr.bf16.mxu0 %v1191
  %1335 = vmatpush1.bf16.msra.mxu0 %v1190
  %1336 = vmatprep.subr.bf16.mxu0 %v1207
  %1337 = vmatpush1.bf16.msra.mxu0 %v1206
  %1338 = vmatprep.subr.bf16.mxu0 0
  %1339 = vmatpush1.bf16.msra.mxu0 0
  %1340 = vmatprep.subr.bf16.mxu0 0
  %1341 = vmatpush1.bf16.msra.mxu0 0
  %1342 = vmatprep.subr.bf16.mxu0 0
  %1343 = vmatpush1.bf16.msra.mxu0 0
  %1344 = vmatprep.subr.bf16.mxu0 0
  %1345 = vmatpush1.bf16.msra.mxu0 0
  %1346 = vmatprep.subr.bf16.mxu0 0
  %1347 = vmatpush1.bf16.msra.mxu0 0
  %1348 = vmatprep.subr.bf16.mxu0 0
  %1349 = vmatpush1.bf16.msra.mxu0 0
  %1350 = vmatprep.subr.bf16.mxu0 0
  %1351 = vmatpush1.bf16.msra.mxu0 0
  %1352 = vmatprep.subr.bf16.mxu0 0
  %1353 = vmatpush1.bf16.msra.mxu0 0
  %1354 = vmatprep.subr.bf16.mxu0 0
  %1355 = vmatpush1.bf16.msra.mxu0 0
  %1356 = vmatprep.subr.bf16.mxu0 0
  %1357 = vmatpush1.bf16.msra.mxu0 0
  %1358 = vmatprep.subr.bf16.mxu0 0
  %1359 = vmatpush1.bf16.msra.mxu0 0
  %1360 = vmatprep.subr.bf16.mxu0 0
  %1361 = vmatpush1.bf16.msra.mxu0 0
  %1362 = vmatprep.mubr.bf16.mxu0 0
  %1363 = vmatmul.mubr.bf16.gmra.mrb[0].mxu0 %v1285
  %v1364 = vpop.f32.mrb[0].mxu0
  %v1365 = vadd.f32 %v895, %v1364
  %v1366 = vpop.f32.mrb[0].mxu0
  %v1367 = vadd.f32 %v899, %v1366
  %v1368 = vpop.f32.mrb[0].mxu0
  %v1369 = vadd.f32 %v895, %v1368
  %v1370 = vpop.f32.mrb[0].mxu0
  %v1371 = vadd.f32 %v899, %v1370
  %1372 = vdwg.mxu0
  %1373 = vmatprep.subr.bf16.mxu0 %v1161
  %1374 = vmatpush1.bf16.msra.mxu0 %v1160
  %1375 = vmatprep.subr.bf16.mxu0 %v1177
  %1376 = vmatpush1.bf16.msra.mxu0 %v1176
  %1377 = vmatprep.subr.bf16.mxu0 %v1193
  %1378 = vmatpush1.bf16.msra.mxu0 %v1192
  %1379 = vmatprep.subr.bf16.mxu0 %v1209
  %1380 = vmatpush1.bf16.msra.mxu0 %v1208
  %1381 = vmatprep.subr.bf16.mxu0 0
  %1382 = vmatpush1.bf16.msra.mxu0 0
  %1383 = vmatprep.subr.bf16.mxu0 0
  %1384 = vmatpush1.bf16.msra.mxu0 0
  %1385 = vmatprep.subr.bf16.mxu0 0
  %1386 = vmatpush1.bf16.msra.mxu0 0
  %1387 = vmatprep.subr.bf16.mxu0 0
  %1388 = vmatpush1.bf16.msra.mxu0 0
  %1389 = vmatprep.subr.bf16.mxu0 0
  %1390 = vmatpush1.bf16.msra.mxu0 0
  %1391 = vmatprep.subr.bf16.mxu0 0
  %1392 = vmatpush1.bf16.msra.mxu0 0
  %1393 = vmatprep.subr.bf16.mxu0 0
  %1394 = vmatpush1.bf16.msra.mxu0 0
  %1395 = vmatprep.subr.bf16.mxu0 0
  %1396 = vmatpush1.bf16.msra.mxu0 0
  %1397 = vmatprep.subr.bf16.mxu0 0
  %1398 = vmatpush1.bf16.msra.mxu0 0
  %1399 = vmatprep.subr.bf16.mxu0 0
  %1400 = vmatpush1.bf16.msra.mxu0 0
  %1401 = vmatprep.subr.bf16.mxu0 0
  %1402 = vmatpush1.bf16.msra.mxu0 0
  %1403 = vmatprep.subr.bf16.mxu0 0
  %1404 = vmatpush1.bf16.msra.mxu0 0
  %1405 = vmatprep.mubr.bf16.mxu0 0
  %1406 = vmatmul.mubr.bf16.gmra.mrb[0].mxu0 %v1285
  %v1407 = vpop.f32.mrb[0].mxu0
  %v1408 = vadd.f32 %v903, %v1407
  %v1409 = vpop.f32.mrb[0].mxu0
  %v1410 = vadd.f32 %v907, %v1409
  %v1411 = vpop.f32.mrb[0].mxu0
  %v1412 = vadd.f32 %v903, %v1411
  %v1413 = vpop.f32.mrb[0].mxu0
  %v1414 = vadd.f32 %v907, %v1413
  %1415 = vdwg.mxu0
  %1416 = vmatprep.subr.bf16.mxu0 %v1163
  %1417 = vmatpush1.bf16.msra.mxu0 %v1162
  %1418 = vmatprep.subr.bf16.mxu0 %v1179
  %1419 = vmatpush1.bf16.msra.mxu0 %v1178
  %1420 = vmatprep.subr.bf16.mxu0 %v1195
  %1421 = vmatpush1.bf16.msra.mxu0 %v1194
  %1422 = vmatprep.subr.bf16.mxu0 %v1211
  %1423 = vmatpush1.bf16.msra.mxu0 %v1210
  %1424 = vmatprep.subr.bf16.mxu0 0
  %1425 = vmatpush1.bf16.msra.mxu0 0
  %1426 = vmatprep.subr.bf16.mxu0 0
  %1427 = vmatpush1.bf16.msra.mxu0 0
  %1428 = vmatprep.subr.bf16.mxu0 0
  %1429 = vmatpush1.bf16.msra.mxu0 0
  %1430 = vmatprep.subr.bf16.mxu0 0
  %1431 = vmatpush1.bf16.msra.mxu0 0
  %1432 = vmatprep.subr.bf16.mxu0 0
  %1433 = vmatpush1.bf16.msra.mxu0 0
  %1434 = vmatprep.subr.bf16.mxu0 0
  %1435 = vmatpush1.bf16.msra.mxu0 0
  %1436 = vmatprep.subr.bf16.mxu0 0
  %1437 = vmatpush1.bf16.msra.mxu0 0
  %1438 = vmatprep.subr.bf16.mxu0 0
  %1439 = vmatpush1.bf16.msra.mxu0 0
  %1440 = vmatprep.subr.bf16.mxu0 0
  %1441 = vmatpush1.bf16.msra.mxu0 0
  %1442 = vmatprep.subr.bf16.mxu0 0
  %1443 = vmatpush1.bf16.msra.mxu0 0
  %1444 = vmatprep.subr.bf16.mxu0 0
  %1445 = vmatpush1.bf16.msra.mxu0 0
  %1446 = vmatprep.subr.bf16.mxu0 0
  %1447 = vmatpush1.bf16.msra.mxu0 0
  %1448 = vmatprep.mubr.bf16.mxu0 0
  %1449 = vmatmul.mubr.bf16.gmra.mrb[0].mxu0 %v1285
  %v1450 = vpop.f32.mrb[0].mxu0
  %v1451 = vadd.f32 %v911, %v1450
  %v1452 = vpop.f32.mrb[0].mxu0
  %v1453 = vadd.f32 %v915, %v1452
  %v1454 = vpop.f32.mrb[0].mxu0
  %v1455 = vadd.f32 %v911, %v1454
  %v1456 = vpop.f32.mrb[0].mxu0
  %v1457 = vadd.f32 %v915, %v1456
  %1458 = vdwg.mxu0
  %1459 = vmatprep.subr.bf16.mxu0 %v1165
  %1460 = vmatpush1.bf16.msra.mxu0 %v1164
  %1461 = vmatprep.subr.bf16.mxu0 %v1181
  %1462 = vmatpush1.bf16.msra.mxu0 %v1180
  %1463 = vmatprep.subr.bf16.mxu0 %v1197
  %1464 = vmatpush1.bf16.msra.mxu0 %v1196
  %1465 = vmatprep.subr.bf16.mxu0 %v1213
  %1466 = vmatpush1.bf16.msra.mxu0 %v1212
  %1467 = vmatprep.subr.bf16.mxu0 0
  %1468 = vmatpush1.bf16.msra.mxu0 0
  %1469 = vmatprep.subr.bf16.mxu0 0
  %1470 = vmatpush1.bf16.msra.mxu0 0
  %1471 = vmatprep.subr.bf16.mxu0 0
  %1472 = vmatpush1.bf16.msra.mxu0 0
  %1473 = vmatprep.subr.bf16.mxu0 0
  %1474 = vmatpush1.bf16.msra.mxu0 0
  %1475 = vmatprep.subr.bf16.mxu0 0
  %1476 = vmatpush1.bf16.msra.mxu0 0
  %1477 = vmatprep.subr.bf16.mxu0 0
  %1478 = vmatpush1.bf16.msra.mxu0 0
  %1479 = vmatprep.subr.bf16.mxu0 0
  %1480 = vmatpush1.bf16.msra.mxu0 0
  %1481 = vmatprep.subr.bf16.mxu0 0
  %1482 = vmatpush1.bf16.msra.mxu0 0
  %1483 = vmatprep.subr.bf16.mxu0 0
  %1484 = vmatpush1.bf16.msra.mxu0 0
  %1485 = vmatprep.subr.bf16.mxu0 0
  %1486 = vmatpush1.bf16.msra.mxu0 0
  %1487 = vmatprep.subr.bf16.mxu0 0
  %1488 = vmatpush1.bf16.msra.mxu0 0
  %1489 = vmatprep.subr.bf16.mxu0 0
  %1490 = vmatpush1.bf16.msra.mxu0 0
  %1491 = vmatprep.mubr.bf16.mxu0 0
  %1492 = vmatmul.mubr.bf16.gmra.mrb[0].mxu0 %v1285
  %v1493 = vpop.f32.mrb[0].mxu0
  %v1494 = vadd.f32 %v919, %v1493
  %v1495 = vpop.f32.mrb[0].mxu0
  %v1496 = vadd.f32 %v923, %v1495
  %v1497 = vpop.f32.mrb[0].mxu0
  %v1498 = vadd.f32 %v919, %v1497
  %v1499 = vpop.f32.mrb[0].mxu0
  %v1500 = vadd.f32 %v923, %v1499
  %1501 = vdwg.mxu0
  %1502 = vmatprep.subr.bf16.mxu0 %v1167
  %1503 = vmatpush1.bf16.msra.mxu0 %v1166
  %1504 = vmatprep.subr.bf16.mxu0 %v1183
  %1505 = vmatpush1.bf16.msra.mxu0 %v1182
  %1506 = vmatprep.subr.bf16.mxu0 %v1199
  %1507 = vmatpush1.bf16.msra.mxu0 %v1198
  %1508 = vmatprep.subr.bf16.mxu0 %v1215
  %1509 = vmatpush1.bf16.msra.mxu0 %v1214
  %1510 = vmatprep.subr.bf16.mxu0 0
  %1511 = vmatpush1.bf16.msra.mxu0 0
  %1512 = vmatprep.subr.bf16.mxu0 0
  %1513 = vmatpush1.bf16.msra.mxu0 0
  %1514 = vmatprep.subr.bf16.mxu0 0
  %1515 = vmatpush1.bf16.msra.mxu0 0
  %1516 = vmatprep.subr.bf16.mxu0 0
  %1517 = vmatpush1.bf16.msra.mxu0 0
  %1518 = vmatprep.subr.bf16.mxu0 0
  %1519 = vmatpush1.bf16.msra.mxu0 0
  %1520 = vmatprep.subr.bf16.mxu0 0
  %1521 = vmatpush1.bf16.msra.mxu0 0
  %1522 = vmatprep.subr.bf16.mxu0 0
  %1523 = vmatpush1.bf16.msra.mxu0 0
  %1524 = vmatprep.subr.bf16.mxu0 0
  %1525 = vmatpush1.bf16.msra.mxu0 0
  %1526 = vmatprep.subr.bf16.mxu0 0
  %1527 = vmatpush1.bf16.msra.mxu0 0
  %1528 = vmatprep.subr.bf16.mxu0 0
  %1529 = vmatpush1.bf16.msra.mxu0 0
  %1530 = vmatprep.subr.bf16.mxu0 0
  %1531 = vmatpush1.bf16.msra.mxu0 0
  %1532 = vmatprep.subr.bf16.mxu0 0
  %1533 = vmatpush1.bf16.msra.mxu0 0
  %1534 = vmatprep.mubr.bf16.mxu0 0
  %1535 = vmatmul.mubr.bf16.gmra.mrb[0].mxu0 %v1285
  %v1536 = vpop.f32.mrb[0].mxu0
  %v1537 = vadd.f32 %v927, %v1536
  %v1538 = vpop.f32.mrb[0].mxu0
  %v1539 = vadd.f32 %v931, %v1538
  %v1540 = vpop.f32.mrb[0].mxu0
  %v1541 = vadd.f32 %v927, %v1540
  %v1542 = vpop.f32.mrb[0].mxu0
  %v1543 = vadd.f32 %v931, %v1542
  %1544 = vdwg.mxu0
  %1545 = vmatprep.subr.bf16.mxu0 %v1169
  %1546 = vmatpush1.bf16.msra.mxu0 %v1168
  %1547 = vmatprep.subr.bf16.mxu0 %v1185
  %1548 = vmatpush1.bf16.msra.mxu0 %v1184
  %1549 = vmatprep.subr.bf16.mxu0 %v1201
  %1550 = vmatpush1.bf16.msra.mxu0 %v1200
  %1551 = vmatprep.subr.bf16.mxu0 %v1217
  %1552 = vmatpush1.bf16.msra.mxu0 %v1216
  %1553 = vmatprep.subr.bf16.mxu0 0
  %1554 = vmatpush1.bf16.msra.mxu0 0
  %1555 = vmatprep.subr.bf16.mxu0 0
  %1556 = vmatpush1.bf16.msra.mxu0 0
  %1557 = vmatprep.subr.bf16.mxu0 0
  %1558 = vmatpush1.bf16.msra.mxu0 0
  %1559 = vmatprep.subr.bf16.mxu0 0
  %1560 = vmatpush1.bf16.msra.mxu0 0
  %1561 = vmatprep.subr.bf16.mxu0 0
  %1562 = vmatpush1.bf16.msra.mxu0 0
  %1563 = vmatprep.subr.bf16.mxu0 0
  %1564 = vmatpush1.bf16.msra.mxu0 0
  %1565 = vmatprep.subr.bf16.mxu0 0
  %1566 = vmatpush1.bf16.msra.mxu0 0
  %1567 = vmatprep.subr.bf16.mxu0 0
  %1568 = vmatpush1.bf16.msra.mxu0 0
  %1569 = vmatprep.subr.bf16.mxu0 0
  %1570 = vmatpush1.bf16.msra.mxu0 0
  %1571 = vmatprep.subr.bf16.mxu0 0
  %1572 = vmatpush1.bf16.msra.mxu0 0
  %1573 = vmatprep.subr.bf16.mxu0 0
  %1574 = vmatpush1.bf16.msra.mxu0 0
  %1575 = vmatprep.subr.bf16.mxu0 0
  %1576 = vmatpush1.bf16.msra.mxu0 0
  %1577 = vmatprep.mubr.bf16.mxu0 0
  %1578 = vmatmul.mubr.bf16.gmra.mrb[0].mxu0 %v1285
  %v1579 = vpop.f32.mrb[0].mxu0
  %v1580 = vadd.f32 %v935, %v1579
  %v1581 = vpop.f32.mrb[0].mxu0
  %v1582 = vadd.f32 %v939, %v1581
  %v1583 = vpop.f32.mrb[0].mxu0
  %v1584 = vadd.f32 %v935, %v1583
  %v1585 = vpop.f32.mrb[0].mxu0
  %v1586 = vadd.f32 %v939, %v1585
  %1587 = vdwg.mxu0
  %1588 = vmatprep.subr.bf16.mxu0 %v1171
  %1589 = vmatpush1.bf16.msra.mxu0 %v1170
  %1590 = vmatprep.subr.bf16.mxu0 %v1187
  %1591 = vmatpush1.bf16.msra.mxu0 %v1186
  %1592 = vmatprep.subr.bf16.mxu0 %v1203
  %1593 = vmatpush1.bf16.msra.mxu0 %v1202
  %1594 = vmatprep.subr.bf16.mxu0 %v1219
  %1595 = vmatpush1.bf16.msra.mxu0 %v1218
  %1596 = vmatprep.subr.bf16.mxu0 0
  %1597 = vmatpush1.bf16.msra.mxu0 0
  %1598 = vmatprep.subr.bf16.mxu0 0
  %1599 = vmatpush1.bf16.msra.mxu0 0
  %1600 = vmatprep.subr.bf16.mxu0 0
  %1601 = vmatpush1.bf16.msra.mxu0 0
  %1602 = vmatprep.subr.bf16.mxu0 0
  %1603 = vmatpush1.bf16.msra.mxu0 0
  %1604 = vmatprep.subr.bf16.mxu0 0
  %1605 = vmatpush1.bf16.msra.mxu0 0
  %1606 = vmatprep.subr.bf16.mxu0 0
  %1607 = vmatpush1.bf16.msra.mxu0 0
  %1608 = vmatprep.subr.bf16.mxu0 0
  %1609 = vmatpush1.bf16.msra.mxu0 0
  %1610 = vmatprep.subr.bf16.mxu0 0
  %1611 = vmatpush1.bf16.msra.mxu0 0
  %1612 = vmatprep.subr.bf16.mxu0 0
  %1613 = vmatpush1.bf16.msra.mxu0 0
  %1614 = vmatprep.subr.bf16.mxu0 0
  %1615 = vmatpush1.bf16.msra.mxu0 0
  %1616 = vmatprep.subr.bf16.mxu0 0
  %1617 = vmatpush1.bf16.msra.mxu0 0
  %1618 = vmatprep.subr.bf16.mxu0 0
  %1619 = vmatpush1.bf16.msra.mxu0 0
  %1620 = vmatprep.mubr.bf16.mxu0 0
  %1621 = vmatmul.mubr.bf16.gmra.mrb[0].mxu0 %v1285
  %v1622 = vpop.f32.mrb[0].mxu0
  %v1623 = vadd.f32 %v943, %v1622
  %v1624 = vpop.f32.mrb[0].mxu0
  %v1625 = vadd.f32 %v947, %v1624
  %v1626 = vpop.f32.mrb[0].mxu0
  %v1627 = vadd.f32 %v943, %v1626
  %v1628 = vpop.f32.mrb[0].mxu0
  %v1629 = vadd.f32 %v947, %v1628
  %1630 = vdwg.mxu0
  %v1631 = vmax.f32 %v1322, 0.0
  %v1632 = vmax.f32 %v1324, 0.0
  %v1633 = vmax.f32 %v1365, 0.0
  %v1634 = vmax.f32 %v1367, 0.0
  %v1635 = vmax.f32 %v1408, 0.0
  %v1636 = vmax.f32 %v1410, 0.0
  %v1637 = vmax.f32 %v1451, 0.0
  %v1638 = vmax.f32 %v1453, 0.0
  %v1639 = vmax.f32 %v1494, 0.0
  %v1640 = vmax.f32 %v1496, 0.0
  %v1641 = vmax.f32 %v1537, 0.0
  %v1642 = vmax.f32 %v1539, 0.0
  %v1643 = vmax.f32 %v1580, 0.0
  %v1644 = vmax.f32 %v1582, 0.0
  %v1645 = vmax.f32 %v1623, 0.0
  %v1646 = vmax.f32 %v1625, 0.0
  %v1647 = vmax.f32 %v1326, 0.0
  %v1648 = vmax.f32 %v1328, 0.0
  %v1649 = vmax.f32 %v1369, 0.0
  %v1650 = vmax.f32 %v1371, 0.0
  %v1651 = vmax.f32 %v1412, 0.0
  %v1652 = vmax.f32 %v1414, 0.0
  %v1653 = vmax.f32 %v1455, 0.0
  %v1654 = vmax.f32 %v1457, 0.0
  %v1655 = vmax.f32 %v1498, 0.0
  %v1656 = vmax.f32 %v1500, 0.0
  %v1657 = vmax.f32 %v1541, 0.0
  %v1658 = vmax.f32 %v1543, 0.0
  %v1659 = vmax.f32 %v1584, 0.0
  %v1660 = vmax.f32 %v1586, 0.0
  %v1661 = vmax.f32 %v1627, 0.0
  %v1662 = vmax.f32 %v1629, 0.0
  %v1663 = vld [vmem:[%s15] sm:$0xf]
  %v1664 = vld [vmem:[%s15 + $0x4] sm:$0xf]
  %v1665 = vld [vmem:[%s15 + $0x8] sm:$0xf]
  %v1666 = vld [vmem:[%s15 + $0xc] sm:$0xf]
  %v1667 = vld [vmem:[%s15 + $0x10] sm:$0xf]
  %v1668 = vld [vmem:[%s15 + $0x14] sm:$0xf]
  %v1669 = vld [vmem:[%s15 + $0x18] sm:$0xf]
  %v1670 = vld [vmem:[%s15 + $0x1c] sm:$0xf]
  %v1671 = vld [vmem:[%s15 + $0x20] sm:$0xf]
  %v1672 = vld [vmem:[%s15 + $0x24] sm:$0xf]
  %v1673 = vld [vmem:[%s15 + $0x28] sm:$0xf]
  %v1674 = vld [vmem:[%s15 + $0x2c] sm:$0xf]
  %v1675 = vld [vmem:[%s15 + $0x30] sm:$0xf]
  %v1676 = vld [vmem:[%s15 + $0x34] sm:$0xf]
  %v1677 = vld [vmem:[%s15 + $0x38] sm:$0xf]
  %v1678 = vld [vmem:[%s15 + $0x3c] sm:$0xf]
  %v1679 = vld [vmem:[%s15 + $0x40] sm:$0xf]
  %v1680 = vld [vmem:[%s15 + $0x44] sm:$0xf]
  %v1681 = vld [vmem:[%s15 + $0x48] sm:$0xf]
  %v1682 = vld [vmem:[%s15 + $0x4c] sm:$0xf]
  %v1683 = vld [vmem:[%s15 + $0x50] sm:$0xf]
  %v1684 = vld [vmem:[%s15 + $0x54] sm:$0xf]
  %v1685 = vld [vmem:[%s15 + $0x58] sm:$0xf]
  %v1686 = vld [vmem:[%s15 + $0x5c] sm:$0xf]
  %v1687 = vld [vmem:[%s15 + $0x60] sm:$0xf]
  %v1688 = vld [vmem:[%s15 + $0x64] sm:$0xf]
  %v1689 = vld [vmem:[%s15 + $0x68] sm:$0xf]
  %v1690 = vld [vmem:[%s15 + $0x6c] sm:$0xf]
  %v1691 = vld [vmem:[%s15 + $0x70] sm:$0xf]
  %v1692 = vld [vmem:[%s15 + $0x74] sm:$0xf]
  %v1693 = vld [vmem:[%s15 + $0x78] sm:$0xf]
  %v1694 = vld [vmem:[%s15 + $0x7c] sm:$0xf]
  %v1695 = vld [vmem:[%s15 + $0x80] sm:$0xf]
  %v1696 = vld [vmem:[%s15 + $0x84] sm:$0xf]
  %v1697 = vld [vmem:[%s15 + $0x88] sm:$0xf]
  %v1698 = vld [vmem:[%s15 + $0x8c] sm:$0xf]
  %v1699 = vld [vmem:[%s15 + $0x90] sm:$0xf]
  %v1700 = vld [vmem:[%s15 + $0x94] sm:$0xf]
  %v1701 = vld [vmem:[%s15 + $0x98] sm:$0xf]
  %v1702 = vld [vmem:[%s15 + $0x9c] sm:$0xf]
  %v1703 = vld [vmem:[%s15 + $0xa0] sm:$0xf]
  %v1704 = vld [vmem:[%s15 + $0xa4] sm:$0xf]
  %v1705 = vld [vmem:[%s15 + $0xa8] sm:$0xf]
  %v1706 = vld [vmem:[%s15 + $0xac] sm:$0xf]
  %v1707 = vld [vmem:[%s15 + $0xb0] sm:$0xf]
  %v1708 = vld [vmem:[%s15 + $0xb4] sm:$0xf]
  %v1709 = vld [vmem:[%s15 + $0xb8] sm:$0xf]
  %v1710 = vld [vmem:[%s15 + $0xbc] sm:$0xf]
  %v1711 = vld [vmem:[%s15 + $0xc0] sm:$0xf]
  %v1712 = vld [vmem:[%s15 + $0xc4] sm:$0xf]
  %v1713 = vld [vmem:[%s15 + $0xc8] sm:$0xf]
  %v1714 = vld [vmem:[%s15 + $0xcc] sm:$0xf]
  %v1715 = vld [vmem:[%s15 + $0xd0] sm:$0xf]
  %v1716 = vld [vmem:[%s15 + $0xd4] sm:$0xf]
  %v1717 = vld [vmem:[%s15 + $0xd8] sm:$0xf]
  %v1718 = vld [vmem:[%s15 + $0xdc] sm:$0xf]
  %v1719 = vld [vmem:[%s15 + $0xe0] sm:$0xf]
  %v1720 = vld [vmem:[%s15 + $0xe4] sm:$0xf]
  %v1721 = vld [vmem:[%s15 + $0xe8] sm:$0xf]
  %v1722 = vld [vmem:[%s15 + $0xec] sm:$0xf]
  %v1723 = vld [vmem:[%s15 + $0xf0] sm:$0xf]
  %v1724 = vld [vmem:[%s15 + $0xf4] sm:$0xf]
  %v1725 = vld [vmem:[%s15 + $0xf8] sm:$0xf]
  %v1726 = vld [vmem:[%s15 + $0xfc] sm:$0xf]
  %v1727 = vld [vmem:[%s15 + $0x100] sm:$0xf]
  %v1728 = vld [vmem:[%s15 + $0x104] sm:$0xf]
  %v1729 = vld [vmem:[%s15 + $0x108] sm:$0xf]
  %v1730 = vld [vmem:[%s15 + $0x10c] sm:$0xf]
  %v1731 = vld [vmem:[%s15 + $0x110] sm:$0xf]
  %v1732 = vld [vmem:[%s15 + $0x114] sm:$0xf]
  %v1733 = vld [vmem:[%s15 + $0x118] sm:$0xf]
  %v1734 = vld [vmem:[%s15 + $0x11c] sm:$0xf]
  %v1735 = vld [vmem:[%s15 + $0x120] sm:$0xf]
  %v1736 = vld [vmem:[%s15 + $0x124] sm:$0xf]
  %v1737 = vld [vmem:[%s15 + $0x128] sm:$0xf]
  %v1738 = vld [vmem:[%s15 + $0x12c] sm:$0xf]
  %v1739 = vld [vmem:[%s15 + $0x130] sm:$0xf]
  %v1740 = vld [vmem:[%s15 + $0x134] sm:$0xf]
  %v1741 = vld [vmem:[%s15 + $0x138] sm:$0xf]
  %v1742 = vld [vmem:[%s15 + $0x13c] sm:$0xf]
  %v1743 = vld [vmem:[%s15 + $0x140] sm:$0xf]
  %v1744 = vld [vmem:[%s15 + $0x144] sm:$0xf]
  %v1745 = vld [vmem:[%s15 + $0x148] sm:$0xf]
  %v1746 = vld [vmem:[%s15 + $0x14c] sm:$0xf]
  %v1747 = vld [vmem:[%s15 + $0x150] sm:$0xf]
  %v1748 = vld [vmem:[%s15 + $0x154] sm:$0xf]
  %v1749 = vld [vmem:[%s15 + $0x158] sm:$0xf]
  %v1750 = vld [vmem:[%s15 + $0x15c] sm:$0xf]
  %v1751 = vld [vmem:[%s15 + $0x160] sm:$0xf]
  %v1752 = vld [vmem:[%s15 + $0x164] sm:$0xf]
  %v1753 = vld [vmem:[%s15 + $0x168] sm:$0xf]
  %v1754 = vld [vmem:[%s15 + $0x16c] sm:$0xf]
  %v1755 = vld [vmem:[%s15 + $0x170] sm:$0xf]
  %v1756 = vld [vmem:[%s15 + $0x174] sm:$0xf]
  %v1757 = vld [vmem:[%s15 + $0x178] sm:$0xf]
  %v1758 = vld [vmem:[%s15 + $0x17c] sm:$0xf]
  %v1759 = vld [vmem:[%s15 + $0x180] sm:$0xf]
  %v1760 = vld [vmem:[%s15 + $0x184] sm:$0xf]
  %v1761 = vld [vmem:[%s15 + $0x188] sm:$0xf]
  %v1762 = vld [vmem:[%s15 + $0x18c] sm:$0xf]
  %v1763 = vld [vmem:[%s15 + $0x190] sm:$0xf]
  %v1764 = vld [vmem:[%s15 + $0x194] sm:$0xf]
  %v1765 = vld [vmem:[%s15 + $0x198] sm:$0xf]
  %v1766 = vld [vmem:[%s15 + $0x19c] sm:$0xf]
  %v1767 = vld [vmem:[%s15 + $0x1a0] sm:$0xf]
  %v1768 = vld [vmem:[%s15 + $0x1a4] sm:$0xf]
  %v1769 = vld [vmem:[%s15 + $0x1a8] sm:$0xf]
  %v1770 = vld [vmem:[%s15 + $0x1ac] sm:$0xf]
  %v1771 = vld [vmem:[%s15 + $0x1b0] sm:$0xf]
  %v1772 = vld [vmem:[%s15 + $0x1b4] sm:$0xf]
  %v1773 = vld [vmem:[%s15 + $0x1b8] sm:$0xf]
  %v1774 = vld [vmem:[%s15 + $0x1bc] sm:$0xf]
  %v1775 = vld [vmem:[%s15 + $0x1c0] sm:$0xf]
  %v1776 = vld [vmem:[%s15 + $0x1c4] sm:$0xf]
  %v1777 = vld [vmem:[%s15 + $0x1c8] sm:$0xf]
  %v1778 = vld [vmem:[%s15 + $0x1cc] sm:$0xf]
  %v1779 = vld [vmem:[%s15 + $0x1d0] sm:$0xf]
  %v1780 = vld [vmem:[%s15 + $0x1d4] sm:$0xf]
  %v1781 = vld [vmem:[%s15 + $0x1d8] sm:$0xf]
  %v1782 = vld [vmem:[%s15 + $0x1dc] sm:$0xf]
  %v1783 = vld [vmem:[%s15 + $0x1e0] sm:$0xf]
  %v1784 = vld [vmem:[%s15 + $0x1e4] sm:$0xf]
  %v1785 = vld [vmem:[%s15 + $0x1e8] sm:$0xf]
  %v1786 = vld [vmem:[%s15 + $0x1ec] sm:$0xf]
  %v1787 = vld [vmem:[%s15 + $0x1f0] sm:$0xf]
  %v1788 = vld [vmem:[%s15 + $0x1f4] sm:$0xf]
  %v1789 = vld [vmem:[%s15 + $0x1f8] sm:$0xf]
  %v1790 = vld [vmem:[%s15 + $0x1fc] sm:$0xf]
  %v1791 = vld [vmem:[%s15 + $0x200] sm:$0xf]
  %v1792 = vld [vmem:[%s15 + $0x204] sm:$0xf]
  %v1793 = vld [vmem:[%s15 + $0x208] sm:$0xf]
  %v1794 = vld [vmem:[%s15 + $0x20c] sm:$0xf]
  %v1795 = vld [vmem:[%s15 + $0x210] sm:$0xf]
  %v1796 = vld [vmem:[%s15 + $0x214] sm:$0xf]
  %v1797 = vld [vmem:[%s15 + $0x218] sm:$0xf]
  %v1798 = vld [vmem:[%s15 + $0x21c] sm:$0xf]
  %v1799 = vld [vmem:[%s15 + $0x220] sm:$0xf]
  %v1800 = vld [vmem:[%s15 + $0x224] sm:$0xf]
  %v1801 = vld [vmem:[%s15 + $0x228] sm:$0xf]
  %v1802 = vld [vmem:[%s15 + $0x22c] sm:$0xf]
  %v1803 = vld [vmem:[%s15 + $0x230] sm:$0xf]
  %v1804 = vld [vmem:[%s15 + $0x234] sm:$0xf]
  %v1805 = vld [vmem:[%s15 + $0x238] sm:$0xf]
  %v1806 = vld [vmem:[%s15 + $0x23c] sm:$0xf]
  %v1807 = vld [vmem:[%s15 + $0x240] sm:$0xf]
  %v1808 = vld [vmem:[%s15 + $0x244] sm:$0xf]
  %v1809 = vld [vmem:[%s15 + $0x248] sm:$0xf]
  %v1810 = vld [vmem:[%s15 + $0x24c] sm:$0xf]
  %v1811 = vld [vmem:[%s15 + $0x250] sm:$0xf]
  %v1812 = vld [vmem:[%s15 + $0x254] sm:$0xf]
  %v1813 = vld [vmem:[%s15 + $0x258] sm:$0xf]
  %v1814 = vld [vmem:[%s15 + $0x25c] sm:$0xf]
  %v1815 = vld [vmem:[%s15 + $0x260] sm:$0xf]
  %v1816 = vld [vmem:[%s15 + $0x264] sm:$0xf]
  %v1817 = vld [vmem:[%s15 + $0x268] sm:$0xf]
  %v1818 = vld [vmem:[%s15 + $0x26c] sm:$0xf]
  %v1819 = vld [vmem:[%s15 + $0x270] sm:$0xf]
  %v1820 = vld [vmem:[%s15 + $0x274] sm:$0xf]
  %v1821 = vld [vmem:[%s15 + $0x278] sm:$0xf]
  %v1822 = vld [vmem:[%s15 + $0x27c] sm:$0xf]
  %v1823 = vld [vmem:[%s15 + $0x280] sm:$0xf]
  %v1824 = vld [vmem:[%s15 + $0x284] sm:$0xf]
  %v1825 = vld [vmem:[%s15 + $0x288] sm:$0xf]
  %v1826 = vld [vmem:[%s15 + $0x28c] sm:$0xf]
  %v1827 = vld [vmem:[%s15 + $0x290] sm:$0xf]
  %v1828 = vld [vmem:[%s15 + $0x294] sm:$0xf]
  %v1829 = vld [vmem:[%s15 + $0x298] sm:$0xf]
  %v1830 = vld [vmem:[%s15 + $0x29c] sm:$0xf]
  %v1831 = vld [vmem:[%s15 + $0x2a0] sm:$0xf]
  %v1832 = vld [vmem:[%s15 + $0x2a4] sm:$0xf]
  %v1833 = vld [vmem:[%s15 + $0x2a8] sm:$0xf]
  %v1834 = vld [vmem:[%s15 + $0x2ac] sm:$0xf]
  %v1835 = vld [vmem:[%s15 + $0x2b0] sm:$0xf]
  %v1836 = vld [vmem:[%s15 + $0x2b4] sm:$0xf]
  %v1837 = vld [vmem:[%s15 + $0x2b8] sm:$0xf]
  %v1838 = vld [vmem:[%s15 + $0x2bc] sm:$0xf]
  %v1839 = vld [vmem:[%s15 + $0x2c0] sm:$0xf]
  %v1840 = vld [vmem:[%s15 + $0x2c4] sm:$0xf]
  %v1841 = vld [vmem:[%s15 + $0x2c8] sm:$0xf]
  %v1842 = vld [vmem:[%s15 + $0x2cc] sm:$0xf]
  %v1843 = vld [vmem:[%s15 + $0x2d0] sm:$0xf]
  %v1844 = vld [vmem:[%s15 + $0x2d4] sm:$0xf]
  %v1845 = vld [vmem:[%s15 + $0x2d8] sm:$0xf]
  %v1846 = vld [vmem:[%s15 + $0x2dc] sm:$0xf]
  %v1847 = vld [vmem:[%s15 + $0x2e0] sm:$0xf]
  %v1848 = vld [vmem:[%s15 + $0x2e4] sm:$0xf]
  %v1849 = vld [vmem:[%s15 + $0x2e8] sm:$0xf]
  %v1850 = vld [vmem:[%s15 + $0x2ec] sm:$0xf]
  %v1851 = vld [vmem:[%s15 + $0x2f0] sm:$0xf]
  %v1852 = vld [vmem:[%s15 + $0x2f4] sm:$0xf]
  %v1853 = vld [vmem:[%s15 + $0x2f8] sm:$0xf]
  %v1854 = vld [vmem:[%s15 + $0x2fc] sm:$0xf]
  %v1855 = vld [vmem:[%s15 + $0x300] sm:$0xf]
  %v1856 = vld [vmem:[%s15 + $0x304] sm:$0xf]
  %v1857 = vld [vmem:[%s15 + $0x308] sm:$0xf]
  %v1858 = vld [vmem:[%s15 + $0x30c] sm:$0xf]
  %v1859 = vld [vmem:[%s15 + $0x310] sm:$0xf]
  %v1860 = vld [vmem:[%s15 + $0x314] sm:$0xf]
  %v1861 = vld [vmem:[%s15 + $0x318] sm:$0xf]
  %v1862 = vld [vmem:[%s15 + $0x31c] sm:$0xf]
  %v1863 = vld [vmem:[%s15 + $0x320] sm:$0xf]
  %v1864 = vld [vmem:[%s15 + $0x324] sm:$0xf]
  %v1865 = vld [vmem:[%s15 + $0x328] sm:$0xf]
  %v1866 = vld [vmem:[%s15 + $0x32c] sm:$0xf]
  %v1867 = vld [vmem:[%s15 + $0x330] sm:$0xf]
  %v1868 = vld [vmem:[%s15 + $0x334] sm:$0xf]
  %v1869 = vld [vmem:[%s15 + $0x338] sm:$0xf]
  %v1870 = vld [vmem:[%s15 + $0x33c] sm:$0xf]
  %v1871 = vld [vmem:[%s15 + $0x340] sm:$0xf]
  %v1872 = vld [vmem:[%s15 + $0x344] sm:$0xf]
  %v1873 = vld [vmem:[%s15 + $0x348] sm:$0xf]
  %v1874 = vld [vmem:[%s15 + $0x34c] sm:$0xf]
  %v1875 = vld [vmem:[%s15 + $0x350] sm:$0xf]
  %v1876 = vld [vmem:[%s15 + $0x354] sm:$0xf]
  %v1877 = vld [vmem:[%s15 + $0x358] sm:$0xf]
  %v1878 = vld [vmem:[%s15 + $0x35c] sm:$0xf]
  %v1879 = vld [vmem:[%s15 + $0x360] sm:$0xf]
  %v1880 = vld [vmem:[%s15 + $0x364] sm:$0xf]
  %v1881 = vld [vmem:[%s15 + $0x368] sm:$0xf]
  %v1882 = vld [vmem:[%s15 + $0x36c] sm:$0xf]
  %v1883 = vld [vmem:[%s15 + $0x370] sm:$0xf]
  %v1884 = vld [vmem:[%s15 + $0x374] sm:$0xf]
  %v1885 = vld [vmem:[%s15 + $0x378] sm:$0xf]
  %v1886 = vld [vmem:[%s15 + $0x37c] sm:$0xf]
  %v1887 = vld [vmem:[%s15 + $0x380] sm:$0xf]
  %v1888 = vld [vmem:[%s15 + $0x384] sm:$0xf]
  %v1889 = vld [vmem:[%s15 + $0x388] sm:$0xf]
  %v1890 = vld [vmem:[%s15 + $0x38c] sm:$0xf]
  %v1891 = vld [vmem:[%s15 + $0x390] sm:$0xf]
  %v1892 = vld [vmem:[%s15 + $0x394] sm:$0xf]
  %v1893 = vld [vmem:[%s15 + $0x398] sm:$0xf]
  %v1894 = vld [vmem:[%s15 + $0x39c] sm:$0xf]
  %v1895 = vld [vmem:[%s15 + $0x3a0] sm:$0xf]
  %v1896 = vld [vmem:[%s15 + $0x3a4] sm:$0xf]
  %v1897 = vld [vmem:[%s15 + $0x3a8] sm:$0xf]
  %v1898 = vld [vmem:[%s15 + $0x3ac] sm:$0xf]
  %v1899 = vld [vmem:[%s15 + $0x3b0] sm:$0xf]
  %v1900 = vld [vmem:[%s15 + $0x3b4] sm:$0xf]
  %v1901 = vld [vmem:[%s15 + $0x3b8] sm:$0xf]
  %v1902 = vld [vmem:[%s15 + $0x3bc] sm:$0xf]
  %v1903 = vld [vmem:[%s15 + $0x3c0] sm:$0xf]
  %v1904 = vld [vmem:[%s15 + $0x3c4] sm:$0xf]
  %v1905 = vld [vmem:[%s15 + $0x3c8] sm:$0xf]
  %v1906 = vld [vmem:[%s15 + $0x3cc] sm:$0xf]
  %v1907 = vld [vmem:[%s15 + $0x3d0] sm:$0xf]
  %v1908 = vld [vmem:[%s15 + $0x3d4] sm:$0xf]
  %v1909 = vld [vmem:[%s15 + $0x3d8] sm:$0xf]
  %v1910 = vld [vmem:[%s15 + $0x3dc] sm:$0xf]
  %v1911 = vld [vmem:[%s15 + $0x3e0] sm:$0xf]
  %v1912 = vld [vmem:[%s15 + $0x3e4] sm:$0xf]
  %v1913 = vld [vmem:[%s15 + $0x3e8] sm:$0xf]
  %v1914 = vld [vmem:[%s15 + $0x3ec] sm:$0xf]
  %v1915 = vld [vmem:[%s15 + $0x3f0] sm:$0xf]
  %v1916 = vld [vmem:[%s15 + $0x3f4] sm:$0xf]
  %v1917 = vld [vmem:[%s15 + $0x3f8] sm:$0xf]
  %v1918 = vld [vmem:[%s15 + $0x3fc] sm:$0xf]
  %v1919 = vpack.c.bf16 %v1647, %v1631
  %v1920 = vpack.c.bf16 %v1648, %v1632
  %v1921 = vpack.c.bf16 %v1649, %v1633
  %v1922 = vpack.c.bf16 %v1650, %v1634
  %v1923 = vpack.c.bf16 %v1651, %v1635
  %v1924 = vpack.c.bf16 %v1652, %v1636
  %v1925 = vpack.c.bf16 %v1653, %v1637
  %v1926 = vpack.c.bf16 %v1654, %v1638
  %v1927 = vpack.c.bf16 %v1655, %v1639
  %v1928 = vpack.c.bf16 %v1656, %v1640
  %v1929 = vpack.c.bf16 %v1657, %v1641
  %v1930 = vpack.c.bf16 %v1658, %v1642
  %v1931 = vpack.c.bf16 %v1659, %v1643
  %v1932 = vpack.c.bf16 %v1660, %v1644
  %v1933 = vpack.c.bf16 %v1661, %v1645
  %v1934 = vpack.c.bf16 %v1662, %v1646
  %v1935 = vld [vmem:[%s16] sm:$0x1]
  %v1937 = vlaneseq
  %v1938 = vshrl.u32 %v1937, 7
  %v1939 = vsub.s32 0, %v1938
  %v1940 = vrot.slane %v1935, %v1939
  %v2198 = vunpack.c.l.b16 %v1663
  %v2199 = vunpack.c.l.b16 %v1664
  %v2200 = vunpack.c.l.b16 %v1665
  %v2201 = vunpack.c.l.b16 %v1666
  %v2202 = vunpack.c.l.b16 %v1667
  %v2203 = vunpack.c.l.b16 %v1668
  %v2204 = vunpack.c.l.b16 %v1669
  %v2205 = vunpack.c.l.b16 %v1670
  %v2206 = vunpack.c.l.b16 %v1671
  %v2207 = vunpack.c.l.b16 %v1672
  %v2208 = vunpack.c.l.b16 %v1673
  %v2209 = vunpack.c.l.b16 %v1674
  %v2210 = vunpack.c.l.b16 %v1675
  %v2211 = vunpack.c.l.b16 %v1676
  %v2212 = vunpack.c.l.b16 %v1677
  %v2213 = vunpack.c.l.b16 %v1678
  %v2214 = vunpack.c.l.b16 %v1679
  %v2215 = vunpack.c.l.b16 %v1680
  %v2216 = vunpack.c.l.b16 %v1681
  %v2217 = vunpack.c.l.b16 %v1682
  %v2218 = vunpack.c.l.b16 %v1683
  %v2219 = vunpack.c.l.b16 %v1684
  %v2220 = vunpack.c.l.b16 %v1685
  %v2221 = vunpack.c.l.b16 %v1686
  %v2222 = vunpack.c.l.b16 %v1687
  %v2223 = vunpack.c.l.b16 %v1688
  %v2224 = vunpack.c.l.b16 %v1689
  %v2225 = vunpack.c.l.b16 %v1690
  %v2226 = vunpack.c.l.b16 %v1691
  %v2227 = vunpack.c.l.b16 %v1692
  %v2228 = vunpack.c.l.b16 %v1693
  %v2229 = vunpack.c.l.b16 %v1694
  %v2230 = vunpack.c.l.b16 %v1695
  %v2231 = vunpack.c.l.b16 %v1696
  %v2232 = vunpack.c.l.b16 %v1697
  %v2233 = vunpack.c.l.b16 %v1698
  %v2234 = vunpack.c.l.b16 %v1699
  %v2235 = vunpack.c.l.b16 %v1700
  %v2236 = vunpack.c.l.b16 %v1701
  %v2237 = vunpack.c.l.b16 %v1702
  %v2238 = vunpack.c.l.b16 %v1703
  %v2239 = vunpack.c.l.b16 %v1704
  %v2240 = vunpack.c.l.b16 %v1705
  %v2241 = vunpack.c.l.b16 %v1706
  %v2242 = vunpack.c.l.b16 %v1707
  %v2243 = vunpack.c.l.b16 %v1708
  %v2244 = vunpack.c.l.b16 %v1709
  %v2245 = vunpack.c.l.b16 %v1710
  %v2246 = vunpack.c.l.b16 %v1711
  %v2247 = vunpack.c.l.b16 %v1712
  %v2248 = vunpack.c.l.b16 %v1713
  %v2249 = vunpack.c.l.b16 %v1714
  %v2250 = vunpack.c.l.b16 %v1715
  %v2251 = vunpack.c.l.b16 %v1716
  %v2252 = vunpack.c.l.b16 %v1717
  %v2253 = vunpack.c.l.b16 %v1718
  %v2254 = vunpack.c.l.b16 %v1719
  %v2255 = vunpack.c.l.b16 %v1720
  %v2256 = vunpack.c.l.b16 %v1721
  %v2257 = vunpack.c.l.b16 %v1722
  %v2258 = vunpack.c.l.b16 %v1723
  %v2259 = vunpack.c.l.b16 %v1724
  %v2260 = vunpack.c.l.b16 %v1725
  %v2261 = vunpack.c.l.b16 %v1726
  %v2262 = vunpack.c.l.b16 %v1727
  %v2263 = vunpack.c.l.b16 %v1728
  %v2264 = vunpack.c.l.b16 %v1729
  %v2265 = vunpack.c.l.b16 %v1730
  %v2266 = vunpack.c.l.b16 %v1731
  %v2267 = vunpack.c.l.b16 %v1732
  %v2268 = vunpack.c.l.b16 %v1733
  %v2269 = vunpack.c.l.b16 %v1734
  %v2270 = vunpack.c.l.b16 %v1735
  %v2271 = vunpack.c.l.b16 %v1736
  %v2272 = vunpack.c.l.b16 %v1737
  %v2273 = vunpack.c.l.b16 %v1738
  %v2274 = vunpack.c.l.b16 %v1739
  %v2275 = vunpack.c.l.b16 %v1740
  %v2276 = vunpack.c.l.b16 %v1741
  %v2277 = vunpack.c.l.b16 %v1742
  %v2278 = vunpack.c.l.b16 %v1743
  %v2279 = vunpack.c.l.b16 %v1744
  %v2280 = vunpack.c.l.b16 %v1745
  %v2281 = vunpack.c.l.b16 %v1746
  %v2282 = vunpack.c.l.b16 %v1747
  %v2283 = vunpack.c.l.b16 %v1748
  %v2284 = vunpack.c.l.b16 %v1749
  %v2285 = vunpack.c.l.b16 %v1750
  %v2286 = vunpack.c.l.b16 %v1751
  %v2287 = vunpack.c.l.b16 %v1752
  %v2288 = vunpack.c.l.b16 %v1753
  %v2289 = vunpack.c.l.b16 %v1754
  %v2290 = vunpack.c.l.b16 %v1755
  %v2291 = vunpack.c.l.b16 %v1756
  %v2292 = vunpack.c.l.b16 %v1757
  %v2293 = vunpack.c.l.b16 %v1758
  %v2294 = vunpack.c.l.b16 %v1759
  %v2295 = vunpack.c.l.b16 %v1760
  %v2296 = vunpack.c.l.b16 %v1761
  %v2297 = vunpack.c.l.b16 %v1762
  %v2298 = vunpack.c.l.b16 %v1763
  %v2299 = vunpack.c.l.b16 %v1764
  %v2300 = vunpack.c.l.b16 %v1765
  %v2301 = vunpack.c.l.b16 %v1766
  %v2302 = vunpack.c.l.b16 %v1767
  %v2303 = vunpack.c.l.b16 %v1768
  %v2304 = vunpack.c.l.b16 %v1769
  %v2305 = vunpack.c.l.b16 %v1770
  %v2306 = vunpack.c.l.b16 %v1771
  %v2307 = vunpack.c.l.b16 %v1772
  %v2308 = vunpack.c.l.b16 %v1773
  %v2309 = vunpack.c.l.b16 %v1774
  %v2310 = vunpack.c.l.b16 %v1775
  %v2311 = vunpack.c.l.b16 %v1776
  %v2312 = vunpack.c.l.b16 %v1777
  %v2313 = vunpack.c.l.b16 %v1778
  %v2314 = vunpack.c.l.b16 %v1779
  %v2315 = vunpack.c.l.b16 %v1780
  %v2316 = vunpack.c.l.b16 %v1781
  %v2317 = vunpack.c.l.b16 %v1782
  %v2318 = vunpack.c.l.b16 %v1783
  %v2319 = vunpack.c.l.b16 %v1784
  %v2320 = vunpack.c.l.b16 %v1785
  %v2321 = vunpack.c.l.b16 %v1786
  %v2322 = vunpack.c.l.b16 %v1787
  %v2323 = vunpack.c.l.b16 %v1788
  %v2324 = vunpack.c.l.b16 %v1789
  %v2325 = vunpack.c.l.b16 %v1790
  %v2326 = vunpack.c.l.b16 %v1791
  %v2327 = vunpack.c.l.b16 %v1792
  %v2328 = vunpack.c.l.b16 %v1793
  %v2329 = vunpack.c.l.b16 %v1794
  %v2330 = vunpack.c.l.b16 %v1795
  %v2331 = vunpack.c.l.b16 %v1796
  %v2332 = vunpack.c.l.b16 %v1797
  %v2333 = vunpack.c.l.b16 %v1798
  %v2334 = vunpack.c.l.b16 %v1799
  %v2335 = vunpack.c.l.b16 %v1800
  %v2336 = vunpack.c.l.b16 %v1801
  %v2337 = vunpack.c.l.b16 %v1802
  %v2338 = vunpack.c.l.b16 %v1803
  %v2339 = vunpack.c.l.b16 %v1804
  %v2340 = vunpack.c.l.b16 %v1805
  %v2341 = vunpack.c.l.b16 %v1806
  %v2342 = vunpack.c.l.b16 %v1807
  %v2343 = vunpack.c.l.b16 %v1808
  %v2344 = vunpack.c.l.b16 %v1809
  %v2345 = vunpack.c.l.b16 %v1810
  %v2346 = vunpack.c.l.b16 %v1811
  %v2347 = vunpack.c.l.b16 %v1812
  %v2348 = vunpack.c.l.b16 %v1813
  %v2349 = vunpack.c.l.b16 %v1814
  %v2350 = vunpack.c.l.b16 %v1815
  %v2351 = vunpack.c.l.b16 %v1816
  %v2352 = vunpack.c.l.b16 %v1817
  %v2353 = vunpack.c.l.b16 %v1818
  %v2354 = vunpack.c.l.b16 %v1819
  %v2355 = vunpack.c.l.b16 %v1820
  %v2356 = vunpack.c.l.b16 %v1821
  %v2357 = vunpack.c.l.b16 %v1822
  %v2358 = vunpack.c.l.b16 %v1823
  %v2359 = vunpack.c.l.b16 %v1824
  %v2360 = vunpack.c.l.b16 %v1825
  %v2361 = vunpack.c.l.b16 %v1826
  %v2362 = vunpack.c.l.b16 %v1827
  %v2363 = vunpack.c.l.b16 %v1828
  %v2364 = vunpack.c.l.b16 %v1829
  %v2365 = vunpack.c.l.b16 %v1830
  %v2366 = vunpack.c.l.b16 %v1831
  %v2367 = vunpack.c.l.b16 %v1832
  %v2368 = vunpack.c.l.b16 %v1833
  %v2369 = vunpack.c.l.b16 %v1834
  %v2370 = vunpack.c.l.b16 %v1835
  %v2371 = vunpack.c.l.b16 %v1836
  %v2372 = vunpack.c.l.b16 %v1837
  %v2373 = vunpack.c.l.b16 %v1838
  %v2374 = vunpack.c.l.b16 %v1839
  %v2375 = vunpack.c.l.b16 %v1840
  %v2376 = vunpack.c.l.b16 %v1841
  %v2377 = vunpack.c.l.b16 %v1842
  %v2378 = vunpack.c.l.b16 %v1843
  %v2379 = vunpack.c.l.b16 %v1844
  %v2380 = vunpack.c.l.b16 %v1845
  %v2381 = vunpack.c.l.b16 %v1846
  %v2382 = vunpack.c.l.b16 %v1847
  %v2383 = vunpack.c.l.b16 %v1848
  %v2384 = vunpack.c.l.b16 %v1849
  %v2385 = vunpack.c.l.b16 %v1850
  %v2386 = vunpack.c.l.b16 %v1851
  %v2387 = vunpack.c.l.b16 %v1852
  %v2388 = vunpack.c.l.b16 %v1853
  %v2389 = vunpack.c.l.b16 %v1854
  %v2390 = vunpack.c.l.b16 %v1855
  %v2391 = vunpack.c.l.b16 %v1856
  %v2392 = vunpack.c.l.b16 %v1857
  %v2393 = vunpack.c.l.b16 %v1858
  %v2394 = vunpack.c.l.b16 %v1859
  %v2395 = vunpack.c.l.b16 %v1860
  %v2396 = vunpack.c.l.b16 %v1861
  %v2397 = vunpack.c.l.b16 %v1862
  %v2398 = vunpack.c.l.b16 %v1863
  %v2399 = vunpack.c.l.b16 %v1864
  %v2400 = vunpack.c.l.b16 %v1865
  %v2401 = vunpack.c.l.b16 %v1866
  %v2402 = vunpack.c.l.b16 %v1867
  %v2403 = vunpack.c.l.b16 %v1868
  %v2404 = vunpack.c.l.b16 %v1869
  %v2405 = vunpack.c.l.b16 %v1870
  %v2406 = vunpack.c.l.b16 %v1871
  %v2407 = vunpack.c.l.b16 %v1872
  %v2408 = vunpack.c.l.b16 %v1873
  %v2409 = vunpack.c.l.b16 %v1874
  %v2410 = vunpack.c.l.b16 %v1875
  %v2411 = vunpack.c.l.b16 %v1876
  %v2412 = vunpack.c.l.b16 %v1877
  %v2413 = vunpack.c.l.b16 %v1878
  %v2414 = vunpack.c.l.b16 %v1879
  %v2415 = vunpack.c.l.b16 %v1880
  %v2416 = vunpack.c.l.b16 %v1881
  %v2417 = vunpack.c.l.b16 %v1882
  %v2418 = vunpack.c.l.b16 %v1883
  %v2419 = vunpack.c.l.b16 %v1884
  %v2420 = vunpack.c.l.b16 %v1885
  %v2421 = vunpack.c.l.b16 %v1886
  %v2422 = vunpack.c.l.b16 %v1887
  %v2423 = vunpack.c.l.b16 %v1888
  %v2424 = vunpack.c.l.b16 %v1889
  %v2425 = vunpack.c.l.b16 %v1890
  %v2426 = vunpack.c.l.b16 %v1891
  %v2427 = vunpack.c.l.b16 %v1892
  %v2428 = vunpack.c.l.b16 %v1893
  %v2429 = vunpack.c.l.b16 %v1894
  %v2430 = vunpack.c.l.b16 %v1895
  %v2431 = vunpack.c.l.b16 %v1896
  %v2432 = vunpack.c.l.b16 %v1897
  %v2433 = vunpack.c.l.b16 %v1898
  %v2434 = vunpack.c.l.b16 %v1899
  %v2435 = vunpack.c.l.b16 %v1900
  %v2436 = vunpack.c.l.b16 %v1901
  %v2437 = vunpack.c.l.b16 %v1902
  %v2438 = vunpack.c.l.b16 %v1903
  %v2439 = vunpack.c.l.b16 %v1904
  %v2440 = vunpack.c.l.b16 %v1905
  %v2441 = vunpack.c.l.b16 %v1906
  %v2442 = vunpack.c.l.b16 %v1907
  %v2443 = vunpack.c.l.b16 %v1908
  %v2444 = vunpack.c.l.b16 %v1909
  %v2445 = vunpack.c.l.b16 %v1910
  %v2446 = vunpack.c.l.b16 %v1911
  %v2447 = vunpack.c.l.b16 %v1912
  %v2448 = vunpack.c.l.b16 %v1913
  %v2449 = vunpack.c.l.b16 %v1914
  %v2450 = vunpack.c.l.b16 %v1915
  %v2451 = vunpack.c.l.b16 %v1916
  %v2452 = vunpack.c.l.b16 %v1917
  %v2453 = vunpack.c.l.b16 %v1918
  %v2454 = vpack.c.b16 %v2199, %v2198
  %v2455 = vpack.c.b16 %v2201, %v2200
  %v2456 = vpack.c.b16 %v2203, %v2202
  %v2457 = vpack.c.b16 %v2205, %v2204
  %v2458 = vpack.c.b16 %v2207, %v2206
  %v2459 = vpack.c.b16 %v2209, %v2208
  %v2460 = vpack.c.b16 %v2211, %v2210
  %v2461 = vpack.c.b16 %v2213, %v2212
  %v2462 = vpack.c.b16 %v2215, %v2214
  %v2463 = vpack.c.b16 %v2217, %v2216
  %v2464 = vpack.c.b16 %v2219, %v2218
  %v2465 = vpack.c.b16 %v2221, %v2220
  %v2466 = vpack.c.b16 %v2223, %v2222
  %v2467 = vpack.c.b16 %v2225, %v2224
  %v2468 = vpack.c.b16 %v2227, %v2226
  %v2469 = vpack.c.b16 %v2229, %v2228
  %v2470 = vpack.c.b16 %v2231, %v2230
  %v2471 = vpack.c.b16 %v2233, %v2232
  %v2472 = vpack.c.b16 %v2235, %v2234
  %v2473 = vpack.c.b16 %v2237, %v2236
  %v2474 = vpack.c.b16 %v2239, %v2238
  %v2475 = vpack.c.b16 %v2241, %v2240
  %v2476 = vpack.c.b16 %v2243, %v2242
  %v2477 = vpack.c.b16 %v2245, %v2244
  %v2478 = vpack.c.b16 %v2247, %v2246
  %v2479 = vpack.c.b16 %v2249, %v2248
  %v2480 = vpack.c.b16 %v2251, %v2250
  %v2481 = vpack.c.b16 %v2253, %v2252
  %v2482 = vpack.c.b16 %v2255, %v2254
  %v2483 = vpack.c.b16 %v2257, %v2256
  %v2484 = vpack.c.b16 %v2259, %v2258
  %v2485 = vpack.c.b16 %v2261, %v2260
  %v2486 = vpack.c.b16 %v2263, %v2262
  %v2487 = vpack.c.b16 %v2265, %v2264
  %v2488 = vpack.c.b16 %v2267, %v2266
  %v2489 = vpack.c.b16 %v2269, %v2268
  %v2490 = vpack.c.b16 %v2271, %v2270
  %v2491 = vpack.c.b16 %v2273, %v2272
  %v2492 = vpack.c.b16 %v2275, %v2274
  %v2493 = vpack.c.b16 %v2277, %v2276
  %v2494 = vpack.c.b16 %v2279, %v2278
  %v2495 = vpack.c.b16 %v2281, %v2280
  %v2496 = vpack.c.b16 %v2283, %v2282
  %v2497 = vpack.c.b16 %v2285, %v2284
  %v2498 = vpack.c.b16 %v2287, %v2286
  %v2499 = vpack.c.b16 %v2289, %v2288
  %v2500 = vpack.c.b16 %v2291, %v2290
  %v2501 = vpack.c.b16 %v2293, %v2292
  %v2502 = vpack.c.b16 %v2295, %v2294
  %v2503 = vpack.c.b16 %v2297, %v2296
  %v2504 = vpack.c.b16 %v2299, %v2298
  %v2505 = vpack.c.b16 %v2301, %v2300
  %v2506 = vpack.c.b16 %v2303, %v2302
  %v2507 = vpack.c.b16 %v2305, %v2304
  %v2508 = vpack.c.b16 %v2307, %v2306
  %v2509 = vpack.c.b16 %v2309, %v2308
  %v2510 = vpack.c.b16 %v2311, %v2310
  %v2511 = vpack.c.b16 %v2313, %v2312
  %v2512 = vpack.c.b16 %v2315, %v2314
  %v2513 = vpack.c.b16 %v2317, %v2316
  %v2514 = vpack.c.b16 %v2319, %v2318
  %v2515 = vpack.c.b16 %v2321, %v2320
  %v2516 = vpack.c.b16 %v2323, %v2322
  %v2517 = vpack.c.b16 %v2325, %v2324
  %v2518 = vpack.c.b16 %v2327, %v2326
  %v2519 = vpack.c.b16 %v2329, %v2328
  %v2520 = vpack.c.b16 %v2331, %v2330
  %v2521 = vpack.c.b16 %v2333, %v2332
  %v2522 = vpack.c.b16 %v2335, %v2334
  %v2523 = vpack.c.b16 %v2337, %v2336
  %v2524 = vpack.c.b16 %v2339, %v2338
  %v2525 = vpack.c.b16 %v2341, %v2340
  %v2526 = vpack.c.b16 %v2343, %v2342
  %v2527 = vpack.c.b16 %v2345, %v2344
  %v2528 = vpack.c.b16 %v2347, %v2346
  %v2529 = vpack.c.b16 %v2349, %v2348
  %v2530 = vpack.c.b16 %v2351, %v2350
  %v2531 = vpack.c.b16 %v2353, %v2352
  %v2532 = vpack.c.b16 %v2355, %v2354
  %v2533 = vpack.c.b16 %v2357, %v2356
  %v2534 = vpack.c.b16 %v2359, %v2358
  %v2535 = vpack.c.b16 %v2361, %v2360
  %v2536 = vpack.c.b16 %v2363, %v2362
  %v2537 = vpack.c.b16 %v2365, %v2364
  %v2538 = vpack.c.b16 %v2367, %v2366
  %v2539 = vpack.c.b16 %v2369, %v2368
  %v2540 = vpack.c.b16 %v2371, %v2370
  %v2541 = vpack.c.b16 %v2373, %v2372
  %v2542 = vpack.c.b16 %v2375, %v2374
  %v2543 = vpack.c.b16 %v2377, %v2376
  %v2544 = vpack.c.b16 %v2379, %v2378
  %v2545 = vpack.c.b16 %v2381, %v2380
  %v2546 = vpack.c.b16 %v2383, %v2382
  %v2547 = vpack.c.b16 %v2385, %v2384
  %v2548 = vpack.c.b16 %v2387, %v2386
  %v2549 = vpack.c.b16 %v2389, %v2388
  %v2550 = vpack.c.b16 %v2391, %v2390
  %v2551 = vpack.c.b16 %v2393, %v2392
  %v2552 = vpack.c.b16 %v2395, %v2394
  %v2553 = vpack.c.b16 %v2397, %v2396
  %v2554 = vpack.c.b16 %v2399, %v2398
  %v2555 = vpack.c.b16 %v2401, %v2400
  %v2556 = vpack.c.b16 %v2403, %v2402
  %v2557 = vpack.c.b16 %v2405, %v2404
  %v2558 = vpack.c.b16 %v2407, %v2406
  %v2559 = vpack.c.b16 %v2409, %v2408
  %v2560 = vpack.c.b16 %v2411, %v2410
  %v2561 = vpack.c.b16 %v2413, %v2412
  %v2562 = vpack.c.b16 %v2415, %v2414
  %v2563 = vpack.c.b16 %v2417, %v2416
  %v2564 = vpack.c.b16 %v2419, %v2418
  %v2565 = vpack.c.b16 %v2421, %v2420
  %v2566 = vpack.c.b16 %v2423, %v2422
  %v2567 = vpack.c.b16 %v2425, %v2424
  %v2568 = vpack.c.b16 %v2427, %v2426
  %v2569 = vpack.c.b16 %v2429, %v2428
  %v2570 = vpack.c.b16 %v2431, %v2430
  %v2571 = vpack.c.b16 %v2433, %v2432
  %v2572 = vpack.c.b16 %v2435, %v2434
  %v2573 = vpack.c.b16 %v2437, %v2436
  %v2574 = vpack.c.b16 %v2439, %v2438
  %v2575 = vpack.c.b16 %v2441, %v2440
  %v2576 = vpack.c.b16 %v2443, %v2442
  %v2577 = vpack.c.b16 %v2445, %v2444
  %v2578 = vpack.c.b16 %v2447, %v2446
  %v2579 = vpack.c.b16 %v2449, %v2448
  %v2580 = vpack.c.b16 %v2451, %v2450
  %v2581 = vpack.c.b16 %v2453, %v2452
  %2710 = vmatprep.subr.bf16.mxu0 0
  %2711 = vmatpush1.bf16.msra.mxu0 %v2454
  %2712 = vmatprep.subr.bf16.mxu0 0
  %2713 = vmatpush1.bf16.msra.mxu0 %v2455
  %2714 = vmatprep.subr.bf16.mxu0 0
  %2715 = vmatpush1.bf16.msra.mxu0 %v2456
  %2716 = vmatprep.subr.bf16.mxu0 0
  %2717 = vmatpush1.bf16.msra.mxu0 %v2457
  %2718 = vmatprep.subr.bf16.mxu0 0
  %2719 = vmatpush1.bf16.msra.mxu0 %v2458
  %2720 = vmatprep.subr.bf16.mxu0 0
  %2721 = vmatpush1.bf16.msra.mxu0 %v2459
  %2722 = vmatprep.subr.bf16.mxu0 0
  %2723 = vmatpush1.bf16.msra.mxu0 %v2460
  %2724 = vmatprep.subr.bf16.mxu0 0
  %2725 = vmatpush1.bf16.msra.mxu0 %v2461
  %2726 = vmatprep.subr.bf16.mxu0 0
  %2727 = vmatpush1.bf16.msra.mxu0 %v2462
  %2728 = vmatprep.subr.bf16.mxu0 0
  %2729 = vmatpush1.bf16.msra.mxu0 %v2463
  %2730 = vmatprep.subr.bf16.mxu0 0
  %2731 = vmatpush1.bf16.msra.mxu0 %v2464
  %2732 = vmatprep.subr.bf16.mxu0 0
  %2733 = vmatpush1.bf16.msra.mxu0 %v2465
  %2734 = vmatprep.subr.bf16.mxu0 0
  %2735 = vmatpush1.bf16.msra.mxu0 %v2466
  %2736 = vmatprep.subr.bf16.mxu0 0
  %2737 = vmatpush1.bf16.msra.mxu0 %v2467
  %2738 = vmatprep.subr.bf16.mxu0 0
  %2739 = vmatpush1.bf16.msra.mxu0 %v2468
  %2740 = vmatprep.subr.bf16.mxu0 0
  %2741 = vmatpush1.bf16.msra.mxu0 %v2469
  %2742 = vmatprep.mubr.bf16.mxu0 %v1920
  %2743 = vmatmul.mubr.bf16.gmra.mrb[0].mxu0 %v1919
  %v2744 = vpop.f32.mrb[0].mxu0
  %v2745 = vadd.f32 %v1940, %v2744
  %v2746 = vpop.f32.mrb[0].mxu0
  %v2747 = vpop.f32.mrb[0].mxu0
  %v2748 = vadd.f32 %v1940, %v2747
  %v2749 = vpop.f32.mrb[0].mxu0
  %2750 = vdwg.mxu0
  %2751 = vmatprep.subr.bf16.mxu0 0
  %2752 = vmatpush1.bf16.msra.mxu0 %v2470
  %2753 = vmatprep.subr.bf16.mxu0 0
  %2754 = vmatpush1.bf16.msra.mxu0 %v2471
  %2755 = vmatprep.subr.bf16.mxu0 0
  %2756 = vmatpush1.bf16.msra.mxu0 %v2472
  %2757 = vmatprep.subr.bf16.mxu0 0
  %2758 = vmatpush1.bf16.msra.mxu0 %v2473
  %2759 = vmatprep.subr.bf16.mxu0 0
  %2760 = vmatpush1.bf16.msra.mxu0 %v2474
  %2761 = vmatprep.subr.bf16.mxu0 0
  %2762 = vmatpush1.bf16.msra.mxu0 %v2475
  %2763 = vmatprep.subr.bf16.mxu0 0
  %2764 = vmatpush1.bf16.msra.mxu0 %v2476
  %2765 = vmatprep.subr.bf16.mxu0 0
  %2766 = vmatpush1.bf16.msra.mxu0 %v2477
  %2767 = vmatprep.subr.bf16.mxu0 0
  %2768 = vmatpush1.bf16.msra.mxu0 %v2478
  %2769 = vmatprep.subr.bf16.mxu0 0
  %2770 = vmatpush1.bf16.msra.mxu0 %v2479
  %2771 = vmatprep.subr.bf16.mxu0 0
  %2772 = vmatpush1.bf16.msra.mxu0 %v2480
  %2773 = vmatprep.subr.bf16.mxu0 0
  %2774 = vmatpush1.bf16.msra.mxu0 %v2481
  %2775 = vmatprep.subr.bf16.mxu0 0
  %2776 = vmatpush1.bf16.msra.mxu0 %v2482
  %2777 = vmatprep.subr.bf16.mxu0 0
  %2778 = vmatpush1.bf16.msra.mxu0 %v2483
  %2779 = vmatprep.subr.bf16.mxu0 0
  %2780 = vmatpush1.bf16.msra.mxu0 %v2484
  %2781 = vmatprep.subr.bf16.mxu0 0
  %2782 = vmatpush1.bf16.msra.mxu0 %v2485
  %2783 = vmatprep.mubr.bf16.mxu0 %v1922
  %2784 = vmatmul.mubr.bf16.gmra.mrb[0].mxu0 %v1921
  %v2785 = vpop.f32.mrb[0].mxu0
  %v2786 = vadd.f32 %v2745, %v2785
  %v2787 = vpop.f32.mrb[0].mxu0
  %v2788 = vpop.f32.mrb[0].mxu0
  %v2789 = vadd.f32 %v2748, %v2788
  %v2790 = vpop.f32.mrb[0].mxu0
  %2791 = vdwg.mxu0
  %2792 = vmatprep.subr.bf16.mxu0 0
  %2793 = vmatpush1.bf16.msra.mxu0 %v2486
  %2794 = vmatprep.subr.bf16.mxu0 0
  %2795 = vmatpush1.bf16.msra.mxu0 %v2487
  %2796 = vmatprep.subr.bf16.mxu0 0
  %2797 = vmatpush1.bf16.msra.mxu0 %v2488
  %2798 = vmatprep.subr.bf16.mxu0 0
  %2799 = vmatpush1.bf16.msra.mxu0 %v2489
  %2800 = vmatprep.subr.bf16.mxu0 0
  %2801 = vmatpush1.bf16.msra.mxu0 %v2490
  %2802 = vmatprep.subr.bf16.mxu0 0
  %2803 = vmatpush1.bf16.msra.mxu0 %v2491
  %2804 = vmatprep.subr.bf16.mxu0 0
  %2805 = vmatpush1.bf16.msra.mxu0 %v2492
  %2806 = vmatprep.subr.bf16.mxu0 0
  %2807 = vmatpush1.bf16.msra.mxu0 %v2493
  %2808 = vmatprep.subr.bf16.mxu0 0
  %2809 = vmatpush1.bf16.msra.mxu0 %v2494
  %2810 = vmatprep.subr.bf16.mxu0 0
  %2811 = vmatpush1.bf16.msra.mxu0 %v2495
  %2812 = vmatprep.subr.bf16.mxu0 0
  %2813 = vmatpush1.bf16.msra.mxu0 %v2496
  %2814 = vmatprep.subr.bf16.mxu0 0
  %2815 = vmatpush1.bf16.msra.mxu0 %v2497
  %2816 = vmatprep.subr.bf16.mxu0 0
  %2817 = vmatpush1.bf16.msra.mxu0 %v2498
  %2818 = vmatprep.subr.bf16.mxu0 0
  %2819 = vmatpush1.bf16.msra.mxu0 %v2499
  %2820 = vmatprep.subr.bf16.mxu0 0
  %2821 = vmatpush1.bf16.msra.mxu0 %v2500
  %2822 = vmatprep.subr.bf16.mxu0 0
  %2823 = vmatpush1.bf16.msra.mxu0 %v2501
  %2824 = vmatprep.mubr.bf16.mxu0 %v1924
  %2825 = vmatmul.mubr.bf16.gmra.mrb[0].mxu0 %v1923
  %v2826 = vpop.f32.mrb[0].mxu0
  %v2827 = vadd.f32 %v2786, %v2826
  %v2828 = vpop.f32.mrb[0].mxu0
  %v2829 = vpop.f32.mrb[0].mxu0
  %v2830 = vadd.f32 %v2789, %v2829
  %v2831 = vpop.f32.mrb[0].mxu0
  %2832 = vdwg.mxu0
  %2833 = vmatprep.subr.bf16.mxu0 0
  %2834 = vmatpush1.bf16.msra.mxu0 %v2502
  %2835 = vmatprep.subr.bf16.mxu0 0
  %2836 = vmatpush1.bf16.msra.mxu0 %v2503
  %2837 = vmatprep.subr.bf16.mxu0 0
  %2838 = vmatpush1.bf16.msra.mxu0 %v2504
  %2839 = vmatprep.subr.bf16.mxu0 0
  %2840 = vmatpush1.bf16.msra.mxu0 %v2505
  %2841 = vmatprep.subr.bf16.mxu0 0
  %2842 = vmatpush1.bf16.msra.mxu0 %v2506
  %2843 = vmatprep.subr.bf16.mxu0 0
  %2844 = vmatpush1.bf16.msra.mxu0 %v2507
  %2845 = vmatprep.subr.bf16.mxu0 0
  %2846 = vmatpush1.bf16.msra.mxu0 %v2508
  %2847 = vmatprep.subr.bf16.mxu0 0
  %2848 = vmatpush1.bf16.msra.mxu0 %v2509
  %2849 = vmatprep.subr.bf16.mxu0 0
  %2850 = vmatpush1.bf16.msra.mxu0 %v2510
  %2851 = vmatprep.subr.bf16.mxu0 0
  %2852 = vmatpush1.bf16.msra.mxu0 %v2511
  %2853 = vmatprep.subr.bf16.mxu0 0
  %2854 = vmatpush1.bf16.msra.mxu0 %v2512
  %2855 = vmatprep.subr.bf16.mxu0 0
  %2856 = vmatpush1.bf16.msra.mxu0 %v2513
  %2857 = vmatprep.subr.bf16.mxu0 0
  %2858 = vmatpush1.bf16.msra.mxu0 %v2514
  %2859 = vmatprep.subr.bf16.mxu0 0
  %2860 = vmatpush1.bf16.msra.mxu0 %v2515
  %2861 = vmatprep.subr.bf16.mxu0 0
  %2862 = vmatpush1.bf16.msra.mxu0 %v2516
  %2863 = vmatprep.subr.bf16.mxu0 0
  %2864 = vmatpush1.bf16.msra.mxu0 %v2517
  %2865 = vmatprep.mubr.bf16.mxu0 %v1926
  %2866 = vmatmul.mubr.bf16.gmra.mrb[0].mxu0 %v1925
  %v2867 = vpop.f32.mrb[0].mxu0
  %v2868 = vadd.f32 %v2827, %v2867
  %v2869 = vpop.f32.mrb[0].mxu0
  %v2870 = vpop.f32.mrb[0].mxu0
  %v2871 = vadd.f32 %v2830, %v2870
  %v2872 = vpop.f32.mrb[0].mxu0
  %2873 = vdwg.mxu0
  %2874 = vmatprep.subr.bf16.mxu0 0
  %2875 = vmatpush1.bf16.msra.mxu0 %v2518
  %2876 = vmatprep.subr.bf16.mxu0 0
  %2877 = vmatpush1.bf16.msra.mxu0 %v2519
  %2878 = vmatprep.subr.bf16.mxu0 0
  %2879 = vmatpush1.bf16.msra.mxu0 %v2520
  %2880 = vmatprep.subr.bf16.mxu0 0
  %2881 = vmatpush1.bf16.msra.mxu0 %v2521
  %2882 = vmatprep.subr.bf16.mxu0 0
  %2883 = vmatpush1.bf16.msra.mxu0 %v2522
  %2884 = vmatprep.subr.bf16.mxu0 0
  %2885 = vmatpush1.bf16.msra.mxu0 %v2523
  %2886 = vmatprep.subr.bf16.mxu0 0
  %2887 = vmatpush1.bf16.msra.mxu0 %v2524
  %2888 = vmatprep.subr.bf16.mxu0 0
  %2889 = vmatpush1.bf16.msra.mxu0 %v2525
  %2890 = vmatprep.subr.bf16.mxu0 0
  %2891 = vmatpush1.bf16.msra.mxu0 %v2526
  %2892 = vmatprep.subr.bf16.mxu0 0
  %2893 = vmatpush1.bf16.msra.mxu0 %v2527
  %2894 = vmatprep.subr.bf16.mxu0 0
  %2895 = vmatpush1.bf16.msra.mxu0 %v2528
  %2896 = vmatprep.subr.bf16.mxu0 0
  %2897 = vmatpush1.bf16.msra.mxu0 %v2529
  %2898 = vmatprep.subr.bf16.mxu0 0
  %2899 = vmatpush1.bf16.msra.mxu0 %v2530
  %2900 = vmatprep.subr.bf16.mxu0 0
  %2901 = vmatpush1.bf16.msra.mxu0 %v2531
  %2902 = vmatprep.subr.bf16.mxu0 0
  %2903 = vmatpush1.bf16.msra.mxu0 %v2532
  %2904 = vmatprep.subr.bf16.mxu0 0
  %2905 = vmatpush1.bf16.msra.mxu0 %v2533
  %2906 = vmatprep.mubr.bf16.mxu0 %v1928
  %2907 = vmatmul.mubr.bf16.gmra.mrb[0].mxu0 %v1927
  %v2908 = vpop.f32.mrb[0].mxu0
  %v2909 = vadd.f32 %v2868, %v2908
  %v2910 = vpop.f32.mrb[0].mxu0
  %v2911 = vpop.f32.mrb[0].mxu0
  %v2912 = vadd.f32 %v2871, %v2911
  %v2913 = vpop.f32.mrb[0].mxu0
  %2914 = vdwg.mxu0
  %2915 = vmatprep.subr.bf16.mxu0 0
  %2916 = vmatpush1.bf16.msra.mxu0 %v2534
  %2917 = vmatprep.subr.bf16.mxu0 0
  %2918 = vmatpush1.bf16.msra.mxu0 %v2535
  %2919 = vmatprep.subr.bf16.mxu0 0
  %2920 = vmatpush1.bf16.msra.mxu0 %v2536
  %2921 = vmatprep.subr.bf16.mxu0 0
  %2922 = vmatpush1.bf16.msra.mxu0 %v2537
  %2923 = vmatprep.subr.bf16.mxu0 0
  %2924 = vmatpush1.bf16.msra.mxu0 %v2538
  %2925 = vmatprep.subr.bf16.mxu0 0
  %2926 = vmatpush1.bf16.msra.mxu0 %v2539
  %2927 = vmatprep.subr.bf16.mxu0 0
  %2928 = vmatpush1.bf16.msra.mxu0 %v2540
  %2929 = vmatprep.subr.bf16.mxu0 0
  %2930 = vmatpush1.bf16.msra.mxu0 %v2541
  %2931 = vmatprep.subr.bf16.mxu0 0
  %2932 = vmatpush1.bf16.msra.mxu0 %v2542
  %2933 = vmatprep.subr.bf16.mxu0 0
  %2934 = vmatpush1.bf16.msra.mxu0 %v2543
  %2935 = vmatprep.subr.bf16.mxu0 0
  %2936 = vmatpush1.bf16.msra.mxu0 %v2544
  %2937 = vmatprep.subr.bf16.mxu0 0
  %2938 = vmatpush1.bf16.msra.mxu0 %v2545
  %2939 = vmatprep.subr.bf16.mxu0 0
  %2940 = vmatpush1.bf16.msra.mxu0 %v2546
  %2941 = vmatprep.subr.bf16.mxu0 0
  %2942 = vmatpush1.bf16.msra.mxu0 %v2547
  %2943 = vmatprep.subr.bf16.mxu0 0
  %2944 = vmatpush1.bf16.msra.mxu0 %v2548
  %2945 = vmatprep.subr.bf16.mxu0 0
  %2946 = vmatpush1.bf16.msra.mxu0 %v2549
  %2947 = vmatprep.mubr.bf16.mxu0 %v1930
  %2948 = vmatmul.mubr.bf16.gmra.mrb[0].mxu0 %v1929
  %v2949 = vpop.f32.mrb[0].mxu0
  %v2950 = vadd.f32 %v2909, %v2949
  %v2951 = vpop.f32.mrb[0].mxu0
  %v2952 = vpop.f32.mrb[0].mxu0
  %v2953 = vadd.f32 %v2912, %v2952
  %v2954 = vpop.f32.mrb[0].mxu0
  %2955 = vdwg.mxu0
  %2956 = vmatprep.subr.bf16.mxu0 0
  %2957 = vmatpush1.bf16.msra.mxu0 %v2550
  %2958 = vmatprep.subr.bf16.mxu0 0
  %2959 = vmatpush1.bf16.msra.mxu0 %v2551
  %2960 = vmatprep.subr.bf16.mxu0 0
  %2961 = vmatpush1.bf16.msra.mxu0 %v2552
  %2962 = vmatprep.subr.bf16.mxu0 0
  %2963 = vmatpush1.bf16.msra.mxu0 %v2553
  %2964 = vmatprep.subr.bf16.mxu0 0
  %2965 = vmatpush1.bf16.msra.mxu0 %v2554
  %2966 = vmatprep.subr.bf16.mxu0 0
  %2967 = vmatpush1.bf16.msra.mxu0 %v2555
  %2968 = vmatprep.subr.bf16.mxu0 0
  %2969 = vmatpush1.bf16.msra.mxu0 %v2556
  %2970 = vmatprep.subr.bf16.mxu0 0
  %2971 = vmatpush1.bf16.msra.mxu0 %v2557
  %2972 = vmatprep.subr.bf16.mxu0 0
  %2973 = vmatpush1.bf16.msra.mxu0 %v2558
  %2974 = vmatprep.subr.bf16.mxu0 0
  %2975 = vmatpush1.bf16.msra.mxu0 %v2559
  %2976 = vmatprep.subr.bf16.mxu0 0
  %2977 = vmatpush1.bf16.msra.mxu0 %v2560
  %2978 = vmatprep.subr.bf16.mxu0 0
  %2979 = vmatpush1.bf16.msra.mxu0 %v2561
  %2980 = vmatprep.subr.bf16.mxu0 0
  %2981 = vmatpush1.bf16.msra.mxu0 %v2562
  %2982 = vmatprep.subr.bf16.mxu0 0
  %2983 = vmatpush1.bf16.msra.mxu0 %v2563
  %2984 = vmatprep.subr.bf16.mxu0 0
  %2985 = vmatpush1.bf16.msra.mxu0 %v2564
  %2986 = vmatprep.subr.bf16.mxu0 0
  %2987 = vmatpush1.bf16.msra.mxu0 %v2565
  %2988 = vmatprep.mubr.bf16.mxu0 %v1932
  %2989 = vmatmul.mubr.bf16.gmra.mrb[0].mxu0 %v1931
  %v2990 = vpop.f32.mrb[0].mxu0
  %v2991 = vadd.f32 %v2950, %v2990
  %v2992 = vpop.f32.mrb[0].mxu0
  %v2993 = vpop.f32.mrb[0].mxu0
  %v2994 = vadd.f32 %v2953, %v2993
  %v2995 = vpop.f32.mrb[0].mxu0
  %2996 = vdwg.mxu0
  %2997 = vmatprep.subr.bf16.mxu0 0
  %2998 = vmatpush1.bf16.msra.mxu0 %v2566
  %2999 = vmatprep.subr.bf16.mxu0 0
  %3000 = vmatpush1.bf16.msra.mxu0 %v2567
  %3001 = vmatprep.subr.bf16.mxu0 0
  %3002 = vmatpush1.bf16.msra.mxu0 %v2568
  %3003 = vmatprep.subr.bf16.mxu0 0
  %3004 = vmatpush1.bf16.msra.mxu0 %v2569
  %3005 = vmatprep.subr.bf16.mxu0 0
  %3006 = vmatpush1.bf16.msra.mxu0 %v2570
  %3007 = vmatprep.subr.bf16.mxu0 0
  %3008 = vmatpush1.bf16.msra.mxu0 %v2571
  %3009 = vmatprep.subr.bf16.mxu0 0
  %3010 = vmatpush1.bf16.msra.mxu0 %v2572
  %3011 = vmatprep.subr.bf16.mxu0 0
  %3012 = vmatpush1.bf16.msra.mxu0 %v2573
  %3013 = vmatprep.subr.bf16.mxu0 0
  %3014 = vmatpush1.bf16.msra.mxu0 %v2574
  %3015 = vmatprep.subr.bf16.mxu0 0
  %3016 = vmatpush1.bf16.msra.mxu0 %v2575
  %3017 = vmatprep.subr.bf16.mxu0 0
  %3018 = vmatpush1.bf16.msra.mxu0 %v2576
  %3019 = vmatprep.subr.bf16.mxu0 0
  %3020 = vmatpush1.bf16.msra.mxu0 %v2577
  %3021 = vmatprep.subr.bf16.mxu0 0
  %3022 = vmatpush1.bf16.msra.mxu0 %v2578
  %3023 = vmatprep.subr.bf16.mxu0 0
  %3024 = vmatpush1.bf16.msra.mxu0 %v2579
  %3025 = vmatprep.subr.bf16.mxu0 0
  %3026 = vmatpush1.bf16.msra.mxu0 %v2580
  %3027 = vmatprep.subr.bf16.mxu0 0
  %3028 = vmatpush1.bf16.msra.mxu0 %v2581
  %3029 = vmatprep.mubr.bf16.mxu0 %v1934
  %3030 = vmatmul.mubr.bf16.gmra.mrb[0].mxu0 %v1933
  %v3031 = vpop.f32.mrb[0].mxu0
  %v3032 = vadd.f32 %v2991, %v3031
  %v3033 = vpop.f32.mrb[0].mxu0
  %v3034 = vpop.f32.mrb[0].mxu0
  %v3035 = vadd.f32 %v2994, %v3034
  %v3036 = vpop.f32.mrb[0].mxu0
  %3037 = vdwg.mxu0
  %v3038 = vadd.f32 %v813, %v3032
  %v3039 = vadd.f32 %v814, %v3035
  %v3040 = vld [vmem:[%s17] sm:$0x1]
  %v3041 = vld [vmem:[%s18] sm:$0x1]
  %v3042 = vsel %vm184, %v3038, 0.0
  %3043 = vadd.xlane.f32.xlu0 %v3042
  %v3044 = vpop.xlane.xlu0 %3043
  %v3045 = vsel %vm184, %v3039, 0.0
  %3046 = vadd.xlane.f32.xlu0 %v3045
  %v3047 = vpop.xlane.xlu0 %3046
  %v3048 = vmul.f32 %v3044, %v778
  %v3049 = vmul.f32 %v3047, %v778
  %v3050 = vsub.f32 %v3038, %v3048
  %v3051 = vsub.f32 %v3039, %v3049
  %v3052 = vmul.f32 %v3050, %v3050
  %v3053 = vmul.f32 %v3051, %v3051
  %v3054 = vsel %vm184, %v3052, 0.0
  %3055 = vadd.xlane.f32.xlu0 %v3054
  %v3056 = vpop.xlane.xlu0 %3055
  %v3057 = vsel %vm184, %v3053, 0.0
  %3058 = vadd.xlane.f32.xlu0 %v3057
  %v3059 = vpop.xlane.xlu0 %3058
  %v3060 = vmul.f32 %v3056, %v778
  %v3061 = vmul.f32 %v3059, %v778
  %v3062 = vadd.f32 %v3060, 1e-05
  %v3063 = vadd.f32 %v3061, 1e-05
  %v3064 = vrsqrt.pop %v3062
  %v3065 = vrsqrt.pop %v3063
  %v3066 = vmul.f32 %v3050, %v3064
  %v3067 = vmul.f32 %v3051, %v3065
  %v3069 = vlaneseq
  %v3070 = vshrl.u32 %v3069, 7
  %v3071 = vsub.s32 0, %v3070
  %v3072 = vrot.slane %v3040, %v3071
  %v3074 = vmul.f32 %v3066, %v3072
  %v3075 = vmul.f32 %v3067, %v3072
  %v3077 = vlaneseq
  %v3078 = vshrl.u32 %v3077, 7
  %v3079 = vsub.s32 0, %v3078
  %v3080 = vrot.slane %v3041, %v3079
  %v3082 = vadd.f32 %v3074, %v3080
  %v3083 = vadd.f32 %v3075, %v3080
  %s3084 = scalar_lea.vmem %s7, 64
  %v3085 = vld [vmem:[%s3084] sm:$0xff]
  %v3086 = vld [vmem:[%s3084 + $0x8] sm:$0xff]
  %v3087 = vld [vmem:[%s3084 + $0x10] sm:$0xff]
  %v3088 = vld [vmem:[%s3084 + $0x18] sm:$0xff]
  %v3089 = vld [vmem:[%s3084 + $0x20] sm:$0xff]
  %v3090 = vld [vmem:[%s3084 + $0x28] sm:$0xff]
  %v3091 = vld [vmem:[%s3084 + $0x30] sm:$0xff]
  %v3092 = vld [vmem:[%s3084 + $0x38] sm:$0xff]
  %v3093 = vpack.c.bf16 %v3083, %v3082
  %s3094 = scalar_lea.vmem %s8, 2
  %v3095 = vld [vmem:[%s3094] sm:$0x3]
  %v3097 = vlaneseq
  %v3098 = vshrl.u32 %v3097, 7
  %v3099 = vsub.s32 0, %v3098
  %v3100 = vrot.slane %v3095, %v3099
  %v3101 = vlaneseq
  %v3102 = vshrl.u32 %v3101, 7
  %v3103 = vsub.s32 1, %v3102
  %v3104 = vrot.slane %v3095, %v3103
  %v3115 = vunpack.c.l.b16 %v3085
  %v3116 = vunpack.c.h.b16 %v3085
  %v3117 = vunpack.c.l.b16 %v3086
  %v3118 = vunpack.c.h.b16 %v3086
  %v3119 = vunpack.c.l.b16 %v3087
  %v3120 = vunpack.c.h.b16 %v3087
  %v3121 = vunpack.c.l.b16 %v3088
  %v3122 = vunpack.c.h.b16 %v3088
  %v3123 = vunpack.c.l.b16 %v3089
  %v3124 = vunpack.c.h.b16 %v3089
  %v3125 = vunpack.c.l.b16 %v3090
  %v3126 = vunpack.c.h.b16 %v3090
  %v3127 = vunpack.c.l.b16 %v3091
  %v3128 = vunpack.c.h.b16 %v3091
  %v3129 = vunpack.c.l.b16 %v3092
  %v3130 = vunpack.c.h.b16 %v3092
  %v3131 = vpack.c.b16 %v3117, %v3115
  %v3132 = vpack.c.b16 %v3118, %v3116
  %v3133 = vpack.c.b16 %v3121, %v3119
  %v3134 = vpack.c.b16 %v3122, %v3120
  %v3135 = vpack.c.b16 %v3125, %v3123
  %v3136 = vpack.c.b16 %v3126, %v3124
  %v3137 = vpack.c.b16 %v3129, %v3127
  %v3138 = vpack.c.b16 %v3130, %v3128
  %v3148 = vsel %vm184, %v3093, 0
  %3150 = vmatprep.subr.bf16.mxu0 %v3132
  %3151 = vmatpush1.bf16.msra.mxu0 %v3131
  %3152 = vmatprep.subr.bf16.mxu0 %v3134
  %3153 = vmatpush1.bf16.msra.mxu0 %v3133
  %3154 = vmatprep.subr.bf16.mxu0 %v3136
  %3155 = vmatpush1.bf16.msra.mxu0 %v3135
  %3156 = vmatprep.subr.bf16.mxu0 %v3138
  %3157 = vmatpush1.bf16.msra.mxu0 %v3137
  %3158 = vmatprep.subr.bf16.mxu0 0
  %3159 = vmatpush1.bf16.msra.mxu0 0
  %3160 = vmatprep.subr.bf16.mxu0 0
  %3161 = vmatpush1.bf16.msra.mxu0 0
  %3162 = vmatprep.subr.bf16.mxu0 0
  %3163 = vmatpush1.bf16.msra.mxu0 0
  %3164 = vmatprep.subr.bf16.mxu0 0
  %3165 = vmatpush1.bf16.msra.mxu0 0
  %3166 = vmatprep.subr.bf16.mxu0 0
  %3167 = vmatpush1.bf16.msra.mxu0 0
  %3168 = vmatprep.subr.bf16.mxu0 0
  %3169 = vmatpush1.bf16.msra.mxu0 0
  %3170 = vmatprep.subr.bf16.mxu0 0
  %3171 = vmatpush1.bf16.msra.mxu0 0
  %3172 = vmatprep.subr.bf16.mxu0 0
  %3173 = vmatpush1.bf16.msra.mxu0 0
  %3174 = vmatprep.subr.bf16.mxu0 0
  %3175 = vmatpush1.bf16.msra.mxu0 0
  %3176 = vmatprep.subr.bf16.mxu0 0
  %3177 = vmatpush1.bf16.msra.mxu0 0
  %3178 = vmatprep.subr.bf16.mxu0 0
  %3179 = vmatpush1.bf16.msra.mxu0 0
  %3180 = vmatprep.subr.bf16.mxu0 0
  %3181 = vmatpush1.bf16.msra.mxu0 0
  %3182 = vmatprep.mubr.bf16.mxu0 0
  %3183 = vmatmul.mubr.bf16.gmra.mrb[0].mxu0 %v3148
  %v3184 = vpop.f32.mrb[0].mxu0
  %v3185 = vadd.f32 %v3100, %v3184
  %v3186 = vpop.f32.mrb[0].mxu0
  %v3187 = vadd.f32 %v3104, %v3186
  %v3188 = vpop.f32.mrb[0].mxu0
  %v3189 = vadd.f32 %v3100, %v3188
  %v3190 = vpop.f32.mrb[0].mxu0
  %v3191 = vadd.f32 %v3104, %v3190
  %3192 = vdwg.mxu0
  %v3193 = vpack.c.bf16 %v3185, %v3185
  %v3194 = vpack.c.bf16 %v3187, %v3187
  %3196 = vrot.lane.b32.xlu0 %v3193, 64
  %v3197 = vpop.permute.xlu0 %3196
  %v3199 = vsel %vm236, %v3193, 0
  %v3202 = vsel %vm236, %v3197, 0
  %3204 = vmatprep.subr.bf16.mxu0 0
  %3205 = vmatpush1.bf16.xpose.msra.mxu0 %v3202
  %3206 = vmatprep.subr.bf16.mxu0 0
  %3207 = vmatpush1.bf16.xpose.msra.mxu0 0
  %3208 = vmatprep.subr.bf16.mxu0 0
  %3209 = vmatpush1.bf16.xpose.msra.mxu0 0
  %3210 = vmatprep.subr.bf16.mxu0 0
  %3211 = vmatpush1.bf16.xpose.msra.mxu0 0
  %3212 = vmatprep.subr.bf16.mxu0 0
  %3213 = vmatpush1.bf16.xpose.msra.mxu0 0
  %3214 = vmatprep.subr.bf16.mxu0 0
  %3215 = vmatpush1.bf16.xpose.msra.mxu0 0
  %3216 = vmatprep.subr.bf16.mxu0 0
  %3217 = vmatpush1.bf16.xpose.msra.mxu0 0
  %3218 = vmatprep.subr.bf16.mxu0 0
  %3219 = vmatpush1.bf16.xpose.msra.mxu0 0
  %3220 = vmatprep.subr.bf16.mxu0 0
  %3221 = vmatpush1.bf16.xpose.msra.mxu0 0
  %3222 = vmatprep.subr.bf16.mxu0 0
  %3223 = vmatpush1.bf16.xpose.msra.mxu0 0
  %3224 = vmatprep.subr.bf16.mxu0 0
  %3225 = vmatpush1.bf16.xpose.msra.mxu0 0
  %3226 = vmatprep.subr.bf16.mxu0 0
  %3227 = vmatpush1.bf16.xpose.msra.mxu0 0
  %3228 = vmatprep.subr.bf16.mxu0 0
  %3229 = vmatpush1.bf16.xpose.msra.mxu0 0
  %3230 = vmatprep.subr.bf16.mxu0 0
  %3231 = vmatpush1.bf16.xpose.msra.mxu0 0
  %3232 = vmatprep.subr.bf16.mxu0 0
  %3233 = vmatpush1.bf16.xpose.msra.mxu0 0
  %3234 = vmatprep.subr.bf16.mxu0 0
  %3235 = vmatpush1.bf16.xpose.msra.mxu0 0
  %3236 = vmatprep.mubr.bf16.mxu0 0
  %3237 = vmatmul.mubr.bf16.gmra.mrb[0].mxu0 %v3199
  %v3238 = vpop.f32.mrb[0].mxu0
  %v3239 = vadd.f32 0.0, %v3238
  %v3240 = vpop.f32.mrb[0].mxu0
  %v3241 = vpop.f32.mrb[0].mxu0
  %v3242 = vpop.f32.mrb[0].mxu0
  %3243 = vdwg.mxu0
  %v3244 = vsel %vm283, %v3239, -inf
  %3245 = vmax.xlane.f32.xlu0 %v3244
  %v3246 = vpop.xlane.xlu0 %3245
  %v3247 = vsub.f32 %v3239, %v3246
  %v3248 = vmul.f32 %v3247, 1.442695
  %v3249 = vpow.pop %v3248
  %v3250 = vsel %vm283, %v3249, 0.0
  %3251 = vadd.xlane.f32.xlu0 %v3250
  %v3252 = vpop.xlane.xlu0 %3251
  %v3253 = vrcp.pop %v3252
  %v3254 = vmul.f32 %v3249, %v3253
  %v3255 = vpack.c.bf16 %v3254, %v3254
  %v3257 = vsel %vm283, %v3255, 0
  %v3260 = vsel %vm299, %v3194, 0
  %3262 = vmatprep.subr.bf16.mxu0 0
  %3263 = vmatpush1.bf16.msra.mxu0 %v3260
  %3264 = vmatprep.subr.bf16.mxu0 0
  %3265 = vmatpush1.bf16.msra.mxu0 0
  %3266 = vmatprep.subr.bf16.mxu0 0
  %3267 = vmatpush1.bf16.msra.mxu0 0
  %3268 = vmatprep.subr.bf16.mxu0 0
  %3269 = vmatpush1.bf16.msra.mxu0 0
  %3270 = vmatprep.subr.bf16.mxu0 0
  %3271 = vmatpush1.bf16.msra.mxu0 0
  %3272 = vmatprep.subr.bf16.mxu0 0
  %3273 = vmatpush1.bf16.msra.mxu0 0
  %3274 = vmatprep.subr.bf16.mxu0 0
  %3275 = vmatpush1.bf16.msra.mxu0 0
  %3276 = vmatprep.subr.bf16.mxu0 0
  %3277 = vmatpush1.bf16.msra.mxu0 0
  %3278 = vmatprep.subr.bf16.mxu0 0
  %3279 = vmatpush1.bf16.msra.mxu0 0
  %3280 = vmatprep.subr.bf16.mxu0 0
  %3281 = vmatpush1.bf16.msra.mxu0 0
  %3282 = vmatprep.subr.bf16.mxu0 0
  %3283 = vmatpush1.bf16.msra.mxu0 0
  %3284 = vmatprep.subr.bf16.mxu0 0
  %3285 = vmatpush1.bf16.msra.mxu0 0
  %3286 = vmatprep.subr.bf16.mxu0 0
  %3287 = vmatpush1.bf16.msra.mxu0 0
  %3288 = vmatprep.subr.bf16.mxu0 0
  %3289 = vmatpush1.bf16.msra.mxu0 0
  %3290 = vmatprep.subr.bf16.mxu0 0
  %3291 = vmatpush1.bf16.msra.mxu0 0
  %3292 = vmatprep.subr.bf16.mxu0 0
  %3293 = vmatpush1.bf16.msra.mxu0 0
  %3294 = vmatprep.mubr.bf16.mxu0 0
  %3295 = vmatmul.mubr.bf16.gmra.mrb[0].mxu0 %v3257
  %v3296 = vpop.f32.mrb[0].mxu0
  %v3297 = vadd.f32 0.0, %v3296
  %v3298 = vpop.f32.mrb[0].mxu0
  %v3299 = vpop.f32.mrb[0].mxu0
  %v3300 = vpop.f32.mrb[0].mxu0
  %3301 = vdwg.mxu0
  %3302 = vrot.lane.b32.xlu0 %v3193, 96
  %v3303 = vpop.permute.xlu0 %3302
  %3304 = vrot.lane.b32.xlu0 %v3193, 32
  %v3305 = vpop.permute.xlu0 %3304
  %v3307 = vsel %vm236, %v3303, 0
  %v3310 = vsel %vm236, %v3305, 0
  %3312 = vmatprep.subr.bf16.mxu0 0
  %3313 = vmatpush1.bf16.xpose.msra.mxu0 %v3310
  %3314 = vmatprep.subr.bf16.mxu0 0
  %3315 = vmatpush1.bf16.xpose.msra.mxu0 0
  %3316 = vmatprep.subr.bf16.mxu0 0
  %3317 = vmatpush1.bf16.xpose.msra.mxu0 0
  %3318 = vmatprep.subr.bf16.mxu0 0
  %3319 = vmatpush1.bf16.xpose.msra.mxu0 0
  %3320 = vmatprep.subr.bf16.mxu0 0
  %3321 = vmatpush1.bf16.xpose.msra.mxu0 0
  %3322 = vmatprep.subr.bf16.mxu0 0
  %3323 = vmatpush1.bf16.xpose.msra.mxu0 0
  %3324 = vmatprep.subr.bf16.mxu0 0
  %3325 = vmatpush1.bf16.xpose.msra.mxu0 0
  %3326 = vmatprep.subr.bf16.mxu0 0
  %3327 = vmatpush1.bf16.xpose.msra.mxu0 0
  %3328 = vmatprep.subr.bf16.mxu0 0
  %3329 = vmatpush1.bf16.xpose.msra.mxu0 0
  %3330 = vmatprep.subr.bf16.mxu0 0
  %3331 = vmatpush1.bf16.xpose.msra.mxu0 0
  %3332 = vmatprep.subr.bf16.mxu0 0
  %3333 = vmatpush1.bf16.xpose.msra.mxu0 0
  %3334 = vmatprep.subr.bf16.mxu0 0
  %3335 = vmatpush1.bf16.xpose.msra.mxu0 0
  %3336 = vmatprep.subr.bf16.mxu0 0
  %3337 = vmatpush1.bf16.xpose.msra.mxu0 0
  %3338 = vmatprep.subr.bf16.mxu0 0
  %3339 = vmatpush1.bf16.xpose.msra.mxu0 0
  %3340 = vmatprep.subr.bf16.mxu0 0
  %3341 = vmatpush1.bf16.xpose.msra.mxu0 0
  %3342 = vmatprep.subr.bf16.mxu0 0
  %3343 = vmatpush1.bf16.xpose.msra.mxu0 0
  %3344 = vmatprep.mubr.bf16.mxu0 0
  %3345 = vmatmul.mubr.bf16.gmra.mrb[0].mxu0 %v3307
  %v3346 = vpop.f32.mrb[0].mxu0
  %v3347 = vadd.f32 0.0, %v3346
  %v3348 = vpop.f32.mrb[0].mxu0
  %v3349 = vpop.f32.mrb[0].mxu0
  %v3350 = vpop.f32.mrb[0].mxu0
  %3351 = vdwg.mxu0
  %v3352 = vsel %vm283, %v3347, -inf
  %3353 = vmax.xlane.f32.xlu0 %v3352
  %v3354 = vpop.xlane.xlu0 %3353
  %v3355 = vsub.f32 %v3347, %v3354
  %v3356 = vmul.f32 %v3355, 1.442695
  %v3357 = vpow.pop %v3356
  %v3358 = vsel %vm283, %v3357, 0.0
  %3359 = vadd.xlane.f32.xlu0 %v3358
  %v3360 = vpop.xlane.xlu0 %3359
  %v3361 = vrcp.pop %v3360
  %v3362 = vmul.f32 %v3357, %v3361
  %v3363 = vpack.c.bf16 %v3362, %v3362
  %3365 = vrot.lane.b32.xlu0 %v3194, 96
  %v3366 = vpop.permute.xlu0 %3365
  %v3368 = vsel %vm283, %v3363, 0
  %v3371 = vsel %vm299, %v3366, 0
  %3373 = vmatprep.subr.bf16.mxu0 0
  %3374 = vmatpush1.bf16.msra.mxu0 %v3371
  %3375 = vmatprep.subr.bf16.mxu0 0
  %3376 = vmatpush1.bf16.msra.mxu0 0
  %3377 = vmatprep.subr.bf16.mxu0 0
  %3378 = vmatpush1.bf16.msra.mxu0 0
  %3379 = vmatprep.subr.bf16.mxu0 0
  %3380 = vmatpush1.bf16.msra.mxu0 0
  %3381 = vmatprep.subr.bf16.mxu0 0
  %3382 = vmatpush1.bf16.msra.mxu0 0
  %3383 = vmatprep.subr.bf16.mxu0 0
  %3384 = vmatpush1.bf16.msra.mxu0 0
  %3385 = vmatprep.subr.bf16.mxu0 0
  %3386 = vmatpush1.bf16.msra.mxu0 0
  %3387 = vmatprep.subr.bf16.mxu0 0
  %3388 = vmatpush1.bf16.msra.mxu0 0
  %3389 = vmatprep.subr.bf16.mxu0 0
  %3390 = vmatpush1.bf16.msra.mxu0 0
  %3391 = vmatprep.subr.bf16.mxu0 0
  %3392 = vmatpush1.bf16.msra.mxu0 0
  %3393 = vmatprep.subr.bf16.mxu0 0
  %3394 = vmatpush1.bf16.msra.mxu0 0
  %3395 = vmatprep.subr.bf16.mxu0 0
  %3396 = vmatpush1.bf16.msra.mxu0 0
  %3397 = vmatprep.subr.bf16.mxu0 0
  %3398 = vmatpush1.bf16.msra.mxu0 0
  %3399 = vmatprep.subr.bf16.mxu0 0
  %3400 = vmatpush1.bf16.msra.mxu0 0
  %3401 = vmatprep.subr.bf16.mxu0 0
  %3402 = vmatpush1.bf16.msra.mxu0 0
  %3403 = vmatprep.subr.bf16.mxu0 0
  %3404 = vmatpush1.bf16.msra.mxu0 0
  %3405 = vmatprep.mubr.bf16.mxu0 0
  %3406 = vmatmul.mubr.bf16.gmra.mrb[0].mxu0 %v3368
  %v3407 = vpop.f32.mrb[0].mxu0
  %v3408 = vadd.f32 0.0, %v3407
  %v3409 = vpop.f32.mrb[0].mxu0
  %v3410 = vpop.f32.mrb[0].mxu0
  %v3411 = vpop.f32.mrb[0].mxu0
  %3412 = vdwg.mxu0
  %3414 = vrot.lane.b32.xlu0 %v3408, 32
  %v3415 = vpop.permute.xlu0 %3414
  %v3417 = vsel %vm236, %v3297, %v3415
  %v3418 = vpack.c.bf16 %v3189, %v3189
  %v3419 = vpack.c.bf16 %v3191, %v3191
  %3421 = vrot.lane.b32.xlu0 %v3418, 64
  %v3422 = vpop.permute.xlu0 %3421
  %v3424 = vsel %vm236, %v3418, 0
  %v3427 = vsel %vm236, %v3422, 0
  %3429 = vmatprep.subr.bf16.mxu0 0
  %3430 = vmatpush1.bf16.xpose.msra.mxu0 %v3427
  %3431 = vmatprep.subr.bf16.mxu0 0
  %3432 = vmatpush1.bf16.xpose.msra.mxu0 0
  %3433 = vmatprep.subr.bf16.mxu0 0
  %3434 = vmatpush1.bf16.xpose.msra.mxu0 0
  %3435 = vmatprep.subr.bf16.mxu0 0
  %3436 = vmatpush1.bf16.xpose.msra.mxu0 0
  %3437 = vmatprep.subr.bf16.mxu0 0
  %3438 = vmatpush1.bf16.xpose.msra.mxu0 0
  %3439 = vmatprep.subr.bf16.mxu0 0
  %3440 = vmatpush1.bf16.xpose.msra.mxu0 0
  %3441 = vmatprep.subr.bf16.mxu0 0
  %3442 = vmatpush1.bf16.xpose.msra.mxu0 0
  %3443 = vmatprep.subr.bf16.mxu0 0
  %3444 = vmatpush1.bf16.xpose.msra.mxu0 0
  %3445 = vmatprep.subr.bf16.mxu0 0
  %3446 = vmatpush1.bf16.xpose.msra.mxu0 0
  %3447 = vmatprep.subr.bf16.mxu0 0
  %3448 = vmatpush1.bf16.xpose.msra.mxu0 0
  %3449 = vmatprep.subr.bf16.mxu0 0
  %3450 = vmatpush1.bf16.xpose.msra.mxu0 0
  %3451 = vmatprep.subr.bf16.mxu0 0
  %3452 = vmatpush1.bf16.xpose.msra.mxu0 0
  %3453 = vmatprep.subr.bf16.mxu0 0
  %3454 = vmatpush1.bf16.xpose.msra.mxu0 0
  %3455 = vmatprep.subr.bf16.mxu0 0
  %3456 = vmatpush1.bf16.xpose.msra.mxu0 0
  %3457 = vmatprep.subr.bf16.mxu0 0
  %3458 = vmatpush1.bf16.xpose.msra.mxu0 0
  %3459 = vmatprep.subr.bf16.mxu0 0
  %3460 = vmatpush1.bf16.xpose.msra.mxu0 0
  %3461 = vmatprep.mubr.bf16.mxu0 0
  %3462 = vmatmul.mubr.bf16.gmra.mrb[0].mxu0 %v3424
  %v3463 = vpop.f32.mrb[0].mxu0
  %v3464 = vadd.f32 0.0, %v3463
  %v3465 = vpop.f32.mrb[0].mxu0
  %v3466 = vpop.f32.mrb[0].mxu0
  %v3467 = vpop.f32.mrb[0].mxu0
  %3468 = vdwg.mxu0
  %v3469 = vsel %vm283, %v3464, -inf
  %3470 = vmax.xlane.f32.xlu0 %v3469
  %v3471 = vpop.xlane.xlu0 %3470
  %v3472 = vsub.f32 %v3464, %v3471
  %v3473 = vmul.f32 %v3472, 1.442695
  %v3474 = vpow.pop %v3473
  %v3475 = vsel %vm283, %v3474, 0.0
  %3476 = vadd.xlane.f32.xlu0 %v3475
  %v3477 = vpop.xlane.xlu0 %3476
  %v3478 = vrcp.pop %v3477
  %v3479 = vmul.f32 %v3474, %v3478
  %v3480 = vpack.c.bf16 %v3479, %v3479
  %v3482 = vsel %vm283, %v3480, 0
  %v3485 = vsel %vm299, %v3419, 0
  %3487 = vmatprep.subr.bf16.mxu0 0
  %3488 = vmatpush1.bf16.msra.mxu0 %v3485
  %3489 = vmatprep.subr.bf16.mxu0 0
  %3490 = vmatpush1.bf16.msra.mxu0 0
  %3491 = vmatprep.subr.bf16.mxu0 0
  %3492 = vmatpush1.bf16.msra.mxu0 0
  %3493 = vmatprep.subr.bf16.mxu0 0
  %3494 = vmatpush1.bf16.msra.mxu0 0
  %3495 = vmatprep.subr.bf16.mxu0 0
  %3496 = vmatpush1.bf16.msra.mxu0 0
  %3497 = vmatprep.subr.bf16.mxu0 0
  %3498 = vmatpush1.bf16.msra.mxu0 0
  %3499 = vmatprep.subr.bf16.mxu0 0
  %3500 = vmatpush1.bf16.msra.mxu0 0
  %3501 = vmatprep.subr.bf16.mxu0 0
  %3502 = vmatpush1.bf16.msra.mxu0 0
  %3503 = vmatprep.subr.bf16.mxu0 0
  %3504 = vmatpush1.bf16.msra.mxu0 0
  %3505 = vmatprep.subr.bf16.mxu0 0
  %3506 = vmatpush1.bf16.msra.mxu0 0
  %3507 = vmatprep.subr.bf16.mxu0 0
  %3508 = vmatpush1.bf16.msra.mxu0 0
  %3509 = vmatprep.subr.bf16.mxu0 0
  %3510 = vmatpush1.bf16.msra.mxu0 0
  %3511 = vmatprep.subr.bf16.mxu0 0
  %3512 = vmatpush1.bf16.msra.mxu0 0
  %3513 = vmatprep.subr.bf16.mxu0 0
  %3514 = vmatpush1.bf16.msra.mxu0 0
  %3515 = vmatprep.subr.bf16.mxu0 0
  %3516 = vmatpush1.bf16.msra.mxu0 0
  %3517 = vmatprep.subr.bf16.mxu0 0
  %3518 = vmatpush1.bf16.msra.mxu0 0
  %3519 = vmatprep.mubr.bf16.mxu0 0
  %3520 = vmatmul.mubr.bf16.gmra.mrb[0].mxu0 %v3482
  %v3521 = vpop.f32.mrb[0].mxu0
  %v3522 = vadd.f32 0.0, %v3521
  %v3523 = vpop.f32.mrb[0].mxu0
  %v3524 = vpop.f32.mrb[0].mxu0
  %v3525 = vpop.f32.mrb[0].mxu0
  %3526 = vdwg.mxu0
  %3527 = vrot.lane.b32.xlu0 %v3418, 96
  %v3528 = vpop.permute.xlu0 %3527
  %3529 = vrot.lane.b32.xlu0 %v3418, 32
  %v3530 = vpop.permute.xlu0 %3529
  %v3532 = vsel %vm236, %v3528, 0
  %v3535 = vsel %vm236, %v3530, 0
  %3537 = vmatprep.subr.bf16.mxu0 0
  %3538 = vmatpush1.bf16.xpose.msra.mxu0 %v3535
  %3539 = vmatprep.subr.bf16.mxu0 0
  %3540 = vmatpush1.bf16.xpose.msra.mxu0 0
  %3541 = vmatprep.subr.bf16.mxu0 0
  %3542 = vmatpush1.bf16.xpose.msra.mxu0 0
  %3543 = vmatprep.subr.bf16.mxu0 0
  %3544 = vmatpush1.bf16.xpose.msra.mxu0 0
  %3545 = vmatprep.subr.bf16.mxu0 0
  %3546 = vmatpush1.bf16.xpose.msra.mxu0 0
  %3547 = vmatprep.subr.bf16.mxu0 0
  %3548 = vmatpush1.bf16.xpose.msra.mxu0 0
  %3549 = vmatprep.subr.bf16.mxu0 0
  %3550 = vmatpush1.bf16.xpose.msra.mxu0 0
  %3551 = vmatprep.subr.bf16.mxu0 0
  %3552 = vmatpush1.bf16.xpose.msra.mxu0 0
  %3553 = vmatprep.subr.bf16.mxu0 0
  %3554 = vmatpush1.bf16.xpose.msra.mxu0 0
  %3555 = vmatprep.subr.bf16.mxu0 0
  %3556 = vmatpush1.bf16.xpose.msra.mxu0 0
  %3557 = vmatprep.subr.bf16.mxu0 0
  %3558 = vmatpush1.bf16.xpose.msra.mxu0 0
  %3559 = vmatprep.subr.bf16.mxu0 0
  %3560 = vmatpush1.bf16.xpose.msra.mxu0 0
  %3561 = vmatprep.subr.bf16.mxu0 0
  %3562 = vmatpush1.bf16.xpose.msra.mxu0 0
  %3563 = vmatprep.subr.bf16.mxu0 0
  %3564 = vmatpush1.bf16.xpose.msra.mxu0 0
  %3565 = vmatprep.subr.bf16.mxu0 0
  %3566 = vmatpush1.bf16.xpose.msra.mxu0 0
  %3567 = vmatprep.subr.bf16.mxu0 0
  %3568 = vmatpush1.bf16.xpose.msra.mxu0 0
  %3569 = vmatprep.mubr.bf16.mxu0 0
  %3570 = vmatmul.mubr.bf16.gmra.mrb[0].mxu0 %v3532
  %v3571 = vpop.f32.mrb[0].mxu0
  %v3572 = vadd.f32 0.0, %v3571
  %v3573 = vpop.f32.mrb[0].mxu0
  %v3574 = vpop.f32.mrb[0].mxu0
  %v3575 = vpop.f32.mrb[0].mxu0
  %3576 = vdwg.mxu0
  %v3577 = vsel %vm283, %v3572, -inf
  %3578 = vmax.xlane.f32.xlu0 %v3577
  %v3579 = vpop.xlane.xlu0 %3578
  %v3580 = vsub.f32 %v3572, %v3579
  %v3581 = vmul.f32 %v3580, 1.442695
  %v3582 = vpow.pop %v3581
  %v3583 = vsel %vm283, %v3582, 0.0
  %3584 = vadd.xlane.f32.xlu0 %v3583
  %v3585 = vpop.xlane.xlu0 %3584
  %v3586 = vrcp.pop %v3585
  %v3587 = vmul.f32 %v3582, %v3586
  %v3588 = vpack.c.bf16 %v3587, %v3587
  %3590 = vrot.lane.b32.xlu0 %v3419, 96
  %v3591 = vpop.permute.xlu0 %3590
  %v3593 = vsel %vm283, %v3588, 0
  %v3596 = vsel %vm299, %v3591, 0
  %3598 = vmatprep.subr.bf16.mxu0 0
  %3599 = vmatpush1.bf16.msra.mxu0 %v3596
  %3600 = vmatprep.subr.bf16.mxu0 0
  %3601 = vmatpush1.bf16.msra.mxu0 0
  %3602 = vmatprep.subr.bf16.mxu0 0
  %3603 = vmatpush1.bf16.msra.mxu0 0
  %3604 = vmatprep.subr.bf16.mxu0 0
  %3605 = vmatpush1.bf16.msra.mxu0 0
  %3606 = vmatprep.subr.bf16.mxu0 0
  %3607 = vmatpush1.bf16.msra.mxu0 0
  %3608 = vmatprep.subr.bf16.mxu0 0
  %3609 = vmatpush1.bf16.msra.mxu0 0
  %3610 = vmatprep.subr.bf16.mxu0 0
  %3611 = vmatpush1.bf16.msra.mxu0 0
  %3612 = vmatprep.subr.bf16.mxu0 0
  %3613 = vmatpush1.bf16.msra.mxu0 0
  %3614 = vmatprep.subr.bf16.mxu0 0
  %3615 = vmatpush1.bf16.msra.mxu0 0
  %3616 = vmatprep.subr.bf16.mxu0 0
  %3617 = vmatpush1.bf16.msra.mxu0 0
  %3618 = vmatprep.subr.bf16.mxu0 0
  %3619 = vmatpush1.bf16.msra.mxu0 0
  %3620 = vmatprep.subr.bf16.mxu0 0
  %3621 = vmatpush1.bf16.msra.mxu0 0
  %3622 = vmatprep.subr.bf16.mxu0 0
  %3623 = vmatpush1.bf16.msra.mxu0 0
  %3624 = vmatprep.subr.bf16.mxu0 0
  %3625 = vmatpush1.bf16.msra.mxu0 0
  %3626 = vmatprep.subr.bf16.mxu0 0
  %3627 = vmatpush1.bf16.msra.mxu0 0
  %3628 = vmatprep.subr.bf16.mxu0 0
  %3629 = vmatpush1.bf16.msra.mxu0 0
  %3630 = vmatprep.mubr.bf16.mxu0 0
  %3631 = vmatmul.mubr.bf16.gmra.mrb[0].mxu0 %v3593
  %v3632 = vpop.f32.mrb[0].mxu0
  %v3633 = vadd.f32 0.0, %v3632
  %v3634 = vpop.f32.mrb[0].mxu0
  %v3635 = vpop.f32.mrb[0].mxu0
  %v3636 = vpop.f32.mrb[0].mxu0
  %3637 = vdwg.mxu0
  %3639 = vrot.lane.b32.xlu0 %v3633, 32
  %v3640 = vpop.permute.xlu0 %3639
  %v3642 = vsel %vm236, %v3522, %v3640
  %s3643 = scalar_lea.vmem %s9, 32
  %v3644 = vld [vmem:[%s3643] sm:$0xf]
  %v3645 = vld [vmem:[%s3643 + $0x4] sm:$0xf]
  %v3646 = vld [vmem:[%s3643 + $0x8] sm:$0xf]
  %v3647 = vld [vmem:[%s3643 + $0xc] sm:$0xf]
  %v3648 = vld [vmem:[%s3643 + $0x10] sm:$0xf]
  %v3649 = vld [vmem:[%s3643 + $0x14] sm:$0xf]
  %v3650 = vld [vmem:[%s3643 + $0x18] sm:$0xf]
  %v3651 = vld [vmem:[%s3643 + $0x1c] sm:$0xf]
  %v3652 = vpack.c.bf16 %v3642, %v3417
  %s3653 = scalar_lea.vmem %s10, 1
  %v3654 = vld [vmem:[%s3653] sm:$0x1]
  %v3656 = vlaneseq
  %v3657 = vshrl.u32 %v3656, 7
  %v3658 = vsub.s32 0, %v3657
  %v3659 = vrot.slane %v3654, %v3658
  %v3669 = vunpack.c.l.b16 %v3644
  %v3670 = vunpack.c.l.b16 %v3645
  %v3671 = vunpack.c.l.b16 %v3646
  %v3672 = vunpack.c.l.b16 %v3647
  %v3673 = vunpack.c.l.b16 %v3648
  %v3674 = vunpack.c.l.b16 %v3649
  %v3675 = vunpack.c.l.b16 %v3650
  %v3676 = vunpack.c.l.b16 %v3651
  %v3677 = vpack.c.b16 %v3670, %v3669
  %v3678 = vpack.c.b16 %v3672, %v3671
  %v3679 = vpack.c.b16 %v3674, %v3673
  %v3680 = vpack.c.b16 %v3676, %v3675
  %v3686 = vsel %vm184, %v3652, 0
  %3688 = vmatprep.subr.bf16.mxu0 0
  %3689 = vmatpush1.bf16.msra.mxu0 %v3677
  %3690 = vmatprep.subr.bf16.mxu0 0
  %3691 = vmatpush1.bf16.msra.mxu0 %v3678
  %3692 = vmatprep.subr.bf16.mxu0 0
  %3693 = vmatpush1.bf16.msra.mxu0 %v3679
  %3694 = vmatprep.subr.bf16.mxu0 0
  %3695 = vmatpush1.bf16.msra.mxu0 %v3680
  %3696 = vmatprep.subr.bf16.mxu0 0
  %3697 = vmatpush1.bf16.msra.mxu0 0
  %3698 = vmatprep.subr.bf16.mxu0 0
  %3699 = vmatpush1.bf16.msra.mxu0 0
  %3700 = vmatprep.subr.bf16.mxu0 0
  %3701 = vmatpush1.bf16.msra.mxu0 0
  %3702 = vmatprep.subr.bf16.mxu0 0
  %3703 = vmatpush1.bf16.msra.mxu0 0
  %3704 = vmatprep.subr.bf16.mxu0 0
  %3705 = vmatpush1.bf16.msra.mxu0 0
  %3706 = vmatprep.subr.bf16.mxu0 0
  %3707 = vmatpush1.bf16.msra.mxu0 0
  %3708 = vmatprep.subr.bf16.mxu0 0
  %3709 = vmatpush1.bf16.msra.mxu0 0
  %3710 = vmatprep.subr.bf16.mxu0 0
  %3711 = vmatpush1.bf16.msra.mxu0 0
  %3712 = vmatprep.subr.bf16.mxu0 0
  %3713 = vmatpush1.bf16.msra.mxu0 0
  %3714 = vmatprep.subr.bf16.mxu0 0
  %3715 = vmatpush1.bf16.msra.mxu0 0
  %3716 = vmatprep.subr.bf16.mxu0 0
  %3717 = vmatpush1.bf16.msra.mxu0 0
  %3718 = vmatprep.subr.bf16.mxu0 0
  %3719 = vmatpush1.bf16.msra.mxu0 0
  %3720 = vmatprep.mubr.bf16.mxu0 0
  %3721 = vmatmul.mubr.bf16.gmra.mrb[0].mxu0 %v3686
  %v3722 = vpop.f32.mrb[0].mxu0
  %v3723 = vadd.f32 %v3659, %v3722
  %v3724 = vpop.f32.mrb[0].mxu0
  %v3725 = vpop.f32.mrb[0].mxu0
  %v3726 = vadd.f32 %v3659, %v3725
  %v3727 = vpop.f32.mrb[0].mxu0
  %3728 = vdwg.mxu0
  %v3729 = vadd.f32 %v3082, %v3723
  %v3730 = vadd.f32 %v3083, %v3726
  %s3731 = scalar_lea.vmem %s11, 1
  %v3732 = vld [vmem:[%s3731] sm:$0x1]
  %s3733 = scalar_lea.vmem %s12, 1
  %v3734 = vld [vmem:[%s3733] sm:$0x1]
  %v3735 = vsel %vm184, %v3729, 0.0
  %3736 = vadd.xlane.f32.xlu0 %v3735
  %v3737 = vpop.xlane.xlu0 %3736
  %v3738 = vsel %vm184, %v3730, 0.0
  %3739 = vadd.xlane.f32.xlu0 %v3738
  %v3740 = vpop.xlane.xlu0 %3739
  %v3741 = vmul.f32 %v3737, %v778
  %v3742 = vmul.f32 %v3740, %v778
  %v3743 = vsub.f32 %v3729, %v3741
  %v3744 = vsub.f32 %v3730, %v3742
  %v3745 = vmul.f32 %v3743, %v3743
  %v3746 = vmul.f32 %v3744, %v3744
  %v3747 = vsel %vm184, %v3745, 0.0
  %3748 = vadd.xlane.f32.xlu0 %v3747
  %v3749 = vpop.xlane.xlu0 %3748
  %v3750 = vsel %vm184, %v3746, 0.0
  %3751 = vadd.xlane.f32.xlu0 %v3750
  %v3752 = vpop.xlane.xlu0 %3751
  %v3753 = vmul.f32 %v3749, %v778
  %v3754 = vmul.f32 %v3752, %v778
  %v3755 = vadd.f32 %v3753, 1e-05
  %v3756 = vadd.f32 %v3754, 1e-05
  %v3757 = vrsqrt.pop %v3755
  %v3758 = vrsqrt.pop %v3756
  %v3759 = vmul.f32 %v3743, %v3757
  %v3760 = vmul.f32 %v3744, %v3758
  %v3762 = vlaneseq
  %v3763 = vshrl.u32 %v3762, 7
  %v3764 = vsub.s32 0, %v3763
  %v3765 = vrot.slane %v3732, %v3764
  %v3767 = vmul.f32 %v3759, %v3765
  %v3768 = vmul.f32 %v3760, %v3765
  %v3770 = vlaneseq
  %v3771 = vshrl.u32 %v3770, 7
  %v3772 = vsub.s32 0, %v3771
  %v3773 = vrot.slane %v3734, %v3772
  %v3775 = vadd.f32 %v3767, %v3773
  %v3776 = vadd.f32 %v3768, %v3773
  %s3777 = scalar_lea.vmem %s13, 512
  %v3778 = vld [vmem:[%s3777] sm:$0xff]
  %v3779 = vld [vmem:[%s3777 + $0x8] sm:$0xff]
  %v3780 = vld [vmem:[%s3777 + $0x10] sm:$0xff]
  %v3781 = vld [vmem:[%s3777 + $0x18] sm:$0xff]
  %v3782 = vld [vmem:[%s3777 + $0x20] sm:$0xff]
  %v3783 = vld [vmem:[%s3777 + $0x28] sm:$0xff]
  %v3784 = vld [vmem:[%s3777 + $0x30] sm:$0xff]
  %v3785 = vld [vmem:[%s3777 + $0x38] sm:$0xff]
  %v3786 = vld [vmem:[%s3777 + $0x40] sm:$0xff]
  %v3787 = vld [vmem:[%s3777 + $0x48] sm:$0xff]
  %v3788 = vld [vmem:[%s3777 + $0x50] sm:$0xff]
  %v3789 = vld [vmem:[%s3777 + $0x58] sm:$0xff]
  %v3790 = vld [vmem:[%s3777 + $0x60] sm:$0xff]
  %v3791 = vld [vmem:[%s3777 + $0x68] sm:$0xff]
  %v3792 = vld [vmem:[%s3777 + $0x70] sm:$0xff]
  %v3793 = vld [vmem:[%s3777 + $0x78] sm:$0xff]
  %v3794 = vld [vmem:[%s3777 + $0x80] sm:$0xff]
  %v3795 = vld [vmem:[%s3777 + $0x88] sm:$0xff]
  %v3796 = vld [vmem:[%s3777 + $0x90] sm:$0xff]
  %v3797 = vld [vmem:[%s3777 + $0x98] sm:$0xff]
  %v3798 = vld [vmem:[%s3777 + $0xa0] sm:$0xff]
  %v3799 = vld [vmem:[%s3777 + $0xa8] sm:$0xff]
  %v3800 = vld [vmem:[%s3777 + $0xb0] sm:$0xff]
  %v3801 = vld [vmem:[%s3777 + $0xb8] sm:$0xff]
  %v3802 = vld [vmem:[%s3777 + $0xc0] sm:$0xff]
  %v3803 = vld [vmem:[%s3777 + $0xc8] sm:$0xff]
  %v3804 = vld [vmem:[%s3777 + $0xd0] sm:$0xff]
  %v3805 = vld [vmem:[%s3777 + $0xd8] sm:$0xff]
  %v3806 = vld [vmem:[%s3777 + $0xe0] sm:$0xff]
  %v3807 = vld [vmem:[%s3777 + $0xe8] sm:$0xff]
  %v3808 = vld [vmem:[%s3777 + $0xf0] sm:$0xff]
  %v3809 = vld [vmem:[%s3777 + $0xf8] sm:$0xff]
  %v3810 = vld [vmem:[%s3777 + $0x100] sm:$0xff]
  %v3811 = vld [vmem:[%s3777 + $0x108] sm:$0xff]
  %v3812 = vld [vmem:[%s3777 + $0x110] sm:$0xff]
  %v3813 = vld [vmem:[%s3777 + $0x118] sm:$0xff]
  %v3814 = vld [vmem:[%s3777 + $0x120] sm:$0xff]
  %v3815 = vld [vmem:[%s3777 + $0x128] sm:$0xff]
  %v3816 = vld [vmem:[%s3777 + $0x130] sm:$0xff]
  %v3817 = vld [vmem:[%s3777 + $0x138] sm:$0xff]
  %v3818 = vld [vmem:[%s3777 + $0x140] sm:$0xff]
  %v3819 = vld [vmem:[%s3777 + $0x148] sm:$0xff]
  %v3820 = vld [vmem:[%s3777 + $0x150] sm:$0xff]
  %v3821 = vld [vmem:[%s3777 + $0x158] sm:$0xff]
  %v3822 = vld [vmem:[%s3777 + $0x160] sm:$0xff]
  %v3823 = vld [vmem:[%s3777 + $0x168] sm:$0xff]
  %v3824 = vld [vmem:[%s3777 + $0x170] sm:$0xff]
  %v3825 = vld [vmem:[%s3777 + $0x178] sm:$0xff]
  %v3826 = vld [vmem:[%s3777 + $0x180] sm:$0xff]
  %v3827 = vld [vmem:[%s3777 + $0x188] sm:$0xff]
  %v3828 = vld [vmem:[%s3777 + $0x190] sm:$0xff]
  %v3829 = vld [vmem:[%s3777 + $0x198] sm:$0xff]
  %v3830 = vld [vmem:[%s3777 + $0x1a0] sm:$0xff]
  %v3831 = vld [vmem:[%s3777 + $0x1a8] sm:$0xff]
  %v3832 = vld [vmem:[%s3777 + $0x1b0] sm:$0xff]
  %v3833 = vld [vmem:[%s3777 + $0x1b8] sm:$0xff]
  %v3834 = vld [vmem:[%s3777 + $0x1c0] sm:$0xff]
  %v3835 = vld [vmem:[%s3777 + $0x1c8] sm:$0xff]
  %v3836 = vld [vmem:[%s3777 + $0x1d0] sm:$0xff]
  %v3837 = vld [vmem:[%s3777 + $0x1d8] sm:$0xff]
  %v3838 = vld [vmem:[%s3777 + $0x1e0] sm:$0xff]
  %v3839 = vld [vmem:[%s3777 + $0x1e8] sm:$0xff]
  %v3840 = vld [vmem:[%s3777 + $0x1f0] sm:$0xff]
  %v3841 = vld [vmem:[%s3777 + $0x1f8] sm:$0xff]
  %v3842 = vpack.c.bf16 %v3776, %v3775
  %s3843 = scalar_lea.vmem %s14, 16
  %v3844 = vld [vmem:[%s3843] sm:$0xff]
  %v3845 = vld [vmem:[%s3843 + $0x8] sm:$0xff]
  %v3848 = vlaneseq
  %v3849 = vshrl.u32 %v3848, 7
  %v3850 = vsub.s32 0, %v3849
  %v3851 = vrot.slane %v3844, %v3850
  %v3852 = vlaneseq
  %v3853 = vshrl.u32 %v3852, 7
  %v3854 = vsub.s32 1, %v3853
  %v3855 = vrot.slane %v3844, %v3854
  %v3856 = vlaneseq
  %v3857 = vshrl.u32 %v3856, 7
  %v3858 = vsub.s32 2, %v3857
  %v3859 = vrot.slane %v3844, %v3858
  %v3860 = vlaneseq
  %v3861 = vshrl.u32 %v3860, 7
  %v3862 = vsub.s32 3, %v3861
  %v3863 = vrot.slane %v3844, %v3862
  %v3864 = vlaneseq
  %v3865 = vshrl.u32 %v3864, 7
  %v3866 = vsub.s32 4, %v3865
  %v3867 = vrot.slane %v3844, %v3866
  %v3868 = vlaneseq
  %v3869 = vshrl.u32 %v3868, 7
  %v3870 = vsub.s32 5, %v3869
  %v3871 = vrot.slane %v3844, %v3870
  %v3872 = vlaneseq
  %v3873 = vshrl.u32 %v3872, 7
  %v3874 = vsub.s32 6, %v3873
  %v3875 = vrot.slane %v3844, %v3874
  %v3876 = vlaneseq
  %v3877 = vshrl.u32 %v3876, 7
  %v3878 = vsub.s32 7, %v3877
  %v3879 = vrot.slane %v3844, %v3878
  %v3880 = vlaneseq
  %v3881 = vshrl.u32 %v3880, 7
  %v3882 = vsub.s32 0, %v3881
  %v3883 = vrot.slane %v3845, %v3882
  %v3884 = vlaneseq
  %v3885 = vshrl.u32 %v3884, 7
  %v3886 = vsub.s32 1, %v3885
  %v3887 = vrot.slane %v3845, %v3886
  %v3888 = vlaneseq
  %v3889 = vshrl.u32 %v3888, 7
  %v3890 = vsub.s32 2, %v3889
  %v3891 = vrot.slane %v3845, %v3890
  %v3892 = vlaneseq
  %v3893 = vshrl.u32 %v3892, 7
  %v3894 = vsub.s32 3, %v3893
  %v3895 = vrot.slane %v3845, %v3894
  %v3896 = vlaneseq
  %v3897 = vshrl.u32 %v3896, 7
  %v3898 = vsub.s32 4, %v3897
  %v3899 = vrot.slane %v3845, %v3898
  %v3900 = vlaneseq
  %v3901 = vshrl.u32 %v3900, 7
  %v3902 = vsub.s32 5, %v3901
  %v3903 = vrot.slane %v3845, %v3902
  %v3904 = vlaneseq
  %v3905 = vshrl.u32 %v3904, 7
  %v3906 = vsub.s32 6, %v3905
  %v3907 = vrot.slane %v3845, %v3906
  %v3908 = vlaneseq
  %v3909 = vshrl.u32 %v3908, 7
  %v3910 = vsub.s32 7, %v3909
  %v3911 = vrot.slane %v3845, %v3910
  %v3992 = vunpack.c.l.b16 %v3778
  %v3993 = vunpack.c.h.b16 %v3778
  %v3994 = vunpack.c.l.b16 %v3779
  %v3995 = vunpack.c.h.b16 %v3779
  %v3996 = vunpack.c.l.b16 %v3780
  %v3997 = vunpack.c.h.b16 %v3780
  %v3998 = vunpack.c.l.b16 %v3781
  %v3999 = vunpack.c.h.b16 %v3781
  %v4000 = vunpack.c.l.b16 %v3782
  %v4001 = vunpack.c.h.b16 %v3782
  %v4002 = vunpack.c.l.b16 %v3783
  %v4003 = vunpack.c.h.b16 %v3783
  %v4004 = vunpack.c.l.b16 %v3784
  %v4005 = vunpack.c.h.b16 %v3784
  %v4006 = vunpack.c.l.b16 %v3785
  %v4007 = vunpack.c.h.b16 %v3785
  %v4008 = vunpack.c.l.b16 %v3786
  %v4009 = vunpack.c.h.b16 %v3786
  %v4010 = vunpack.c.l.b16 %v3787
  %v4011 = vunpack.c.h.b16 %v3787
  %v4012 = vunpack.c.l.b16 %v3788
  %v4013 = vunpack.c.h.b16 %v3788
  %v4014 = vunpack.c.l.b16 %v3789
  %v4015 = vunpack.c.h.b16 %v3789
  %v4016 = vunpack.c.l.b16 %v3790
  %v4017 = vunpack.c.h.b16 %v3790
  %v4018 = vunpack.c.l.b16 %v3791
  %v4019 = vunpack.c.h.b16 %v3791
  %v4020 = vunpack.c.l.b16 %v3792
  %v4021 = vunpack.c.h.b16 %v3792
  %v4022 = vunpack.c.l.b16 %v3793
  %v4023 = vunpack.c.h.b16 %v3793
  %v4024 = vunpack.c.l.b16 %v3794
  %v4025 = vunpack.c.h.b16 %v3794
  %v4026 = vunpack.c.l.b16 %v3795
  %v4027 = vunpack.c.h.b16 %v3795
  %v4028 = vunpack.c.l.b16 %v3796
  %v4029 = vunpack.c.h.b16 %v3796
  %v4030 = vunpack.c.l.b16 %v3797
  %v4031 = vunpack.c.h.b16 %v3797
  %v4032 = vunpack.c.l.b16 %v3798
  %v4033 = vunpack.c.h.b16 %v3798
  %v4034 = vunpack.c.l.b16 %v3799
  %v4035 = vunpack.c.h.b16 %v3799
  %v4036 = vunpack.c.l.b16 %v3800
  %v4037 = vunpack.c.h.b16 %v3800
  %v4038 = vunpack.c.l.b16 %v3801
  %v4039 = vunpack.c.h.b16 %v3801
  %v4040 = vunpack.c.l.b16 %v3802
  %v4041 = vunpack.c.h.b16 %v3802
  %v4042 = vunpack.c.l.b16 %v3803
  %v4043 = vunpack.c.h.b16 %v3803
  %v4044 = vunpack.c.l.b16 %v3804
  %v4045 = vunpack.c.h.b16 %v3804
  %v4046 = vunpack.c.l.b16 %v3805
  %v4047 = vunpack.c.h.b16 %v3805
  %v4048 = vunpack.c.l.b16 %v3806
  %v4049 = vunpack.c.h.b16 %v3806
  %v4050 = vunpack.c.l.b16 %v3807
  %v4051 = vunpack.c.h.b16 %v3807
  %v4052 = vunpack.c.l.b16 %v3808
  %v4053 = vunpack.c.h.b16 %v3808
  %v4054 = vunpack.c.l.b16 %v3809
  %v4055 = vunpack.c.h.b16 %v3809
  %v4056 = vunpack.c.l.b16 %v3810
  %v4057 = vunpack.c.h.b16 %v3810
  %v4058 = vunpack.c.l.b16 %v3811
  %v4059 = vunpack.c.h.b16 %v3811
  %v4060 = vunpack.c.l.b16 %v3812
  %v4061 = vunpack.c.h.b16 %v3812
  %v4062 = vunpack.c.l.b16 %v3813
  %v4063 = vunpack.c.h.b16 %v3813
  %v4064 = vunpack.c.l.b16 %v3814
  %v4065 = vunpack.c.h.b16 %v3814
  %v4066 = vunpack.c.l.b16 %v3815
  %v4067 = vunpack.c.h.b16 %v3815
  %v4068 = vunpack.c.l.b16 %v3816
  %v4069 = vunpack.c.h.b16 %v3816
  %v4070 = vunpack.c.l.b16 %v3817
  %v4071 = vunpack.c.h.b16 %v3817
  %v4072 = vunpack.c.l.b16 %v3818
  %v4073 = vunpack.c.h.b16 %v3818
  %v4074 = vunpack.c.l.b16 %v3819
  %v4075 = vunpack.c.h.b16 %v3819
  %v4076 = vunpack.c.l.b16 %v3820
  %v4077 = vunpack.c.h.b16 %v3820
  %v4078 = vunpack.c.l.b16 %v3821
  %v4079 = vunpack.c.h.b16 %v3821
  %v4080 = vunpack.c.l.b16 %v3822
  %v4081 = vunpack.c.h.b16 %v3822
  %v4082 = vunpack.c.l.b16 %v3823
  %v4083 = vunpack.c.h.b16 %v3823
  %v4084 = vunpack.c.l.b16 %v3824
  %v4085 = vunpack.c.h.b16 %v3824
  %v4086 = vunpack.c.l.b16 %v3825
  %v4087 = vunpack.c.h.b16 %v3825
  %v4088 = vunpack.c.l.b16 %v3826
  %v4089 = vunpack.c.h.b16 %v3826
  %v4090 = vunpack.c.l.b16 %v3827
  %v4091 = vunpack.c.h.b16 %v3827
  %v4092 = vunpack.c.l.b16 %v3828
  %v4093 = vunpack.c.h.b16 %v3828
  %v4094 = vunpack.c.l.b16 %v3829
  %v4095 = vunpack.c.h.b16 %v3829
  %v4096 = vunpack.c.l.b16 %v3830
  %v4097 = vunpack.c.h.b16 %v3830
  %v4098 = vunpack.c.l.b16 %v3831
  %v4099 = vunpack.c.h.b16 %v3831
  %v4100 = vunpack.c.l.b16 %v3832
  %v4101 = vunpack.c.h.b16 %v3832
  %v4102 = vunpack.c.l.b16 %v3833
  %v4103 = vunpack.c.h.b16 %v3833
  %v4104 = vunpack.c.l.b16 %v3834
  %v4105 = vunpack.c.h.b16 %v3834
  %v4106 = vunpack.c.l.b16 %v3835
  %v4107 = vunpack.c.h.b16 %v3835
  %v4108 = vunpack.c.l.b16 %v3836
  %v4109 = vunpack.c.h.b16 %v3836
  %v4110 = vunpack.c.l.b16 %v3837
  %v4111 = vunpack.c.h.b16 %v3837
  %v4112 = vunpack.c.l.b16 %v3838
  %v4113 = vunpack.c.h.b16 %v3838
  %v4114 = vunpack.c.l.b16 %v3839
  %v4115 = vunpack.c.h.b16 %v3839
  %v4116 = vunpack.c.l.b16 %v3840
  %v4117 = vunpack.c.h.b16 %v3840
  %v4118 = vunpack.c.l.b16 %v3841
  %v4119 = vunpack.c.h.b16 %v3841
  %v4120 = vpack.c.b16 %v4008, %v3992
  %v4121 = vpack.c.b16 %v4009, %v3993
  %v4122 = vpack.c.b16 %v4010, %v3994
  %v4123 = vpack.c.b16 %v4011, %v3995
  %v4124 = vpack.c.b16 %v4012, %v3996
  %v4125 = vpack.c.b16 %v4013, %v3997
  %v4126 = vpack.c.b16 %v4014, %v3998
  %v4127 = vpack.c.b16 %v4015, %v3999
  %v4128 = vpack.c.b16 %v4016, %v4000
  %v4129 = vpack.c.b16 %v4017, %v4001
  %v4130 = vpack.c.b16 %v4018, %v4002
  %v4131 = vpack.c.b16 %v4019, %v4003
  %v4132 = vpack.c.b16 %v4020, %v4004
  %v4133 = vpack.c.b16 %v4021, %v4005
  %v4134 = vpack.c.b16 %v4022, %v4006
  %v4135 = vpack.c.b16 %v4023, %v4007
  %v4136 = vpack.c.b16 %v4040, %v4024
  %v4137 = vpack.c.b16 %v4041, %v4025
  %v4138 = vpack.c.b16 %v4042, %v4026
  %v4139 = vpack.c.b16 %v4043, %v4027
  %v4140 = vpack.c.b16 %v4044, %v4028
  %v4141 = vpack.c.b16 %v4045, %v4029
  %v4142 = vpack.c.b16 %v4046, %v4030
  %v4143 = vpack.c.b16 %v4047, %v4031
  %v4144 = vpack.c.b16 %v4048, %v4032
  %v4145 = vpack.c.b16 %v4049, %v4033
  %v4146 = vpack.c.b16 %v4050, %v4034
  %v4147 = vpack.c.b16 %v4051, %v4035
  %v4148 = vpack.c.b16 %v4052, %v4036
  %v4149 = vpack.c.b16 %v4053, %v4037
  %v4150 = vpack.c.b16 %v4054, %v4038
  %v4151 = vpack.c.b16 %v4055, %v4039
  %v4152 = vpack.c.b16 %v4072, %v4056
  %v4153 = vpack.c.b16 %v4073, %v4057
  %v4154 = vpack.c.b16 %v4074, %v4058
  %v4155 = vpack.c.b16 %v4075, %v4059
  %v4156 = vpack.c.b16 %v4076, %v4060
  %v4157 = vpack.c.b16 %v4077, %v4061
  %v4158 = vpack.c.b16 %v4078, %v4062
  %v4159 = vpack.c.b16 %v4079, %v4063
  %v4160 = vpack.c.b16 %v4080, %v4064
  %v4161 = vpack.c.b16 %v4081, %v4065
  %v4162 = vpack.c.b16 %v4082, %v4066
  %v4163 = vpack.c.b16 %v4083, %v4067
  %v4164 = vpack.c.b16 %v4084, %v4068
  %v4165 = vpack.c.b16 %v4085, %v4069
  %v4166 = vpack.c.b16 %v4086, %v4070
  %v4167 = vpack.c.b16 %v4087, %v4071
  %v4168 = vpack.c.b16 %v4104, %v4088
  %v4169 = vpack.c.b16 %v4105, %v4089
  %v4170 = vpack.c.b16 %v4106, %v4090
  %v4171 = vpack.c.b16 %v4107, %v4091
  %v4172 = vpack.c.b16 %v4108, %v4092
  %v4173 = vpack.c.b16 %v4109, %v4093
  %v4174 = vpack.c.b16 %v4110, %v4094
  %v4175 = vpack.c.b16 %v4111, %v4095
  %v4176 = vpack.c.b16 %v4112, %v4096
  %v4177 = vpack.c.b16 %v4113, %v4097
  %v4178 = vpack.c.b16 %v4114, %v4098
  %v4179 = vpack.c.b16 %v4115, %v4099
  %v4180 = vpack.c.b16 %v4116, %v4100
  %v4181 = vpack.c.b16 %v4117, %v4101
  %v4182 = vpack.c.b16 %v4118, %v4102
  %v4183 = vpack.c.b16 %v4119, %v4103
  %v4249 = vsel %vm184, %v3842, 0
  %4251 = vmatprep.subr.bf16.mxu0 %v4121
  %4252 = vmatpush1.bf16.msra.mxu0 %v4120
  %4253 = vmatprep.subr.bf16.mxu0 %v4137
  %4254 = vmatpush1.bf16.msra.mxu0 %v4136
  %4255 = vmatprep.subr.bf16.mxu0 %v4153
  %4256 = vmatpush1.bf16.msra.mxu0 %v4152
  %4257 = vmatprep.subr.bf16.mxu0 %v4169
  %4258 = vmatpush1.bf16.msra.mxu0 %v4168
  %4259 = vmatprep.subr.bf16.mxu0 0
  %4260 = vmatpush1.bf16.msra.mxu0 0
  %4261 = vmatprep.subr.bf16.mxu0 0
  %4262 = vmatpush1.bf16.msra.mxu0 0
  %4263 = vmatprep.subr.bf16.mxu0 0
  %4264 = vmatpush1.bf16.msra.mxu0 0
  %4265 = vmatprep.subr.bf16.mxu0 0
  %4266 = vmatpush1.bf16.msra.mxu0 0
  %4267 = vmatprep.subr.bf16.mxu0 0
  %4268 = vmatpush1.bf16.msra.mxu0 0
  %4269 = vmatprep.subr.bf16.mxu0 0
  %4270 = vmatpush1.bf16.msra.mxu0 0
  %4271 = vmatprep.subr.bf16.mxu0 0
  %4272 = vmatpush1.bf16.msra.mxu0 0
  %4273 = vmatprep.subr.bf16.mxu0 0
  %4274 = vmatpush1.bf16.msra.mxu0 0
  %4275 = vmatprep.subr.bf16.mxu0 0
  %4276 = vmatpush1.bf16.msra.mxu0 0
  %4277 = vmatprep.subr.bf16.mxu0 0
  %4278 = vmatpush1.bf16.msra.mxu0 0
  %4279 = vmatprep.subr.bf16.mxu0 0
  %4280 = vmatpush1.bf16.msra.mxu0 0
  %4281 = vmatprep.subr.bf16.mxu0 0
  %4282 = vmatpush1.bf16.msra.mxu0 0
  %4283 = vmatprep.mubr.bf16.mxu0 0
  %4284 = vmatmul.mubr.bf16.gmra.mrb[0].mxu0 %v4249
  %v4285 = vpop.f32.mrb[0].mxu0
  %v4286 = vadd.f32 %v3851, %v4285
  %v4287 = vpop.f32.mrb[0].mxu0
  %v4288 = vadd.f32 %v3855, %v4287
  %v4289 = vpop.f32.mrb[0].mxu0
  %v4290 = vadd.f32 %v3851, %v4289
  %v4291 = vpop.f32.mrb[0].mxu0
  %v4292 = vadd.f32 %v3855, %v4291
  %4293 = vdwg.mxu0
  %4294 = vmatprep.subr.bf16.mxu0 %v4123
  %4295 = vmatpush1.bf16.msra.mxu0 %v4122
  %4296 = vmatprep.subr.bf16.mxu0 %v4139
  %4297 = vmatpush1.bf16.msra.mxu0 %v4138
  %4298 = vmatprep.subr.bf16.mxu0 %v4155
  %4299 = vmatpush1.bf16.msra.mxu0 %v4154
  %4300 = vmatprep.subr.bf16.mxu0 %v4171
  %4301 = vmatpush1.bf16.msra.mxu0 %v4170
  %4302 = vmatprep.subr.bf16.mxu0 0
  %4303 = vmatpush1.bf16.msra.mxu0 0
  %4304 = vmatprep.subr.bf16.mxu0 0
  %4305 = vmatpush1.bf16.msra.mxu0 0
  %4306 = vmatprep.subr.bf16.mxu0 0
  %4307 = vmatpush1.bf16.msra.mxu0 0
  %4308 = vmatprep.subr.bf16.mxu0 0
  %4309 = vmatpush1.bf16.msra.mxu0 0
  %4310 = vmatprep.subr.bf16.mxu0 0
  %4311 = vmatpush1.bf16.msra.mxu0 0
  %4312 = vmatprep.subr.bf16.mxu0 0
  %4313 = vmatpush1.bf16.msra.mxu0 0
  %4314 = vmatprep.subr.bf16.mxu0 0
  %4315 = vmatpush1.bf16.msra.mxu0 0
  %4316 = vmatprep.subr.bf16.mxu0 0
  %4317 = vmatpush1.bf16.msra.mxu0 0
  %4318 = vmatprep.subr.bf16.mxu0 0
  %4319 = vmatpush1.bf16.msra.mxu0 0
  %4320 = vmatprep.subr.bf16.mxu0 0
  %4321 = vmatpush1.bf16.msra.mxu0 0
  %4322 = vmatprep.subr.bf16.mxu0 0
  %4323 = vmatpush1.bf16.msra.mxu0 0
  %4324 = vmatprep.subr.bf16.mxu0 0
  %4325 = vmatpush1.bf16.msra.mxu0 0
  %4326 = vmatprep.mubr.bf16.mxu0 0
  %4327 = vmatmul.mubr.bf16.gmra.mrb[0].mxu0 %v4249
  %v4328 = vpop.f32.mrb[0].mxu0
  %v4329 = vadd.f32 %v3859, %v4328
  %v4330 = vpop.f32.mrb[0].mxu0
  %v4331 = vadd.f32 %v3863, %v4330
  %v4332 = vpop.f32.mrb[0].mxu0
  %v4333 = vadd.f32 %v3859, %v4332
  %v4334 = vpop.f32.mrb[0].mxu0
  %v4335 = vadd.f32 %v3863, %v4334
  %4336 = vdwg.mxu0
  %4337 = vmatprep.subr.bf16.mxu0 %v4125
  %4338 = vmatpush1.bf16.msra.mxu0 %v4124
  %4339 = vmatprep.subr.bf16.mxu0 %v4141
  %4340 = vmatpush1.bf16.msra.mxu0 %v4140
  %4341 = vmatprep.subr.bf16.mxu0 %v4157
  %4342 = vmatpush1.bf16.msra.mxu0 %v4156
  %4343 = vmatprep.subr.bf16.mxu0 %v4173
  %4344 = vmatpush1.bf16.msra.mxu0 %v4172
  %4345 = vmatprep.subr.bf16.mxu0 0
  %4346 = vmatpush1.bf16.msra.mxu0 0
  %4347 = vmatprep.subr.bf16.mxu0 0
  %4348 = vmatpush1.bf16.msra.mxu0 0
  %4349 = vmatprep.subr.bf16.mxu0 0
  %4350 = vmatpush1.bf16.msra.mxu0 0
  %4351 = vmatprep.subr.bf16.mxu0 0
  %4352 = vmatpush1.bf16.msra.mxu0 0
  %4353 = vmatprep.subr.bf16.mxu0 0
  %4354 = vmatpush1.bf16.msra.mxu0 0
  %4355 = vmatprep.subr.bf16.mxu0 0
  %4356 = vmatpush1.bf16.msra.mxu0 0
  %4357 = vmatprep.subr.bf16.mxu0 0
  %4358 = vmatpush1.bf16.msra.mxu0 0
  %4359 = vmatprep.subr.bf16.mxu0 0
  %4360 = vmatpush1.bf16.msra.mxu0 0
  %4361 = vmatprep.subr.bf16.mxu0 0
  %4362 = vmatpush1.bf16.msra.mxu0 0
  %4363 = vmatprep.subr.bf16.mxu0 0
  %4364 = vmatpush1.bf16.msra.mxu0 0
  %4365 = vmatprep.subr.bf16.mxu0 0
  %4366 = vmatpush1.bf16.msra.mxu0 0
  %4367 = vmatprep.subr.bf16.mxu0 0
  %4368 = vmatpush1.bf16.msra.mxu0 0
  %4369 = vmatprep.mubr.bf16.mxu0 0
  %4370 = vmatmul.mubr.bf16.gmra.mrb[0].mxu0 %v4249
  %v4371 = vpop.f32.mrb[0].mxu0
  %v4372 = vadd.f32 %v3867, %v4371
  %v4373 = vpop.f32.mrb[0].mxu0
  %v4374 = vadd.f32 %v3871, %v4373
  %v4375 = vpop.f32.mrb[0].mxu0
  %v4376 = vadd.f32 %v3867, %v4375
  %v4377 = vpop.f32.mrb[0].mxu0
  %v4378 = vadd.f32 %v3871, %v4377
  %4379 = vdwg.mxu0
  %4380 = vmatprep.subr.bf16.mxu0 %v4127
  %4381 = vmatpush1.bf16.msra.mxu0 %v4126
  %4382 = vmatprep.subr.bf16.mxu0 %v4143
  %4383 = vmatpush1.bf16.msra.mxu0 %v4142
  %4384 = vmatprep.subr.bf16.mxu0 %v4159
  %4385 = vmatpush1.bf16.msra.mxu0 %v4158
  %4386 = vmatprep.subr.bf16.mxu0 %v4175
  %4387 = vmatpush1.bf16.msra.mxu0 %v4174
  %4388 = vmatprep.subr.bf16.mxu0 0
  %4389 = vmatpush1.bf16.msra.mxu0 0
  %4390 = vmatprep.subr.bf16.mxu0 0
  %4391 = vmatpush1.bf16.msra.mxu0 0
  %4392 = vmatprep.subr.bf16.mxu0 0
  %4393 = vmatpush1.bf16.msra.mxu0 0
  %4394 = vmatprep.subr.bf16.mxu0 0
  %4395 = vmatpush1.bf16.msra.mxu0 0
  %4396 = vmatprep.subr.bf16.mxu0 0
  %4397 = vmatpush1.bf16.msra.mxu0 0
  %4398 = vmatprep.subr.bf16.mxu0 0
  %4399 = vmatpush1.bf16.msra.mxu0 0
  %4400 = vmatprep.subr.bf16.mxu0 0
  %4401 = vmatpush1.bf16.msra.mxu0 0
  %4402 = vmatprep.subr.bf16.mxu0 0
  %4403 = vmatpush1.bf16.msra.mxu0 0
  %4404 = vmatprep.subr.bf16.mxu0 0
  %4405 = vmatpush1.bf16.msra.mxu0 0
  %4406 = vmatprep.subr.bf16.mxu0 0
  %4407 = vmatpush1.bf16.msra.mxu0 0
  %4408 = vmatprep.subr.bf16.mxu0 0
  %4409 = vmatpush1.bf16.msra.mxu0 0
  %4410 = vmatprep.subr.bf16.mxu0 0
  %4411 = vmatpush1.bf16.msra.mxu0 0
  %4412 = vmatprep.mubr.bf16.mxu0 0
  %4413 = vmatmul.mubr.bf16.gmra.mrb[0].mxu0 %v4249
  %v4414 = vpop.f32.mrb[0].mxu0
  %v4415 = vadd.f32 %v3875, %v4414
  %v4416 = vpop.f32.mrb[0].mxu0
  %v4417 = vadd.f32 %v3879, %v4416
  %v4418 = vpop.f32.mrb[0].mxu0
  %v4419 = vadd.f32 %v3875, %v4418
  %v4420 = vpop.f32.mrb[0].mxu0
  %v4421 = vadd.f32 %v3879, %v4420
  %4422 = vdwg.mxu0
  %4423 = vmatprep.subr.bf16.mxu0 %v4129
  %4424 = vmatpush1.bf16.msra.mxu0 %v4128
  %4425 = vmatprep.subr.bf16.mxu0 %v4145
  %4426 = vmatpush1.bf16.msra.mxu0 %v4144
  %4427 = vmatprep.subr.bf16.mxu0 %v4161
  %4428 = vmatpush1.bf16.msra.mxu0 %v4160
  %4429 = vmatprep.subr.bf16.mxu0 %v4177
  %4430 = vmatpush1.bf16.msra.mxu0 %v4176
  %4431 = vmatprep.subr.bf16.mxu0 0
  %4432 = vmatpush1.bf16.msra.mxu0 0
  %4433 = vmatprep.subr.bf16.mxu0 0
  %4434 = vmatpush1.bf16.msra.mxu0 0
  %4435 = vmatprep.subr.bf16.mxu0 0
  %4436 = vmatpush1.bf16.msra.mxu0 0
  %4437 = vmatprep.subr.bf16.mxu0 0
  %4438 = vmatpush1.bf16.msra.mxu0 0
  %4439 = vmatprep.subr.bf16.mxu0 0
  %4440 = vmatpush1.bf16.msra.mxu0 0
  %4441 = vmatprep.subr.bf16.mxu0 0
  %4442 = vmatpush1.bf16.msra.mxu0 0
  %4443 = vmatprep.subr.bf16.mxu0 0
  %4444 = vmatpush1.bf16.msra.mxu0 0
  %4445 = vmatprep.subr.bf16.mxu0 0
  %4446 = vmatpush1.bf16.msra.mxu0 0
  %4447 = vmatprep.subr.bf16.mxu0 0
  %4448 = vmatpush1.bf16.msra.mxu0 0
  %4449 = vmatprep.subr.bf16.mxu0 0
  %4450 = vmatpush1.bf16.msra.mxu0 0
  %4451 = vmatprep.subr.bf16.mxu0 0
  %4452 = vmatpush1.bf16.msra.mxu0 0
  %4453 = vmatprep.subr.bf16.mxu0 0
  %4454 = vmatpush1.bf16.msra.mxu0 0
  %4455 = vmatprep.mubr.bf16.mxu0 0
  %4456 = vmatmul.mubr.bf16.gmra.mrb[0].mxu0 %v4249
  %v4457 = vpop.f32.mrb[0].mxu0
  %v4458 = vadd.f32 %v3883, %v4457
  %v4459 = vpop.f32.mrb[0].mxu0
  %v4460 = vadd.f32 %v3887, %v4459
  %v4461 = vpop.f32.mrb[0].mxu0
  %v4462 = vadd.f32 %v3883, %v4461
  %v4463 = vpop.f32.mrb[0].mxu0
  %v4464 = vadd.f32 %v3887, %v4463
  %4465 = vdwg.mxu0
  %4466 = vmatprep.subr.bf16.mxu0 %v4131
  %4467 = vmatpush1.bf16.msra.mxu0 %v4130
  %4468 = vmatprep.subr.bf16.mxu0 %v4147
  %4469 = vmatpush1.bf16.msra.mxu0 %v4146
  %4470 = vmatprep.subr.bf16.mxu0 %v4163
  %4471 = vmatpush1.bf16.msra.mxu0 %v4162
  %4472 = vmatprep.subr.bf16.mxu0 %v4179
  %4473 = vmatpush1.bf16.msra.mxu0 %v4178
  %4474 = vmatprep.subr.bf16.mxu0 0
  %4475 = vmatpush1.bf16.msra.mxu0 0
  %4476 = vmatprep.subr.bf16.mxu0 0
  %4477 = vmatpush1.bf16.msra.mxu0 0
  %4478 = vmatprep.subr.bf16.mxu0 0
  %4479 = vmatpush1.bf16.msra.mxu0 0
  %4480 = vmatprep.subr.bf16.mxu0 0
  %4481 = vmatpush1.bf16.msra.mxu0 0
  %4482 = vmatprep.subr.bf16.mxu0 0
  %4483 = vmatpush1.bf16.msra.mxu0 0
  %4484 = vmatprep.subr.bf16.mxu0 0
  %4485 = vmatpush1.bf16.msra.mxu0 0
  %4486 = vmatprep.subr.bf16.mxu0 0
  %4487 = vmatpush1.bf16.msra.mxu0 0
  %4488 = vmatprep.subr.bf16.mxu0 0
  %4489 = vmatpush1.bf16.msra.mxu0 0
  %4490 = vmatprep.subr.bf16.mxu0 0
  %4491 = vmatpush1.bf16.msra.mxu0 0
  %4492 = vmatprep.subr.bf16.mxu0 0
  %4493 = vmatpush1.bf16.msra.mxu0 0
  %4494 = vmatprep.subr.bf16.mxu0 0
  %4495 = vmatpush1.bf16.msra.mxu0 0
  %4496 = vmatprep.subr.bf16.mxu0 0
  %4497 = vmatpush1.bf16.msra.mxu0 0
  %4498 = vmatprep.mubr.bf16.mxu0 0
  %4499 = vmatmul.mubr.bf16.gmra.mrb[0].mxu0 %v4249
  %v4500 = vpop.f32.mrb[0].mxu0
  %v4501 = vadd.f32 %v3891, %v4500
  %v4502 = vpop.f32.mrb[0].mxu0
  %v4503 = vadd.f32 %v3895, %v4502
  %v4504 = vpop.f32.mrb[0].mxu0
  %v4505 = vadd.f32 %v3891, %v4504
  %v4506 = vpop.f32.mrb[0].mxu0
  %v4507 = vadd.f32 %v3895, %v4506
  %4508 = vdwg.mxu0
  %4509 = vmatprep.subr.bf16.mxu0 %v4133
  %4510 = vmatpush1.bf16.msra.mxu0 %v4132
  %4511 = vmatprep.subr.bf16.mxu0 %v4149
  %4512 = vmatpush1.bf16.msra.mxu0 %v4148
  %4513 = vmatprep.subr.bf16.mxu0 %v4165
  %4514 = vmatpush1.bf16.msra.mxu0 %v4164
  %4515 = vmatprep.subr.bf16.mxu0 %v4181
  %4516 = vmatpush1.bf16.msra.mxu0 %v4180
  %4517 = vmatprep.subr.bf16.mxu0 0
  %4518 = vmatpush1.bf16.msra.mxu0 0
  %4519 = vmatprep.subr.bf16.mxu0 0
  %4520 = vmatpush1.bf16.msra.mxu0 0
  %4521 = vmatprep.subr.bf16.mxu0 0
  %4522 = vmatpush1.bf16.msra.mxu0 0
  %4523 = vmatprep.subr.bf16.mxu0 0
  %4524 = vmatpush1.bf16.msra.mxu0 0
  %4525 = vmatprep.subr.bf16.mxu0 0
  %4526 = vmatpush1.bf16.msra.mxu0 0
  %4527 = vmatprep.subr.bf16.mxu0 0
  %4528 = vmatpush1.bf16.msra.mxu0 0
  %4529 = vmatprep.subr.bf16.mxu0 0
  %4530 = vmatpush1.bf16.msra.mxu0 0
  %4531 = vmatprep.subr.bf16.mxu0 0
  %4532 = vmatpush1.bf16.msra.mxu0 0
  %4533 = vmatprep.subr.bf16.mxu0 0
  %4534 = vmatpush1.bf16.msra.mxu0 0
  %4535 = vmatprep.subr.bf16.mxu0 0
  %4536 = vmatpush1.bf16.msra.mxu0 0
  %4537 = vmatprep.subr.bf16.mxu0 0
  %4538 = vmatpush1.bf16.msra.mxu0 0
  %4539 = vmatprep.subr.bf16.mxu0 0
  %4540 = vmatpush1.bf16.msra.mxu0 0
  %4541 = vmatprep.mubr.bf16.mxu0 0
  %4542 = vmatmul.mubr.bf16.gmra.mrb[0].mxu0 %v4249
  %v4543 = vpop.f32.mrb[0].mxu0
  %v4544 = vadd.f32 %v3899, %v4543
  %v4545 = vpop.f32.mrb[0].mxu0
  %v4546 = vadd.f32 %v3903, %v4545
  %v4547 = vpop.f32.mrb[0].mxu0
  %v4548 = vadd.f32 %v3899, %v4547
  %v4549 = vpop.f32.mrb[0].mxu0
  %v4550 = vadd.f32 %v3903, %v4549
  %4551 = vdwg.mxu0
  %4552 = vmatprep.subr.bf16.mxu0 %v4135
  %4553 = vmatpush1.bf16.msra.mxu0 %v4134
  %4554 = vmatprep.subr.bf16.mxu0 %v4151
  %4555 = vmatpush1.bf16.msra.mxu0 %v4150
  %4556 = vmatprep.subr.bf16.mxu0 %v4167
  %4557 = vmatpush1.bf16.msra.mxu0 %v4166
  %4558 = vmatprep.subr.bf16.mxu0 %v4183
  %4559 = vmatpush1.bf16.msra.mxu0 %v4182
  %4560 = vmatprep.subr.bf16.mxu0 0
  %4561 = vmatpush1.bf16.msra.mxu0 0
  %4562 = vmatprep.subr.bf16.mxu0 0
  %4563 = vmatpush1.bf16.msra.mxu0 0
  %4564 = vmatprep.subr.bf16.mxu0 0
  %4565 = vmatpush1.bf16.msra.mxu0 0
  %4566 = vmatprep.subr.bf16.mxu0 0
  %4567 = vmatpush1.bf16.msra.mxu0 0
  %4568 = vmatprep.subr.bf16.mxu0 0
  %4569 = vmatpush1.bf16.msra.mxu0 0
  %4570 = vmatprep.subr.bf16.mxu0 0
  %4571 = vmatpush1.bf16.msra.mxu0 0
  %4572 = vmatprep.subr.bf16.mxu0 0
  %4573 = vmatpush1.bf16.msra.mxu0 0
  %4574 = vmatprep.subr.bf16.mxu0 0
  %4575 = vmatpush1.bf16.msra.mxu0 0
  %4576 = vmatprep.subr.bf16.mxu0 0
  %4577 = vmatpush1.bf16.msra.mxu0 0
  %4578 = vmatprep.subr.bf16.mxu0 0
  %4579 = vmatpush1.bf16.msra.mxu0 0
  %4580 = vmatprep.subr.bf16.mxu0 0
  %4581 = vmatpush1.bf16.msra.mxu0 0
  %4582 = vmatprep.subr.bf16.mxu0 0
  %4583 = vmatpush1.bf16.msra.mxu0 0
  %4584 = vmatprep.mubr.bf16.mxu0 0
  %4585 = vmatmul.mubr.bf16.gmra.mrb[0].mxu0 %v4249
  %v4586 = vpop.f32.mrb[0].mxu0
  %v4587 = vadd.f32 %v3907, %v4586
  %v4588 = vpop.f32.mrb[0].mxu0
  %v4589 = vadd.f32 %v3911, %v4588
  %v4590 = vpop.f32.mrb[0].mxu0
  %v4591 = vadd.f32 %v3907, %v4590
  %v4592 = vpop.f32.mrb[0].mxu0
  %v4593 = vadd.f32 %v3911, %v4592
  %4594 = vdwg.mxu0
  %v4595 = vmax.f32 %v4286, 0.0
  %v4596 = vmax.f32 %v4288, 0.0
  %v4597 = vmax.f32 %v4329, 0.0
  %v4598 = vmax.f32 %v4331, 0.0
  %v4599 = vmax.f32 %v4372, 0.0
  %v4600 = vmax.f32 %v4374, 0.0
  %v4601 = vmax.f32 %v4415, 0.0
  %v4602 = vmax.f32 %v4417, 0.0
  %v4603 = vmax.f32 %v4458, 0.0
  %v4604 = vmax.f32 %v4460, 0.0
  %v4605 = vmax.f32 %v4501, 0.0
  %v4606 = vmax.f32 %v4503, 0.0
  %v4607 = vmax.f32 %v4544, 0.0
  %v4608 = vmax.f32 %v4546, 0.0
  %v4609 = vmax.f32 %v4587, 0.0
  %v4610 = vmax.f32 %v4589, 0.0
  %v4611 = vmax.f32 %v4290, 0.0
  %v4612 = vmax.f32 %v4292, 0.0
  %v4613 = vmax.f32 %v4333, 0.0
  %v4614 = vmax.f32 %v4335, 0.0
  %v4615 = vmax.f32 %v4376, 0.0
  %v4616 = vmax.f32 %v4378, 0.0
  %v4617 = vmax.f32 %v4419, 0.0
  %v4618 = vmax.f32 %v4421, 0.0
  %v4619 = vmax.f32 %v4462, 0.0
  %v4620 = vmax.f32 %v4464, 0.0
  %v4621 = vmax.f32 %v4505, 0.0
  %v4622 = vmax.f32 %v4507, 0.0
  %v4623 = vmax.f32 %v4548, 0.0
  %v4624 = vmax.f32 %v4550, 0.0
  %v4625 = vmax.f32 %v4591, 0.0
  %v4626 = vmax.f32 %v4593, 0.0
  %s4627 = scalar_lea.vmem %s15, 1024
  %v4628 = vld [vmem:[%s4627] sm:$0xf]
  %v4629 = vld [vmem:[%s4627 + $0x4] sm:$0xf]
  %v4630 = vld [vmem:[%s4627 + $0x8] sm:$0xf]
  %v4631 = vld [vmem:[%s4627 + $0xc] sm:$0xf]
  %v4632 = vld [vmem:[%s4627 + $0x10] sm:$0xf]
  %v4633 = vld [vmem:[%s4627 + $0x14] sm:$0xf]
  %v4634 = vld [vmem:[%s4627 + $0x18] sm:$0xf]
  %v4635 = vld [vmem:[%s4627 + $0x1c] sm:$0xf]
  %v4636 = vld [vmem:[%s4627 + $0x20] sm:$0xf]
  %v4637 = vld [vmem:[%s4627 + $0x24] sm:$0xf]
  %v4638 = vld [vmem:[%s4627 + $0x28] sm:$0xf]
  %v4639 = vld [vmem:[%s4627 + $0x2c] sm:$0xf]
  %v4640 = vld [vmem:[%s4627 + $0x30] sm:$0xf]
  %v4641 = vld [vmem:[%s4627 + $0x34] sm:$0xf]
  %v4642 = vld [vmem:[%s4627 + $0x38] sm:$0xf]
  %v4643 = vld [vmem:[%s4627 + $0x3c] sm:$0xf]
  %v4644 = vld [vmem:[%s4627 + $0x40] sm:$0xf]
  %v4645 = vld [vmem:[%s4627 + $0x44] sm:$0xf]
  %v4646 = vld [vmem:[%s4627 + $0x48] sm:$0xf]
  %v4647 = vld [vmem:[%s4627 + $0x4c] sm:$0xf]
  %v4648 = vld [vmem:[%s4627 + $0x50] sm:$0xf]
  %v4649 = vld [vmem:[%s4627 + $0x54] sm:$0xf]
  %v4650 = vld [vmem:[%s4627 + $0x58] sm:$0xf]
  %v4651 = vld [vmem:[%s4627 + $0x5c] sm:$0xf]
  %v4652 = vld [vmem:[%s4627 + $0x60] sm:$0xf]
  %v4653 = vld [vmem:[%s4627 + $0x64] sm:$0xf]
  %v4654 = vld [vmem:[%s4627 + $0x68] sm:$0xf]
  %v4655 = vld [vmem:[%s4627 + $0x6c] sm:$0xf]
  %v4656 = vld [vmem:[%s4627 + $0x70] sm:$0xf]
  %v4657 = vld [vmem:[%s4627 + $0x74] sm:$0xf]
  %v4658 = vld [vmem:[%s4627 + $0x78] sm:$0xf]
  %v4659 = vld [vmem:[%s4627 + $0x7c] sm:$0xf]
  %v4660 = vld [vmem:[%s4627 + $0x80] sm:$0xf]
  %v4661 = vld [vmem:[%s4627 + $0x84] sm:$0xf]
  %v4662 = vld [vmem:[%s4627 + $0x88] sm:$0xf]
  %v4663 = vld [vmem:[%s4627 + $0x8c] sm:$0xf]
  %v4664 = vld [vmem:[%s4627 + $0x90] sm:$0xf]
  %v4665 = vld [vmem:[%s4627 + $0x94] sm:$0xf]
  %v4666 = vld [vmem:[%s4627 + $0x98] sm:$0xf]
  %v4667 = vld [vmem:[%s4627 + $0x9c] sm:$0xf]
  %v4668 = vld [vmem:[%s4627 + $0xa0] sm:$0xf]
  %v4669 = vld [vmem:[%s4627 + $0xa4] sm:$0xf]
  %v4670 = vld [vmem:[%s4627 + $0xa8] sm:$0xf]
  %v4671 = vld [vmem:[%s4627 + $0xac] sm:$0xf]
  %v4672 = vld [vmem:[%s4627 + $0xb0] sm:$0xf]
  %v4673 = vld [vmem:[%s4627 + $0xb4] sm:$0xf]
  %v4674 = vld [vmem:[%s4627 + $0xb8] sm:$0xf]
  %v4675 = vld [vmem:[%s4627 + $0xbc] sm:$0xf]
  %v4676 = vld [vmem:[%s4627 + $0xc0] sm:$0xf]
  %v4677 = vld [vmem:[%s4627 + $0xc4] sm:$0xf]
  %v4678 = vld [vmem:[%s4627 + $0xc8] sm:$0xf]
  %v4679 = vld [vmem:[%s4627 + $0xcc] sm:$0xf]
  %v4680 = vld [vmem:[%s4627 + $0xd0] sm:$0xf]
  %v4681 = vld [vmem:[%s4627 + $0xd4] sm:$0xf]
  %v4682 = vld [vmem:[%s4627 + $0xd8] sm:$0xf]
  %v4683 = vld [vmem:[%s4627 + $0xdc] sm:$0xf]
  %v4684 = vld [vmem:[%s4627 + $0xe0] sm:$0xf]
  %v4685 = vld [vmem:[%s4627 + $0xe4] sm:$0xf]
  %v4686 = vld [vmem:[%s4627 + $0xe8] sm:$0xf]
  %v4687 = vld [vmem:[%s4627 + $0xec] sm:$0xf]
  %v4688 = vld [vmem:[%s4627 + $0xf0] sm:$0xf]
  %v4689 = vld [vmem:[%s4627 + $0xf4] sm:$0xf]
  %v4690 = vld [vmem:[%s4627 + $0xf8] sm:$0xf]
  %v4691 = vld [vmem:[%s4627 + $0xfc] sm:$0xf]
  %v4692 = vld [vmem:[%s4627 + $0x100] sm:$0xf]
  %v4693 = vld [vmem:[%s4627 + $0x104] sm:$0xf]
  %v4694 = vld [vmem:[%s4627 + $0x108] sm:$0xf]
  %v4695 = vld [vmem:[%s4627 + $0x10c] sm:$0xf]
  %v4696 = vld [vmem:[%s4627 + $0x110] sm:$0xf]
  %v4697 = vld [vmem:[%s4627 + $0x114] sm:$0xf]
  %v4698 = vld [vmem:[%s4627 + $0x118] sm:$0xf]
  %v4699 = vld [vmem:[%s4627 + $0x11c] sm:$0xf]
  %v4700 = vld [vmem:[%s4627 + $0x120] sm:$0xf]
  %v4701 = vld [vmem:[%s4627 + $0x124] sm:$0xf]
  %v4702 = vld [vmem:[%s4627 + $0x128] sm:$0xf]
  %v4703 = vld [vmem:[%s4627 + $0x12c] sm:$0xf]
  %v4704 = vld [vmem:[%s4627 + $0x130] sm:$0xf]
  %v4705 = vld [vmem:[%s4627 + $0x134] sm:$0xf]
  %v4706 = vld [vmem:[%s4627 + $0x138] sm:$0xf]
  %v4707 = vld [vmem:[%s4627 + $0x13c] sm:$0xf]
  %v4708 = vld [vmem:[%s4627 + $0x140] sm:$0xf]
  %v4709 = vld [vmem:[%s4627 + $0x144] sm:$0xf]
  %v4710 = vld [vmem:[%s4627 + $0x148] sm:$0xf]
  %v4711 = vld [vmem:[%s4627 + $0x14c] sm:$0xf]
  %v4712 = vld [vmem:[%s4627 + $0x150] sm:$0xf]
  %v4713 = vld [vmem:[%s4627 + $0x154] sm:$0xf]
  %v4714 = vld [vmem:[%s4627 + $0x158] sm:$0xf]
  %v4715 = vld [vmem:[%s4627 + $0x15c] sm:$0xf]
  %v4716 = vld [vmem:[%s4627 + $0x160] sm:$0xf]
  %v4717 = vld [vmem:[%s4627 + $0x164] sm:$0xf]
  %v4718 = vld [vmem:[%s4627 + $0x168] sm:$0xf]
  %v4719 = vld [vmem:[%s4627 + $0x16c] sm:$0xf]
  %v4720 = vld [vmem:[%s4627 + $0x170] sm:$0xf]
  %v4721 = vld [vmem:[%s4627 + $0x174] sm:$0xf]
  %v4722 = vld [vmem:[%s4627 + $0x178] sm:$0xf]
  %v4723 = vld [vmem:[%s4627 + $0x17c] sm:$0xf]
  %v4724 = vld [vmem:[%s4627 + $0x180] sm:$0xf]
  %v4725 = vld [vmem:[%s4627 + $0x184] sm:$0xf]
  %v4726 = vld [vmem:[%s4627 + $0x188] sm:$0xf]
  %v4727 = vld [vmem:[%s4627 + $0x18c] sm:$0xf]
  %v4728 = vld [vmem:[%s4627 + $0x190] sm:$0xf]
  %v4729 = vld [vmem:[%s4627 + $0x194] sm:$0xf]
  %v4730 = vld [vmem:[%s4627 + $0x198] sm:$0xf]
  %v4731 = vld [vmem:[%s4627 + $0x19c] sm:$0xf]
  %v4732 = vld [vmem:[%s4627 + $0x1a0] sm:$0xf]
  %v4733 = vld [vmem:[%s4627 + $0x1a4] sm:$0xf]
  %v4734 = vld [vmem:[%s4627 + $0x1a8] sm:$0xf]
  %v4735 = vld [vmem:[%s4627 + $0x1ac] sm:$0xf]
  %v4736 = vld [vmem:[%s4627 + $0x1b0] sm:$0xf]
  %v4737 = vld [vmem:[%s4627 + $0x1b4] sm:$0xf]
  %v4738 = vld [vmem:[%s4627 + $0x1b8] sm:$0xf]
  %v4739 = vld [vmem:[%s4627 + $0x1bc] sm:$0xf]
  %v4740 = vld [vmem:[%s4627 + $0x1c0] sm:$0xf]
  %v4741 = vld [vmem:[%s4627 + $0x1c4] sm:$0xf]
  %v4742 = vld [vmem:[%s4627 + $0x1c8] sm:$0xf]
  %v4743 = vld [vmem:[%s4627 + $0x1cc] sm:$0xf]
  %v4744 = vld [vmem:[%s4627 + $0x1d0] sm:$0xf]
  %v4745 = vld [vmem:[%s4627 + $0x1d4] sm:$0xf]
  %v4746 = vld [vmem:[%s4627 + $0x1d8] sm:$0xf]
  %v4747 = vld [vmem:[%s4627 + $0x1dc] sm:$0xf]
  %v4748 = vld [vmem:[%s4627 + $0x1e0] sm:$0xf]
  %v4749 = vld [vmem:[%s4627 + $0x1e4] sm:$0xf]
  %v4750 = vld [vmem:[%s4627 + $0x1e8] sm:$0xf]
  %v4751 = vld [vmem:[%s4627 + $0x1ec] sm:$0xf]
  %v4752 = vld [vmem:[%s4627 + $0x1f0] sm:$0xf]
  %v4753 = vld [vmem:[%s4627 + $0x1f4] sm:$0xf]
  %v4754 = vld [vmem:[%s4627 + $0x1f8] sm:$0xf]
  %v4755 = vld [vmem:[%s4627 + $0x1fc] sm:$0xf]
  %v4756 = vld [vmem:[%s4627 + $0x200] sm:$0xf]
  %v4757 = vld [vmem:[%s4627 + $0x204] sm:$0xf]
  %v4758 = vld [vmem:[%s4627 + $0x208] sm:$0xf]
  %v4759 = vld [vmem:[%s4627 + $0x20c] sm:$0xf]
  %v4760 = vld [vmem:[%s4627 + $0x210] sm:$0xf]
  %v4761 = vld [vmem:[%s4627 + $0x214] sm:$0xf]
  %v4762 = vld [vmem:[%s4627 + $0x218] sm:$0xf]
  %v4763 = vld [vmem:[%s4627 + $0x21c] sm:$0xf]
  %v4764 = vld [vmem:[%s4627 + $0x220] sm:$0xf]
  %v4765 = vld [vmem:[%s4627 + $0x224] sm:$0xf]
  %v4766 = vld [vmem:[%s4627 + $0x228] sm:$0xf]
  %v4767 = vld [vmem:[%s4627 + $0x22c] sm:$0xf]
  %v4768 = vld [vmem:[%s4627 + $0x230] sm:$0xf]
  %v4769 = vld [vmem:[%s4627 + $0x234] sm:$0xf]
  %v4770 = vld [vmem:[%s4627 + $0x238] sm:$0xf]
  %v4771 = vld [vmem:[%s4627 + $0x23c] sm:$0xf]
  %v4772 = vld [vmem:[%s4627 + $0x240] sm:$0xf]
  %v4773 = vld [vmem:[%s4627 + $0x244] sm:$0xf]
  %v4774 = vld [vmem:[%s4627 + $0x248] sm:$0xf]
  %v4775 = vld [vmem:[%s4627 + $0x24c] sm:$0xf]
  %v4776 = vld [vmem:[%s4627 + $0x250] sm:$0xf]
  %v4777 = vld [vmem:[%s4627 + $0x254] sm:$0xf]
  %v4778 = vld [vmem:[%s4627 + $0x258] sm:$0xf]
  %v4779 = vld [vmem:[%s4627 + $0x25c] sm:$0xf]
  %v4780 = vld [vmem:[%s4627 + $0x260] sm:$0xf]
  %v4781 = vld [vmem:[%s4627 + $0x264] sm:$0xf]
  %v4782 = vld [vmem:[%s4627 + $0x268] sm:$0xf]
  %v4783 = vld [vmem:[%s4627 + $0x26c] sm:$0xf]
  %v4784 = vld [vmem:[%s4627 + $0x270] sm:$0xf]
  %v4785 = vld [vmem:[%s4627 + $0x274] sm:$0xf]
  %v4786 = vld [vmem:[%s4627 + $0x278] sm:$0xf]
  %v4787 = vld [vmem:[%s4627 + $0x27c] sm:$0xf]
  %v4788 = vld [vmem:[%s4627 + $0x280] sm:$0xf]
  %v4789 = vld [vmem:[%s4627 + $0x284] sm:$0xf]
  %v4790 = vld [vmem:[%s4627 + $0x288] sm:$0xf]
  %v4791 = vld [vmem:[%s4627 + $0x28c] sm:$0xf]
  %v4792 = vld [vmem:[%s4627 + $0x290] sm:$0xf]
  %v4793 = vld [vmem:[%s4627 + $0x294] sm:$0xf]
  %v4794 = vld [vmem:[%s4627 + $0x298] sm:$0xf]
  %v4795 = vld [vmem:[%s4627 + $0x29c] sm:$0xf]
  %v4796 = vld [vmem:[%s4627 + $0x2a0] sm:$0xf]
  %v4797 = vld [vmem:[%s4627 + $0x2a4] sm:$0xf]
  %v4798 = vld [vmem:[%s4627 + $0x2a8] sm:$0xf]
  %v4799 = vld [vmem:[%s4627 + $0x2ac] sm:$0xf]
  %v4800 = vld [vmem:[%s4627 + $0x2b0] sm:$0xf]
  %v4801 = vld [vmem:[%s4627 + $0x2b4] sm:$0xf]
  %v4802 = vld [vmem:[%s4627 + $0x2b8] sm:$0xf]
  %v4803 = vld [vmem:[%s4627 + $0x2bc] sm:$0xf]
  %v4804 = vld [vmem:[%s4627 + $0x2c0] sm:$0xf]
  %v4805 = vld [vmem:[%s4627 + $0x2c4] sm:$0xf]
  %v4806 = vld [vmem:[%s4627 + $0x2c8] sm:$0xf]
  %v4807 = vld [vmem:[%s4627 + $0x2cc] sm:$0xf]
  %v4808 = vld [vmem:[%s4627 + $0x2d0] sm:$0xf]
  %v4809 = vld [vmem:[%s4627 + $0x2d4] sm:$0xf]
  %v4810 = vld [vmem:[%s4627 + $0x2d8] sm:$0xf]
  %v4811 = vld [vmem:[%s4627 + $0x2dc] sm:$0xf]
  %v4812 = vld [vmem:[%s4627 + $0x2e0] sm:$0xf]
  %v4813 = vld [vmem:[%s4627 + $0x2e4] sm:$0xf]
  %v4814 = vld [vmem:[%s4627 + $0x2e8] sm:$0xf]
  %v4815 = vld [vmem:[%s4627 + $0x2ec] sm:$0xf]
  %v4816 = vld [vmem:[%s4627 + $0x2f0] sm:$0xf]
  %v4817 = vld [vmem:[%s4627 + $0x2f4] sm:$0xf]
  %v4818 = vld [vmem:[%s4627 + $0x2f8] sm:$0xf]
  %v4819 = vld [vmem:[%s4627 + $0x2fc] sm:$0xf]
  %v4820 = vld [vmem:[%s4627 + $0x300] sm:$0xf]
  %v4821 = vld [vmem:[%s4627 + $0x304] sm:$0xf]
  %v4822 = vld [vmem:[%s4627 + $0x308] sm:$0xf]
  %v4823 = vld [vmem:[%s4627 + $0x30c] sm:$0xf]
  %v4824 = vld [vmem:[%s4627 + $0x310] sm:$0xf]
  %v4825 = vld [vmem:[%s4627 + $0x314] sm:$0xf]
  %v4826 = vld [vmem:[%s4627 + $0x318] sm:$0xf]
  %v4827 = vld [vmem:[%s4627 + $0x31c] sm:$0xf]
  %v4828 = vld [vmem:[%s4627 + $0x320] sm:$0xf]
  %v4829 = vld [vmem:[%s4627 + $0x324] sm:$0xf]
  %v4830 = vld [vmem:[%s4627 + $0x328] sm:$0xf]
  %v4831 = vld [vmem:[%s4627 + $0x32c] sm:$0xf]
  %v4832 = vld [vmem:[%s4627 + $0x330] sm:$0xf]
  %v4833 = vld [vmem:[%s4627 + $0x334] sm:$0xf]
  %v4834 = vld [vmem:[%s4627 + $0x338] sm:$0xf]
  %v4835 = vld [vmem:[%s4627 + $0x33c] sm:$0xf]
  %v4836 = vld [vmem:[%s4627 + $0x340] sm:$0xf]
  %v4837 = vld [vmem:[%s4627 + $0x344] sm:$0xf]
  %v4838 = vld [vmem:[%s4627 + $0x348] sm:$0xf]
  %v4839 = vld [vmem:[%s4627 + $0x34c] sm:$0xf]
  %v4840 = vld [vmem:[%s4627 + $0x350] sm:$0xf]
  %v4841 = vld [vmem:[%s4627 + $0x354] sm:$0xf]
  %v4842 = vld [vmem:[%s4627 + $0x358] sm:$0xf]
  %v4843 = vld [vmem:[%s4627 + $0x35c] sm:$0xf]
  %v4844 = vld [vmem:[%s4627 + $0x360] sm:$0xf]
  %v4845 = vld [vmem:[%s4627 + $0x364] sm:$0xf]
  %v4846 = vld [vmem:[%s4627 + $0x368] sm:$0xf]
  %v4847 = vld [vmem:[%s4627 + $0x36c] sm:$0xf]
  %v4848 = vld [vmem:[%s4627 + $0x370] sm:$0xf]
  %v4849 = vld [vmem:[%s4627 + $0x374] sm:$0xf]
  %v4850 = vld [vmem:[%s4627 + $0x378] sm:$0xf]
  %v4851 = vld [vmem:[%s4627 + $0x37c] sm:$0xf]
  %v4852 = vld [vmem:[%s4627 + $0x380] sm:$0xf]
  %v4853 = vld [vmem:[%s4627 + $0x384] sm:$0xf]
  %v4854 = vld [vmem:[%s4627 + $0x388] sm:$0xf]
  %v4855 = vld [vmem:[%s4627 + $0x38c] sm:$0xf]
  %v4856 = vld [vmem:[%s4627 + $0x390] sm:$0xf]
  %v4857 = vld [vmem:[%s4627 + $0x394] sm:$0xf]
  %v4858 = vld [vmem:[%s4627 + $0x398] sm:$0xf]
  %v4859 = vld [vmem:[%s4627 + $0x39c] sm:$0xf]
  %v4860 = vld [vmem:[%s4627 + $0x3a0] sm:$0xf]
  %v4861 = vld [vmem:[%s4627 + $0x3a4] sm:$0xf]
  %v4862 = vld [vmem:[%s4627 + $0x3a8] sm:$0xf]
  %v4863 = vld [vmem:[%s4627 + $0x3ac] sm:$0xf]
  %v4864 = vld [vmem:[%s4627 + $0x3b0] sm:$0xf]
  %v4865 = vld [vmem:[%s4627 + $0x3b4] sm:$0xf]
  %v4866 = vld [vmem:[%s4627 + $0x3b8] sm:$0xf]
  %v4867 = vld [vmem:[%s4627 + $0x3bc] sm:$0xf]
  %v4868 = vld [vmem:[%s4627 + $0x3c0] sm:$0xf]
  %v4869 = vld [vmem:[%s4627 + $0x3c4] sm:$0xf]
  %v4870 = vld [vmem:[%s4627 + $0x3c8] sm:$0xf]
  %v4871 = vld [vmem:[%s4627 + $0x3cc] sm:$0xf]
  %v4872 = vld [vmem:[%s4627 + $0x3d0] sm:$0xf]
  %v4873 = vld [vmem:[%s4627 + $0x3d4] sm:$0xf]
  %v4874 = vld [vmem:[%s4627 + $0x3d8] sm:$0xf]
  %v4875 = vld [vmem:[%s4627 + $0x3dc] sm:$0xf]
  %v4876 = vld [vmem:[%s4627 + $0x3e0] sm:$0xf]
  %v4877 = vld [vmem:[%s4627 + $0x3e4] sm:$0xf]
  %v4878 = vld [vmem:[%s4627 + $0x3e8] sm:$0xf]
  %v4879 = vld [vmem:[%s4627 + $0x3ec] sm:$0xf]
  %v4880 = vld [vmem:[%s4627 + $0x3f0] sm:$0xf]
  %v4881 = vld [vmem:[%s4627 + $0x3f4] sm:$0xf]
  %v4882 = vld [vmem:[%s4627 + $0x3f8] sm:$0xf]
  %v4883 = vld [vmem:[%s4627 + $0x3fc] sm:$0xf]
  %v4884 = vpack.c.bf16 %v4611, %v4595
  %v4885 = vpack.c.bf16 %v4612, %v4596
  %v4886 = vpack.c.bf16 %v4613, %v4597
  %v4887 = vpack.c.bf16 %v4614, %v4598
  %v4888 = vpack.c.bf16 %v4615, %v4599
  %v4889 = vpack.c.bf16 %v4616, %v4600
  %v4890 = vpack.c.bf16 %v4617, %v4601
  %v4891 = vpack.c.bf16 %v4618, %v4602
  %v4892 = vpack.c.bf16 %v4619, %v4603
  %v4893 = vpack.c.bf16 %v4620, %v4604
  %v4894 = vpack.c.bf16 %v4621, %v4605
  %v4895 = vpack.c.bf16 %v4622, %v4606
  %v4896 = vpack.c.bf16 %v4623, %v4607
  %v4897 = vpack.c.bf16 %v4624, %v4608
  %v4898 = vpack.c.bf16 %v4625, %v4609
  %v4899 = vpack.c.bf16 %v4626, %v4610
  %s4900 = scalar_lea.vmem %s16, 1
  %v4901 = vld [vmem:[%s4900] sm:$0x1]
  %v4903 = vlaneseq
  %v4904 = vshrl.u32 %v4903, 7
  %v4905 = vsub.s32 0, %v4904
  %v4906 = vrot.slane %v4901, %v4905
  %v5164 = vunpack.c.l.b16 %v4628
  %v5165 = vunpack.c.l.b16 %v4629
  %v5166 = vunpack.c.l.b16 %v4630
  %v5167 = vunpack.c.l.b16 %v4631
  %v5168 = vunpack.c.l.b16 %v4632
  %v5169 = vunpack.c.l.b16 %v4633
  %v5170 = vunpack.c.l.b16 %v4634
  %v5171 = vunpack.c.l.b16 %v4635
  %v5172 = vunpack.c.l.b16 %v4636
  %v5173 = vunpack.c.l.b16 %v4637
  %v5174 = vunpack.c.l.b16 %v4638
  %v5175 = vunpack.c.l.b16 %v4639
  %v5176 = vunpack.c.l.b16 %v4640
  %v5177 = vunpack.c.l.b16 %v4641
  %v5178 = vunpack.c.l.b16 %v4642
  %v5179 = vunpack.c.l.b16 %v4643
  %v5180 = vunpack.c.l.b16 %v4644
  %v5181 = vunpack.c.l.b16 %v4645
  %v5182 = vunpack.c.l.b16 %v4646
  %v5183 = vunpack.c.l.b16 %v4647
  %v5184 = vunpack.c.l.b16 %v4648
  %v5185 = vunpack.c.l.b16 %v4649
  %v5186 = vunpack.c.l.b16 %v4650
  %v5187 = vunpack.c.l.b16 %v4651
  %v5188 = vunpack.c.l.b16 %v4652
  %v5189 = vunpack.c.l.b16 %v4653
  %v5190 = vunpack.c.l.b16 %v4654
  %v5191 = vunpack.c.l.b16 %v4655
  %v5192 = vunpack.c.l.b16 %v4656
  %v5193 = vunpack.c.l.b16 %v4657
  %v5194 = vunpack.c.l.b16 %v4658
  %v5195 = vunpack.c.l.b16 %v4659
  %v5196 = vunpack.c.l.b16 %v4660
  %v5197 = vunpack.c.l.b16 %v4661
  %v5198 = vunpack.c.l.b16 %v4662
  %v5199 = vunpack.c.l.b16 %v4663
  %v5200 = vunpack.c.l.b16 %v4664
  %v5201 = vunpack.c.l.b16 %v4665
  %v5202 = vunpack.c.l.b16 %v4666
  %v5203 = vunpack.c.l.b16 %v4667
  %v5204 = vunpack.c.l.b16 %v4668
  %v5205 = vunpack.c.l.b16 %v4669
  %v5206 = vunpack.c.l.b16 %v4670
  %v5207 = vunpack.c.l.b16 %v4671
  %v5208 = vunpack.c.l.b16 %v4672
  %v5209 = vunpack.c.l.b16 %v4673
  %v5210 = vunpack.c.l.b16 %v4674
  %v5211 = vunpack.c.l.b16 %v4675
  %v5212 = vunpack.c.l.b16 %v4676
  %v5213 = vunpack.c.l.b16 %v4677
  %v5214 = vunpack.c.l.b16 %v4678
  %v5215 = vunpack.c.l.b16 %v4679
  %v5216 = vunpack.c.l.b16 %v4680
  %v5217 = vunpack.c.l.b16 %v4681
  %v5218 = vunpack.c.l.b16 %v4682
  %v5219 = vunpack.c.l.b16 %v4683
  %v5220 = vunpack.c.l.b16 %v4684
  %v5221 = vunpack.c.l.b16 %v4685
  %v5222 = vunpack.c.l.b16 %v4686
  %v5223 = vunpack.c.l.b16 %v4687
  %v5224 = vunpack.c.l.b16 %v4688
  %v5225 = vunpack.c.l.b16 %v4689
  %v5226 = vunpack.c.l.b16 %v4690
  %v5227 = vunpack.c.l.b16 %v4691
  %v5228 = vunpack.c.l.b16 %v4692
  %v5229 = vunpack.c.l.b16 %v4693
  %v5230 = vunpack.c.l.b16 %v4694
  %v5231 = vunpack.c.l.b16 %v4695
  %v5232 = vunpack.c.l.b16 %v4696
  %v5233 = vunpack.c.l.b16 %v4697
  %v5234 = vunpack.c.l.b16 %v4698
  %v5235 = vunpack.c.l.b16 %v4699
  %v5236 = vunpack.c.l.b16 %v4700
  %v5237 = vunpack.c.l.b16 %v4701
  %v5238 = vunpack.c.l.b16 %v4702
  %v5239 = vunpack.c.l.b16 %v4703
  %v5240 = vunpack.c.l.b16 %v4704
  %v5241 = vunpack.c.l.b16 %v4705
  %v5242 = vunpack.c.l.b16 %v4706
  %v5243 = vunpack.c.l.b16 %v4707
  %v5244 = vunpack.c.l.b16 %v4708
  %v5245 = vunpack.c.l.b16 %v4709
  %v5246 = vunpack.c.l.b16 %v4710
  %v5247 = vunpack.c.l.b16 %v4711
  %v5248 = vunpack.c.l.b16 %v4712
  %v5249 = vunpack.c.l.b16 %v4713
  %v5250 = vunpack.c.l.b16 %v4714
  %v5251 = vunpack.c.l.b16 %v4715
  %v5252 = vunpack.c.l.b16 %v4716
  %v5253 = vunpack.c.l.b16 %v4717
  %v5254 = vunpack.c.l.b16 %v4718
  %v5255 = vunpack.c.l.b16 %v4719
  %v5256 = vunpack.c.l.b16 %v4720
  %v5257 = vunpack.c.l.b16 %v4721
  %v5258 = vunpack.c.l.b16 %v4722
  %v5259 = vunpack.c.l.b16 %v4723
  %v5260 = vunpack.c.l.b16 %v4724
  %v5261 = vunpack.c.l.b16 %v4725
  %v5262 = vunpack.c.l.b16 %v4726
  %v5263 = vunpack.c.l.b16 %v4727
  %v5264 = vunpack.c.l.b16 %v4728
  %v5265 = vunpack.c.l.b16 %v4729
  %v5266 = vunpack.c.l.b16 %v4730
  %v5267 = vunpack.c.l.b16 %v4731
  %v5268 = vunpack.c.l.b16 %v4732
  %v5269 = vunpack.c.l.b16 %v4733
  %v5270 = vunpack.c.l.b16 %v4734
  %v5271 = vunpack.c.l.b16 %v4735
  %v5272 = vunpack.c.l.b16 %v4736
  %v5273 = vunpack.c.l.b16 %v4737
  %v5274 = vunpack.c.l.b16 %v4738
  %v5275 = vunpack.c.l.b16 %v4739
  %v5276 = vunpack.c.l.b16 %v4740
  %v5277 = vunpack.c.l.b16 %v4741
  %v5278 = vunpack.c.l.b16 %v4742
  %v5279 = vunpack.c.l.b16 %v4743
  %v5280 = vunpack.c.l.b16 %v4744
  %v5281 = vunpack.c.l.b16 %v4745
  %v5282 = vunpack.c.l.b16 %v4746
  %v5283 = vunpack.c.l.b16 %v4747
  %v5284 = vunpack.c.l.b16 %v4748
  %v5285 = vunpack.c.l.b16 %v4749
  %v5286 = vunpack.c.l.b16 %v4750
  %v5287 = vunpack.c.l.b16 %v4751
  %v5288 = vunpack.c.l.b16 %v4752
  %v5289 = vunpack.c.l.b16 %v4753
  %v5290 = vunpack.c.l.b16 %v4754
  %v5291 = vunpack.c.l.b16 %v4755
  %v5292 = vunpack.c.l.b16 %v4756
  %v5293 = vunpack.c.l.b16 %v4757
  %v5294 = vunpack.c.l.b16 %v4758
  %v5295 = vunpack.c.l.b16 %v4759
  %v5296 = vunpack.c.l.b16 %v4760
  %v5297 = vunpack.c.l.b16 %v4761
  %v5298 = vunpack.c.l.b16 %v4762
  %v5299 = vunpack.c.l.b16 %v4763
  %v5300 = vunpack.c.l.b16 %v4764
  %v5301 = vunpack.c.l.b16 %v4765
  %v5302 = vunpack.c.l.b16 %v4766
  %v5303 = vunpack.c.l.b16 %v4767
  %v5304 = vunpack.c.l.b16 %v4768
  %v5305 = vunpack.c.l.b16 %v4769
  %v5306 = vunpack.c.l.b16 %v4770
  %v5307 = vunpack.c.l.b16 %v4771
  %v5308 = vunpack.c.l.b16 %v4772
  %v5309 = vunpack.c.l.b16 %v4773
  %v5310 = vunpack.c.l.b16 %v4774
  %v5311 = vunpack.c.l.b16 %v4775
  %v5312 = vunpack.c.l.b16 %v4776
  %v5313 = vunpack.c.l.b16 %v4777
  %v5314 = vunpack.c.l.b16 %v4778
  %v5315 = vunpack.c.l.b16 %v4779
  %v5316 = vunpack.c.l.b16 %v4780
  %v5317 = vunpack.c.l.b16 %v4781
  %v5318 = vunpack.c.l.b16 %v4782
  %v5319 = vunpack.c.l.b16 %v4783
  %v5320 = vunpack.c.l.b16 %v4784
  %v5321 = vunpack.c.l.b16 %v4785
  %v5322 = vunpack.c.l.b16 %v4786
  %v5323 = vunpack.c.l.b16 %v4787
  %v5324 = vunpack.c.l.b16 %v4788
  %v5325 = vunpack.c.l.b16 %v4789
  %v5326 = vunpack.c.l.b16 %v4790
  %v5327 = vunpack.c.l.b16 %v4791
  %v5328 = vunpack.c.l.b16 %v4792
  %v5329 = vunpack.c.l.b16 %v4793
  %v5330 = vunpack.c.l.b16 %v4794
  %v5331 = vunpack.c.l.b16 %v4795
  %v5332 = vunpack.c.l.b16 %v4796
  %v5333 = vunpack.c.l.b16 %v4797
  %v5334 = vunpack.c.l.b16 %v4798
  %v5335 = vunpack.c.l.b16 %v4799
  %v5336 = vunpack.c.l.b16 %v4800
  %v5337 = vunpack.c.l.b16 %v4801
  %v5338 = vunpack.c.l.b16 %v4802
  %v5339 = vunpack.c.l.b16 %v4803
  %v5340 = vunpack.c.l.b16 %v4804
  %v5341 = vunpack.c.l.b16 %v4805
  %v5342 = vunpack.c.l.b16 %v4806
  %v5343 = vunpack.c.l.b16 %v4807
  %v5344 = vunpack.c.l.b16 %v4808
  %v5345 = vunpack.c.l.b16 %v4809
  %v5346 = vunpack.c.l.b16 %v4810
  %v5347 = vunpack.c.l.b16 %v4811
  %v5348 = vunpack.c.l.b16 %v4812
  %v5349 = vunpack.c.l.b16 %v4813
  %v5350 = vunpack.c.l.b16 %v4814
  %v5351 = vunpack.c.l.b16 %v4815
  %v5352 = vunpack.c.l.b16 %v4816
  %v5353 = vunpack.c.l.b16 %v4817
  %v5354 = vunpack.c.l.b16 %v4818
  %v5355 = vunpack.c.l.b16 %v4819
  %v5356 = vunpack.c.l.b16 %v4820
  %v5357 = vunpack.c.l.b16 %v4821
  %v5358 = vunpack.c.l.b16 %v4822
  %v5359 = vunpack.c.l.b16 %v4823
  %v5360 = vunpack.c.l.b16 %v4824
  %v5361 = vunpack.c.l.b16 %v4825
  %v5362 = vunpack.c.l.b16 %v4826
  %v5363 = vunpack.c.l.b16 %v4827
  %v5364 = vunpack.c.l.b16 %v4828
  %v5365 = vunpack.c.l.b16 %v4829
  %v5366 = vunpack.c.l.b16 %v4830
  %v5367 = vunpack.c.l.b16 %v4831
  %v5368 = vunpack.c.l.b16 %v4832
  %v5369 = vunpack.c.l.b16 %v4833
  %v5370 = vunpack.c.l.b16 %v4834
  %v5371 = vunpack.c.l.b16 %v4835
  %v5372 = vunpack.c.l.b16 %v4836
  %v5373 = vunpack.c.l.b16 %v4837
  %v5374 = vunpack.c.l.b16 %v4838
  %v5375 = vunpack.c.l.b16 %v4839
  %v5376 = vunpack.c.l.b16 %v4840
  %v5377 = vunpack.c.l.b16 %v4841
  %v5378 = vunpack.c.l.b16 %v4842
  %v5379 = vunpack.c.l.b16 %v4843
  %v5380 = vunpack.c.l.b16 %v4844
  %v5381 = vunpack.c.l.b16 %v4845
  %v5382 = vunpack.c.l.b16 %v4846
  %v5383 = vunpack.c.l.b16 %v4847
  %v5384 = vunpack.c.l.b16 %v4848
  %v5385 = vunpack.c.l.b16 %v4849
  %v5386 = vunpack.c.l.b16 %v4850
  %v5387 = vunpack.c.l.b16 %v4851
  %v5388 = vunpack.c.l.b16 %v4852
  %v5389 = vunpack.c.l.b16 %v4853
  %v5390 = vunpack.c.l.b16 %v4854
  %v5391 = vunpack.c.l.b16 %v4855
  %v5392 = vunpack.c.l.b16 %v4856
  %v5393 = vunpack.c.l.b16 %v4857
  %v5394 = vunpack.c.l.b16 %v4858
  %v5395 = vunpack.c.l.b16 %v4859
  %v5396 = vunpack.c.l.b16 %v4860
  %v5397 = vunpack.c.l.b16 %v4861
  %v5398 = vunpack.c.l.b16 %v4862
  %v5399 = vunpack.c.l.b16 %v4863
  %v5400 = vunpack.c.l.b16 %v4864
  %v5401 = vunpack.c.l.b16 %v4865
  %v5402 = vunpack.c.l.b16 %v4866
  %v5403 = vunpack.c.l.b16 %v4867
  %v5404 = vunpack.c.l.b16 %v4868
  %v5405 = vunpack.c.l.b16 %v4869
  %v5406 = vunpack.c.l.b16 %v4870
  %v5407 = vunpack.c.l.b16 %v4871
  %v5408 = vunpack.c.l.b16 %v4872
  %v5409 = vunpack.c.l.b16 %v4873
  %v5410 = vunpack.c.l.b16 %v4874
  %v5411 = vunpack.c.l.b16 %v4875
  %v5412 = vunpack.c.l.b16 %v4876
  %v5413 = vunpack.c.l.b16 %v4877
  %v5414 = vunpack.c.l.b16 %v4878
  %v5415 = vunpack.c.l.b16 %v4879
  %v5416 = vunpack.c.l.b16 %v4880
  %v5417 = vunpack.c.l.b16 %v4881
  %v5418 = vunpack.c.l.b16 %v4882
  %v5419 = vunpack.c.l.b16 %v4883
  %v5420 = vpack.c.b16 %v5165, %v5164
  %v5421 = vpack.c.b16 %v5167, %v5166
  %v5422 = vpack.c.b16 %v5169, %v5168
  %v5423 = vpack.c.b16 %v5171, %v5170
  %v5424 = vpack.c.b16 %v5173, %v5172
  %v5425 = vpack.c.b16 %v5175, %v5174
  %v5426 = vpack.c.b16 %v5177, %v5176
  %v5427 = vpack.c.b16 %v5179, %v5178
  %v5428 = vpack.c.b16 %v5181, %v5180
  %v5429 = vpack.c.b16 %v5183, %v5182
  %v5430 = vpack.c.b16 %v5185, %v5184
  %v5431 = vpack.c.b16 %v5187, %v5186
  %v5432 = vpack.c.b16 %v5189, %v5188
  %v5433 = vpack.c.b16 %v5191, %v5190
  %v5434 = vpack.c.b16 %v5193, %v5192
  %v5435 = vpack.c.b16 %v5195, %v5194
  %v5436 = vpack.c.b16 %v5197, %v5196
  %v5437 = vpack.c.b16 %v5199, %v5198
  %v5438 = vpack.c.b16 %v5201, %v5200
  %v5439 = vpack.c.b16 %v5203, %v5202
  %v5440 = vpack.c.b16 %v5205, %v5204
  %v5441 = vpack.c.b16 %v5207, %v5206
  %v5442 = vpack.c.b16 %v5209, %v5208
  %v5443 = vpack.c.b16 %v5211, %v5210
  %v5444 = vpack.c.b16 %v5213, %v5212
  %v5445 = vpack.c.b16 %v5215, %v5214
  %v5446 = vpack.c.b16 %v5217, %v5216
  %v5447 = vpack.c.b16 %v5219, %v5218
  %v5448 = vpack.c.b16 %v5221, %v5220
  %v5449 = vpack.c.b16 %v5223, %v5222
  %v5450 = vpack.c.b16 %v5225, %v5224
  %v5451 = vpack.c.b16 %v5227, %v5226
  %v5452 = vpack.c.b16 %v5229, %v5228
  %v5453 = vpack.c.b16 %v5231, %v5230
  %v5454 = vpack.c.b16 %v5233, %v5232
  %v5455 = vpack.c.b16 %v5235, %v5234
  %v5456 = vpack.c.b16 %v5237, %v5236
  %v5457 = vpack.c.b16 %v5239, %v5238
  %v5458 = vpack.c.b16 %v5241, %v5240
  %v5459 = vpack.c.b16 %v5243, %v5242
  %v5460 = vpack.c.b16 %v5245, %v5244
  %v5461 = vpack.c.b16 %v5247, %v5246
  %v5462 = vpack.c.b16 %v5249, %v5248
  %v5463 = vpack.c.b16 %v5251, %v5250
  %v5464 = vpack.c.b16 %v5253, %v5252
  %v5465 = vpack.c.b16 %v5255, %v5254
  %v5466 = vpack.c.b16 %v5257, %v5256
  %v5467 = vpack.c.b16 %v5259, %v5258
  %v5468 = vpack.c.b16 %v5261, %v5260
  %v5469 = vpack.c.b16 %v5263, %v5262
  %v5470 = vpack.c.b16 %v5265, %v5264
  %v5471 = vpack.c.b16 %v5267, %v5266
  %v5472 = vpack.c.b16 %v5269, %v5268
  %v5473 = vpack.c.b16 %v5271, %v5270
  %v5474 = vpack.c.b16 %v5273, %v5272
  %v5475 = vpack.c.b16 %v5275, %v5274
  %v5476 = vpack.c.b16 %v5277, %v5276
  %v5477 = vpack.c.b16 %v5279, %v5278
  %v5478 = vpack.c.b16 %v5281, %v5280
  %v5479 = vpack.c.b16 %v5283, %v5282
  %v5480 = vpack.c.b16 %v5285, %v5284
  %v5481 = vpack.c.b16 %v5287, %v5286
  %v5482 = vpack.c.b16 %v5289, %v5288
  %v5483 = vpack.c.b16 %v5291, %v5290
  %v5484 = vpack.c.b16 %v5293, %v5292
  %v5485 = vpack.c.b16 %v5295, %v5294
  %v5486 = vpack.c.b16 %v5297, %v5296
  %v5487 = vpack.c.b16 %v5299, %v5298
  %v5488 = vpack.c.b16 %v5301, %v5300
  %v5489 = vpack.c.b16 %v5303, %v5302
  %v5490 = vpack.c.b16 %v5305, %v5304
  %v5491 = vpack.c.b16 %v5307, %v5306
  %v5492 = vpack.c.b16 %v5309, %v5308
  %v5493 = vpack.c.b16 %v5311, %v5310
  %v5494 = vpack.c.b16 %v5313, %v5312
  %v5495 = vpack.c.b16 %v5315, %v5314
  %v5496 = vpack.c.b16 %v5317, %v5316
  %v5497 = vpack.c.b16 %v5319, %v5318
  %v5498 = vpack.c.b16 %v5321, %v5320
  %v5499 = vpack.c.b16 %v5323, %v5322
  %v5500 = vpack.c.b16 %v5325, %v5324
  %v5501 = vpack.c.b16 %v5327, %v5326
  %v5502 = vpack.c.b16 %v5329, %v5328
  %v5503 = vpack.c.b16 %v5331, %v5330
  %v5504 = vpack.c.b16 %v5333, %v5332
  %v5505 = vpack.c.b16 %v5335, %v5334
  %v5506 = vpack.c.b16 %v5337, %v5336
  %v5507 = vpack.c.b16 %v5339, %v5338
  %v5508 = vpack.c.b16 %v5341, %v5340
  %v5509 = vpack.c.b16 %v5343, %v5342
  %v5510 = vpack.c.b16 %v5345, %v5344
  %v5511 = vpack.c.b16 %v5347, %v5346
  %v5512 = vpack.c.b16 %v5349, %v5348
  %v5513 = vpack.c.b16 %v5351, %v5350
  %v5514 = vpack.c.b16 %v5353, %v5352
  %v5515 = vpack.c.b16 %v5355, %v5354
  %v5516 = vpack.c.b16 %v5357, %v5356
  %v5517 = vpack.c.b16 %v5359, %v5358
  %v5518 = vpack.c.b16 %v5361, %v5360
  %v5519 = vpack.c.b16 %v5363, %v5362
  %v5520 = vpack.c.b16 %v5365, %v5364
  %v5521 = vpack.c.b16 %v5367, %v5366
  %v5522 = vpack.c.b16 %v5369, %v5368
  %v5523 = vpack.c.b16 %v5371, %v5370
  %v5524 = vpack.c.b16 %v5373, %v5372
  %v5525 = vpack.c.b16 %v5375, %v5374
  %v5526 = vpack.c.b16 %v5377, %v5376
  %v5527 = vpack.c.b16 %v5379, %v5378
  %v5528 = vpack.c.b16 %v5381, %v5380
  %v5529 = vpack.c.b16 %v5383, %v5382
  %v5530 = vpack.c.b16 %v5385, %v5384
  %v5531 = vpack.c.b16 %v5387, %v5386
  %v5532 = vpack.c.b16 %v5389, %v5388
  %v5533 = vpack.c.b16 %v5391, %v5390
  %v5534 = vpack.c.b16 %v5393, %v5392
  %v5535 = vpack.c.b16 %v5395, %v5394
  %v5536 = vpack.c.b16 %v5397, %v5396
  %v5537 = vpack.c.b16 %v5399, %v5398
  %v5538 = vpack.c.b16 %v5401, %v5400
  %v5539 = vpack.c.b16 %v5403, %v5402
  %v5540 = vpack.c.b16 %v5405, %v5404
  %v5541 = vpack.c.b16 %v5407, %v5406
  %v5542 = vpack.c.b16 %v5409, %v5408
  %v5543 = vpack.c.b16 %v5411, %v5410
  %v5544 = vpack.c.b16 %v5413, %v5412
  %v5545 = vpack.c.b16 %v5415, %v5414
  %v5546 = vpack.c.b16 %v5417, %v5416
  %v5547 = vpack.c.b16 %v5419, %v5418
  %5676 = vmatprep.subr.bf16.mxu0 0
  %5677 = vmatpush1.bf16.msra.mxu0 %v5420
  %5678 = vmatprep.subr.bf16.mxu0 0
  %5679 = vmatpush1.bf16.msra.mxu0 %v5421
  %5680 = vmatprep.subr.bf16.mxu0 0
  %5681 = vmatpush1.bf16.msra.mxu0 %v5422
  %5682 = vmatprep.subr.bf16.mxu0 0
  %5683 = vmatpush1.bf16.msra.mxu0 %v5423
  %5684 = vmatprep.subr.bf16.mxu0 0
  %5685 = vmatpush1.bf16.msra.mxu0 %v5424
  %5686 = vmatprep.subr.bf16.mxu0 0
  %5687 = vmatpush1.bf16.msra.mxu0 %v5425
  %5688 = vmatprep.subr.bf16.mxu0 0
  %5689 = vmatpush1.bf16.msra.mxu0 %v5426
  %5690 = vmatprep.subr.bf16.mxu0 0
  %5691 = vmatpush1.bf16.msra.mxu0 %v5427
  %5692 = vmatprep.subr.bf16.mxu0 0
  %5693 = vmatpush1.bf16.msra.mxu0 %v5428
  %5694 = vmatprep.subr.bf16.mxu0 0
  %5695 = vmatpush1.bf16.msra.mxu0 %v5429
  %5696 = vmatprep.subr.bf16.mxu0 0
  %5697 = vmatpush1.bf16.msra.mxu0 %v5430
  %5698 = vmatprep.subr.bf16.mxu0 0
  %5699 = vmatpush1.bf16.msra.mxu0 %v5431
  %5700 = vmatprep.subr.bf16.mxu0 0
  %5701 = vmatpush1.bf16.msra.mxu0 %v5432
  %5702 = vmatprep.subr.bf16.mxu0 0
  %5703 = vmatpush1.bf16.msra.mxu0 %v5433
  %5704 = vmatprep.subr.bf16.mxu0 0
  %5705 = vmatpush1.bf16.msra.mxu0 %v5434
  %5706 = vmatprep.subr.bf16.mxu0 0
  %5707 = vmatpush1.bf16.msra.mxu0 %v5435
  %5708 = vmatprep.mubr.bf16.mxu0 %v4885
  %5709 = vmatmul.mubr.bf16.gmra.mrb[0].mxu0 %v4884
  %v5710 = vpop.f32.mrb[0].mxu0
  %v5711 = vadd.f32 %v4906, %v5710
  %v5712 = vpop.f32.mrb[0].mxu0
  %v5713 = vpop.f32.mrb[0].mxu0
  %v5714 = vadd.f32 %v4906, %v5713
  %v5715 = vpop.f32.mrb[0].mxu0
  %5716 = vdwg.mxu0
  %5717 = vmatprep.subr.bf16.mxu0 0
  %5718 = vmatpush1.bf16.msra.mxu0 %v5436
  %5719 = vmatprep.subr.bf16.mxu0 0
  %5720 = vmatpush1.bf16.msra.mxu0 %v5437
  %5721 = vmatprep.subr.bf16.mxu0 0
  %5722 = vmatpush1.bf16.msra.mxu0 %v5438
  %5723 = vmatprep.subr.bf16.mxu0 0
  %5724 = vmatpush1.bf16.msra.mxu0 %v5439
  %5725 = vmatprep.subr.bf16.mxu0 0
  %5726 = vmatpush1.bf16.msra.mxu0 %v5440
  %5727 = vmatprep.subr.bf16.mxu0 0
  %5728 = vmatpush1.bf16.msra.mxu0 %v5441
  %5729 = vmatprep.subr.bf16.mxu0 0
  %5730 = vmatpush1.bf16.msra.mxu0 %v5442
  %5731 = vmatprep.subr.bf16.mxu0 0
  %5732 = vmatpush1.bf16.msra.mxu0 %v5443
  %5733 = vmatprep.subr.bf16.mxu0 0
  %5734 = vmatpush1.bf16.msra.mxu0 %v5444
  %5735 = vmatprep.subr.bf16.mxu0 0
  %5736 = vmatpush1.bf16.msra.mxu0 %v5445
  %5737 = vmatprep.subr.bf16.mxu0 0
  %5738 = vmatpush1.bf16.msra.mxu0 %v5446
  %5739 = vmatprep.subr.bf16.mxu0 0
  %5740 = vmatpush1.bf16.msra.mxu0 %v5447
  %5741 = vmatprep.subr.bf16.mxu0 0
  %5742 = vmatpush1.bf16.msra.mxu0 %v5448
  %5743 = vmatprep.subr.bf16.mxu0 0
  %5744 = vmatpush1.bf16.msra.mxu0 %v5449
  %5745 = vmatprep.subr.bf16.mxu0 0
  %5746 = vmatpush1.bf16.msra.mxu0 %v5450
  %5747 = vmatprep.subr.bf16.mxu0 0
  %5748 = vmatpush1.bf16.msra.mxu0 %v5451
  %5749 = vmatprep.mubr.bf16.mxu0 %v4887
  %5750 = vmatmul.mubr.bf16.gmra.mrb[0].mxu0 %v4886
  %v5751 = vpop.f32.mrb[0].mxu0
  %v5752 = vadd.f32 %v5711, %v5751
  %v5753 = vpop.f32.mrb[0].mxu0
  %v5754 = vpop.f32.mrb[0].mxu0
  %v5755 = vadd.f32 %v5714, %v5754
  %v5756 = vpop.f32.mrb[0].mxu0
  %5757 = vdwg.mxu0
  %5758 = vmatprep.subr.bf16.mxu0 0
  %5759 = vmatpush1.bf16.msra.mxu0 %v5452
  %5760 = vmatprep.subr.bf16.mxu0 0
  %5761 = vmatpush1.bf16.msra.mxu0 %v5453
  %5762 = vmatprep.subr.bf16.mxu0 0
  %5763 = vmatpush1.bf16.msra.mxu0 %v5454
  %5764 = vmatprep.subr.bf16.mxu0 0
  %5765 = vmatpush1.bf16.msra.mxu0 %v5455
  %5766 = vmatprep.subr.bf16.mxu0 0
  %5767 = vmatpush1.bf16.msra.mxu0 %v5456
  %5768 = vmatprep.subr.bf16.mxu0 0
  %5769 = vmatpush1.bf16.msra.mxu0 %v5457
  %5770 = vmatprep.subr.bf16.mxu0 0
  %5771 = vmatpush1.bf16.msra.mxu0 %v5458
  %5772 = vmatprep.subr.bf16.mxu0 0
  %5773 = vmatpush1.bf16.msra.mxu0 %v5459
  %5774 = vmatprep.subr.bf16.mxu0 0
  %5775 = vmatpush1.bf16.msra.mxu0 %v5460
  %5776 = vmatprep.subr.bf16.mxu0 0
  %5777 = vmatpush1.bf16.msra.mxu0 %v5461
  %5778 = vmatprep.subr.bf16.mxu0 0
  %5779 = vmatpush1.bf16.msra.mxu0 %v5462
  %5780 = vmatprep.subr.bf16.mxu0 0
  %5781 = vmatpush1.bf16.msra.mxu0 %v5463
  %5782 = vmatprep.subr.bf16.mxu0 0
  %5783 = vmatpush1.bf16.msra.mxu0 %v5464
  %5784 = vmatprep.subr.bf16.mxu0 0
  %5785 = vmatpush1.bf16.msra.mxu0 %v5465
  %5786 = vmatprep.subr.bf16.mxu0 0
  %5787 = vmatpush1.bf16.msra.mxu0 %v5466
  %5788 = vmatprep.subr.bf16.mxu0 0
  %5789 = vmatpush1.bf16.msra.mxu0 %v5467
  %5790 = vmatprep.mubr.bf16.mxu0 %v4889
  %5791 = vmatmul.mubr.bf16.gmra.mrb[0].mxu0 %v4888
  %v5792 = vpop.f32.mrb[0].mxu0
  %v5793 = vadd.f32 %v5752, %v5792
  %v5794 = vpop.f32.mrb[0].mxu0
  %v5795 = vpop.f32.mrb[0].mxu0
  %v5796 = vadd.f32 %v5755, %v5795
  %v5797 = vpop.f32.mrb[0].mxu0
  %5798 = vdwg.mxu0
  %5799 = vmatprep.subr.bf16.mxu0 0
  %5800 = vmatpush1.bf16.msra.mxu0 %v5468
  %5801 = vmatprep.subr.bf16.mxu0 0
  %5802 = vmatpush1.bf16.msra.mxu0 %v5469
  %5803 = vmatprep.subr.bf16.mxu0 0
  %5804 = vmatpush1.bf16.msra.mxu0 %v5470
  %5805 = vmatprep.subr.bf16.mxu0 0
  %5806 = vmatpush1.bf16.msra.mxu0 %v5471
  %5807 = vmatprep.subr.bf16.mxu0 0
  %5808 = vmatpush1.bf16.msra.mxu0 %v5472
  %5809 = vmatprep.subr.bf16.mxu0 0
  %5810 = vmatpush1.bf16.msra.mxu0 %v5473
  %5811 = vmatprep.subr.bf16.mxu0 0
  %5812 = vmatpush1.bf16.msra.mxu0 %v5474
  %5813 = vmatprep.subr.bf16.mxu0 0
  %5814 = vmatpush1.bf16.msra.mxu0 %v5475
  %5815 = vmatprep.subr.bf16.mxu0 0
  %5816 = vmatpush1.bf16.msra.mxu0 %v5476
  %5817 = vmatprep.subr.bf16.mxu0 0
  %5818 = vmatpush1.bf16.msra.mxu0 %v5477
  %5819 = vmatprep.subr.bf16.mxu0 0
  %5820 = vmatpush1.bf16.msra.mxu0 %v5478
  %5821 = vmatprep.subr.bf16.mxu0 0
  %5822 = vmatpush1.bf16.msra.mxu0 %v5479
  %5823 = vmatprep.subr.bf16.mxu0 0
  %5824 = vmatpush1.bf16.msra.mxu0 %v5480
  %5825 = vmatprep.subr.bf16.mxu0 0
  %5826 = vmatpush1.bf16.msra.mxu0 %v5481
  %5827 = vmatprep.subr.bf16.mxu0 0
  %5828 = vmatpush1.bf16.msra.mxu0 %v5482
  %5829 = vmatprep.subr.bf16.mxu0 0
  %5830 = vmatpush1.bf16.msra.mxu0 %v5483
  %5831 = vmatprep.mubr.bf16.mxu0 %v4891
  %5832 = vmatmul.mubr.bf16.gmra.mrb[0].mxu0 %v4890
  %v5833 = vpop.f32.mrb[0].mxu0
  %v5834 = vadd.f32 %v5793, %v5833
  %v5835 = vpop.f32.mrb[0].mxu0
  %v5836 = vpop.f32.mrb[0].mxu0
  %v5837 = vadd.f32 %v5796, %v5836
  %v5838 = vpop.f32.mrb[0].mxu0
  %5839 = vdwg.mxu0
  %5840 = vmatprep.subr.bf16.mxu0 0
  %5841 = vmatpush1.bf16.msra.mxu0 %v5484
  %5842 = vmatprep.subr.bf16.mxu0 0
  %5843 = vmatpush1.bf16.msra.mxu0 %v5485
  %5844 = vmatprep.subr.bf16.mxu0 0
  %5845 = vmatpush1.bf16.msra.mxu0 %v5486
  %5846 = vmatprep.subr.bf16.mxu0 0
  %5847 = vmatpush1.bf16.msra.mxu0 %v5487
  %5848 = vmatprep.subr.bf16.mxu0 0
  %5849 = vmatpush1.bf16.msra.mxu0 %v5488
  %5850 = vmatprep.subr.bf16.mxu0 0
  %5851 = vmatpush1.bf16.msra.mxu0 %v5489
  %5852 = vmatprep.subr.bf16.mxu0 0
  %5853 = vmatpush1.bf16.msra.mxu0 %v5490
  %5854 = vmatprep.subr.bf16.mxu0 0
  %5855 = vmatpush1.bf16.msra.mxu0 %v5491
  %5856 = vmatprep.subr.bf16.mxu0 0
  %5857 = vmatpush1.bf16.msra.mxu0 %v5492
  %5858 = vmatprep.subr.bf16.mxu0 0
  %5859 = vmatpush1.bf16.msra.mxu0 %v5493
  %5860 = vmatprep.subr.bf16.mxu0 0
  %5861 = vmatpush1.bf16.msra.mxu0 %v5494
  %5862 = vmatprep.subr.bf16.mxu0 0
  %5863 = vmatpush1.bf16.msra.mxu0 %v5495
  %5864 = vmatprep.subr.bf16.mxu0 0
  %5865 = vmatpush1.bf16.msra.mxu0 %v5496
  %5866 = vmatprep.subr.bf16.mxu0 0
  %5867 = vmatpush1.bf16.msra.mxu0 %v5497
  %5868 = vmatprep.subr.bf16.mxu0 0
  %5869 = vmatpush1.bf16.msra.mxu0 %v5498
  %5870 = vmatprep.subr.bf16.mxu0 0
  %5871 = vmatpush1.bf16.msra.mxu0 %v5499
  %5872 = vmatprep.mubr.bf16.mxu0 %v4893
  %5873 = vmatmul.mubr.bf16.gmra.mrb[0].mxu0 %v4892
  %v5874 = vpop.f32.mrb[0].mxu0
  %v5875 = vadd.f32 %v5834, %v5874
  %v5876 = vpop.f32.mrb[0].mxu0
  %v5877 = vpop.f32.mrb[0].mxu0
  %v5878 = vadd.f32 %v5837, %v5877
  %v5879 = vpop.f32.mrb[0].mxu0
  %5880 = vdwg.mxu0
  %5881 = vmatprep.subr.bf16.mxu0 0
  %5882 = vmatpush1.bf16.msra.mxu0 %v5500
  %5883 = vmatprep.subr.bf16.mxu0 0
  %5884 = vmatpush1.bf16.msra.mxu0 %v5501
  %5885 = vmatprep.subr.bf16.mxu0 0
  %5886 = vmatpush1.bf16.msra.mxu0 %v5502
  %5887 = vmatprep.subr.bf16.mxu0 0
  %5888 = vmatpush1.bf16.msra.mxu0 %v5503
  %5889 = vmatprep.subr.bf16.mxu0 0
  %5890 = vmatpush1.bf16.msra.mxu0 %v5504
  %5891 = vmatprep.subr.bf16.mxu0 0
  %5892 = vmatpush1.bf16.msra.mxu0 %v5505
  %5893 = vmatprep.subr.bf16.mxu0 0
  %5894 = vmatpush1.bf16.msra.mxu0 %v5506
  %5895 = vmatprep.subr.bf16.mxu0 0
  %5896 = vmatpush1.bf16.msra.mxu0 %v5507
  %5897 = vmatprep.subr.bf16.mxu0 0
  %5898 = vmatpush1.bf16.msra.mxu0 %v5508
  %5899 = vmatprep.subr.bf16.mxu0 0
  %5900 = vmatpush1.bf16.msra.mxu0 %v5509
  %5901 = vmatprep.subr.bf16.mxu0 0
  %5902 = vmatpush1.bf16.msra.mxu0 %v5510
  %5903 = vmatprep.subr.bf16.mxu0 0
  %5904 = vmatpush1.bf16.msra.mxu0 %v5511
  %5905 = vmatprep.subr.bf16.mxu0 0
  %5906 = vmatpush1.bf16.msra.mxu0 %v5512
  %5907 = vmatprep.subr.bf16.mxu0 0
  %5908 = vmatpush1.bf16.msra.mxu0 %v5513
  %5909 = vmatprep.subr.bf16.mxu0 0
  %5910 = vmatpush1.bf16.msra.mxu0 %v5514
  %5911 = vmatprep.subr.bf16.mxu0 0
  %5912 = vmatpush1.bf16.msra.mxu0 %v5515
  %5913 = vmatprep.mubr.bf16.mxu0 %v4895
  %5914 = vmatmul.mubr.bf16.gmra.mrb[0].mxu0 %v4894
  %v5915 = vpop.f32.mrb[0].mxu0
  %v5916 = vadd.f32 %v5875, %v5915
  %v5917 = vpop.f32.mrb[0].mxu0
  %v5918 = vpop.f32.mrb[0].mxu0
  %v5919 = vadd.f32 %v5878, %v5918
  %v5920 = vpop.f32.mrb[0].mxu0
  %5921 = vdwg.mxu0
  %5922 = vmatprep.subr.bf16.mxu0 0
  %5923 = vmatpush1.bf16.msra.mxu0 %v5516
  %5924 = vmatprep.subr.bf16.mxu0 0
  %5925 = vmatpush1.bf16.msra.mxu0 %v5517
  %5926 = vmatprep.subr.bf16.mxu0 0
  %5927 = vmatpush1.bf16.msra.mxu0 %v5518
  %5928 = vmatprep.subr.bf16.mxu0 0
  %5929 = vmatpush1.bf16.msra.mxu0 %v5519
  %5930 = vmatprep.subr.bf16.mxu0 0
  %5931 = vmatpush1.bf16.msra.mxu0 %v5520
  %5932 = vmatprep.subr.bf16.mxu0 0
  %5933 = vmatpush1.bf16.msra.mxu0 %v5521
  %5934 = vmatprep.subr.bf16.mxu0 0
  %5935 = vmatpush1.bf16.msra.mxu0 %v5522
  %5936 = vmatprep.subr.bf16.mxu0 0
  %5937 = vmatpush1.bf16.msra.mxu0 %v5523
  %5938 = vmatprep.subr.bf16.mxu0 0
  %5939 = vmatpush1.bf16.msra.mxu0 %v5524
  %5940 = vmatprep.subr.bf16.mxu0 0
  %5941 = vmatpush1.bf16.msra.mxu0 %v5525
  %5942 = vmatprep.subr.bf16.mxu0 0
  %5943 = vmatpush1.bf16.msra.mxu0 %v5526
  %5944 = vmatprep.subr.bf16.mxu0 0
  %5945 = vmatpush1.bf16.msra.mxu0 %v5527
  %5946 = vmatprep.subr.bf16.mxu0 0
  %5947 = vmatpush1.bf16.msra.mxu0 %v5528
  %5948 = vmatprep.subr.bf16.mxu0 0
  %5949 = vmatpush1.bf16.msra.mxu0 %v5529
  %5950 = vmatprep.subr.bf16.mxu0 0
  %5951 = vmatpush1.bf16.msra.mxu0 %v5530
  %5952 = vmatprep.subr.bf16.mxu0 0
  %5953 = vmatpush1.bf16.msra.mxu0 %v5531
  %5954 = vmatprep.mubr.bf16.mxu0 %v4897
  %5955 = vmatmul.mubr.bf16.gmra.mrb[0].mxu0 %v4896
  %v5956 = vpop.f32.mrb[0].mxu0
  %v5957 = vadd.f32 %v5916, %v5956
  %v5958 = vpop.f32.mrb[0].mxu0
  %v5959 = vpop.f32.mrb[0].mxu0
  %v5960 = vadd.f32 %v5919, %v5959
  %v5961 = vpop.f32.mrb[0].mxu0
  %5962 = vdwg.mxu0
  %5963 = vmatprep.subr.bf16.mxu0 0
  %5964 = vmatpush1.bf16.msra.mxu0 %v5532
  %5965 = vmatprep.subr.bf16.mxu0 0
  %5966 = vmatpush1.bf16.msra.mxu0 %v5533
  %5967 = vmatprep.subr.bf16.mxu0 0
  %5968 = vmatpush1.bf16.msra.mxu0 %v5534
  %5969 = vmatprep.subr.bf16.mxu0 0
  %5970 = vmatpush1.bf16.msra.mxu0 %v5535
  %5971 = vmatprep.subr.bf16.mxu0 0
  %5972 = vmatpush1.bf16.msra.mxu0 %v5536
  %5973 = vmatprep.subr.bf16.mxu0 0
  %5974 = vmatpush1.bf16.msra.mxu0 %v5537
  %5975 = vmatprep.subr.bf16.mxu0 0
  %5976 = vmatpush1.bf16.msra.mxu0 %v5538
  %5977 = vmatprep.subr.bf16.mxu0 0
  %5978 = vmatpush1.bf16.msra.mxu0 %v5539
  %5979 = vmatprep.subr.bf16.mxu0 0
  %5980 = vmatpush1.bf16.msra.mxu0 %v5540
  %5981 = vmatprep.subr.bf16.mxu0 0
  %5982 = vmatpush1.bf16.msra.mxu0 %v5541
  %5983 = vmatprep.subr.bf16.mxu0 0
  %5984 = vmatpush1.bf16.msra.mxu0 %v5542
  %5985 = vmatprep.subr.bf16.mxu0 0
  %5986 = vmatpush1.bf16.msra.mxu0 %v5543
  %5987 = vmatprep.subr.bf16.mxu0 0
  %5988 = vmatpush1.bf16.msra.mxu0 %v5544
  %5989 = vmatprep.subr.bf16.mxu0 0
  %5990 = vmatpush1.bf16.msra.mxu0 %v5545
  %5991 = vmatprep.subr.bf16.mxu0 0
  %5992 = vmatpush1.bf16.msra.mxu0 %v5546
  %5993 = vmatprep.subr.bf16.mxu0 0
  %5994 = vmatpush1.bf16.msra.mxu0 %v5547
  %5995 = vmatprep.mubr.bf16.mxu0 %v4899
  %5996 = vmatmul.mubr.bf16.gmra.mrb[0].mxu0 %v4898
  %v5997 = vpop.f32.mrb[0].mxu0
  %v5998 = vadd.f32 %v5957, %v5997
  %v5999 = vpop.f32.mrb[0].mxu0
  %v6000 = vpop.f32.mrb[0].mxu0
  %v6001 = vadd.f32 %v5960, %v6000
  %v6002 = vpop.f32.mrb[0].mxu0
  %6003 = vdwg.mxu0
  %v6004 = vadd.f32 %v3775, %v5998
  %v6005 = vadd.f32 %v3776, %v6001
  %s6006 = scalar_lea.vmem %s17, 1
  %v6007 = vld [vmem:[%s6006] sm:$0x1]
  %s6008 = scalar_lea.vmem %s18, 1
  %v6009 = vld [vmem:[%s6008] sm:$0x1]
  %v6010 = vsel %vm184, %v6004, 0.0
  %6011 = vadd.xlane.f32.xlu0 %v6010
  %v6012 = vpop.xlane.xlu0 %6011
  %v6013 = vsel %vm184, %v6005, 0.0
  %6014 = vadd.xlane.f32.xlu0 %v6013
  %v6015 = vpop.xlane.xlu0 %6014
  %v6016 = vmul.f32 %v6012, %v778
  %v6017 = vmul.f32 %v6015, %v778
  %v6018 = vsub.f32 %v6004, %v6016
  %v6019 = vsub.f32 %v6005, %v6017
  %v6020 = vmul.f32 %v6018, %v6018
  %v6021 = vmul.f32 %v6019, %v6019
  %v6022 = vsel %vm184, %v6020, 0.0
  %6023 = vadd.xlane.f32.xlu0 %v6022
  %v6024 = vpop.xlane.xlu0 %6023
  %v6025 = vsel %vm184, %v6021, 0.0
  %6026 = vadd.xlane.f32.xlu0 %v6025
  %v6027 = vpop.xlane.xlu0 %6026
  %v6028 = vmul.f32 %v6024, %v778
  %v6029 = vmul.f32 %v6027, %v778
  %v6030 = vadd.f32 %v6028, 1e-05
  %v6031 = vadd.f32 %v6029, 1e-05
  %v6032 = vrsqrt.pop %v6030
  %v6033 = vrsqrt.pop %v6031
  %v6034 = vmul.f32 %v6018, %v6032
  %v6035 = vmul.f32 %v6019, %v6033
  %v6037 = vlaneseq
  %v6038 = vshrl.u32 %v6037, 7
  %v6039 = vsub.s32 0, %v6038
  %v6040 = vrot.slane %v6007, %v6039
  %v6042 = vmul.f32 %v6034, %v6040
  %v6043 = vmul.f32 %v6035, %v6040
  %v6045 = vlaneseq
  %v6046 = vshrl.u32 %v6045, 7
  %v6047 = vsub.s32 0, %v6046
  %v6048 = vrot.slane %v6009, %v6047
  %v6050 = vadd.f32 %v6042, %v6048
  %v6051 = vadd.f32 %v6043, %v6048
  %s6052 = scalar_lea.vmem %s7, 128
  %v6053 = vld [vmem:[%s6052] sm:$0xff]
  %v6054 = vld [vmem:[%s6052 + $0x8] sm:$0xff]
  %v6055 = vld [vmem:[%s6052 + $0x10] sm:$0xff]
  %v6056 = vld [vmem:[%s6052 + $0x18] sm:$0xff]
  %v6057 = vld [vmem:[%s6052 + $0x20] sm:$0xff]
  %v6058 = vld [vmem:[%s6052 + $0x28] sm:$0xff]
  %v6059 = vld [vmem:[%s6052 + $0x30] sm:$0xff]
  %v6060 = vld [vmem:[%s6052 + $0x38] sm:$0xff]
  %v6061 = vpack.c.bf16 %v6051, %v6050
  %s6062 = scalar_lea.vmem %s8, 4
  %v6063 = vld [vmem:[%s6062] sm:$0x3]
  %v6065 = vlaneseq
  %v6066 = vshrl.u32 %v6065, 7
  %v6067 = vsub.s32 0, %v6066
  %v6068 = vrot.slane %v6063, %v6067
  %v6069 = vlaneseq
  %v6070 = vshrl.u32 %v6069, 7
  %v6071 = vsub.s32 1, %v6070
  %v6072 = vrot.slane %v6063, %v6071
  %v6083 = vunpack.c.l.b16 %v6053
  %v6084 = vunpack.c.h.b16 %v6053
  %v6085 = vunpack.c.l.b16 %v6054
  %v6086 = vunpack.c.h.b16 %v6054
  %v6087 = vunpack.c.l.b16 %v6055
  %v6088 = vunpack.c.h.b16 %v6055
  %v6089 = vunpack.c.l.b16 %v6056
  %v6090 = vunpack.c.h.b16 %v6056
  %v6091 = vunpack.c.l.b16 %v6057
  %v6092 = vunpack.c.h.b16 %v6057
  %v6093 = vunpack.c.l.b16 %v6058
  %v6094 = vunpack.c.h.b16 %v6058
  %v6095 = vunpack.c.l.b16 %v6059
  %v6096 = vunpack.c.h.b16 %v6059
  %v6097 = vunpack.c.l.b16 %v6060
  %v6098 = vunpack.c.h.b16 %v6060
  %v6099 = vpack.c.b16 %v6085, %v6083
  %v6100 = vpack.c.b16 %v6086, %v6084
  %v6101 = vpack.c.b16 %v6089, %v6087
  %v6102 = vpack.c.b16 %v6090, %v6088
  %v6103 = vpack.c.b16 %v6093, %v6091
  %v6104 = vpack.c.b16 %v6094, %v6092
  %v6105 = vpack.c.b16 %v6097, %v6095
  %v6106 = vpack.c.b16 %v6098, %v6096
  %v6116 = vsel %vm184, %v6061, 0
  %6118 = vmatprep.subr.bf16.mxu0 %v6100
  %6119 = vmatpush1.bf16.msra.mxu0 %v6099
  %6120 = vmatprep.subr.bf16.mxu0 %v6102
  %6121 = vmatpush1.bf16.msra.mxu0 %v6101
  %6122 = vmatprep.subr.bf16.mxu0 %v6104
  %6123 = vmatpush1.bf16.msra.mxu0 %v6103
  %6124 = vmatprep.subr.bf16.mxu0 %v6106
  %6125 = vmatpush1.bf16.msra.mxu0 %v6105
  %6126 = vmatprep.subr.bf16.mxu0 0
  %6127 = vmatpush1.bf16.msra.mxu0 0
  %6128 = vmatprep.subr.bf16.mxu0 0
  %6129 = vmatpush1.bf16.msra.mxu0 0
  %6130 = vmatprep.subr.bf16.mxu0 0
  %6131 = vmatpush1.bf16.msra.mxu0 0
  %6132 = vmatprep.subr.bf16.mxu0 0
  %6133 = vmatpush1.bf16.msra.mxu0 0
  %6134 = vmatprep.subr.bf16.mxu0 0
  %6135 = vmatpush1.bf16.msra.mxu0 0
  %6136 = vmatprep.subr.bf16.mxu0 0
  %6137 = vmatpush1.bf16.msra.mxu0 0
  %6138 = vmatprep.subr.bf16.mxu0 0
  %6139 = vmatpush1.bf16.msra.mxu0 0
  %6140 = vmatprep.subr.bf16.mxu0 0
  %6141 = vmatpush1.bf16.msra.mxu0 0
  %6142 = vmatprep.subr.bf16.mxu0 0
  %6143 = vmatpush1.bf16.msra.mxu0 0
  %6144 = vmatprep.subr.bf16.mxu0 0
  %6145 = vmatpush1.bf16.msra.mxu0 0
  %6146 = vmatprep.subr.bf16.mxu0 0
  %6147 = vmatpush1.bf16.msra.mxu0 0
  %6148 = vmatprep.subr.bf16.mxu0 0
  %6149 = vmatpush1.bf16.msra.mxu0 0
  %6150 = vmatprep.mubr.bf16.mxu0 0
  %6151 = vmatmul.mubr.bf16.gmra.mrb[0].mxu0 %v6116
  %v6152 = vpop.f32.mrb[0].mxu0
  %v6153 = vadd.f32 %v6068, %v6152
  %v6154 = vpop.f32.mrb[0].mxu0
  %v6155 = vadd.f32 %v6072, %v6154
  %v6156 = vpop.f32.mrb[0].mxu0
  %v6157 = vadd.f32 %v6068, %v6156
  %v6158 = vpop.f32.mrb[0].mxu0
  %v6159 = vadd.f32 %v6072, %v6158
  %6160 = vdwg.mxu0
  %v6161 = vpack.c.bf16 %v6153, %v6153
  %v6162 = vpack.c.bf16 %v6155, %v6155
  %6164 = vrot.lane.b32.xlu0 %v6161, 64
  %v6165 = vpop.permute.xlu0 %6164
  %v6167 = vsel %vm236, %v6161, 0
  %v6170 = vsel %vm236, %v6165, 0
  %6172 = vmatprep.subr.bf16.mxu0 0
  %6173 = vmatpush1.bf16.xpose.msra.mxu0 %v6170
  %6174 = vmatprep.subr.bf16.mxu0 0
  %6175 = vmatpush1.bf16.xpose.msra.mxu0 0
  %6176 = vmatprep.subr.bf16.mxu0 0
  %6177 = vmatpush1.bf16.xpose.msra.mxu0 0
  %6178 = vmatprep.subr.bf16.mxu0 0
  %6179 = vmatpush1.bf16.xpose.msra.mxu0 0
  %6180 = vmatprep.subr.bf16.mxu0 0
  %6181 = vmatpush1.bf16.xpose.msra.mxu0 0
  %6182 = vmatprep.subr.bf16.mxu0 0
  %6183 = vmatpush1.bf16.xpose.msra.mxu0 0
  %6184 = vmatprep.subr.bf16.mxu0 0
  %6185 = vmatpush1.bf16.xpose.msra.mxu0 0
  %6186 = vmatprep.subr.bf16.mxu0 0
  %6187 = vmatpush1.bf16.xpose.msra.mxu0 0
  %6188 = vmatprep.subr.bf16.mxu0 0
  %6189 = vmatpush1.bf16.xpose.msra.mxu0 0
  %6190 = vmatprep.subr.bf16.mxu0 0
  %6191 = vmatpush1.bf16.xpose.msra.mxu0 0
  %6192 = vmatprep.subr.bf16.mxu0 0
  %6193 = vmatpush1.bf16.xpose.msra.mxu0 0
  %6194 = vmatprep.subr.bf16.mxu0 0
  %6195 = vmatpush1.bf16.xpose.msra.mxu0 0
  %6196 = vmatprep.subr.bf16.mxu0 0
  %6197 = vmatpush1.bf16.xpose.msra.mxu0 0
  %6198 = vmatprep.subr.bf16.mxu0 0
  %6199 = vmatpush1.bf16.xpose.msra.mxu0 0
  %6200 = vmatprep.subr.bf16.mxu0 0
  %6201 = vmatpush1.bf16.xpose.msra.mxu0 0
  %6202 = vmatprep.subr.bf16.mxu0 0
  %6203 = vmatpush1.bf16.xpose.msra.mxu0 0
  %6204 = vmatprep.mubr.bf16.mxu0 0
  %6205 = vmatmul.mubr.bf16.gmra.mrb[0].mxu0 %v6167
  %v6206 = vpop.f32.mrb[0].mxu0
  %v6207 = vadd.f32 0.0, %v6206
  %v6208 = vpop.f32.mrb[0].mxu0
  %v6209 = vpop.f32.mrb[0].mxu0
  %v6210 = vpop.f32.mrb[0].mxu0
  %6211 = vdwg.mxu0
  %v6212 = vsel %vm283, %v6207, -inf
  %6213 = vmax.xlane.f32.xlu0 %v6212
  %v6214 = vpop.xlane.xlu0 %6213
  %v6215 = vsub.f32 %v6207, %v6214
  %v6216 = vmul.f32 %v6215, 1.442695
  %v6217 = vpow.pop %v6216
  %v6218 = vsel %vm283, %v6217, 0.0
  %6219 = vadd.xlane.f32.xlu0 %v6218
  %v6220 = vpop.xlane.xlu0 %6219
  %v6221 = vrcp.pop %v6220
  %v6222 = vmul.f32 %v6217, %v6221
  %v6223 = vpack.c.bf16 %v6222, %v6222
  %v6225 = vsel %vm283, %v6223, 0
  %v6228 = vsel %vm299, %v6162, 0
  %6230 = vmatprep.subr.bf16.mxu0 0
  %6231 = vmatpush1.bf16.msra.mxu0 %v6228
  %6232 = vmatprep.subr.bf16.mxu0 0
  %6233 = vmatpush1.bf16.msra.mxu0 0
  %6234 = vmatprep.subr.bf16.mxu0 0
  %6235 = vmatpush1.bf16.msra.mxu0 0
  %6236 = vmatprep.subr.bf16.mxu0 0
  %6237 = vmatpush1.bf16.msra.mxu0 0
  %6238 = vmatprep.subr.bf16.mxu0 0
  %6239 = vmatpush1.bf16.msra.mxu0 0
  %6240 = vmatprep.subr.bf16.mxu0 0
  %6241 = vmatpush1.bf16.msra.mxu0 0
  %6242 = vmatprep.subr.bf16.mxu0 0
  %6243 = vmatpush1.bf16.msra.mxu0 0
  %6244 = vmatprep.subr.bf16.mxu0 0
  %6245 = vmatpush1.bf16.msra.mxu0 0
  %6246 = vmatprep.subr.bf16.mxu0 0
  %6247 = vmatpush1.bf16.msra.mxu0 0
  %6248 = vmatprep.subr.bf16.mxu0 0
  %6249 = vmatpush1.bf16.msra.mxu0 0
  %6250 = vmatprep.subr.bf16.mxu0 0
  %6251 = vmatpush1.bf16.msra.mxu0 0
  %6252 = vmatprep.subr.bf16.mxu0 0
  %6253 = vmatpush1.bf16.msra.mxu0 0
  %6254 = vmatprep.subr.bf16.mxu0 0
  %6255 = vmatpush1.bf16.msra.mxu0 0
  %6256 = vmatprep.subr.bf16.mxu0 0
  %6257 = vmatpush1.bf16.msra.mxu0 0
  %6258 = vmatprep.subr.bf16.mxu0 0
  %6259 = vmatpush1.bf16.msra.mxu0 0
  %6260 = vmatprep.subr.bf16.mxu0 0
  %6261 = vmatpush1.bf16.msra.mxu0 0
  %6262 = vmatprep.mubr.bf16.mxu0 0
  %6263 = vmatmul.mubr.bf16.gmra.mrb[0].mxu0 %v6225
  %v6264 = vpop.f32.mrb[0].mxu0
  %v6265 = vadd.f32 0.0, %v6264
  %v6266 = vpop.f32.mrb[0].mxu0
  %v6267 = vpop.f32.mrb[0].mxu0
  %v6268 = vpop.f32.mrb[0].mxu0
  %6269 = vdwg.mxu0
  %6270 = vrot.lane.b32.xlu0 %v6161, 96
  %v6271 = vpop.permute.xlu0 %6270
  %6272 = vrot.lane.b32.xlu0 %v6161, 32
  %v6273 = vpop.permute.xlu0 %6272
  %v6275 = vsel %vm236, %v6271, 0
  %v6278 = vsel %vm236, %v6273, 0
  %6280 = vmatprep.subr.bf16.mxu0 0
  %6281 = vmatpush1.bf16.xpose.msra.mxu0 %v6278
  %6282 = vmatprep.subr.bf16.mxu0 0
  %6283 = vmatpush1.bf16.xpose.msra.mxu0 0
  %6284 = vmatprep.subr.bf16.mxu0 0
  %6285 = vmatpush1.bf16.xpose.msra.mxu0 0
  %6286 = vmatprep.subr.bf16.mxu0 0
  %6287 = vmatpush1.bf16.xpose.msra.mxu0 0
  %6288 = vmatprep.subr.bf16.mxu0 0
  %6289 = vmatpush1.bf16.xpose.msra.mxu0 0
  %6290 = vmatprep.subr.bf16.mxu0 0
  %6291 = vmatpush1.bf16.xpose.msra.mxu0 0
  %6292 = vmatprep.subr.bf16.mxu0 0
  %6293 = vmatpush1.bf16.xpose.msra.mxu0 0
  %6294 = vmatprep.subr.bf16.mxu0 0
  %6295 = vmatpush1.bf16.xpose.msra.mxu0 0
  %6296 = vmatprep.subr.bf16.mxu0 0
  %6297 = vmatpush1.bf16.xpose.msra.mxu0 0
  %6298 = vmatprep.subr.bf16.mxu0 0
  %6299 = vmatpush1.bf16.xpose.msra.mxu0 0
  %6300 = vmatprep.subr.bf16.mxu0 0
  %6301 = vmatpush1.bf16.xpose.msra.mxu0 0
  %6302 = vmatprep.subr.bf16.mxu0 0
  %6303 = vmatpush1.bf16.xpose.msra.mxu0 0
  %6304 = vmatprep.subr.bf16.mxu0 0
  %6305 = vmatpush1.bf16.xpose.msra.mxu0 0
  %6306 = vmatprep.subr.bf16.mxu0 0
  %6307 = vmatpush1.bf16.xpose.msra.mxu0 0
  %6308 = vmatprep.subr.bf16.mxu0 0
  %6309 = vmatpush1.bf16.xpose.msra.mxu0 0
  %6310 = vmatprep.subr.bf16.mxu0 0
  %6311 = vmatpush1.bf16.xpose.msra.mxu0 0
  %6312 = vmatprep.mubr.bf16.mxu0 0
  %6313 = vmatmul.mubr.bf16.gmra.mrb[0].mxu0 %v6275
  %v6314 = vpop.f32.mrb[0].mxu0
  %v6315 = vadd.f32 0.0, %v6314
  %v6316 = vpop.f32.mrb[0].mxu0
  %v6317 = vpop.f32.mrb[0].mxu0
  %v6318 = vpop.f32.mrb[0].mxu0
  %6319 = vdwg.mxu0
  %v6320 = vsel %vm283, %v6315, -inf
  %6321 = vmax.xlane.f32.xlu0 %v6320
  %v6322 = vpop.xlane.xlu0 %6321
  %v6323 = vsub.f32 %v6315, %v6322
  %v6324 = vmul.f32 %v6323, 1.442695
  %v6325 = vpow.pop %v6324
  %v6326 = vsel %vm283, %v6325, 0.0
  %6327 = vadd.xlane.f32.xlu0 %v6326
  %v6328 = vpop.xlane.xlu0 %6327
  %v6329 = vrcp.pop %v6328
  %v6330 = vmul.f32 %v6325, %v6329
  %v6331 = vpack.c.bf16 %v6330, %v6330
  %6333 = vrot.lane.b32.xlu0 %v6162, 96
  %v6334 = vpop.permute.xlu0 %6333
  %v6336 = vsel %vm283, %v6331, 0
  %v6339 = vsel %vm299, %v6334, 0
  %6341 = vmatprep.subr.bf16.mxu0 0
  %6342 = vmatpush1.bf16.msra.mxu0 %v6339
  %6343 = vmatprep.subr.bf16.mxu0 0
  %6344 = vmatpush1.bf16.msra.mxu0 0
  %6345 = vmatprep.subr.bf16.mxu0 0
  %6346 = vmatpush1.bf16.msra.mxu0 0
  %6347 = vmatprep.subr.bf16.mxu0 0
  %6348 = vmatpush1.bf16.msra.mxu0 0
  %6349 = vmatprep.subr.bf16.mxu0 0
  %6350 = vmatpush1.bf16.msra.mxu0 0
  %6351 = vmatprep.subr.bf16.mxu0 0
  %6352 = vmatpush1.bf16.msra.mxu0 0
  %6353 = vmatprep.subr.bf16.mxu0 0
  %6354 = vmatpush1.bf16.msra.mxu0 0
  %6355 = vmatprep.subr.bf16.mxu0 0
  %6356 = vmatpush1.bf16.msra.mxu0 0
  %6357 = vmatprep.subr.bf16.mxu0 0
  %6358 = vmatpush1.bf16.msra.mxu0 0
  %6359 = vmatprep.subr.bf16.mxu0 0
  %6360 = vmatpush1.bf16.msra.mxu0 0
  %6361 = vmatprep.subr.bf16.mxu0 0
  %6362 = vmatpush1.bf16.msra.mxu0 0
  %6363 = vmatprep.subr.bf16.mxu0 0
  %6364 = vmatpush1.bf16.msra.mxu0 0
  %6365 = vmatprep.subr.bf16.mxu0 0
  %6366 = vmatpush1.bf16.msra.mxu0 0
  %6367 = vmatprep.subr.bf16.mxu0 0
  %6368 = vmatpush1.bf16.msra.mxu0 0
  %6369 = vmatprep.subr.bf16.mxu0 0
  %6370 = vmatpush1.bf16.msra.mxu0 0
  %6371 = vmatprep.subr.bf16.mxu0 0
  %6372 = vmatpush1.bf16.msra.mxu0 0
  %6373 = vmatprep.mubr.bf16.mxu0 0
  %6374 = vmatmul.mubr.bf16.gmra.mrb[0].mxu0 %v6336
  %v6375 = vpop.f32.mrb[0].mxu0
  %v6376 = vadd.f32 0.0, %v6375
  %v6377 = vpop.f32.mrb[0].mxu0
  %v6378 = vpop.f32.mrb[0].mxu0
  %v6379 = vpop.f32.mrb[0].mxu0
  %6380 = vdwg.mxu0
  %6382 = vrot.lane.b32.xlu0 %v6376, 32
  %v6383 = vpop.permute.xlu0 %6382
  %v6385 = vsel %vm236, %v6265, %v6383
  %v6386 = vpack.c.bf16 %v6157, %v6157
  %v6387 = vpack.c.bf16 %v6159, %v6159
  %6389 = vrot.lane.b32.xlu0 %v6386, 64
  %v6390 = vpop.permute.xlu0 %6389
  %v6392 = vsel %vm236, %v6386, 0
  %v6395 = vsel %vm236, %v6390, 0
  %6397 = vmatprep.subr.bf16.mxu0 0
  %6398 = vmatpush1.bf16.xpose.msra.mxu0 %v6395
  %6399 = vmatprep.subr.bf16.mxu0 0
  %6400 = vmatpush1.bf16.xpose.msra.mxu0 0
  %6401 = vmatprep.subr.bf16.mxu0 0
  %6402 = vmatpush1.bf16.xpose.msra.mxu0 0
  %6403 = vmatprep.subr.bf16.mxu0 0
  %6404 = vmatpush1.bf16.xpose.msra.mxu0 0
  %6405 = vmatprep.subr.bf16.mxu0 0
  %6406 = vmatpush1.bf16.xpose.msra.mxu0 0
  %6407 = vmatprep.subr.bf16.mxu0 0
  %6408 = vmatpush1.bf16.xpose.msra.mxu0 0
  %6409 = vmatprep.subr.bf16.mxu0 0
  %6410 = vmatpush1.bf16.xpose.msra.mxu0 0
  %6411 = vmatprep.subr.bf16.mxu0 0
  %6412 = vmatpush1.bf16.xpose.msra.mxu0 0
  %6413 = vmatprep.subr.bf16.mxu0 0
  %6414 = vmatpush1.bf16.xpose.msra.mxu0 0
  %6415 = vmatprep.subr.bf16.mxu0 0
  %6416 = vmatpush1.bf16.xpose.msra.mxu0 0
  %6417 = vmatprep.subr.bf16.mxu0 0
  %6418 = vmatpush1.bf16.xpose.msra.mxu0 0
  %6419 = vmatprep.subr.bf16.mxu0 0
  %6420 = vmatpush1.bf16.xpose.msra.mxu0 0
  %6421 = vmatprep.subr.bf16.mxu0 0
  %6422 = vmatpush1.bf16.xpose.msra.mxu0 0
  %6423 = vmatprep.subr.bf16.mxu0 0
  %6424 = vmatpush1.bf16.xpose.msra.mxu0 0
  %6425 = vmatprep.subr.bf16.mxu0 0
  %6426 = vmatpush1.bf16.xpose.msra.mxu0 0
  %6427 = vmatprep.subr.bf16.mxu0 0
  %6428 = vmatpush1.bf16.xpose.msra.mxu0 0
  %6429 = vmatprep.mubr.bf16.mxu0 0
  %6430 = vmatmul.mubr.bf16.gmra.mrb[0].mxu0 %v6392
  %v6431 = vpop.f32.mrb[0].mxu0
  %v6432 = vadd.f32 0.0, %v6431
  %v6433 = vpop.f32.mrb[0].mxu0
  %v6434 = vpop.f32.mrb[0].mxu0
  %v6435 = vpop.f32.mrb[0].mxu0
  %6436 = vdwg.mxu0
  %v6437 = vsel %vm283, %v6432, -inf
  %6438 = vmax.xlane.f32.xlu0 %v6437
  %v6439 = vpop.xlane.xlu0 %6438
  %v6440 = vsub.f32 %v6432, %v6439
  %v6441 = vmul.f32 %v6440, 1.442695
  %v6442 = vpow.pop %v6441
  %v6443 = vsel %vm283, %v6442, 0.0
  %6444 = vadd.xlane.f32.xlu0 %v6443
  %v6445 = vpop.xlane.xlu0 %6444
  %v6446 = vrcp.pop %v6445
  %v6447 = vmul.f32 %v6442, %v6446
  %v6448 = vpack.c.bf16 %v6447, %v6447
  %v6450 = vsel %vm283, %v6448, 0
  %v6453 = vsel %vm299, %v6387, 0
  %6455 = vmatprep.subr.bf16.mxu0 0
  %6456 = vmatpush1.bf16.msra.mxu0 %v6453
  %6457 = vmatprep.subr.bf16.mxu0 0
  %6458 = vmatpush1.bf16.msra.mxu0 0
  %6459 = vmatprep.subr.bf16.mxu0 0
  %6460 = vmatpush1.bf16.msra.mxu0 0
  %6461 = vmatprep.subr.bf16.mxu0 0
  %6462 = vmatpush1.bf16.msra.mxu0 0
  %6463 = vmatprep.subr.bf16.mxu0 0
  %6464 = vmatpush1.bf16.msra.mxu0 0
  %6465 = vmatprep.subr.bf16.mxu0 0
  %6466 = vmatpush1.bf16.msra.mxu0 0
  %6467 = vmatprep.subr.bf16.mxu0 0
  %6468 = vmatpush1.bf16.msra.mxu0 0
  %6469 = vmatprep.subr.bf16.mxu0 0
  %6470 = vmatpush1.bf16.msra.mxu0 0
  %6471 = vmatprep.subr.bf16.mxu0 0
  %6472 = vmatpush1.bf16.msra.mxu0 0
  %6473 = vmatprep.subr.bf16.mxu0 0
  %6474 = vmatpush1.bf16.msra.mxu0 0
  %6475 = vmatprep.subr.bf16.mxu0 0
  %6476 = vmatpush1.bf16.msra.mxu0 0
  %6477 = vmatprep.subr.bf16.mxu0 0
  %6478 = vmatpush1.bf16.msra.mxu0 0
  %6479 = vmatprep.subr.bf16.mxu0 0
  %6480 = vmatpush1.bf16.msra.mxu0 0
  %6481 = vmatprep.subr.bf16.mxu0 0
  %6482 = vmatpush1.bf16.msra.mxu0 0
  %6483 = vmatprep.subr.bf16.mxu0 0
  %6484 = vmatpush1.bf16.msra.mxu0 0
  %6485 = vmatprep.subr.bf16.mxu0 0
  %6486 = vmatpush1.bf16.msra.mxu0 0
  %6487 = vmatprep.mubr.bf16.mxu0 0
  %6488 = vmatmul.mubr.bf16.gmra.mrb[0].mxu0 %v6450
  %v6489 = vpop.f32.mrb[0].mxu0
  %v6490 = vadd.f32 0.0, %v6489
  %v6491 = vpop.f32.mrb[0].mxu0
  %v6492 = vpop.f32.mrb[0].mxu0
  %v6493 = vpop.f32.mrb[0].mxu0
  %6494 = vdwg.mxu0
  %6495 = vrot.lane.b32.xlu0 %v6386, 96
  %v6496 = vpop.permute.xlu0 %6495
  %6497 = vrot.lane.b32.xlu0 %v6386, 32
  %v6498 = vpop.permute.xlu0 %6497
  %v6500 = vsel %vm236, %v6496, 0
  %v6503 = vsel %vm236, %v6498, 0
  %6505 = vmatprep.subr.bf16.mxu0 0
  %6506 = vmatpush1.bf16.xpose.msra.mxu0 %v6503
  %6507 = vmatprep.subr.bf16.mxu0 0
  %6508 = vmatpush1.bf16.xpose.msra.mxu0 0
  %6509 = vmatprep.subr.bf16.mxu0 0
  %6510 = vmatpush1.bf16.xpose.msra.mxu0 0
  %6511 = vmatprep.subr.bf16.mxu0 0
  %6512 = vmatpush1.bf16.xpose.msra.mxu0 0
  %6513 = vmatprep.subr.bf16.mxu0 0
  %6514 = vmatpush1.bf16.xpose.msra.mxu0 0
  %6515 = vmatprep.subr.bf16.mxu0 0
  %6516 = vmatpush1.bf16.xpose.msra.mxu0 0
  %6517 = vmatprep.subr.bf16.mxu0 0
  %6518 = vmatpush1.bf16.xpose.msra.mxu0 0
  %6519 = vmatprep.subr.bf16.mxu0 0
  %6520 = vmatpush1.bf16.xpose.msra.mxu0 0
  %6521 = vmatprep.subr.bf16.mxu0 0
  %6522 = vmatpush1.bf16.xpose.msra.mxu0 0
  %6523 = vmatprep.subr.bf16.mxu0 0
  %6524 = vmatpush1.bf16.xpose.msra.mxu0 0
  %6525 = vmatprep.subr.bf16.mxu0 0
  %6526 = vmatpush1.bf16.xpose.msra.mxu0 0
  %6527 = vmatprep.subr.bf16.mxu0 0
  %6528 = vmatpush1.bf16.xpose.msra.mxu0 0
  %6529 = vmatprep.subr.bf16.mxu0 0
  %6530 = vmatpush1.bf16.xpose.msra.mxu0 0
  %6531 = vmatprep.subr.bf16.mxu0 0
  %6532 = vmatpush1.bf16.xpose.msra.mxu0 0
  %6533 = vmatprep.subr.bf16.mxu0 0
  %6534 = vmatpush1.bf16.xpose.msra.mxu0 0
  %6535 = vmatprep.subr.bf16.mxu0 0
  %6536 = vmatpush1.bf16.xpose.msra.mxu0 0
  %6537 = vmatprep.mubr.bf16.mxu0 0
  %6538 = vmatmul.mubr.bf16.gmra.mrb[0].mxu0 %v6500
  %v6539 = vpop.f32.mrb[0].mxu0
  %v6540 = vadd.f32 0.0, %v6539
  %v6541 = vpop.f32.mrb[0].mxu0
  %v6542 = vpop.f32.mrb[0].mxu0
  %v6543 = vpop.f32.mrb[0].mxu0
  %6544 = vdwg.mxu0
  %v6545 = vsel %vm283, %v6540, -inf
  %6546 = vmax.xlane.f32.xlu0 %v6545
  %v6547 = vpop.xlane.xlu0 %6546
  %v6548 = vsub.f32 %v6540, %v6547
  %v6549 = vmul.f32 %v6548, 1.442695
  %v6550 = vpow.pop %v6549
  %v6551 = vsel %vm283, %v6550, 0.0
  %6552 = vadd.xlane.f32.xlu0 %v6551
  %v6553 = vpop.xlane.xlu0 %6552
  %v6554 = vrcp.pop %v6553
  %v6555 = vmul.f32 %v6550, %v6554
  %v6556 = vpack.c.bf16 %v6555, %v6555
  %6558 = vrot.lane.b32.xlu0 %v6387, 96
  %v6559 = vpop.permute.xlu0 %6558
  %v6561 = vsel %vm283, %v6556, 0
  %v6564 = vsel %vm299, %v6559, 0
  %6566 = vmatprep.subr.bf16.mxu0 0
  %6567 = vmatpush1.bf16.msra.mxu0 %v6564
  %6568 = vmatprep.subr.bf16.mxu0 0
  %6569 = vmatpush1.bf16.msra.mxu0 0
  %6570 = vmatprep.subr.bf16.mxu0 0
  %6571 = vmatpush1.bf16.msra.mxu0 0
  %6572 = vmatprep.subr.bf16.mxu0 0
  %6573 = vmatpush1.bf16.msra.mxu0 0
  %6574 = vmatprep.subr.bf16.mxu0 0
  %6575 = vmatpush1.bf16.msra.mxu0 0
  %6576 = vmatprep.subr.bf16.mxu0 0
  %6577 = vmatpush1.bf16.msra.mxu0 0
  %6578 = vmatprep.subr.bf16.mxu0 0
  %6579 = vmatpush1.bf16.msra.mxu0 0
  %6580 = vmatprep.subr.bf16.mxu0 0
  %6581 = vmatpush1.bf16.msra.mxu0 0
  %6582 = vmatprep.subr.bf16.mxu0 0
  %6583 = vmatpush1.bf16.msra.mxu0 0
  %6584 = vmatprep.subr.bf16.mxu0 0
  %6585 = vmatpush1.bf16.msra.mxu0 0
  %6586 = vmatprep.subr.bf16.mxu0 0
  %6587 = vmatpush1.bf16.msra.mxu0 0
  %6588 = vmatprep.subr.bf16.mxu0 0
  %6589 = vmatpush1.bf16.msra.mxu0 0
  %6590 = vmatprep.subr.bf16.mxu0 0
  %6591 = vmatpush1.bf16.msra.mxu0 0
  %6592 = vmatprep.subr.bf16.mxu0 0
  %6593 = vmatpush1.bf16.msra.mxu0 0
  %6594 = vmatprep.subr.bf16.mxu0 0
  %6595 = vmatpush1.bf16.msra.mxu0 0
  %6596 = vmatprep.subr.bf16.mxu0 0
  %6597 = vmatpush1.bf16.msra.mxu0 0
  %6598 = vmatprep.mubr.bf16.mxu0 0
  %6599 = vmatmul.mubr.bf16.gmra.mrb[0].mxu0 %v6561
  %v6600 = vpop.f32.mrb[0].mxu0
  %v6601 = vadd.f32 0.0, %v6600
  %v6602 = vpop.f32.mrb[0].mxu0
  %v6603 = vpop.f32.mrb[0].mxu0
  %v6604 = vpop.f32.mrb[0].mxu0
  %6605 = vdwg.mxu0
  %6607 = vrot.lane.b32.xlu0 %v6601, 32
  %v6608 = vpop.permute.xlu0 %6607
  %v6610 = vsel %vm236, %v6490, %v6608
  %s6611 = scalar_lea.vmem %s9, 64
  %v6612 = vld [vmem:[%s6611] sm:$0xf]
  %v6613 = vld [vmem:[%s6611 + $0x4] sm:$0xf]
  %v6614 = vld [vmem:[%s6611 + $0x8] sm:$0xf]
  %v6615 = vld [vmem:[%s6611 + $0xc] sm:$0xf]
  %v6616 = vld [vmem:[%s6611 + $0x10] sm:$0xf]
  %v6617 = vld [vmem:[%s6611 + $0x14] sm:$0xf]
  %v6618 = vld [vmem:[%s6611 + $0x18] sm:$0xf]
  %v6619 = vld [vmem:[%s6611 + $0x1c] sm:$0xf]
  %v6620 = vpack.c.bf16 %v6610, %v6385
  %s6621 = scalar_lea.vmem %s10, 2
  %v6622 = vld [vmem:[%s6621] sm:$0x1]
  %v6624 = vlaneseq
  %v6625 = vshrl.u32 %v6624, 7
  %v6626 = vsub.s32 0, %v6625
  %v6627 = vrot.slane %v6622, %v6626
  %v6637 = vunpack.c.l.b16 %v6612
  %v6638 = vunpack.c.l.b16 %v6613
  %v6639 = vunpack.c.l.b16 %v6614
  %v6640 = vunpack.c.l.b16 %v6615
  %v6641 = vunpack.c.l.b16 %v6616
  %v6642 = vunpack.c.l.b16 %v6617
  %v6643 = vunpack.c.l.b16 %v6618
  %v6644 = vunpack.c.l.b16 %v6619
  %v6645 = vpack.c.b16 %v6638, %v6637
  %v6646 = vpack.c.b16 %v6640, %v6639
  %v6647 = vpack.c.b16 %v6642, %v6641
  %v6648 = vpack.c.b16 %v6644, %v6643
  %v6654 = vsel %vm184, %v6620, 0
  %6656 = vmatprep.subr.bf16.mxu0 0
  %6657 = vmatpush1.bf16.msra.mxu0 %v6645
  %6658 = vmatprep.subr.bf16.mxu0 0
  %6659 = vmatpush1.bf16.msra.mxu0 %v6646
  %6660 = vmatprep.subr.bf16.mxu0 0
  %6661 = vmatpush1.bf16.msra.mxu0 %v6647
  %6662 = vmatprep.subr.bf16.mxu0 0
  %6663 = vmatpush1.bf16.msra.mxu0 %v6648
  %6664 = vmatprep.subr.bf16.mxu0 0
  %6665 = vmatpush1.bf16.msra.mxu0 0
  %6666 = vmatprep.subr.bf16.mxu0 0
  %6667 = vmatpush1.bf16.msra.mxu0 0
  %6668 = vmatprep.subr.bf16.mxu0 0
  %6669 = vmatpush1.bf16.msra.mxu0 0
  %6670 = vmatprep.subr.bf16.mxu0 0
  %6671 = vmatpush1.bf16.msra.mxu0 0
  %6672 = vmatprep.subr.bf16.mxu0 0
  %6673 = vmatpush1.bf16.msra.mxu0 0
  %6674 = vmatprep.subr.bf16.mxu0 0
  %6675 = vmatpush1.bf16.msra.mxu0 0
  %6676 = vmatprep.subr.bf16.mxu0 0
  %6677 = vmatpush1.bf16.msra.mxu0 0
  %6678 = vmatprep.subr.bf16.mxu0 0
  %6679 = vmatpush1.bf16.msra.mxu0 0
  %6680 = vmatprep.subr.bf16.mxu0 0
  %6681 = vmatpush1.bf16.msra.mxu0 0
  %6682 = vmatprep.subr.bf16.mxu0 0
  %6683 = vmatpush1.bf16.msra.mxu0 0
  %6684 = vmatprep.subr.bf16.mxu0 0
  %6685 = vmatpush1.bf16.msra.mxu0 0
  %6686 = vmatprep.subr.bf16.mxu0 0
  %6687 = vmatpush1.bf16.msra.mxu0 0
  %6688 = vmatprep.mubr.bf16.mxu0 0
  %6689 = vmatmul.mubr.bf16.gmra.mrb[0].mxu0 %v6654
  %v6690 = vpop.f32.mrb[0].mxu0
  %v6691 = vadd.f32 %v6627, %v6690
  %v6692 = vpop.f32.mrb[0].mxu0
  %v6693 = vpop.f32.mrb[0].mxu0
  %v6694 = vadd.f32 %v6627, %v6693
  %v6695 = vpop.f32.mrb[0].mxu0
  %6696 = vdwg.mxu0
  %v6697 = vadd.f32 %v6050, %v6691
  %v6698 = vadd.f32 %v6051, %v6694
  %s6699 = scalar_lea.vmem %s11, 2
  %v6700 = vld [vmem:[%s6699] sm:$0x1]
  %s6701 = scalar_lea.vmem %s12, 2
  %v6702 = vld [vmem:[%s6701] sm:$0x1]
  %v6703 = vsel %vm184, %v6697, 0.0
  %6704 = vadd.xlane.f32.xlu0 %v6703
  %v6705 = vpop.xlane.xlu0 %6704
  %v6706 = vsel %vm184, %v6698, 0.0
  %6707 = vadd.xlane.f32.xlu0 %v6706
  %v6708 = vpop.xlane.xlu0 %6707
  %v6709 = vmul.f32 %v6705, %v778
  %v6710 = vmul.f32 %v6708, %v778
  %v6711 = vsub.f32 %v6697, %v6709
  %v6712 = vsub.f32 %v6698, %v6710
  %v6713 = vmul.f32 %v6711, %v6711
  %v6714 = vmul.f32 %v6712, %v6712
  %v6715 = vsel %vm184, %v6713, 0.0
  %6716 = vadd.xlane.f32.xlu0 %v6715
  %v6717 = vpop.xlane.xlu0 %6716
  %v6718 = vsel %vm184, %v6714, 0.0
  %6719 = vadd.xlane.f32.xlu0 %v6718
  %v6720 = vpop.xlane.xlu0 %6719
  %v6721 = vmul.f32 %v6717, %v778
  %v6722 = vmul.f32 %v6720, %v778
  %v6723 = vadd.f32 %v6721, 1e-05
  %v6724 = vadd.f32 %v6722, 1e-05
  %v6725 = vrsqrt.pop %v6723
  %v6726 = vrsqrt.pop %v6724
  %v6727 = vmul.f32 %v6711, %v6725
  %v6728 = vmul.f32 %v6712, %v6726
  %v6730 = vlaneseq
  %v6731 = vshrl.u32 %v6730, 7
  %v6732 = vsub.s32 0, %v6731
  %v6733 = vrot.slane %v6700, %v6732
  %v6735 = vmul.f32 %v6727, %v6733
  %v6736 = vmul.f32 %v6728, %v6733
  %v6738 = vlaneseq
  %v6739 = vshrl.u32 %v6738, 7
  %v6740 = vsub.s32 0, %v6739
  %v6741 = vrot.slane %v6702, %v6740
  %v6743 = vadd.f32 %v6735, %v6741
  %v6744 = vadd.f32 %v6736, %v6741
  %s6745 = scalar_lea.vmem %s13, 1024
  %v6746 = vld [vmem:[%s6745] sm:$0xff]
  %v6747 = vld [vmem:[%s6745 + $0x8] sm:$0xff]
  %v6748 = vld [vmem:[%s6745 + $0x10] sm:$0xff]
  %v6749 = vld [vmem:[%s6745 + $0x18] sm:$0xff]
  %v6750 = vld [vmem:[%s6745 + $0x20] sm:$0xff]
  %v6751 = vld [vmem:[%s6745 + $0x28] sm:$0xff]
  %v6752 = vld [vmem:[%s6745 + $0x30] sm:$0xff]
  %v6753 = vld [vmem:[%s6745 + $0x38] sm:$0xff]
  %v6754 = vld [vmem:[%s6745 + $0x40] sm:$0xff]
  %v6755 = vld [vmem:[%s6745 + $0x48] sm:$0xff]
  %v6756 = vld [vmem:[%s6745 + $0x50] sm:$0xff]
  %v6757 = vld [vmem:[%s6745 + $0x58] sm:$0xff]
  %v6758 = vld [vmem:[%s6745 + $0x60] sm:$0xff]
  %v6759 = vld [vmem:[%s6745 + $0x68] sm:$0xff]
  %v6760 = vld [vmem:[%s6745 + $0x70] sm:$0xff]
  %v6761 = vld [vmem:[%s6745 + $0x78] sm:$0xff]
  %v6762 = vld [vmem:[%s6745 + $0x80] sm:$0xff]
  %v6763 = vld [vmem:[%s6745 + $0x88] sm:$0xff]
  %v6764 = vld [vmem:[%s6745 + $0x90] sm:$0xff]
  %v6765 = vld [vmem:[%s6745 + $0x98] sm:$0xff]
  %v6766 = vld [vmem:[%s6745 + $0xa0] sm:$0xff]
  %v6767 = vld [vmem:[%s6745 + $0xa8] sm:$0xff]
  %v6768 = vld [vmem:[%s6745 + $0xb0] sm:$0xff]
  %v6769 = vld [vmem:[%s6745 + $0xb8] sm:$0xff]
  %v6770 = vld [vmem:[%s6745 + $0xc0] sm:$0xff]
  %v6771 = vld [vmem:[%s6745 + $0xc8] sm:$0xff]
  %v6772 = vld [vmem:[%s6745 + $0xd0] sm:$0xff]
  %v6773 = vld [vmem:[%s6745 + $0xd8] sm:$0xff]
  %v6774 = vld [vmem:[%s6745 + $0xe0] sm:$0xff]
  %v6775 = vld [vmem:[%s6745 + $0xe8] sm:$0xff]
  %v6776 = vld [vmem:[%s6745 + $0xf0] sm:$0xff]
  %v6777 = vld [vmem:[%s6745 + $0xf8] sm:$0xff]
  %v6778 = vld [vmem:[%s6745 + $0x100] sm:$0xff]
  %v6779 = vld [vmem:[%s6745 + $0x108] sm:$0xff]
  %v6780 = vld [vmem:[%s6745 + $0x110] sm:$0xff]
  %v6781 = vld [vmem:[%s6745 + $0x118] sm:$0xff]
  %v6782 = vld [vmem:[%s6745 + $0x120] sm:$0xff]
  %v6783 = vld [vmem:[%s6745 + $0x128] sm:$0xff]
  %v6784 = vld [vmem:[%s6745 + $0x130] sm:$0xff]
  %v6785 = vld [vmem:[%s6745 + $0x138] sm:$0xff]
  %v6786 = vld [vmem:[%s6745 + $0x140] sm:$0xff]
  %v6787 = vld [vmem:[%s6745 + $0x148] sm:$0xff]
  %v6788 = vld [vmem:[%s6745 + $0x150] sm:$0xff]
  %v6789 = vld [vmem:[%s6745 + $0x158] sm:$0xff]
  %v6790 = vld [vmem:[%s6745 + $0x160] sm:$0xff]
  %v6791 = vld [vmem:[%s6745 + $0x168] sm:$0xff]
  %v6792 = vld [vmem:[%s6745 + $0x170] sm:$0xff]
  %v6793 = vld [vmem:[%s6745 + $0x178] sm:$0xff]
  %v6794 = vld [vmem:[%s6745 + $0x180] sm:$0xff]
  %v6795 = vld [vmem:[%s6745 + $0x188] sm:$0xff]
  %v6796 = vld [vmem:[%s6745 + $0x190] sm:$0xff]
  %v6797 = vld [vmem:[%s6745 + $0x198] sm:$0xff]
  %v6798 = vld [vmem:[%s6745 + $0x1a0] sm:$0xff]
  %v6799 = vld [vmem:[%s6745 + $0x1a8] sm:$0xff]
  %v6800 = vld [vmem:[%s6745 + $0x1b0] sm:$0xff]
  %v6801 = vld [vmem:[%s6745 + $0x1b8] sm:$0xff]
  %v6802 = vld [vmem:[%s6745 + $0x1c0] sm:$0xff]
  %v6803 = vld [vmem:[%s6745 + $0x1c8] sm:$0xff]
  %v6804 = vld [vmem:[%s6745 + $0x1d0] sm:$0xff]
  %v6805 = vld [vmem:[%s6745 + $0x1d8] sm:$0xff]
  %v6806 = vld [vmem:[%s6745 + $0x1e0] sm:$0xff]
  %v6807 = vld [vmem:[%s6745 + $0x1e8] sm:$0xff]
  %v6808 = vld [vmem:[%s6745 + $0x1f0] sm:$0xff]
  %v6809 = vld [vmem:[%s6745 + $0x1f8] sm:$0xff]
  %v6810 = vpack.c.bf16 %v6744, %v6743
  %s6811 = scalar_lea.vmem %s14, 32
  %v6812 = vld [vmem:[%s6811] sm:$0xff]
  %v6813 = vld [vmem:[%s6811 + $0x8] sm:$0xff]
  %v6816 = vlaneseq
  %v6817 = vshrl.u32 %v6816, 7
  %v6818 = vsub.s32 0, %v6817
  %v6819 = vrot.slane %v6812, %v6818
  %v6820 = vlaneseq
  %v6821 = vshrl.u32 %v6820, 7
  %v6822 = vsub.s32 1, %v6821
  %v6823 = vrot.slane %v6812, %v6822
  %v6824 = vlaneseq
  %v6825 = vshrl.u32 %v6824, 7
  %v6826 = vsub.s32 2, %v6825
  %v6827 = vrot.slane %v6812, %v6826
  %v6828 = vlaneseq
  %v6829 = vshrl.u32 %v6828, 7
  %v6830 = vsub.s32 3, %v6829
  %v6831 = vrot.slane %v6812, %v6830
  %v6832 = vlaneseq
  %v6833 = vshrl.u32 %v6832, 7
  %v6834 = vsub.s32 4, %v6833
  %v6835 = vrot.slane %v6812, %v6834
  %v6836 = vlaneseq
  %v6837 = vshrl.u32 %v6836, 7
  %v6838 = vsub.s32 5, %v6837
  %v6839 = vrot.slane %v6812, %v6838
  %v6840 = vlaneseq
  %v6841 = vshrl.u32 %v6840, 7
  %v6842 = vsub.s32 6, %v6841
  %v6843 = vrot.slane %v6812, %v6842
  %v6844 = vlaneseq
  %v6845 = vshrl.u32 %v6844, 7
  %v6846 = vsub.s32 7, %v6845
  %v6847 = vrot.slane %v6812, %v6846
  %v6848 = vlaneseq
  %v6849 = vshrl.u32 %v6848, 7
  %v6850 = vsub.s32 0, %v6849
  %v6851 = vrot.slane %v6813, %v6850
  %v6852 = vlaneseq
  %v6853 = vshrl.u32 %v6852, 7
  %v6854 = vsub.s32 1, %v6853
  %v6855 = vrot.slane %v6813, %v6854
  %v6856 = vlaneseq
  %v6857 = vshrl.u32 %v6856, 7
  %v6858 = vsub.s32 2, %v6857
  %v6859 = vrot.slane %v6813, %v6858
  %v6860 = vlaneseq
  %v6861 = vshrl.u32 %v6860, 7
  %v6862 = vsub.s32 3, %v6861
  %v6863 = vrot.slane %v6813, %v6862
  %v6864 = vlaneseq
  %v6865 = vshrl.u32 %v6864, 7
  %v6866 = vsub.s32 4, %v6865
  %v6867 = vrot.slane %v6813, %v6866
  %v6868 = vlaneseq
  %v6869 = vshrl.u32 %v6868, 7
  %v6870 = vsub.s32 5, %v6869
  %v6871 = vrot.slane %v6813, %v6870
  %v6872 = vlaneseq
  %v6873 = vshrl.u32 %v6872, 7
  %v6874 = vsub.s32 6, %v6873
  %v6875 = vrot.slane %v6813, %v6874
  %v6876 = vlaneseq
  %v6877 = vshrl.u32 %v6876, 7
  %v6878 = vsub.s32 7, %v6877
  %v6879 = vrot.slane %v6813, %v6878
  %v6960 = vunpack.c.l.b16 %v6746
  %v6961 = vunpack.c.h.b16 %v6746
  %v6962 = vunpack.c.l.b16 %v6747
  %v6963 = vunpack.c.h.b16 %v6747
  %v6964 = vunpack.c.l.b16 %v6748
  %v6965 = vunpack.c.h.b16 %v6748
  %v6966 = vunpack.c.l.b16 %v6749
  %v6967 = vunpack.c.h.b16 %v6749
  %v6968 = vunpack.c.l.b16 %v6750
  %v6969 = vunpack.c.h.b16 %v6750
  %v6970 = vunpack.c.l.b16 %v6751
  %v6971 = vunpack.c.h.b16 %v6751
  %v6972 = vunpack.c.l.b16 %v6752
  %v6973 = vunpack.c.h.b16 %v6752
  %v6974 = vunpack.c.l.b16 %v6753
  %v6975 = vunpack.c.h.b16 %v6753
  %v6976 = vunpack.c.l.b16 %v6754
  %v6977 = vunpack.c.h.b16 %v6754
  %v6978 = vunpack.c.l.b16 %v6755
  %v6979 = vunpack.c.h.b16 %v6755
  %v6980 = vunpack.c.l.b16 %v6756
  %v6981 = vunpack.c.h.b16 %v6756
  %v6982 = vunpack.c.l.b16 %v6757
  %v6983 = vunpack.c.h.b16 %v6757
  %v6984 = vunpack.c.l.b16 %v6758
  %v6985 = vunpack.c.h.b16 %v6758
  %v6986 = vunpack.c.l.b16 %v6759
  %v6987 = vunpack.c.h.b16 %v6759
  %v6988 = vunpack.c.l.b16 %v6760
  %v6989 = vunpack.c.h.b16 %v6760
  %v6990 = vunpack.c.l.b16 %v6761
  %v6991 = vunpack.c.h.b16 %v6761
  %v6992 = vunpack.c.l.b16 %v6762
  %v6993 = vunpack.c.h.b16 %v6762
  %v6994 = vunpack.c.l.b16 %v6763
  %v6995 = vunpack.c.h.b16 %v6763
  %v6996 = vunpack.c.l.b16 %v6764
  %v6997 = vunpack.c.h.b16 %v6764
  %v6998 = vunpack.c.l.b16 %v6765
  %v6999 = vunpack.c.h.b16 %v6765
  %v7000 = vunpack.c.l.b16 %v6766
  %v7001 = vunpack.c.h.b16 %v6766
  %v7002 = vunpack.c.l.b16 %v6767
  %v7003 = vunpack.c.h.b16 %v6767
  %v7004 = vunpack.c.l.b16 %v6768
  %v7005 = vunpack.c.h.b16 %v6768
  %v7006 = vunpack.c.l.b16 %v6769
  %v7007 = vunpack.c.h.b16 %v6769
  %v7008 = vunpack.c.l.b16 %v6770
  %v7009 = vunpack.c.h.b16 %v6770
  %v7010 = vunpack.c.l.b16 %v6771
  %v7011 = vunpack.c.h.b16 %v6771
  %v7012 = vunpack.c.l.b16 %v6772
  %v7013 = vunpack.c.h.b16 %v6772
  %v7014 = vunpack.c.l.b16 %v6773
  %v7015 = vunpack.c.h.b16 %v6773
  %v7016 = vunpack.c.l.b16 %v6774
  %v7017 = vunpack.c.h.b16 %v6774
  %v7018 = vunpack.c.l.b16 %v6775
  %v7019 = vunpack.c.h.b16 %v6775
  %v7020 = vunpack.c.l.b16 %v6776
  %v7021 = vunpack.c.h.b16 %v6776
  %v7022 = vunpack.c.l.b16 %v6777
  %v7023 = vunpack.c.h.b16 %v6777
  %v7024 = vunpack.c.l.b16 %v6778
  %v7025 = vunpack.c.h.b16 %v6778
  %v7026 = vunpack.c.l.b16 %v6779
  %v7027 = vunpack.c.h.b16 %v6779
  %v7028 = vunpack.c.l.b16 %v6780
  %v7029 = vunpack.c.h.b16 %v6780
  %v7030 = vunpack.c.l.b16 %v6781
  %v7031 = vunpack.c.h.b16 %v6781
  %v7032 = vunpack.c.l.b16 %v6782
  %v7033 = vunpack.c.h.b16 %v6782
  %v7034 = vunpack.c.l.b16 %v6783
  %v7035 = vunpack.c.h.b16 %v6783
  %v7036 = vunpack.c.l.b16 %v6784
  %v7037 = vunpack.c.h.b16 %v6784
  %v7038 = vunpack.c.l.b16 %v6785
  %v7039 = vunpack.c.h.b16 %v6785
  %v7040 = vunpack.c.l.b16 %v6786
  %v7041 = vunpack.c.h.b16 %v6786
  %v7042 = vunpack.c.l.b16 %v6787
  %v7043 = vunpack.c.h.b16 %v6787
  %v7044 = vunpack.c.l.b16 %v6788
  %v7045 = vunpack.c.h.b16 %v6788
  %v7046 = vunpack.c.l.b16 %v6789
  %v7047 = vunpack.c.h.b16 %v6789
  %v7048 = vunpack.c.l.b16 %v6790
  %v7049 = vunpack.c.h.b16 %v6790
  %v7050 = vunpack.c.l.b16 %v6791
  %v7051 = vunpack.c.h.b16 %v6791
  %v7052 = vunpack.c.l.b16 %v6792
  %v7053 = vunpack.c.h.b16 %v6792
  %v7054 = vunpack.c.l.b16 %v6793
  %v7055 = vunpack.c.h.b16 %v6793
  %v7056 = vunpack.c.l.b16 %v6794
  %v7057 = vunpack.c.h.b16 %v6794
  %v7058 = vunpack.c.l.b16 %v6795
  %v7059 = vunpack.c.h.b16 %v6795
  %v7060 = vunpack.c.l.b16 %v6796
  %v7061 = vunpack.c.h.b16 %v6796
  %v7062 = vunpack.c.l.b16 %v6797
  %v7063 = vunpack.c.h.b16 %v6797
  %v7064 = vunpack.c.l.b16 %v6798
  %v7065 = vunpack.c.h.b16 %v6798
  %v7066 = vunpack.c.l.b16 %v6799
  %v7067 = vunpack.c.h.b16 %v6799
  %v7068 = vunpack.c.l.b16 %v6800
  %v7069 = vunpack.c.h.b16 %v6800
  %v7070 = vunpack.c.l.b16 %v6801
  %v7071 = vunpack.c.h.b16 %v6801
  %v7072 = vunpack.c.l.b16 %v6802
  %v7073 = vunpack.c.h.b16 %v6802
  %v7074 = vunpack.c.l.b16 %v6803
  %v7075 = vunpack.c.h.b16 %v6803
  %v7076 = vunpack.c.l.b16 %v6804
  %v7077 = vunpack.c.h.b16 %v6804
  %v7078 = vunpack.c.l.b16 %v6805
  %v7079 = vunpack.c.h.b16 %v6805
  %v7080 = vunpack.c.l.b16 %v6806
  %v7081 = vunpack.c.h.b16 %v6806
  %v7082 = vunpack.c.l.b16 %v6807
  %v7083 = vunpack.c.h.b16 %v6807
  %v7084 = vunpack.c.l.b16 %v6808
  %v7085 = vunpack.c.h.b16 %v6808
  %v7086 = vunpack.c.l.b16 %v6809
  %v7087 = vunpack.c.h.b16 %v6809
  %v7088 = vpack.c.b16 %v6976, %v6960
  %v7089 = vpack.c.b16 %v6977, %v6961
  %v7090 = vpack.c.b16 %v6978, %v6962
  %v7091 = vpack.c.b16 %v6979, %v6963
  %v7092 = vpack.c.b16 %v6980, %v6964
  %v7093 = vpack.c.b16 %v6981, %v6965
  %v7094 = vpack.c.b16 %v6982, %v6966
  %v7095 = vpack.c.b16 %v6983, %v6967
  %v7096 = vpack.c.b16 %v6984, %v6968
  %v7097 = vpack.c.b16 %v6985, %v6969
  %v7098 = vpack.c.b16 %v6986, %v6970
  %v7099 = vpack.c.b16 %v6987, %v6971
  %v7100 = vpack.c.b16 %v6988, %v6972
  %v7101 = vpack.c.b16 %v6989, %v6973
  %v7102 = vpack.c.b16 %v6990, %v6974
  %v7103 = vpack.c.b16 %v6991, %v6975
  %v7104 = vpack.c.b16 %v7008, %v6992
  %v7105 = vpack.c.b16 %v7009, %v6993
  %v7106 = vpack.c.b16 %v7010, %v6994
  %v7107 = vpack.c.b16 %v7011, %v6995
  %v7108 = vpack.c.b16 %v7012, %v6996
  %v7109 = vpack.c.b16 %v7013, %v6997
  %v7110 = vpack.c.b16 %v7014, %v6998
  %v7111 = vpack.c.b16 %v7015, %v6999
  %v7112 = vpack.c.b16 %v7016, %v7000
  %v7113 = vpack.c.b16 %v7017, %v7001
  %v7114 = vpack.c.b16 %v7018, %v7002
  %v7115 = vpack.c.b16 %v7019, %v7003
  %v7116 = vpack.c.b16 %v7020, %v7004
  %v7117 = vpack.c.b16 %v7021, %v7005
  %v7118 = vpack.c.b16 %v7022, %v7006
  %v7119 = vpack.c.b16 %v7023, %v7007
  %v7120 = vpack.c.b16 %v7040, %v7024
  %v7121 = vpack.c.b16 %v7041, %v7025
  %v7122 = vpack.c.b16 %v7042, %v7026
  %v7123 = vpack.c.b16 %v7043, %v7027
  %v7124 = vpack.c.b16 %v7044, %v7028
  %v7125 = vpack.c.b16 %v7045, %v7029
  %v7126 = vpack.c.b16 %v7046, %v7030
  %v7127 = vpack.c.b16 %v7047, %v7031
  %v7128 = vpack.c.b16 %v7048, %v7032
  %v7129 = vpack.c.b16 %v7049, %v7033
  %v7130 = vpack.c.b16 %v7050, %v7034
  %v7131 = vpack.c.b16 %v7051, %v7035
  %v7132 = vpack.c.b16 %v7052, %v7036
  %v7133 = vpack.c.b16 %v7053, %v7037
  %v7134 = vpack.c.b16 %v7054, %v7038
  %v7135 = vpack.c.b16 %v7055, %v7039
  %v7136 = vpack.c.b16 %v7072, %v7056
  %v7137 = vpack.c.b16 %v7073, %v7057
  %v7138 = vpack.c.b16 %v7074, %v7058
  %v7139 = vpack.c.b16 %v7075, %v7059
  %v7140 = vpack.c.b16 %v7076, %v7060
  %v7141 = vpack.c.b16 %v7077, %v7061
  %v7142 = vpack.c.b16 %v7078, %v7062
  %v7143 = vpack.c.b16 %v7079, %v7063
  %v7144 = vpack.c.b16 %v7080, %v7064
  %v7145 = vpack.c.b16 %v7081, %v7065
  %v7146 = vpack.c.b16 %v7082, %v7066
  %v7147 = vpack.c.b16 %v7083, %v7067
  %v7148 = vpack.c.b16 %v7084, %v7068
  %v7149 = vpack.c.b16 %v7085, %v7069
  %v7150 = vpack.c.b16 %v7086, %v7070
  %v7151 = vpack.c.b16 %v7087, %v7071
  %v7217 = vsel %vm184, %v6810, 0
  %7219 = vmatprep.subr.bf16.mxu0 %v7089
  %7220 = vmatpush1.bf16.msra.mxu0 %v7088
  %7221 = vmatprep.subr.bf16.mxu0 %v7105
  %7222 = vmatpush1.bf16.msra.mxu0 %v7104
  %7223 = vmatprep.subr.bf16.mxu0 %v7121
  %7224 = vmatpush1.bf16.msra.mxu0 %v7120
  %7225 = vmatprep.subr.bf16.mxu0 %v7137
  %7226 = vmatpush1.bf16.msra.mxu0 %v7136
  %7227 = vmatprep.subr.bf16.mxu0 0
  %7228 = vmatpush1.bf16.msra.mxu0 0
  %7229 = vmatprep.subr.bf16.mxu0 0
  %7230 = vmatpush1.bf16.msra.mxu0 0
  %7231 = vmatprep.subr.bf16.mxu0 0
  %7232 = vmatpush1.bf16.msra.mxu0 0
  %7233 = vmatprep.subr.bf16.mxu0 0
  %7234 = vmatpush1.bf16.msra.mxu0 0
  %7235 = vmatprep.subr.bf16.mxu0 0
  %7236 = vmatpush1.bf16.msra.mxu0 0
  %7237 = vmatprep.subr.bf16.mxu0 0
  %7238 = vmatpush1.bf16.msra.mxu0 0
  %7239 = vmatprep.subr.bf16.mxu0 0
  %7240 = vmatpush1.bf16.msra.mxu0 0
  %7241 = vmatprep.subr.bf16.mxu0 0
  %7242 = vmatpush1.bf16.msra.mxu0 0
  %7243 = vmatprep.subr.bf16.mxu0 0
  %7244 = vmatpush1.bf16.msra.mxu0 0
  %7245 = vmatprep.subr.bf16.mxu0 0
  %7246 = vmatpush1.bf16.msra.mxu0 0
  %7247 = vmatprep.subr.bf16.mxu0 0
  %7248 = vmatpush1.bf16.msra.mxu0 0
  %7249 = vmatprep.subr.bf16.mxu0 0
  %7250 = vmatpush1.bf16.msra.mxu0 0
  %7251 = vmatprep.mubr.bf16.mxu0 0
  %7252 = vmatmul.mubr.bf16.gmra.mrb[0].mxu0 %v7217
  %v7253 = vpop.f32.mrb[0].mxu0
  %v7254 = vadd.f32 %v6819, %v7253
  %v7255 = vpop.f32.mrb[0].mxu0
  %v7256 = vadd.f32 %v6823, %v7255
  %v7257 = vpop.f32.mrb[0].mxu0
  %v7258 = vadd.f32 %v6819, %v7257
  %v7259 = vpop.f32.mrb[0].mxu0
  %v7260 = vadd.f32 %v6823, %v7259
  %7261 = vdwg.mxu0
  %7262 = vmatprep.subr.bf16.mxu0 %v7091
  %7263 = vmatpush1.bf16.msra.mxu0 %v7090
  %7264 = vmatprep.subr.bf16.mxu0 %v7107
  %7265 = vmatpush1.bf16.msra.mxu0 %v7106
  %7266 = vmatprep.subr.bf16.mxu0 %v7123
  %7267 = vmatpush1.bf16.msra.mxu0 %v7122
  %7268 = vmatprep.subr.bf16.mxu0 %v7139
  %7269 = vmatpush1.bf16.msra.mxu0 %v7138
  %7270 = vmatprep.subr.bf16.mxu0 0
  %7271 = vmatpush1.bf16.msra.mxu0 0
  %7272 = vmatprep.subr.bf16.mxu0 0
  %7273 = vmatpush1.bf16.msra.mxu0 0
  %7274 = vmatprep.subr.bf16.mxu0 0
  %7275 = vmatpush1.bf16.msra.mxu0 0
  %7276 = vmatprep.subr.bf16.mxu0 0
  %7277 = vmatpush1.bf16.msra.mxu0 0
  %7278 = vmatprep.subr.bf16.mxu0 0
  %7279 = vmatpush1.bf16.msra.mxu0 0
  %7280 = vmatprep.subr.bf16.mxu0 0
  %7281 = vmatpush1.bf16.msra.mxu0 0
  %7282 = vmatprep.subr.bf16.mxu0 0
  %7283 = vmatpush1.bf16.msra.mxu0 0
  %7284 = vmatprep.subr.bf16.mxu0 0
  %7285 = vmatpush1.bf16.msra.mxu0 0
  %7286 = vmatprep.subr.bf16.mxu0 0
  %7287 = vmatpush1.bf16.msra.mxu0 0
  %7288 = vmatprep.subr.bf16.mxu0 0
  %7289 = vmatpush1.bf16.msra.mxu0 0
  %7290 = vmatprep.subr.bf16.mxu0 0
  %7291 = vmatpush1.bf16.msra.mxu0 0
  %7292 = vmatprep.subr.bf16.mxu0 0
  %7293 = vmatpush1.bf16.msra.mxu0 0
  %7294 = vmatprep.mubr.bf16.mxu0 0
  %7295 = vmatmul.mubr.bf16.gmra.mrb[0].mxu0 %v7217
  %v7296 = vpop.f32.mrb[0].mxu0
  %v7297 = vadd.f32 %v6827, %v7296
  %v7298 = vpop.f32.mrb[0].mxu0
  %v7299 = vadd.f32 %v6831, %v7298
  %v7300 = vpop.f32.mrb[0].mxu0
  %v7301 = vadd.f32 %v6827, %v7300
  %v7302 = vpop.f32.mrb[0].mxu0
  %v7303 = vadd.f32 %v6831, %v7302
  %7304 = vdwg.mxu0
  %7305 = vmatprep.subr.bf16.mxu0 %v7093
  %7306 = vmatpush1.bf16.msra.mxu0 %v7092
  %7307 = vmatprep.subr.bf16.mxu0 %v7109
  %7308 = vmatpush1.bf16.msra.mxu0 %v7108
  %7309 = vmatprep.subr.bf16.mxu0 %v7125
  %7310 = vmatpush1.bf16.msra.mxu0 %v7124
  %7311 = vmatprep.subr.bf16.mxu0 %v7141
  %7312 = vmatpush1.bf16.msra.mxu0 %v7140
  %7313 = vmatprep.subr.bf16.mxu0 0
  %7314 = vmatpush1.bf16.msra.mxu0 0
  %7315 = vmatprep.subr.bf16.mxu0 0
  %7316 = vmatpush1.bf16.msra.mxu0 0
  %7317 = vmatprep.subr.bf16.mxu0 0
  %7318 = vmatpush1.bf16.msra.mxu0 0
  %7319 = vmatprep.subr.bf16.mxu0 0
  %7320 = vmatpush1.bf16.msra.mxu0 0
  %7321 = vmatprep.subr.bf16.mxu0 0
  %7322 = vmatpush1.bf16.msra.mxu0 0
  %7323 = vmatprep.subr.bf16.mxu0 0
  %7324 = vmatpush1.bf16.msra.mxu0 0
  %7325 = vmatprep.subr.bf16.mxu0 0
  %7326 = vmatpush1.bf16.msra.mxu0 0
  %7327 = vmatprep.subr.bf16.mxu0 0
  %7328 = vmatpush1.bf16.msra.mxu0 0
  %7329 = vmatprep.subr.bf16.mxu0 0
  %7330 = vmatpush1.bf16.msra.mxu0 0
  %7331 = vmatprep.subr.bf16.mxu0 0
  %7332 = vmatpush1.bf16.msra.mxu0 0
  %7333 = vmatprep.subr.bf16.mxu0 0
  %7334 = vmatpush1.bf16.msra.mxu0 0
  %7335 = vmatprep.subr.bf16.mxu0 0
  %7336 = vmatpush1.bf16.msra.mxu0 0
  %7337 = vmatprep.mubr.bf16.mxu0 0
  %7338 = vmatmul.mubr.bf16.gmra.mrb[0].mxu0 %v7217
  %v7339 = vpop.f32.mrb[0].mxu0
  %v7340 = vadd.f32 %v6835, %v7339
  %v7341 = vpop.f32.mrb[0].mxu0
  %v7342 = vadd.f32 %v6839, %v7341
  %v7343 = vpop.f32.mrb[0].mxu0
  %v7344 = vadd.f32 %v6835, %v7343
  %v7345 = vpop.f32.mrb[0].mxu0
  %v7346 = vadd.f32 %v6839, %v7345
  %7347 = vdwg.mxu0
  %7348 = vmatprep.subr.bf16.mxu0 %v7095
  %7349 = vmatpush1.bf16.msra.mxu0 %v7094
  %7350 = vmatprep.subr.bf16.mxu0 %v7111
  %7351 = vmatpush1.bf16.msra.mxu0 %v7110
  %7352 = vmatprep.subr.bf16.mxu0 %v7127
  %7353 = vmatpush1.bf16.msra.mxu0 %v7126
  %7354 = vmatprep.subr.bf16.mxu0 %v7143
  %7355 = vmatpush1.bf16.msra.mxu0 %v7142
  %7356 = vmatprep.subr.bf16.mxu0 0
  %7357 = vmatpush1.bf16.msra.mxu0 0
  %7358 = vmatprep.subr.bf16.mxu0 0
  %7359 = vmatpush1.bf16.msra.mxu0 0
  %7360 = vmatprep.subr.bf16.mxu0 0
  %7361 = vmatpush1.bf16.msra.mxu0 0
  %7362 = vmatprep.subr.bf16.mxu0 0
  %7363 = vmatpush1.bf16.msra.mxu0 0
  %7364 = vmatprep.subr.bf16.mxu0 0
  %7365 = vmatpush1.bf16.msra.mxu0 0
  %7366 = vmatprep.subr.bf16.mxu0 0
  %7367 = vmatpush1.bf16.msra.mxu0 0
  %7368 = vmatprep.subr.bf16.mxu0 0
  %7369 = vmatpush1.bf16.msra.mxu0 0
  %7370 = vmatprep.subr.bf16.mxu0 0
  %7371 = vmatpush1.bf16.msra.mxu0 0
  %7372 = vmatprep.subr.bf16.mxu0 0
  %7373 = vmatpush1.bf16.msra.mxu0 0
  %7374 = vmatprep.subr.bf16.mxu0 0
  %7375 = vmatpush1.bf16.msra.mxu0 0
  %7376 = vmatprep.subr.bf16.mxu0 0
  %7377 = vmatpush1.bf16.msra.mxu0 0
  %7378 = vmatprep.subr.bf16.mxu0 0
  %7379 = vmatpush1.bf16.msra.mxu0 0
  %7380 = vmatprep.mubr.bf16.mxu0 0
  %7381 = vmatmul.mubr.bf16.gmra.mrb[0].mxu0 %v7217
  %v7382 = vpop.f32.mrb[0].mxu0
  %v7383 = vadd.f32 %v6843, %v7382
  %v7384 = vpop.f32.mrb[0].mxu0
  %v7385 = vadd.f32 %v6847, %v7384
  %v7386 = vpop.f32.mrb[0].mxu0
  %v7387 = vadd.f32 %v6843, %v7386
  %v7388 = vpop.f32.mrb[0].mxu0
  %v7389 = vadd.f32 %v6847, %v7388
  %7390 = vdwg.mxu0
  %7391 = vmatprep.subr.bf16.mxu0 %v7097
  %7392 = vmatpush1.bf16.msra.mxu0 %v7096
  %7393 = vmatprep.subr.bf16.mxu0 %v7113
  %7394 = vmatpush1.bf16.msra.mxu0 %v7112
  %7395 = vmatprep.subr.bf16.mxu0 %v7129
  %7396 = vmatpush1.bf16.msra.mxu0 %v7128
  %7397 = vmatprep.subr.bf16.mxu0 %v7145
  %7398 = vmatpush1.bf16.msra.mxu0 %v7144
  %7399 = vmatprep.subr.bf16.mxu0 0
  %7400 = vmatpush1.bf16.msra.mxu0 0
  %7401 = vmatprep.subr.bf16.mxu0 0
  %7402 = vmatpush1.bf16.msra.mxu0 0
  %7403 = vmatprep.subr.bf16.mxu0 0
  %7404 = vmatpush1.bf16.msra.mxu0 0
  %7405 = vmatprep.subr.bf16.mxu0 0
  %7406 = vmatpush1.bf16.msra.mxu0 0
  %7407 = vmatprep.subr.bf16.mxu0 0
  %7408 = vmatpush1.bf16.msra.mxu0 0
  %7409 = vmatprep.subr.bf16.mxu0 0
  %7410 = vmatpush1.bf16.msra.mxu0 0
  %7411 = vmatprep.subr.bf16.mxu0 0
  %7412 = vmatpush1.bf16.msra.mxu0 0
  %7413 = vmatprep.subr.bf16.mxu0 0
  %7414 = vmatpush1.bf16.msra.mxu0 0
  %7415 = vmatprep.subr.bf16.mxu0 0
  %7416 = vmatpush1.bf16.msra.mxu0 0
  %7417 = vmatprep.subr.bf16.mxu0 0
  %7418 = vmatpush1.bf16.msra.mxu0 0
  %7419 = vmatprep.subr.bf16.mxu0 0
  %7420 = vmatpush1.bf16.msra.mxu0 0
  %7421 = vmatprep.subr.bf16.mxu0 0
  %7422 = vmatpush1.bf16.msra.mxu0 0
  %7423 = vmatprep.mubr.bf16.mxu0 0
  %7424 = vmatmul.mubr.bf16.gmra.mrb[0].mxu0 %v7217
  %v7425 = vpop.f32.mrb[0].mxu0
  %v7426 = vadd.f32 %v6851, %v7425
  %v7427 = vpop.f32.mrb[0].mxu0
  %v7428 = vadd.f32 %v6855, %v7427
  %v7429 = vpop.f32.mrb[0].mxu0
  %v7430 = vadd.f32 %v6851, %v7429
  %v7431 = vpop.f32.mrb[0].mxu0
  %v7432 = vadd.f32 %v6855, %v7431
  %7433 = vdwg.mxu0
  %7434 = vmatprep.subr.bf16.mxu0 %v7099
  %7435 = vmatpush1.bf16.msra.mxu0 %v7098
  %7436 = vmatprep.subr.bf16.mxu0 %v7115
  %7437 = vmatpush1.bf16.msra.mxu0 %v7114
  %7438 = vmatprep.subr.bf16.mxu0 %v7131
  %7439 = vmatpush1.bf16.msra.mxu0 %v7130
  %7440 = vmatprep.subr.bf16.mxu0 %v7147
  %7441 = vmatpush1.bf16.msra.mxu0 %v7146
  %7442 = vmatprep.subr.bf16.mxu0 0
  %7443 = vmatpush1.bf16.msra.mxu0 0
  %7444 = vmatprep.subr.bf16.mxu0 0
  %7445 = vmatpush1.bf16.msra.mxu0 0
  %7446 = vmatprep.subr.bf16.mxu0 0
  %7447 = vmatpush1.bf16.msra.mxu0 0
  %7448 = vmatprep.subr.bf16.mxu0 0
  %7449 = vmatpush1.bf16.msra.mxu0 0
  %7450 = vmatprep.subr.bf16.mxu0 0
  %7451 = vmatpush1.bf16.msra.mxu0 0
  %7452 = vmatprep.subr.bf16.mxu0 0
  %7453 = vmatpush1.bf16.msra.mxu0 0
  %7454 = vmatprep.subr.bf16.mxu0 0
  %7455 = vmatpush1.bf16.msra.mxu0 0
  %7456 = vmatprep.subr.bf16.mxu0 0
  %7457 = vmatpush1.bf16.msra.mxu0 0
  %7458 = vmatprep.subr.bf16.mxu0 0
  %7459 = vmatpush1.bf16.msra.mxu0 0
  %7460 = vmatprep.subr.bf16.mxu0 0
  %7461 = vmatpush1.bf16.msra.mxu0 0
  %7462 = vmatprep.subr.bf16.mxu0 0
  %7463 = vmatpush1.bf16.msra.mxu0 0
  %7464 = vmatprep.subr.bf16.mxu0 0
  %7465 = vmatpush1.bf16.msra.mxu0 0
  %7466 = vmatprep.mubr.bf16.mxu0 0
  %7467 = vmatmul.mubr.bf16.gmra.mrb[0].mxu0 %v7217
  %v7468 = vpop.f32.mrb[0].mxu0
  %v7469 = vadd.f32 %v6859, %v7468
  %v7470 = vpop.f32.mrb[0].mxu0
  %v7471 = vadd.f32 %v6863, %v7470
  %v7472 = vpop.f32.mrb[0].mxu0
  %v7473 = vadd.f32 %v6859, %v7472
  %v7474 = vpop.f32.mrb[0].mxu0
  %v7475 = vadd.f32 %v6863, %v7474
  %7476 = vdwg.mxu0
  %7477 = vmatprep.subr.bf16.mxu0 %v7101
  %7478 = vmatpush1.bf16.msra.mxu0 %v7100
  %7479 = vmatprep.subr.bf16.mxu0 %v7117
  %7480 = vmatpush1.bf16.msra.mxu0 %v7116
  %7481 = vmatprep.subr.bf16.mxu0 %v7133
  %7482 = vmatpush1.bf16.msra.mxu0 %v7132
  %7483 = vmatprep.subr.bf16.mxu0 %v7149
  %7484 = vmatpush1.bf16.msra.mxu0 %v7148
  %7485 = vmatprep.subr.bf16.mxu0 0
  %7486 = vmatpush1.bf16.msra.mxu0 0
  %7487 = vmatprep.subr.bf16.mxu0 0
  %7488 = vmatpush1.bf16.msra.mxu0 0
  %7489 = vmatprep.subr.bf16.mxu0 0
  %7490 = vmatpush1.bf16.msra.mxu0 0
  %7491 = vmatprep.subr.bf16.mxu0 0
  %7492 = vmatpush1.bf16.msra.mxu0 0
  %7493 = vmatprep.subr.bf16.mxu0 0
  %7494 = vmatpush1.bf16.msra.mxu0 0
  %7495 = vmatprep.subr.bf16.mxu0 0
  %7496 = vmatpush1.bf16.msra.mxu0 0
  %7497 = vmatprep.subr.bf16.mxu0 0
  %7498 = vmatpush1.bf16.msra.mxu0 0
  %7499 = vmatprep.subr.bf16.mxu0 0
  %7500 = vmatpush1.bf16.msra.mxu0 0
  %7501 = vmatprep.subr.bf16.mxu0 0
  %7502 = vmatpush1.bf16.msra.mxu0 0
  %7503 = vmatprep.subr.bf16.mxu0 0
  %7504 = vmatpush1.bf16.msra.mxu0 0
  %7505 = vmatprep.subr.bf16.mxu0 0
  %7506 = vmatpush1.bf16.msra.mxu0 0
  %7507 = vmatprep.subr.bf16.mxu0 0
  %7508 = vmatpush1.bf16.msra.mxu0 0
  %7509 = vmatprep.mubr.bf16.mxu0 0
  %7510 = vmatmul.mubr.bf16.gmra.mrb[0].mxu0 %v7217
  %v7511 = vpop.f32.mrb[0].mxu0
  %v7512 = vadd.f32 %v6867, %v7511
  %v7513 = vpop.f32.mrb[0].mxu0
  %v7514 = vadd.f32 %v6871, %v7513
  %v7515 = vpop.f32.mrb[0].mxu0
  %v7516 = vadd.f32 %v6867, %v7515
  %v7517 = vpop.f32.mrb[0].mxu0
  %v7518 = vadd.f32 %v6871, %v7517
  %7519 = vdwg.mxu0
  %7520 = vmatprep.subr.bf16.mxu0 %v7103
  %7521 = vmatpush1.bf16.msra.mxu0 %v7102
  %7522 = vmatprep.subr.bf16.mxu0 %v7119
  %7523 = vmatpush1.bf16.msra.mxu0 %v7118
  %7524 = vmatprep.subr.bf16.mxu0 %v7135
  %7525 = vmatpush1.bf16.msra.mxu0 %v7134
  %7526 = vmatprep.subr.bf16.mxu0 %v7151
  %7527 = vmatpush1.bf16.msra.mxu0 %v7150
  %7528 = vmatprep.subr.bf16.mxu0 0
  %7529 = vmatpush1.bf16.msra.mxu0 0
  %7530 = vmatprep.subr.bf16.mxu0 0
  %7531 = vmatpush1.bf16.msra.mxu0 0
  %7532 = vmatprep.subr.bf16.mxu0 0
  %7533 = vmatpush1.bf16.msra.mxu0 0
  %7534 = vmatprep.subr.bf16.mxu0 0
  %7535 = vmatpush1.bf16.msra.mxu0 0
  %7536 = vmatprep.subr.bf16.mxu0 0
  %7537 = vmatpush1.bf16.msra.mxu0 0
  %7538 = vmatprep.subr.bf16.mxu0 0
  %7539 = vmatpush1.bf16.msra.mxu0 0
  %7540 = vmatprep.subr.bf16.mxu0 0
  %7541 = vmatpush1.bf16.msra.mxu0 0
  %7542 = vmatprep.subr.bf16.mxu0 0
  %7543 = vmatpush1.bf16.msra.mxu0 0
  %7544 = vmatprep.subr.bf16.mxu0 0
  %7545 = vmatpush1.bf16.msra.mxu0 0
  %7546 = vmatprep.subr.bf16.mxu0 0
  %7547 = vmatpush1.bf16.msra.mxu0 0
  %7548 = vmatprep.subr.bf16.mxu0 0
  %7549 = vmatpush1.bf16.msra.mxu0 0
  %7550 = vmatprep.subr.bf16.mxu0 0
  %7551 = vmatpush1.bf16.msra.mxu0 0
  %7552 = vmatprep.mubr.bf16.mxu0 0
  %7553 = vmatmul.mubr.bf16.gmra.mrb[0].mxu0 %v7217
  %v7554 = vpop.f32.mrb[0].mxu0
  %v7555 = vadd.f32 %v6875, %v7554
  %v7556 = vpop.f32.mrb[0].mxu0
  %v7557 = vadd.f32 %v6879, %v7556
  %v7558 = vpop.f32.mrb[0].mxu0
  %v7559 = vadd.f32 %v6875, %v7558
  %v7560 = vpop.f32.mrb[0].mxu0
  %v7561 = vadd.f32 %v6879, %v7560
  %7562 = vdwg.mxu0
  %v7563 = vmax.f32 %v7254, 0.0
  %v7564 = vmax.f32 %v7256, 0.0
  %v7565 = vmax.f32 %v7297, 0.0
  %v7566 = vmax.f32 %v7299, 0.0
  %v7567 = vmax.f32 %v7340, 0.0
  %v7568 = vmax.f32 %v7342, 0.0
  %v7569 = vmax.f32 %v7383, 0.0
  %v7570 = vmax.f32 %v7385, 0.0
  %v7571 = vmax.f32 %v7426, 0.0
  %v7572 = vmax.f32 %v7428, 0.0
  %v7573 = vmax.f32 %v7469, 0.0
  %v7574 = vmax.f32 %v7471, 0.0
  %v7575 = vmax.f32 %v7512, 0.0
  %v7576 = vmax.f32 %v7514, 0.0
  %v7577 = vmax.f32 %v7555, 0.0
  %v7578 = vmax.f32 %v7557, 0.0
  %v7579 = vmax.f32 %v7258, 0.0
  %v7580 = vmax.f32 %v7260, 0.0
  %v7581 = vmax.f32 %v7301, 0.0
  %v7582 = vmax.f32 %v7303, 0.0
  %v7583 = vmax.f32 %v7344, 0.0
  %v7584 = vmax.f32 %v7346, 0.0
  %v7585 = vmax.f32 %v7387, 0.0
  %v7586 = vmax.f32 %v7389, 0.0
  %v7587 = vmax.f32 %v7430, 0.0
  %v7588 = vmax.f32 %v7432, 0.0
  %v7589 = vmax.f32 %v7473, 0.0
  %v7590 = vmax.f32 %v7475, 0.0
  %v7591 = vmax.f32 %v7516, 0.0
  %v7592 = vmax.f32 %v7518, 0.0
  %v7593 = vmax.f32 %v7559, 0.0
  %v7594 = vmax.f32 %v7561, 0.0
  %s7595 = scalar_lea.vmem %s15, 2048
  %v7596 = vld [vmem:[%s7595] sm:$0xf]
  %v7597 = vld [vmem:[%s7595 + $0x4] sm:$0xf]
  %v7598 = vld [vmem:[%s7595 + $0x8] sm:$0xf]
  %v7599 = vld [vmem:[%s7595 + $0xc] sm:$0xf]
  %v7600 = vld [vmem:[%s7595 + $0x10] sm:$0xf]
  %v7601 = vld [vmem:[%s7595 + $0x14] sm:$0xf]
  %v7602 = vld [vmem:[%s7595 + $0x18] sm:$0xf]
  %v7603 = vld [vmem:[%s7595 + $0x1c] sm:$0xf]
  %v7604 = vld [vmem:[%s7595 + $0x20] sm:$0xf]
  %v7605 = vld [vmem:[%s7595 + $0x24] sm:$0xf]
  %v7606 = vld [vmem:[%s7595 + $0x28] sm:$0xf]
  %v7607 = vld [vmem:[%s7595 + $0x2c] sm:$0xf]
  %v7608 = vld [vmem:[%s7595 + $0x30] sm:$0xf]
  %v7609 = vld [vmem:[%s7595 + $0x34] sm:$0xf]
  %v7610 = vld [vmem:[%s7595 + $0x38] sm:$0xf]
  %v7611 = vld [vmem:[%s7595 + $0x3c] sm:$0xf]
  %v7612 = vld [vmem:[%s7595 + $0x40] sm:$0xf]
  %v7613 = vld [vmem:[%s7595 + $0x44] sm:$0xf]
  %v7614 = vld [vmem:[%s7595 + $0x48] sm:$0xf]
  %v7615 = vld [vmem:[%s7595 + $0x4c] sm:$0xf]
  %v7616 = vld [vmem:[%s7595 + $0x50] sm:$0xf]
  %v7617 = vld [vmem:[%s7595 + $0x54] sm:$0xf]
  %v7618 = vld [vmem:[%s7595 + $0x58] sm:$0xf]
  %v7619 = vld [vmem:[%s7595 + $0x5c] sm:$0xf]
  %v7620 = vld [vmem:[%s7595 + $0x60] sm:$0xf]
  %v7621 = vld [vmem:[%s7595 + $0x64] sm:$0xf]
  %v7622 = vld [vmem:[%s7595 + $0x68] sm:$0xf]
  %v7623 = vld [vmem:[%s7595 + $0x6c] sm:$0xf]
  %v7624 = vld [vmem:[%s7595 + $0x70] sm:$0xf]
  %v7625 = vld [vmem:[%s7595 + $0x74] sm:$0xf]
  %v7626 = vld [vmem:[%s7595 + $0x78] sm:$0xf]
  %v7627 = vld [vmem:[%s7595 + $0x7c] sm:$0xf]
  %v7628 = vld [vmem:[%s7595 + $0x80] sm:$0xf]
  %v7629 = vld [vmem:[%s7595 + $0x84] sm:$0xf]
  %v7630 = vld [vmem:[%s7595 + $0x88] sm:$0xf]
  %v7631 = vld [vmem:[%s7595 + $0x8c] sm:$0xf]
  %v7632 = vld [vmem:[%s7595 + $0x90] sm:$0xf]
  %v7633 = vld [vmem:[%s7595 + $0x94] sm:$0xf]
  %v7634 = vld [vmem:[%s7595 + $0x98] sm:$0xf]
  %v7635 = vld [vmem:[%s7595 + $0x9c] sm:$0xf]
  %v7636 = vld [vmem:[%s7595 + $0xa0] sm:$0xf]
  %v7637 = vld [vmem:[%s7595 + $0xa4] sm:$0xf]
  %v7638 = vld [vmem:[%s7595 + $0xa8] sm:$0xf]
  %v7639 = vld [vmem:[%s7595 + $0xac] sm:$0xf]
  %v7640 = vld [vmem:[%s7595 + $0xb0] sm:$0xf]
  %v7641 = vld [vmem:[%s7595 + $0xb4] sm:$0xf]
  %v7642 = vld [vmem:[%s7595 + $0xb8] sm:$0xf]
  %v7643 = vld [vmem:[%s7595 + $0xbc] sm:$0xf]
  %v7644 = vld [vmem:[%s7595 + $0xc0] sm:$0xf]
  %v7645 = vld [vmem:[%s7595 + $0xc4] sm:$0xf]
  %v7646 = vld [vmem:[%s7595 + $0xc8] sm:$0xf]
  %v7647 = vld [vmem:[%s7595 + $0xcc] sm:$0xf]
  %v7648 = vld [vmem:[%s7595 + $0xd0] sm:$0xf]
  %v7649 = vld [vmem:[%s7595 + $0xd4] sm:$0xf]
  %v7650 = vld [vmem:[%s7595 + $0xd8] sm:$0xf]
  %v7651 = vld [vmem:[%s7595 + $0xdc] sm:$0xf]
  %v7652 = vld [vmem:[%s7595 + $0xe0] sm:$0xf]
  %v7653 = vld [vmem:[%s7595 + $0xe4] sm:$0xf]
  %v7654 = vld [vmem:[%s7595 + $0xe8] sm:$0xf]
  %v7655 = vld [vmem:[%s7595 + $0xec] sm:$0xf]
  %v7656 = vld [vmem:[%s7595 + $0xf0] sm:$0xf]
  %v7657 = vld [vmem:[%s7595 + $0xf4] sm:$0xf]
  %v7658 = vld [vmem:[%s7595 + $0xf8] sm:$0xf]
  %v7659 = vld [vmem:[%s7595 + $0xfc] sm:$0xf]
  %v7660 = vld [vmem:[%s7595 + $0x100] sm:$0xf]
  %v7661 = vld [vmem:[%s7595 + $0x104] sm:$0xf]
  %v7662 = vld [vmem:[%s7595 + $0x108] sm:$0xf]
  %v7663 = vld [vmem:[%s7595 + $0x10c] sm:$0xf]
  %v7664 = vld [vmem:[%s7595 + $0x110] sm:$0xf]
  %v7665 = vld [vmem:[%s7595 + $0x114] sm:$0xf]
  %v7666 = vld [vmem:[%s7595 + $0x118] sm:$0xf]
  %v7667 = vld [vmem:[%s7595 + $0x11c] sm:$0xf]
  %v7668 = vld [vmem:[%s7595 + $0x120] sm:$0xf]
  %v7669 = vld [vmem:[%s7595 + $0x124] sm:$0xf]
  %v7670 = vld [vmem:[%s7595 + $0x128] sm:$0xf]
  %v7671 = vld [vmem:[%s7595 + $0x12c] sm:$0xf]
  %v7672 = vld [vmem:[%s7595 + $0x130] sm:$0xf]
  %v7673 = vld [vmem:[%s7595 + $0x134] sm:$0xf]
  %v7674 = vld [vmem:[%s7595 + $0x138] sm:$0xf]
  %v7675 = vld [vmem:[%s7595 + $0x13c] sm:$0xf]
  %v7676 = vld [vmem:[%s7595 + $0x140] sm:$0xf]
  %v7677 = vld [vmem:[%s7595 + $0x144] sm:$0xf]
  %v7678 = vld [vmem:[%s7595 + $0x148] sm:$0xf]
  %v7679 = vld [vmem:[%s7595 + $0x14c] sm:$0xf]
  %v7680 = vld [vmem:[%s7595 + $0x150] sm:$0xf]
  %v7681 = vld [vmem:[%s7595 + $0x154] sm:$0xf]
  %v7682 = vld [vmem:[%s7595 + $0x158] sm:$0xf]
  %v7683 = vld [vmem:[%s7595 + $0x15c] sm:$0xf]
  %v7684 = vld [vmem:[%s7595 + $0x160] sm:$0xf]
  %v7685 = vld [vmem:[%s7595 + $0x164] sm:$0xf]
  %v7686 = vld [vmem:[%s7595 + $0x168] sm:$0xf]
  %v7687 = vld [vmem:[%s7595 + $0x16c] sm:$0xf]
  %v7688 = vld [vmem:[%s7595 + $0x170] sm:$0xf]
  %v7689 = vld [vmem:[%s7595 + $0x174] sm:$0xf]
  %v7690 = vld [vmem:[%s7595 + $0x178] sm:$0xf]
  %v7691 = vld [vmem:[%s7595 + $0x17c] sm:$0xf]
  %v7692 = vld [vmem:[%s7595 + $0x180] sm:$0xf]
  %v7693 = vld [vmem:[%s7595 + $0x184] sm:$0xf]
  %v7694 = vld [vmem:[%s7595 + $0x188] sm:$0xf]
  %v7695 = vld [vmem:[%s7595 + $0x18c] sm:$0xf]
  %v7696 = vld [vmem:[%s7595 + $0x190] sm:$0xf]
  %v7697 = vld [vmem:[%s7595 + $0x194] sm:$0xf]
  %v7698 = vld [vmem:[%s7595 + $0x198] sm:$0xf]
  %v7699 = vld [vmem:[%s7595 + $0x19c] sm:$0xf]
  %v7700 = vld [vmem:[%s7595 + $0x1a0] sm:$0xf]
  %v7701 = vld [vmem:[%s7595 + $0x1a4] sm:$0xf]
  %v7702 = vld [vmem:[%s7595 + $0x1a8] sm:$0xf]
  %v7703 = vld [vmem:[%s7595 + $0x1ac] sm:$0xf]
  %v7704 = vld [vmem:[%s7595 + $0x1b0] sm:$0xf]
  %v7705 = vld [vmem:[%s7595 + $0x1b4] sm:$0xf]
  %v7706 = vld [vmem:[%s7595 + $0x1b8] sm:$0xf]
  %v7707 = vld [vmem:[%s7595 + $0x1bc] sm:$0xf]
  %v7708 = vld [vmem:[%s7595 + $0x1c0] sm:$0xf]
  %v7709 = vld [vmem:[%s7595 + $0x1c4] sm:$0xf]
  %v7710 = vld [vmem:[%s7595 + $0x1c8] sm:$0xf]
  %v7711 = vld [vmem:[%s7595 + $0x1cc] sm:$0xf]
  %v7712 = vld [vmem:[%s7595 + $0x1d0] sm:$0xf]
  %v7713 = vld [vmem:[%s7595 + $0x1d4] sm:$0xf]
  %v7714 = vld [vmem:[%s7595 + $0x1d8] sm:$0xf]
  %v7715 = vld [vmem:[%s7595 + $0x1dc] sm:$0xf]
  %v7716 = vld [vmem:[%s7595 + $0x1e0] sm:$0xf]
  %v7717 = vld [vmem:[%s7595 + $0x1e4] sm:$0xf]
  %v7718 = vld [vmem:[%s7595 + $0x1e8] sm:$0xf]
  %v7719 = vld [vmem:[%s7595 + $0x1ec] sm:$0xf]
  %v7720 = vld [vmem:[%s7595 + $0x1f0] sm:$0xf]
  %v7721 = vld [vmem:[%s7595 + $0x1f4] sm:$0xf]
  %v7722 = vld [vmem:[%s7595 + $0x1f8] sm:$0xf]
  %v7723 = vld [vmem:[%s7595 + $0x1fc] sm:$0xf]
  %v7724 = vld [vmem:[%s7595 + $0x200] sm:$0xf]
  %v7725 = vld [vmem:[%s7595 + $0x204] sm:$0xf]
  %v7726 = vld [vmem:[%s7595 + $0x208] sm:$0xf]
  %v7727 = vld [vmem:[%s7595 + $0x20c] sm:$0xf]
  %v7728 = vld [vmem:[%s7595 + $0x210] sm:$0xf]
  %v7729 = vld [vmem:[%s7595 + $0x214] sm:$0xf]
  %v7730 = vld [vmem:[%s7595 + $0x218] sm:$0xf]
  %v7731 = vld [vmem:[%s7595 + $0x21c] sm:$0xf]
  %v7732 = vld [vmem:[%s7595 + $0x220] sm:$0xf]
  %v7733 = vld [vmem:[%s7595 + $0x224] sm:$0xf]
  %v7734 = vld [vmem:[%s7595 + $0x228] sm:$0xf]
  %v7735 = vld [vmem:[%s7595 + $0x22c] sm:$0xf]
  %v7736 = vld [vmem:[%s7595 + $0x230] sm:$0xf]
  %v7737 = vld [vmem:[%s7595 + $0x234] sm:$0xf]
  %v7738 = vld [vmem:[%s7595 + $0x238] sm:$0xf]
  %v7739 = vld [vmem:[%s7595 + $0x23c] sm:$0xf]
  %v7740 = vld [vmem:[%s7595 + $0x240] sm:$0xf]
  %v7741 = vld [vmem:[%s7595 + $0x244] sm:$0xf]
  %v7742 = vld [vmem:[%s7595 + $0x248] sm:$0xf]
  %v7743 = vld [vmem:[%s7595 + $0x24c] sm:$0xf]
  %v7744 = vld [vmem:[%s7595 + $0x250] sm:$0xf]
  %v7745 = vld [vmem:[%s7595 + $0x254] sm:$0xf]
  %v7746 = vld [vmem:[%s7595 + $0x258] sm:$0xf]
  %v7747 = vld [vmem:[%s7595 + $0x25c] sm:$0xf]
  %v7748 = vld [vmem:[%s7595 + $0x260] sm:$0xf]
  %v7749 = vld [vmem:[%s7595 + $0x264] sm:$0xf]
  %v7750 = vld [vmem:[%s7595 + $0x268] sm:$0xf]
  %v7751 = vld [vmem:[%s7595 + $0x26c] sm:$0xf]
  %v7752 = vld [vmem:[%s7595 + $0x270] sm:$0xf]
  %v7753 = vld [vmem:[%s7595 + $0x274] sm:$0xf]
  %v7754 = vld [vmem:[%s7595 + $0x278] sm:$0xf]
  %v7755 = vld [vmem:[%s7595 + $0x27c] sm:$0xf]
  %v7756 = vld [vmem:[%s7595 + $0x280] sm:$0xf]
  %v7757 = vld [vmem:[%s7595 + $0x284] sm:$0xf]
  %v7758 = vld [vmem:[%s7595 + $0x288] sm:$0xf]
  %v7759 = vld [vmem:[%s7595 + $0x28c] sm:$0xf]
  %v7760 = vld [vmem:[%s7595 + $0x290] sm:$0xf]
  %v7761 = vld [vmem:[%s7595 + $0x294] sm:$0xf]
  %v7762 = vld [vmem:[%s7595 + $0x298] sm:$0xf]
  %v7763 = vld [vmem:[%s7595 + $0x29c] sm:$0xf]
  %v7764 = vld [vmem:[%s7595 + $0x2a0] sm:$0xf]
  %v7765 = vld [vmem:[%s7595 + $0x2a4] sm:$0xf]
  %v7766 = vld [vmem:[%s7595 + $0x2a8] sm:$0xf]
  %v7767 = vld [vmem:[%s7595 + $0x2ac] sm:$0xf]
  %v7768 = vld [vmem:[%s7595 + $0x2b0] sm:$0xf]
  %v7769 = vld [vmem:[%s7595 + $0x2b4] sm:$0xf]
  %v7770 = vld [vmem:[%s7595 + $0x2b8] sm:$0xf]
  %v7771 = vld [vmem:[%s7595 + $0x2bc] sm:$0xf]
  %v7772 = vld [vmem:[%s7595 + $0x2c0] sm:$0xf]
  %v7773 = vld [vmem:[%s7595 + $0x2c4] sm:$0xf]
  %v7774 = vld [vmem:[%s7595 + $0x2c8] sm:$0xf]
  %v7775 = vld [vmem:[%s7595 + $0x2cc] sm:$0xf]
  %v7776 = vld [vmem:[%s7595 + $0x2d0] sm:$0xf]
  %v7777 = vld [vmem:[%s7595 + $0x2d4] sm:$0xf]
  %v7778 = vld [vmem:[%s7595 + $0x2d8] sm:$0xf]
  %v7779 = vld [vmem:[%s7595 + $0x2dc] sm:$0xf]
  %v7780 = vld [vmem:[%s7595 + $0x2e0] sm:$0xf]
  %v7781 = vld [vmem:[%s7595 + $0x2e4] sm:$0xf]
  %v7782 = vld [vmem:[%s7595 + $0x2e8] sm:$0xf]
  %v7783 = vld [vmem:[%s7595 + $0x2ec] sm:$0xf]
  %v7784 = vld [vmem:[%s7595 + $0x2f0] sm:$0xf]
  %v7785 = vld [vmem:[%s7595 + $0x2f4] sm:$0xf]
  %v7786 = vld [vmem:[%s7595 + $0x2f8] sm:$0xf]
  %v7787 = vld [vmem:[%s7595 + $0x2fc] sm:$0xf]
  %v7788 = vld [vmem:[%s7595 + $0x300] sm:$0xf]
  %v7789 = vld [vmem:[%s7595 + $0x304] sm:$0xf]
  %v7790 = vld [vmem:[%s7595 + $0x308] sm:$0xf]
  %v7791 = vld [vmem:[%s7595 + $0x30c] sm:$0xf]
  %v7792 = vld [vmem:[%s7595 + $0x310] sm:$0xf]
  %v7793 = vld [vmem:[%s7595 + $0x314] sm:$0xf]
  %v7794 = vld [vmem:[%s7595 + $0x318] sm:$0xf]
  %v7795 = vld [vmem:[%s7595 + $0x31c] sm:$0xf]
  %v7796 = vld [vmem:[%s7595 + $0x320] sm:$0xf]
  %v7797 = vld [vmem:[%s7595 + $0x324] sm:$0xf]
  %v7798 = vld [vmem:[%s7595 + $0x328] sm:$0xf]
  %v7799 = vld [vmem:[%s7595 + $0x32c] sm:$0xf]
  %v7800 = vld [vmem:[%s7595 + $0x330] sm:$0xf]
  %v7801 = vld [vmem:[%s7595 + $0x334] sm:$0xf]
  %v7802 = vld [vmem:[%s7595 + $0x338] sm:$0xf]
  %v7803 = vld [vmem:[%s7595 + $0x33c] sm:$0xf]
  %v7804 = vld [vmem:[%s7595 + $0x340] sm:$0xf]
  %v7805 = vld [vmem:[%s7595 + $0x344] sm:$0xf]
  %v7806 = vld [vmem:[%s7595 + $0x348] sm:$0xf]
  %v7807 = vld [vmem:[%s7595 + $0x34c] sm:$0xf]
  %v7808 = vld [vmem:[%s7595 + $0x350] sm:$0xf]
  %v7809 = vld [vmem:[%s7595 + $0x354] sm:$0xf]
  %v7810 = vld [vmem:[%s7595 + $0x358] sm:$0xf]
  %v7811 = vld [vmem:[%s7595 + $0x35c] sm:$0xf]
  %v7812 = vld [vmem:[%s7595 + $0x360] sm:$0xf]
  %v7813 = vld [vmem:[%s7595 + $0x364] sm:$0xf]
  %v7814 = vld [vmem:[%s7595 + $0x368] sm:$0xf]
  %v7815 = vld [vmem:[%s7595 + $0x36c] sm:$0xf]
  %v7816 = vld [vmem:[%s7595 + $0x370] sm:$0xf]
  %v7817 = vld [vmem:[%s7595 + $0x374] sm:$0xf]
  %v7818 = vld [vmem:[%s7595 + $0x378] sm:$0xf]
  %v7819 = vld [vmem:[%s7595 + $0x37c] sm:$0xf]
  %v7820 = vld [vmem:[%s7595 + $0x380] sm:$0xf]
  %v7821 = vld [vmem:[%s7595 + $0x384] sm:$0xf]
  %v7822 = vld [vmem:[%s7595 + $0x388] sm:$0xf]
  %v7823 = vld [vmem:[%s7595 + $0x38c] sm:$0xf]
  %v7824 = vld [vmem:[%s7595 + $0x390] sm:$0xf]
  %v7825 = vld [vmem:[%s7595 + $0x394] sm:$0xf]
  %v7826 = vld [vmem:[%s7595 + $0x398] sm:$0xf]
  %v7827 = vld [vmem:[%s7595 + $0x39c] sm:$0xf]
  %v7828 = vld [vmem:[%s7595 + $0x3a0] sm:$0xf]
  %v7829 = vld [vmem:[%s7595 + $0x3a4] sm:$0xf]
  %v7830 = vld [vmem:[%s7595 + $0x3a8] sm:$0xf]
  %v7831 = vld [vmem:[%s7595 + $0x3ac] sm:$0xf]
  %v7832 = vld [vmem:[%s7595 + $0x3b0] sm:$0xf]
  %v7833 = vld [vmem:[%s7595 + $0x3b4] sm:$0xf]
  %v7834 = vld [vmem:[%s7595 + $0x3b8] sm:$0xf]
  %v7835 = vld [vmem:[%s7595 + $0x3bc] sm:$0xf]
  %v7836 = vld [vmem:[%s7595 + $0x3c0] sm:$0xf]
  %v7837 = vld [vmem:[%s7595 + $0x3c4] sm:$0xf]
  %v7838 = vld [vmem:[%s7595 + $0x3c8] sm:$0xf]
  %v7839 = vld [vmem:[%s7595 + $0x3cc] sm:$0xf]
  %v7840 = vld [vmem:[%s7595 + $0x3d0] sm:$0xf]
  %v7841 = vld [vmem:[%s7595 + $0x3d4] sm:$0xf]
  %v7842 = vld [vmem:[%s7595 + $0x3d8] sm:$0xf]
  %v7843 = vld [vmem:[%s7595 + $0x3dc] sm:$0xf]
  %v7844 = vld [vmem:[%s7595 + $0x3e0] sm:$0xf]
  %v7845 = vld [vmem:[%s7595 + $0x3e4] sm:$0xf]
  %v7846 = vld [vmem:[%s7595 + $0x3e8] sm:$0xf]
  %v7847 = vld [vmem:[%s7595 + $0x3ec] sm:$0xf]
  %v7848 = vld [vmem:[%s7595 + $0x3f0] sm:$0xf]
  %v7849 = vld [vmem:[%s7595 + $0x3f4] sm:$0xf]
  %v7850 = vld [vmem:[%s7595 + $0x3f8] sm:$0xf]
  %v7851 = vld [vmem:[%s7595 + $0x3fc] sm:$0xf]
  %v7852 = vpack.c.bf16 %v7579, %v7563
  %v7853 = vpack.c.bf16 %v7580, %v7564
  %v7854 = vpack.c.bf16 %v7581, %v7565
  %v7855 = vpack.c.bf16 %v7582, %v7566
  %v7856 = vpack.c.bf16 %v7583, %v7567
  %v7857 = vpack.c.bf16 %v7584, %v7568
  %v7858 = vpack.c.bf16 %v7585, %v7569
  %v7859 = vpack.c.bf16 %v7586, %v7570
  %v7860 = vpack.c.bf16 %v7587, %v7571
  %v7861 = vpack.c.bf16 %v7588, %v7572
  %v7862 = vpack.c.bf16 %v7589, %v7573
  %v7863 = vpack.c.bf16 %v7590, %v7574
  %v7864 = vpack.c.bf16 %v7591, %v7575
  %v7865 = vpack.c.bf16 %v7592, %v7576
  %v7866 = vpack.c.bf16 %v7593, %v7577
  %v7867 = vpack.c.bf16 %v7594, %v7578
  %s7868 = scalar_lea.vmem %s16, 2
  %v7869 = vld [vmem:[%s7868] sm:$0x1]
  %v7871 = vlaneseq
  %v7872 = vshrl.u32 %v7871, 7
  %v7873 = vsub.s32 0, %v7872
  %v7874 = vrot.slane %v7869, %v7873
  %v8132 = vunpack.c.l.b16 %v7596
  %v8133 = vunpack.c.l.b16 %v7597
  %v8134 = vunpack.c.l.b16 %v7598
  %v8135 = vunpack.c.l.b16 %v7599
  %v8136 = vunpack.c.l.b16 %v7600
  %v8137 = vunpack.c.l.b16 %v7601
  %v8138 = vunpack.c.l.b16 %v7602
  %v8139 = vunpack.c.l.b16 %v7603
  %v8140 = vunpack.c.l.b16 %v7604
  %v8141 = vunpack.c.l.b16 %v7605
  %v8142 = vunpack.c.l.b16 %v7606
  %v8143 = vunpack.c.l.b16 %v7607
  %v8144 = vunpack.c.l.b16 %v7608
  %v8145 = vunpack.c.l.b16 %v7609
  %v8146 = vunpack.c.l.b16 %v7610
  %v8147 = vunpack.c.l.b16 %v7611
  %v8148 = vunpack.c.l.b16 %v7612
  %v8149 = vunpack.c.l.b16 %v7613
  %v8150 = vunpack.c.l.b16 %v7614
  %v8151 = vunpack.c.l.b16 %v7615
  %v8152 = vunpack.c.l.b16 %v7616
  %v8153 = vunpack.c.l.b16 %v7617
  %v8154 = vunpack.c.l.b16 %v7618
  %v8155 = vunpack.c.l.b16 %v7619
  %v8156 = vunpack.c.l.b16 %v7620
  %v8157 = vunpack.c.l.b16 %v7621
  %v8158 = vunpack.c.l.b16 %v7622
  %v8159 = vunpack.c.l.b16 %v7623
  %v8160 = vunpack.c.l.b16 %v7624
  %v8161 = vunpack.c.l.b16 %v7625
  %v8162 = vunpack.c.l.b16 %v7626
  %v8163 = vunpack.c.l.b16 %v7627
  %v8164 = vunpack.c.l.b16 %v7628
  %v8165 = vunpack.c.l.b16 %v7629
  %v8166 = vunpack.c.l.b16 %v7630
  %v8167 = vunpack.c.l.b16 %v7631
  %v8168 = vunpack.c.l.b16 %v7632
  %v8169 = vunpack.c.l.b16 %v7633
  %v8170 = vunpack.c.l.b16 %v7634
  %v8171 = vunpack.c.l.b16 %v7635
  %v8172 = vunpack.c.l.b16 %v7636
  %v8173 = vunpack.c.l.b16 %v7637
  %v8174 = vunpack.c.l.b16 %v7638
  %v8175 = vunpack.c.l.b16 %v7639
  %v8176 = vunpack.c.l.b16 %v7640
  %v8177 = vunpack.c.l.b16 %v7641
  %v8178 = vunpack.c.l.b16 %v7642
  %v8179 = vunpack.c.l.b16 %v7643
  %v8180 = vunpack.c.l.b16 %v7644
  %v8181 = vunpack.c.l.b16 %v7645
  %v8182 = vunpack.c.l.b16 %v7646
  %v8183 = vunpack.c.l.b16 %v7647
  %v8184 = vunpack.c.l.b16 %v7648
  %v8185 = vunpack.c.l.b16 %v7649
  %v8186 = vunpack.c.l.b16 %v7650
  %v8187 = vunpack.c.l.b16 %v7651
  %v8188 = vunpack.c.l.b16 %v7652
  %v8189 = vunpack.c.l.b16 %v7653
  %v8190 = vunpack.c.l.b16 %v7654
  %v8191 = vunpack.c.l.b16 %v7655
  %v8192 = vunpack.c.l.b16 %v7656
  %v8193 = vunpack.c.l.b16 %v7657
  %v8194 = vunpack.c.l.b16 %v7658
  %v8195 = vunpack.c.l.b16 %v7659
  %v8196 = vunpack.c.l.b16 %v7660
  %v8197 = vunpack.c.l.b16 %v7661
  %v8198 = vunpack.c.l.b16 %v7662
  %v8199 = vunpack.c.l.b16 %v7663
  %v8200 = vunpack.c.l.b16 %v7664
  %v8201 = vunpack.c.l.b16 %v7665
  %v8202 = vunpack.c.l.b16 %v7666
  %v8203 = vunpack.c.l.b16 %v7667
  %v8204 = vunpack.c.l.b16 %v7668
  %v8205 = vunpack.c.l.b16 %v7669
  %v8206 = vunpack.c.l.b16 %v7670
  %v8207 = vunpack.c.l.b16 %v7671
  %v8208 = vunpack.c.l.b16 %v7672
  %v8209 = vunpack.c.l.b16 %v7673
  %v8210 = vunpack.c.l.b16 %v7674
  %v8211 = vunpack.c.l.b16 %v7675
  %v8212 = vunpack.c.l.b16 %v7676
  %v8213 = vunpack.c.l.b16 %v7677
  %v8214 = vunpack.c.l.b16 %v7678
  %v8215 = vunpack.c.l.b16 %v7679
  %v8216 = vunpack.c.l.b16 %v7680
  %v8217 = vunpack.c.l.b16 %v7681
  %v8218 = vunpack.c.l.b16 %v7682
  %v8219 = vunpack.c.l.b16 %v7683
  %v8220 = vunpack.c.l.b16 %v7684
  %v8221 = vunpack.c.l.b16 %v7685
  %v8222 = vunpack.c.l.b16 %v7686
  %v8223 = vunpack.c.l.b16 %v7687
  %v8224 = vunpack.c.l.b16 %v7688
  %v8225 = vunpack.c.l.b16 %v7689
  %v8226 = vunpack.c.l.b16 %v7690
  %v8227 = vunpack.c.l.b16 %v7691
  %v8228 = vunpack.c.l.b16 %v7692
  %v8229 = vunpack.c.l.b16 %v7693
  %v8230 = vunpack.c.l.b16 %v7694
  %v8231 = vunpack.c.l.b16 %v7695
  %v8232 = vunpack.c.l.b16 %v7696
  %v8233 = vunpack.c.l.b16 %v7697
  %v8234 = vunpack.c.l.b16 %v7698
  %v8235 = vunpack.c.l.b16 %v7699
  %v8236 = vunpack.c.l.b16 %v7700
  %v8237 = vunpack.c.l.b16 %v7701
  %v8238 = vunpack.c.l.b16 %v7702
  %v8239 = vunpack.c.l.b16 %v7703
  %v8240 = vunpack.c.l.b16 %v7704
  %v8241 = vunpack.c.l.b16 %v7705
  %v8242 = vunpack.c.l.b16 %v7706
  %v8243 = vunpack.c.l.b16 %v7707
  %v8244 = vunpack.c.l.b16 %v7708
  %v8245 = vunpack.c.l.b16 %v7709
  %v8246 = vunpack.c.l.b16 %v7710
  %v8247 = vunpack.c.l.b16 %v7711
  %v8248 = vunpack.c.l.b16 %v7712
  %v8249 = vunpack.c.l.b16 %v7713
  %v8250 = vunpack.c.l.b16 %v7714
  %v8251 = vunpack.c.l.b16 %v7715
  %v8252 = vunpack.c.l.b16 %v7716
  %v8253 = vunpack.c.l.b16 %v7717
  %v8254 = vunpack.c.l.b16 %v7718
  %v8255 = vunpack.c.l.b16 %v7719
  %v8256 = vunpack.c.l.b16 %v7720
  %v8257 = vunpack.c.l.b16 %v7721
  %v8258 = vunpack.c.l.b16 %v7722
  %v8259 = vunpack.c.l.b16 %v7723
  %v8260 = vunpack.c.l.b16 %v7724
  %v8261 = vunpack.c.l.b16 %v7725
  %v8262 = vunpack.c.l.b16 %v7726
  %v8263 = vunpack.c.l.b16 %v7727
  %v8264 = vunpack.c.l.b16 %v7728
  %v8265 = vunpack.c.l.b16 %v7729
  %v8266 = vunpack.c.l.b16 %v7730
  %v8267 = vunpack.c.l.b16 %v7731
  %v8268 = vunpack.c.l.b16 %v7732
  %v8269 = vunpack.c.l.b16 %v7733
  %v8270 = vunpack.c.l.b16 %v7734
  %v8271 = vunpack.c.l.b16 %v7735
  %v8272 = vunpack.c.l.b16 %v7736
  %v8273 = vunpack.c.l.b16 %v7737
  %v8274 = vunpack.c.l.b16 %v7738
  %v8275 = vunpack.c.l.b16 %v7739
  %v8276 = vunpack.c.l.b16 %v7740
  %v8277 = vunpack.c.l.b16 %v7741
  %v8278 = vunpack.c.l.b16 %v7742
  %v8279 = vunpack.c.l.b16 %v7743
  %v8280 = vunpack.c.l.b16 %v7744
  %v8281 = vunpack.c.l.b16 %v7745
  %v8282 = vunpack.c.l.b16 %v7746
  %v8283 = vunpack.c.l.b16 %v7747
  %v8284 = vunpack.c.l.b16 %v7748
  %v8285 = vunpack.c.l.b16 %v7749
  %v8286 = vunpack.c.l.b16 %v7750
  %v8287 = vunpack.c.l.b16 %v7751
  %v8288 = vunpack.c.l.b16 %v7752
  %v8289 = vunpack.c.l.b16 %v7753
  %v8290 = vunpack.c.l.b16 %v7754
  %v8291 = vunpack.c.l.b16 %v7755
  %v8292 = vunpack.c.l.b16 %v7756
  %v8293 = vunpack.c.l.b16 %v7757
  %v8294 = vunpack.c.l.b16 %v7758
  %v8295 = vunpack.c.l.b16 %v7759
  %v8296 = vunpack.c.l.b16 %v7760
  %v8297 = vunpack.c.l.b16 %v7761
  %v8298 = vunpack.c.l.b16 %v7762
  %v8299 = vunpack.c.l.b16 %v7763
  %v8300 = vunpack.c.l.b16 %v7764
  %v8301 = vunpack.c.l.b16 %v7765
  %v8302 = vunpack.c.l.b16 %v7766
  %v8303 = vunpack.c.l.b16 %v7767
  %v8304 = vunpack.c.l.b16 %v7768
  %v8305 = vunpack.c.l.b16 %v7769
  %v8306 = vunpack.c.l.b16 %v7770
  %v8307 = vunpack.c.l.b16 %v7771
  %v8308 = vunpack.c.l.b16 %v7772
  %v8309 = vunpack.c.l.b16 %v7773
  %v8310 = vunpack.c.l.b16 %v7774
  %v8311 = vunpack.c.l.b16 %v7775
  %v8312 = vunpack.c.l.b16 %v7776
  %v8313 = vunpack.c.l.b16 %v7777
  %v8314 = vunpack.c.l.b16 %v7778
  %v8315 = vunpack.c.l.b16 %v7779
  %v8316 = vunpack.c.l.b16 %v7780
  %v8317 = vunpack.c.l.b16 %v7781
  %v8318 = vunpack.c.l.b16 %v7782
  %v8319 = vunpack.c.l.b16 %v7783
  %v8320 = vunpack.c.l.b16 %v7784
  %v8321 = vunpack.c.l.b16 %v7785
  %v8322 = vunpack.c.l.b16 %v7786
  %v8323 = vunpack.c.l.b16 %v7787
  %v8324 = vunpack.c.l.b16 %v7788
  %v8325 = vunpack.c.l.b16 %v7789
  %v8326 = vunpack.c.l.b16 %v7790
  %v8327 = vunpack.c.l.b16 %v7791
  %v8328 = vunpack.c.l.b16 %v7792
  %v8329 = vunpack.c.l.b16 %v7793
  %v8330 = vunpack.c.l.b16 %v7794
  %v8331 = vunpack.c.l.b16 %v7795
  %v8332 = vunpack.c.l.b16 %v7796
  %v8333 = vunpack.c.l.b16 %v7797
  %v8334 = vunpack.c.l.b16 %v7798
  %v8335 = vunpack.c.l.b16 %v7799
  %v8336 = vunpack.c.l.b16 %v7800
  %v8337 = vunpack.c.l.b16 %v7801
  %v8338 = vunpack.c.l.b16 %v7802
  %v8339 = vunpack.c.l.b16 %v7803
  %v8340 = vunpack.c.l.b16 %v7804
  %v8341 = vunpack.c.l.b16 %v7805
  %v8342 = vunpack.c.l.b16 %v7806
  %v8343 = vunpack.c.l.b16 %v7807
  %v8344 = vunpack.c.l.b16 %v7808
  %v8345 = vunpack.c.l.b16 %v7809
  %v8346 = vunpack.c.l.b16 %v7810
  %v8347 = vunpack.c.l.b16 %v7811
  %v8348 = vunpack.c.l.b16 %v7812
  %v8349 = vunpack.c.l.b16 %v7813
  %v8350 = vunpack.c.l.b16 %v7814
  %v8351 = vunpack.c.l.b16 %v7815
  %v8352 = vunpack.c.l.b16 %v7816
  %v8353 = vunpack.c.l.b16 %v7817
  %v8354 = vunpack.c.l.b16 %v7818
  %v8355 = vunpack.c.l.b16 %v7819
  %v8356 = vunpack.c.l.b16 %v7820
  %v8357 = vunpack.c.l.b16 %v7821
  %v8358 = vunpack.c.l.b16 %v7822
  %v8359 = vunpack.c.l.b16 %v7823
  %v8360 = vunpack.c.l.b16 %v7824
  %v8361 = vunpack.c.l.b16 %v7825
  %v8362 = vunpack.c.l.b16 %v7826
  %v8363 = vunpack.c.l.b16 %v7827
  %v8364 = vunpack.c.l.b16 %v7828
  %v8365 = vunpack.c.l.b16 %v7829
  %v8366 = vunpack.c.l.b16 %v7830
  %v8367 = vunpack.c.l.b16 %v7831
  %v8368 = vunpack.c.l.b16 %v7832
  %v8369 = vunpack.c.l.b16 %v7833
  %v8370 = vunpack.c.l.b16 %v7834
  %v8371 = vunpack.c.l.b16 %v7835
  %v8372 = vunpack.c.l.b16 %v7836
  %v8373 = vunpack.c.l.b16 %v7837
  %v8374 = vunpack.c.l.b16 %v7838
  %v8375 = vunpack.c.l.b16 %v7839
  %v8376 = vunpack.c.l.b16 %v7840
  %v8377 = vunpack.c.l.b16 %v7841
  %v8378 = vunpack.c.l.b16 %v7842
  %v8379 = vunpack.c.l.b16 %v7843
  %v8380 = vunpack.c.l.b16 %v7844
  %v8381 = vunpack.c.l.b16 %v7845
  %v8382 = vunpack.c.l.b16 %v7846
  %v8383 = vunpack.c.l.b16 %v7847
  %v8384 = vunpack.c.l.b16 %v7848
  %v8385 = vunpack.c.l.b16 %v7849
  %v8386 = vunpack.c.l.b16 %v7850
  %v8387 = vunpack.c.l.b16 %v7851
  %v8388 = vpack.c.b16 %v8133, %v8132
  %v8389 = vpack.c.b16 %v8135, %v8134
  %v8390 = vpack.c.b16 %v8137, %v8136
  %v8391 = vpack.c.b16 %v8139, %v8138
  %v8392 = vpack.c.b16 %v8141, %v8140
  %v8393 = vpack.c.b16 %v8143, %v8142
  %v8394 = vpack.c.b16 %v8145, %v8144
  %v8395 = vpack.c.b16 %v8147, %v8146
  %v8396 = vpack.c.b16 %v8149, %v8148
  %v8397 = vpack.c.b16 %v8151, %v8150
  %v8398 = vpack.c.b16 %v8153, %v8152
  %v8399 = vpack.c.b16 %v8155, %v8154
  %v8400 = vpack.c.b16 %v8157, %v8156
  %v8401 = vpack.c.b16 %v8159, %v8158
  %v8402 = vpack.c.b16 %v8161, %v8160
  %v8403 = vpack.c.b16 %v8163, %v8162
  %v8404 = vpack.c.b16 %v8165, %v8164
  %v8405 = vpack.c.b16 %v8167, %v8166
  %v8406 = vpack.c.b16 %v8169, %v8168
  %v8407 = vpack.c.b16 %v8171, %v8170
  %v8408 = vpack.c.b16 %v8173, %v8172
  %v8409 = vpack.c.b16 %v8175, %v8174
  %v8410 = vpack.c.b16 %v8177, %v8176
  %v8411 = vpack.c.b16 %v8179, %v8178
  %v8412 = vpack.c.b16 %v8181, %v8180
  %v8413 = vpack.c.b16 %v8183, %v8182
  %v8414 = vpack.c.b16 %v8185, %v8184
  %v8415 = vpack.c.b16 %v8187, %v8186
  %v8416 = vpack.c.b16 %v8189, %v8188
  %v8417 = vpack.c.b16 %v8191, %v8190
  %v8418 = vpack.c.b16 %v8193, %v8192
  %v8419 = vpack.c.b16 %v8195, %v8194
  %v8420 = vpack.c.b16 %v8197, %v8196
  %v8421 = vpack.c.b16 %v8199, %v8198
  %v8422 = vpack.c.b16 %v8201, %v8200
  %v8423 = vpack.c.b16 %v8203, %v8202
  %v8424 = vpack.c.b16 %v8205, %v8204
  %v8425 = vpack.c.b16 %v8207, %v8206
  %v8426 = vpack.c.b16 %v8209, %v8208
  %v8427 = vpack.c.b16 %v8211, %v8210
  %v8428 = vpack.c.b16 %v8213, %v8212
  %v8429 = vpack.c.b16 %v8215, %v8214
  %v8430 = vpack.c.b16 %v8217, %v8216
  %v8431 = vpack.c.b16 %v8219, %v8218
  %v8432 = vpack.c.b16 %v8221, %v8220
  %v8433 = vpack.c.b16 %v8223, %v8222
  %v8434 = vpack.c.b16 %v8225, %v8224
  %v8435 = vpack.c.b16 %v8227, %v8226
  %v8436 = vpack.c.b16 %v8229, %v8228
  %v8437 = vpack.c.b16 %v8231, %v8230
  %v8438 = vpack.c.b16 %v8233, %v8232
  %v8439 = vpack.c.b16 %v8235, %v8234
  %v8440 = vpack.c.b16 %v8237, %v8236
  %v8441 = vpack.c.b16 %v8239, %v8238
  %v8442 = vpack.c.b16 %v8241, %v8240
  %v8443 = vpack.c.b16 %v8243, %v8242
  %v8444 = vpack.c.b16 %v8245, %v8244
  %v8445 = vpack.c.b16 %v8247, %v8246
  %v8446 = vpack.c.b16 %v8249, %v8248
  %v8447 = vpack.c.b16 %v8251, %v8250
  %v8448 = vpack.c.b16 %v8253, %v8252
  %v8449 = vpack.c.b16 %v8255, %v8254
  %v8450 = vpack.c.b16 %v8257, %v8256
  %v8451 = vpack.c.b16 %v8259, %v8258
  %v8452 = vpack.c.b16 %v8261, %v8260
  %v8453 = vpack.c.b16 %v8263, %v8262
  %v8454 = vpack.c.b16 %v8265, %v8264
  %v8455 = vpack.c.b16 %v8267, %v8266
  %v8456 = vpack.c.b16 %v8269, %v8268
  %v8457 = vpack.c.b16 %v8271, %v8270
  %v8458 = vpack.c.b16 %v8273, %v8272
  %v8459 = vpack.c.b16 %v8275, %v8274
  %v8460 = vpack.c.b16 %v8277, %v8276
  %v8461 = vpack.c.b16 %v8279, %v8278
  %v8462 = vpack.c.b16 %v8281, %v8280
  %v8463 = vpack.c.b16 %v8283, %v8282
  %v8464 = vpack.c.b16 %v8285, %v8284
  %v8465 = vpack.c.b16 %v8287, %v8286
  %v8466 = vpack.c.b16 %v8289, %v8288
  %v8467 = vpack.c.b16 %v8291, %v8290
  %v8468 = vpack.c.b16 %v8293, %v8292
  %v8469 = vpack.c.b16 %v8295, %v8294
  %v8470 = vpack.c.b16 %v8297, %v8296
  %v8471 = vpack.c.b16 %v8299, %v8298
  %v8472 = vpack.c.b16 %v8301, %v8300
  %v8473 = vpack.c.b16 %v8303, %v8302
  %v8474 = vpack.c.b16 %v8305, %v8304
  %v8475 = vpack.c.b16 %v8307, %v8306
  %v8476 = vpack.c.b16 %v8309, %v8308
  %v8477 = vpack.c.b16 %v8311, %v8310
  %v8478 = vpack.c.b16 %v8313, %v8312
  %v8479 = vpack.c.b16 %v8315, %v8314
  %v8480 = vpack.c.b16 %v8317, %v8316
  %v8481 = vpack.c.b16 %v8319, %v8318
  %v8482 = vpack.c.b16 %v8321, %v8320
  %v8483 = vpack.c.b16 %v8323, %v8322
  %v8484 = vpack.c.b16 %v8325, %v8324
  %v8485 = vpack.c.b16 %v8327, %v8326
  %v8486 = vpack.c.b16 %v8329, %v8328
  %v8487 = vpack.c.b16 %v8331, %v8330
  %v8488 = vpack.c.b16 %v8333, %v8332
  %v8489 = vpack.c.b16 %v8335, %v8334
  %v8490 = vpack.c.b16 %v8337, %v8336
  %v8491 = vpack.c.b16 %v8339, %v8338
  %v8492 = vpack.c.b16 %v8341, %v8340
  %v8493 = vpack.c.b16 %v8343, %v8342
  %v8494 = vpack.c.b16 %v8345, %v8344
  %v8495 = vpack.c.b16 %v8347, %v8346
  %v8496 = vpack.c.b16 %v8349, %v8348
  %v8497 = vpack.c.b16 %v8351, %v8350
  %v8498 = vpack.c.b16 %v8353, %v8352
  %v8499 = vpack.c.b16 %v8355, %v8354
  %v8500 = vpack.c.b16 %v8357, %v8356
  %v8501 = vpack.c.b16 %v8359, %v8358
  %v8502 = vpack.c.b16 %v8361, %v8360
  %v8503 = vpack.c.b16 %v8363, %v8362
  %v8504 = vpack.c.b16 %v8365, %v8364
  %v8505 = vpack.c.b16 %v8367, %v8366
  %v8506 = vpack.c.b16 %v8369, %v8368
  %v8507 = vpack.c.b16 %v8371, %v8370
  %v8508 = vpack.c.b16 %v8373, %v8372
  %v8509 = vpack.c.b16 %v8375, %v8374
  %v8510 = vpack.c.b16 %v8377, %v8376
  %v8511 = vpack.c.b16 %v8379, %v8378
  %v8512 = vpack.c.b16 %v8381, %v8380
  %v8513 = vpack.c.b16 %v8383, %v8382
  %v8514 = vpack.c.b16 %v8385, %v8384
  %v8515 = vpack.c.b16 %v8387, %v8386
  %8644 = vmatprep.subr.bf16.mxu0 0
  %8645 = vmatpush1.bf16.msra.mxu0 %v8388
  %8646 = vmatprep.subr.bf16.mxu0 0
  %8647 = vmatpush1.bf16.msra.mxu0 %v8389
  %8648 = vmatprep.subr.bf16.mxu0 0
  %8649 = vmatpush1.bf16.msra.mxu0 %v8390
  %8650 = vmatprep.subr.bf16.mxu0 0
  %8651 = vmatpush1.bf16.msra.mxu0 %v8391
  %8652 = vmatprep.subr.bf16.mxu0 0
  %8653 = vmatpush1.bf16.msra.mxu0 %v8392
  %8654 = vmatprep.subr.bf16.mxu0 0
  %8655 = vmatpush1.bf16.msra.mxu0 %v8393
  %8656 = vmatprep.subr.bf16.mxu0 0
  %8657 = vmatpush1.bf16.msra.mxu0 %v8394
  %8658 = vmatprep.subr.bf16.mxu0 0
  %8659 = vmatpush1.bf16.msra.mxu0 %v8395
  %8660 = vmatprep.subr.bf16.mxu0 0
  %8661 = vmatpush1.bf16.msra.mxu0 %v8396
  %8662 = vmatprep.subr.bf16.mxu0 0
  %8663 = vmatpush1.bf16.msra.mxu0 %v8397
  %8664 = vmatprep.subr.bf16.mxu0 0
  %8665 = vmatpush1.bf16.msra.mxu0 %v8398
  %8666 = vmatprep.subr.bf16.mxu0 0
  %8667 = vmatpush1.bf16.msra.mxu0 %v8399
  %8668 = vmatprep.subr.bf16.mxu0 0
  %8669 = vmatpush1.bf16.msra.mxu0 %v8400
  %8670 = vmatprep.subr.bf16.mxu0 0
  %8671 = vmatpush1.bf16.msra.mxu0 %v8401
  %8672 = vmatprep.subr.bf16.mxu0 0
  %8673 = vmatpush1.bf16.msra.mxu0 %v8402
  %8674 = vmatprep.subr.bf16.mxu0 0
  %8675 = vmatpush1.bf16.msra.mxu0 %v8403
  %8676 = vmatprep.mubr.bf16.mxu0 %v7853
  %8677 = vmatmul.mubr.bf16.gmra.mrb[0].mxu0 %v7852
  %v8678 = vpop.f32.mrb[0].mxu0
  %v8679 = vadd.f32 %v7874, %v8678
  %v8680 = vpop.f32.mrb[0].mxu0
  %v8681 = vpop.f32.mrb[0].mxu0
  %v8682 = vadd.f32 %v7874, %v8681
  %v8683 = vpop.f32.mrb[0].mxu0
  %8684 = vdwg.mxu0
  %8685 = vmatprep.subr.bf16.mxu0 0
  %8686 = vmatpush1.bf16.msra.mxu0 %v8404
  %8687 = vmatprep.subr.bf16.mxu0 0
  %8688 = vmatpush1.bf16.msra.mxu0 %v8405
  %8689 = vmatprep.subr.bf16.mxu0 0
  %8690 = vmatpush1.bf16.msra.mxu0 %v8406
  %8691 = vmatprep.subr.bf16.mxu0 0
  %8692 = vmatpush1.bf16.msra.mxu0 %v8407
  %8693 = vmatprep.subr.bf16.mxu0 0
  %8694 = vmatpush1.bf16.msra.mxu0 %v8408
  %8695 = vmatprep.subr.bf16.mxu0 0
  %8696 = vmatpush1.bf16.msra.mxu0 %v8409
  %8697 = vmatprep.subr.bf16.mxu0 0
  %8698 = vmatpush1.bf16.msra.mxu0 %v8410
  %8699 = vmatprep.subr.bf16.mxu0 0
  %8700 = vmatpush1.bf16.msra.mxu0 %v8411
  %8701 = vmatprep.subr.bf16.mxu0 0
  %8702 = vmatpush1.bf16.msra.mxu0 %v8412
  %8703 = vmatprep.subr.bf16.mxu0 0
  %8704 = vmatpush1.bf16.msra.mxu0 %v8413
  %8705 = vmatprep.subr.bf16.mxu0 0
  %8706 = vmatpush1.bf16.msra.mxu0 %v8414
  %8707 = vmatprep.subr.bf16.mxu0 0
  %8708 = vmatpush1.bf16.msra.mxu0 %v8415
  %8709 = vmatprep.subr.bf16.mxu0 0
  %8710 = vmatpush1.bf16.msra.mxu0 %v8416
  %8711 = vmatprep.subr.bf16.mxu0 0
  %8712 = vmatpush1.bf16.msra.mxu0 %v8417
  %8713 = vmatprep.subr.bf16.mxu0 0
  %8714 = vmatpush1.bf16.msra.mxu0 %v8418
  %8715 = vmatprep.subr.bf16.mxu0 0
  %8716 = vmatpush1.bf16.msra.mxu0 %v8419
  %8717 = vmatprep.mubr.bf16.mxu0 %v7855
  %8718 = vmatmul.mubr.bf16.gmra.mrb[0].mxu0 %v7854
  %v8719 = vpop.f32.mrb[0].mxu0
  %v8720 = vadd.f32 %v8679, %v8719
  %v8721 = vpop.f32.mrb[0].mxu0
  %v8722 = vpop.f32.mrb[0].mxu0
  %v8723 = vadd.f32 %v8682, %v8722
  %v8724 = vpop.f32.mrb[0].mxu0
  %8725 = vdwg.mxu0
  %8726 = vmatprep.subr.bf16.mxu0 0
  %8727 = vmatpush1.bf16.msra.mxu0 %v8420
  %8728 = vmatprep.subr.bf16.mxu0 0
  %8729 = vmatpush1.bf16.msra.mxu0 %v8421
  %8730 = vmatprep.subr.bf16.mxu0 0
  %8731 = vmatpush1.bf16.msra.mxu0 %v8422
  %8732 = vmatprep.subr.bf16.mxu0 0
  %8733 = vmatpush1.bf16.msra.mxu0 %v8423
  %8734 = vmatprep.subr.bf16.mxu0 0
  %8735 = vmatpush1.bf16.msra.mxu0 %v8424
  %8736 = vmatprep.subr.bf16.mxu0 0
  %8737 = vmatpush1.bf16.msra.mxu0 %v8425
  %8738 = vmatprep.subr.bf16.mxu0 0
  %8739 = vmatpush1.bf16.msra.mxu0 %v8426
  %8740 = vmatprep.subr.bf16.mxu0 0
  %8741 = vmatpush1.bf16.msra.mxu0 %v8427
  %8742 = vmatprep.subr.bf16.mxu0 0
  %8743 = vmatpush1.bf16.msra.mxu0 %v8428
  %8744 = vmatprep.subr.bf16.mxu0 0
  %8745 = vmatpush1.bf16.msra.mxu0 %v8429
  %8746 = vmatprep.subr.bf16.mxu0 0
  %8747 = vmatpush1.bf16.msra.mxu0 %v8430
  %8748 = vmatprep.subr.bf16.mxu0 0
  %8749 = vmatpush1.bf16.msra.mxu0 %v8431
  %8750 = vmatprep.subr.bf16.mxu0 0
  %8751 = vmatpush1.bf16.msra.mxu0 %v8432
  %8752 = vmatprep.subr.bf16.mxu0 0
  %8753 = vmatpush1.bf16.msra.mxu0 %v8433
  %8754 = vmatprep.subr.bf16.mxu0 0
  %8755 = vmatpush1.bf16.msra.mxu0 %v8434
  %8756 = vmatprep.subr.bf16.mxu0 0
  %8757 = vmatpush1.bf16.msra.mxu0 %v8435
  %8758 = vmatprep.mubr.bf16.mxu0 %v7857
  %8759 = vmatmul.mubr.bf16.gmra.mrb[0].mxu0 %v7856
  %v8760 = vpop.f32.mrb[0].mxu0
  %v8761 = vadd.f32 %v8720, %v8760
  %v8762 = vpop.f32.mrb[0].mxu0
  %v8763 = vpop.f32.mrb[0].mxu0
  %v8764 = vadd.f32 %v8723, %v8763
  %v8765 = vpop.f32.mrb[0].mxu0
  %8766 = vdwg.mxu0
  %8767 = vmatprep.subr.bf16.mxu0 0
  %8768 = vmatpush1.bf16.msra.mxu0 %v8436
  %8769 = vmatprep.subr.bf16.mxu0 0
  %8770 = vmatpush1.bf16.msra.mxu0 %v8437
  %8771 = vmatprep.subr.bf16.mxu0 0
  %8772 = vmatpush1.bf16.msra.mxu0 %v8438
  %8773 = vmatprep.subr.bf16.mxu0 0
  %8774 = vmatpush1.bf16.msra.mxu0 %v8439
  %8775 = vmatprep.subr.bf16.mxu0 0
  %8776 = vmatpush1.bf16.msra.mxu0 %v8440
  %8777 = vmatprep.subr.bf16.mxu0 0
  %8778 = vmatpush1.bf16.msra.mxu0 %v8441
  %8779 = vmatprep.subr.bf16.mxu0 0
  %8780 = vmatpush1.bf16.msra.mxu0 %v8442
  %8781 = vmatprep.subr.bf16.mxu0 0
  %8782 = vmatpush1.bf16.msra.mxu0 %v8443
  %8783 = vmatprep.subr.bf16.mxu0 0
  %8784 = vmatpush1.bf16.msra.mxu0 %v8444
  %8785 = vmatprep.subr.bf16.mxu0 0
  %8786 = vmatpush1.bf16.msra.mxu0 %v8445
  %8787 = vmatprep.subr.bf16.mxu0 0
  %8788 = vmatpush1.bf16.msra.mxu0 %v8446
  %8789 = vmatprep.subr.bf16.mxu0 0
  %8790 = vmatpush1.bf16.msra.mxu0 %v8447
  %8791 = vmatprep.subr.bf16.mxu0 0
  %8792 = vmatpush1.bf16.msra.mxu0 %v8448
  %8793 = vmatprep.subr.bf16.mxu0 0
  %8794 = vmatpush1.bf16.msra.mxu0 %v8449
  %8795 = vmatprep.subr.bf16.mxu0 0
  %8796 = vmatpush1.bf16.msra.mxu0 %v8450
  %8797 = vmatprep.subr.bf16.mxu0 0
  %8798 = vmatpush1.bf16.msra.mxu0 %v8451
  %8799 = vmatprep.mubr.bf16.mxu0 %v7859
  %8800 = vmatmul.mubr.bf16.gmra.mrb[0].mxu0 %v7858
  %v8801 = vpop.f32.mrb[0].mxu0
  %v8802 = vadd.f32 %v8761, %v8801
  %v8803 = vpop.f32.mrb[0].mxu0
  %v8804 = vpop.f32.mrb[0].mxu0
  %v8805 = vadd.f32 %v8764, %v8804
  %v8806 = vpop.f32.mrb[0].mxu0
  %8807 = vdwg.mxu0
  %8808 = vmatprep.subr.bf16.mxu0 0
  %8809 = vmatpush1.bf16.msra.mxu0 %v8452
  %8810 = vmatprep.subr.bf16.mxu0 0
  %8811 = vmatpush1.bf16.msra.mxu0 %v8453
  %8812 = vmatprep.subr.bf16.mxu0 0
  %8813 = vmatpush1.bf16.msra.mxu0 %v8454
  %8814 = vmatprep.subr.bf16.mxu0 0
  %8815 = vmatpush1.bf16.msra.mxu0 %v8455
  %8816 = vmatprep.subr.bf16.mxu0 0
  %8817 = vmatpush1.bf16.msra.mxu0 %v8456
  %8818 = vmatprep.subr.bf16.mxu0 0
  %8819 = vmatpush1.bf16.msra.mxu0 %v8457
  %8820 = vmatprep.subr.bf16.mxu0 0
  %8821 = vmatpush1.bf16.msra.mxu0 %v8458
  %8822 = vmatprep.subr.bf16.mxu0 0
  %8823 = vmatpush1.bf16.msra.mxu0 %v8459
  %8824 = vmatprep.subr.bf16.mxu0 0
  %8825 = vmatpush1.bf16.msra.mxu0 %v8460
  %8826 = vmatprep.subr.bf16.mxu0 0
  %8827 = vmatpush1.bf16.msra.mxu0 %v8461
  %8828 = vmatprep.subr.bf16.mxu0 0
  %8829 = vmatpush1.bf16.msra.mxu0 %v8462
  %8830 = vmatprep.subr.bf16.mxu0 0
  %8831 = vmatpush1.bf16.msra.mxu0 %v8463
  %8832 = vmatprep.subr.bf16.mxu0 0
  %8833 = vmatpush1.bf16.msra.mxu0 %v8464
  %8834 = vmatprep.subr.bf16.mxu0 0
  %8835 = vmatpush1.bf16.msra.mxu0 %v8465
  %8836 = vmatprep.subr.bf16.mxu0 0
  %8837 = vmatpush1.bf16.msra.mxu0 %v8466
  %8838 = vmatprep.subr.bf16.mxu0 0
  %8839 = vmatpush1.bf16.msra.mxu0 %v8467
  %8840 = vmatprep.mubr.bf16.mxu0 %v7861
  %8841 = vmatmul.mubr.bf16.gmra.mrb[0].mxu0 %v7860
  %v8842 = vpop.f32.mrb[0].mxu0
  %v8843 = vadd.f32 %v8802, %v8842
  %v8844 = vpop.f32.mrb[0].mxu0
  %v8845 = vpop.f32.mrb[0].mxu0
  %v8846 = vadd.f32 %v8805, %v8845
  %v8847 = vpop.f32.mrb[0].mxu0
  %8848 = vdwg.mxu0
  %8849 = vmatprep.subr.bf16.mxu0 0
  %8850 = vmatpush1.bf16.msra.mxu0 %v8468
  %8851 = vmatprep.subr.bf16.mxu0 0
  %8852 = vmatpush1.bf16.msra.mxu0 %v8469
  %8853 = vmatprep.subr.bf16.mxu0 0
  %8854 = vmatpush1.bf16.msra.mxu0 %v8470
  %8855 = vmatprep.subr.bf16.mxu0 0
  %8856 = vmatpush1.bf16.msra.mxu0 %v8471
  %8857 = vmatprep.subr.bf16.mxu0 0
  %8858 = vmatpush1.bf16.msra.mxu0 %v8472
  %8859 = vmatprep.subr.bf16.mxu0 0
  %8860 = vmatpush1.bf16.msra.mxu0 %v8473
  %8861 = vmatprep.subr.bf16.mxu0 0
  %8862 = vmatpush1.bf16.msra.mxu0 %v8474
  %8863 = vmatprep.subr.bf16.mxu0 0
  %8864 = vmatpush1.bf16.msra.mxu0 %v8475
  %8865 = vmatprep.subr.bf16.mxu0 0
  %8866 = vmatpush1.bf16.msra.mxu0 %v8476
  %8867 = vmatprep.subr.bf16.mxu0 0
  %8868 = vmatpush1.bf16.msra.mxu0 %v8477
  %8869 = vmatprep.subr.bf16.mxu0 0
  %8870 = vmatpush1.bf16.msra.mxu0 %v8478
  %8871 = vmatprep.subr.bf16.mxu0 0
  %8872 = vmatpush1.bf16.msra.mxu0 %v8479
  %8873 = vmatprep.subr.bf16.mxu0 0
  %8874 = vmatpush1.bf16.msra.mxu0 %v8480
  %8875 = vmatprep.subr.bf16.mxu0 0
  %8876 = vmatpush1.bf16.msra.mxu0 %v8481
  %8877 = vmatprep.subr.bf16.mxu0 0
  %8878 = vmatpush1.bf16.msra.mxu0 %v8482
  %8879 = vmatprep.subr.bf16.mxu0 0
  %8880 = vmatpush1.bf16.msra.mxu0 %v8483
  %8881 = vmatprep.mubr.bf16.mxu0 %v7863
  %8882 = vmatmul.mubr.bf16.gmra.mrb[0].mxu0 %v7862
  %v8883 = vpop.f32.mrb[0].mxu0
  %v8884 = vadd.f32 %v8843, %v8883
  %v8885 = vpop.f32.mrb[0].mxu0
  %v8886 = vpop.f32.mrb[0].mxu0
  %v8887 = vadd.f32 %v8846, %v8886
  %v8888 = vpop.f32.mrb[0].mxu0
  %8889 = vdwg.mxu0
  %8890 = vmatprep.subr.bf16.mxu0 0
  %8891 = vmatpush1.bf16.msra.mxu0 %v8484
  %8892 = vmatprep.subr.bf16.mxu0 0
  %8893 = vmatpush1.bf16.msra.mxu0 %v8485
  %8894 = vmatprep.subr.bf16.mxu0 0
  %8895 = vmatpush1.bf16.msra.mxu0 %v8486
  %8896 = vmatprep.subr.bf16.mxu0 0
  %8897 = vmatpush1.bf16.msra.mxu0 %v8487
  %8898 = vmatprep.subr.bf16.mxu0 0
  %8899 = vmatpush1.bf16.msra.mxu0 %v8488
  %8900 = vmatprep.subr.bf16.mxu0 0
  %8901 = vmatpush1.bf16.msra.mxu0 %v8489
  %8902 = vmatprep.subr.bf16.mxu0 0
  %8903 = vmatpush1.bf16.msra.mxu0 %v8490
  %8904 = vmatprep.subr.bf16.mxu0 0
  %8905 = vmatpush1.bf16.msra.mxu0 %v8491
  %8906 = vmatprep.subr.bf16.mxu0 0
  %8907 = vmatpush1.bf16.msra.mxu0 %v8492
  %8908 = vmatprep.subr.bf16.mxu0 0
  %8909 = vmatpush1.bf16.msra.mxu0 %v8493
  %8910 = vmatprep.subr.bf16.mxu0 0
  %8911 = vmatpush1.bf16.msra.mxu0 %v8494
  %8912 = vmatprep.subr.bf16.mxu0 0
  %8913 = vmatpush1.bf16.msra.mxu0 %v8495
  %8914 = vmatprep.subr.bf16.mxu0 0
  %8915 = vmatpush1.bf16.msra.mxu0 %v8496
  %8916 = vmatprep.subr.bf16.mxu0 0
  %8917 = vmatpush1.bf16.msra.mxu0 %v8497
  %8918 = vmatprep.subr.bf16.mxu0 0
  %8919 = vmatpush1.bf16.msra.mxu0 %v8498
  %8920 = vmatprep.subr.bf16.mxu0 0
  %8921 = vmatpush1.bf16.msra.mxu0 %v8499
  %8922 = vmatprep.mubr.bf16.mxu0 %v7865
  %8923 = vmatmul.mubr.bf16.gmra.mrb[0].mxu0 %v7864
  %v8924 = vpop.f32.mrb[0].mxu0
  %v8925 = vadd.f32 %v8884, %v8924
  %v8926 = vpop.f32.mrb[0].mxu0
  %v8927 = vpop.f32.mrb[0].mxu0
  %v8928 = vadd.f32 %v8887, %v8927
  %v8929 = vpop.f32.mrb[0].mxu0
  %8930 = vdwg.mxu0
  %8931 = vmatprep.subr.bf16.mxu0 0
  %8932 = vmatpush1.bf16.msra.mxu0 %v8500
  %8933 = vmatprep.subr.bf16.mxu0 0
  %8934 = vmatpush1.bf16.msra.mxu0 %v8501
  %8935 = vmatprep.subr.bf16.mxu0 0
  %8936 = vmatpush1.bf16.msra.mxu0 %v8502
  %8937 = vmatprep.subr.bf16.mxu0 0
  %8938 = vmatpush1.bf16.msra.mxu0 %v8503
  %8939 = vmatprep.subr.bf16.mxu0 0
  %8940 = vmatpush1.bf16.msra.mxu0 %v8504
  %8941 = vmatprep.subr.bf16.mxu0 0
  %8942 = vmatpush1.bf16.msra.mxu0 %v8505
  %8943 = vmatprep.subr.bf16.mxu0 0
  %8944 = vmatpush1.bf16.msra.mxu0 %v8506
  %8945 = vmatprep.subr.bf16.mxu0 0
  %8946 = vmatpush1.bf16.msra.mxu0 %v8507
  %8947 = vmatprep.subr.bf16.mxu0 0
  %8948 = vmatpush1.bf16.msra.mxu0 %v8508
  %8949 = vmatprep.subr.bf16.mxu0 0
  %8950 = vmatpush1.bf16.msra.mxu0 %v8509
  %8951 = vmatprep.subr.bf16.mxu0 0
  %8952 = vmatpush1.bf16.msra.mxu0 %v8510
  %8953 = vmatprep.subr.bf16.mxu0 0
  %8954 = vmatpush1.bf16.msra.mxu0 %v8511
  %8955 = vmatprep.subr.bf16.mxu0 0
  %8956 = vmatpush1.bf16.msra.mxu0 %v8512
  %8957 = vmatprep.subr.bf16.mxu0 0
  %8958 = vmatpush1.bf16.msra.mxu0 %v8513
  %8959 = vmatprep.subr.bf16.mxu0 0
  %8960 = vmatpush1.bf16.msra.mxu0 %v8514
  %8961 = vmatprep.subr.bf16.mxu0 0
  %8962 = vmatpush1.bf16.msra.mxu0 %v8515
  %8963 = vmatprep.mubr.bf16.mxu0 %v7867
  %8964 = vmatmul.mubr.bf16.gmra.mrb[0].mxu0 %v7866
  %v8965 = vpop.f32.mrb[0].mxu0
  %v8966 = vadd.f32 %v8925, %v8965
  %v8967 = vpop.f32.mrb[0].mxu0
  %v8968 = vpop.f32.mrb[0].mxu0
  %v8969 = vadd.f32 %v8928, %v8968
  %v8970 = vpop.f32.mrb[0].mxu0
  %8971 = vdwg.mxu0
  %v8972 = vadd.f32 %v6743, %v8966
  %v8973 = vadd.f32 %v6744, %v8969
  %s8974 = scalar_lea.vmem %s17, 2
  %v8975 = vld [vmem:[%s8974] sm:$0x1]
  %s8976 = scalar_lea.vmem %s18, 2
  %v8977 = vld [vmem:[%s8976] sm:$0x1]
  %v8978 = vsel %vm184, %v8972, 0.0
  %8979 = vadd.xlane.f32.xlu0 %v8978
  %v8980 = vpop.xlane.xlu0 %8979
  %v8981 = vsel %vm184, %v8973, 0.0
  %8982 = vadd.xlane.f32.xlu0 %v8981
  %v8983 = vpop.xlane.xlu0 %8982
  %v8984 = vmul.f32 %v8980, %v778
  %v8985 = vmul.f32 %v8983, %v778
  %v8986 = vsub.f32 %v8972, %v8984
  %v8987 = vsub.f32 %v8973, %v8985
  %v8988 = vmul.f32 %v8986, %v8986
  %v8989 = vmul.f32 %v8987, %v8987
  %v8990 = vsel %vm184, %v8988, 0.0
  %8991 = vadd.xlane.f32.xlu0 %v8990
  %v8992 = vpop.xlane.xlu0 %8991
  %v8993 = vsel %vm184, %v8989, 0.0
  %8994 = vadd.xlane.f32.xlu0 %v8993
  %v8995 = vpop.xlane.xlu0 %8994
  %v8996 = vmul.f32 %v8992, %v778
  %v8997 = vmul.f32 %v8995, %v778
  %v8998 = vadd.f32 %v8996, 1e-05
  %v8999 = vadd.f32 %v8997, 1e-05
  %v9000 = vrsqrt.pop %v8998
  %v9001 = vrsqrt.pop %v8999
  %v9002 = vmul.f32 %v8986, %v9000
  %v9003 = vmul.f32 %v8987, %v9001
  %v9005 = vlaneseq
  %v9006 = vshrl.u32 %v9005, 7
  %v9007 = vsub.s32 0, %v9006
  %v9008 = vrot.slane %v8975, %v9007
  %v9010 = vmul.f32 %v9002, %v9008
  %v9011 = vmul.f32 %v9003, %v9008
  %v9013 = vlaneseq
  %v9014 = vshrl.u32 %v9013, 7
  %v9015 = vsub.s32 0, %v9014
  %v9016 = vrot.slane %v8977, %v9015
  %v9018 = vadd.f32 %v9010, %v9016
  %v9019 = vadd.f32 %v9011, %v9016
  %v9020 = vld [vmem:[%s3] sm:$0xf]
  %v9021 = vld [vmem:[%s3 + $0x4] sm:$0xf]
  %v9022 = vld [vmem:[%s3 + $0x8] sm:$0xf]
  %v9023 = vld [vmem:[%s3 + $0xc] sm:$0xf]
  %v9024 = vld [vmem:[%s3 + $0x10] sm:$0xf]
  %v9025 = vld [vmem:[%s3 + $0x14] sm:$0xf]
  %v9026 = vld [vmem:[%s3 + $0x18] sm:$0xf]
  %v9027 = vld [vmem:[%s3 + $0x1c] sm:$0xf]
  %v9028 = vpack.c.bf16 %v9019, %v9018
  %v9029 = vld [vmem:[%s4] sm:$0x1]
  %v9031 = vlaneseq
  %v9032 = vshrl.u32 %v9031, 7
  %v9033 = vsub.s32 0, %v9032
  %v9034 = vrot.slane %v9029, %v9033
  %v9044 = vunpack.c.l.b16 %v9020
  %v9045 = vunpack.c.l.b16 %v9021
  %v9046 = vunpack.c.l.b16 %v9022
  %v9047 = vunpack.c.l.b16 %v9023
  %v9048 = vunpack.c.l.b16 %v9024
  %v9049 = vunpack.c.l.b16 %v9025
  %v9050 = vunpack.c.l.b16 %v9026
  %v9051 = vunpack.c.l.b16 %v9027
  %v9052 = vpack.c.b16 %v9045, %v9044
  %v9053 = vpack.c.b16 %v9047, %v9046
  %v9054 = vpack.c.b16 %v9049, %v9048
  %v9055 = vpack.c.b16 %v9051, %v9050
  %v9061 = vsel %vm184, %v9028, 0
  %9063 = vmatprep.subr.bf16.mxu0 0
  %9064 = vmatpush1.bf16.msra.mxu0 %v9052
  %9065 = vmatprep.subr.bf16.mxu0 0
  %9066 = vmatpush1.bf16.msra.mxu0 %v9053
  %9067 = vmatprep.subr.bf16.mxu0 0
  %9068 = vmatpush1.bf16.msra.mxu0 %v9054
  %9069 = vmatprep.subr.bf16.mxu0 0
  %9070 = vmatpush1.bf16.msra.mxu0 %v9055
  %9071 = vmatprep.subr.bf16.mxu0 0
  %9072 = vmatpush1.bf16.msra.mxu0 0
  %9073 = vmatprep.subr.bf16.mxu0 0
  %9074 = vmatpush1.bf16.msra.mxu0 0
  %9075 = vmatprep.subr.bf16.mxu0 0
  %9076 = vmatpush1.bf16.msra.mxu0 0
  %9077 = vmatprep.subr.bf16.mxu0 0
  %9078 = vmatpush1.bf16.msra.mxu0 0
  %9079 = vmatprep.subr.bf16.mxu0 0
  %9080 = vmatpush1.bf16.msra.mxu0 0
  %9081 = vmatprep.subr.bf16.mxu0 0
  %9082 = vmatpush1.bf16.msra.mxu0 0
  %9083 = vmatprep.subr.bf16.mxu0 0
  %9084 = vmatpush1.bf16.msra.mxu0 0
  %9085 = vmatprep.subr.bf16.mxu0 0
  %9086 = vmatpush1.bf16.msra.mxu0 0
  %9087 = vmatprep.subr.bf16.mxu0 0
  %9088 = vmatpush1.bf16.msra.mxu0 0
  %9089 = vmatprep.subr.bf16.mxu0 0
  %9090 = vmatpush1.bf16.msra.mxu0 0
  %9091 = vmatprep.subr.bf16.mxu0 0
  %9092 = vmatpush1.bf16.msra.mxu0 0
  %9093 = vmatprep.subr.bf16.mxu0 0
  %9094 = vmatpush1.bf16.msra.mxu0 0
  %9095 = vmatprep.mubr.bf16.mxu0 0
  %9096 = vmatmul.mubr.bf16.gmra.mrb[0].mxu0 %v9061
  %v9097 = vpop.f32.mrb[0].mxu0
  %v9098 = vadd.f32 %v9034, %v9097
  %v9099 = vpop.f32.mrb[0].mxu0
  %v9100 = vpop.f32.mrb[0].mxu0
  %v9101 = vadd.f32 %v9034, %v9100
  %v9102 = vpop.f32.mrb[0].mxu0
  %9103 = vdwg.mxu0
  %v9104 = vmax.f32 %v9098, 0.0
  %v9105 = vmax.f32 %v9101, 0.0
  %v9106 = vld [vmem:[%s5] sm:$0xf]
  %v9107 = vld [vmem:[%s5 + $0x4] sm:$0xf]
  %v9108 = vld [vmem:[%s5 + $0x8] sm:$0xf]
  %v9109 = vld [vmem:[%s5 + $0xc] sm:$0xf]
  %v9110 = vpack.c.bf16 %v9105, %v9104
  %v9111 = vld [vmem:[%s6] sm:$0x1]
  %v9113 = vlaneseq
  %v9114 = vshrl.u32 %v9113, 7
  %v9115 = vsub.s32 0, %v9114
  %v9116 = vrot.slane %v9111, %v9115
  %v9122 = vunpack.c.l.b16 %v9106
  %v9123 = vunpack.c.l.b16 %v9107
  %v9124 = vunpack.c.l.b16 %v9108
  %v9125 = vunpack.c.l.b16 %v9109
  %v9126 = vpack.c.b16 %v9123, %v9122
  %v9127 = vpack.c.b16 %v9125, %v9124
  %v9131 = vsel %vm236, %v9110, 0
  %9133 = vmatprep.subr.bf16.mxu0 0
  %9134 = vmatpush1.bf16.msra.mxu0 %v9126
  %9135 = vmatprep.subr.bf16.mxu0 0
  %9136 = vmatpush1.bf16.msra.mxu0 %v9127
  %9137 = vmatprep.subr.bf16.mxu0 0
  %9138 = vmatpush1.bf16.msra.mxu0 0
  %9139 = vmatprep.subr.bf16.mxu0 0
  %9140 = vmatpush1.bf16.msra.mxu0 0
  %9141 = vmatprep.subr.bf16.mxu0 0
  %9142 = vmatpush1.bf16.msra.mxu0 0
  %9143 = vmatprep.subr.bf16.mxu0 0
  %9144 = vmatpush1.bf16.msra.mxu0 0
  %9145 = vmatprep.subr.bf16.mxu0 0
  %9146 = vmatpush1.bf16.msra.mxu0 0
  %9147 = vmatprep.subr.bf16.mxu0 0
  %9148 = vmatpush1.bf16.msra.mxu0 0
  %9149 = vmatprep.subr.bf16.mxu0 0
  %9150 = vmatpush1.bf16.msra.mxu0 0
  %9151 = vmatprep.subr.bf16.mxu0 0
  %9152 = vmatpush1.bf16.msra.mxu0 0
  %9153 = vmatprep.subr.bf16.mxu0 0
  %9154 = vmatpush1.bf16.msra.mxu0 0
  %9155 = vmatprep.subr.bf16.mxu0 0
  %9156 = vmatpush1.bf16.msra.mxu0 0
  %9157 = vmatprep.subr.bf16.mxu0 0
  %9158 = vmatpush1.bf16.msra.mxu0 0
  %9159 = vmatprep.subr.bf16.mxu0 0
  %9160 = vmatpush1.bf16.msra.mxu0 0
  %9161 = vmatprep.subr.bf16.mxu0 0
  %9162 = vmatpush1.bf16.msra.mxu0 0
  %9163 = vmatprep.subr.bf16.mxu0 0
  %9164 = vmatpush1.bf16.msra.mxu0 0
  %9165 = vmatprep.mubr.bf16.mxu0 0
  %9166 = vmatmul.mubr.bf16.gmra.mrb[0].mxu0 %v9131
  %v9167 = vpop.f32.mrb[0].mxu0
  %v9168 = vadd.f32 %v9116, %v9167
  %v9169 = vpop.f32.mrb[0].mxu0
  %v9170 = vpop.f32.mrb[0].mxu0
  %v9171 = vadd.f32 %v9116, %v9170
  %v9172 = vpop.f32.mrb[0].mxu0
  %9173 = vdwg.mxu0
  %vm9174 = vcmask 31744
  %9175 = vst.msk [vmem:[%s19] sm:$0xff] %vm9174, %v9168
  %9176 = vst.msk [vmem:[%s19 + $0x8] sm:$0xff] %vm9174, %v9171
  // Predicated region
  $region78: #{dtqn_forward.1} parent=0 // pred_check
    _
  $region79: #{dtqn_forward.1} parent=0 // pred_check_branch
    %9178 = sbr.rel (0) target = $region81
  $region80: #{dtqn_forward.1} parent=0 // pred_region
    _
  $region81: #{dtqn_forward.1} parent=0 // pred_fallthru
    _
  // Predicated region
  $region82: #{dtqn_forward.1} parent=0 // pred_check
    _
  $region83: #{dtqn_forward.1} parent=0 // pred_check_branch
    %9180 = sbr.rel (0) target = $region85
  $region84: #{dtqn_forward.1} parent=0 // pred_region
    _
  $region85: #{dtqn_forward.1} parent=0 // pred_fallthru
    _

</llo_original>
